<compile_context>
chip_gen: v7x
topology: tpu7x:2x2x1
jax: 0.10.0
libtpu: 0.0.40
codegen_flags: <defaults>
</compile_context>

<pallas_src>
import functools

import jax
import jax.numpy as jnp
from jax.experimental import pallas as pl
from jax.experimental.pallas import tpu as pltpu


def _round_up(x, m):
    return ((x + m - 1) // m) * m


def _cdiv(a, b):
    return -(-a // b)


def _split_rows(m, target, align):
    """Balanced tiling of m rows: (#tiles, tile_size, padded_m)."""
    n_tiles = max(1, _cdiv(m, target))
    t = _round_up(_cdiv(m, n_tiles), align)
    return n_tiles, t, n_tiles * t


_VMEM_LIMIT = 32 * 1024 * 1024   # fits v5e's scoped budget, < physical everywhere


# ----------------------------- Pallas kernels --------------------------------

def _bn_matmul_kernel(a_ref, w_ref, m_ref, o_ref, sum_ref, sq_ref, *, cgrp):
    """o = A @ W (bf16 in, f32 acc, bf16 out) + masked per-tile column stats.

    m_ref is a (TM, 4) f32 per-row validity mask, one column per output phase
    group; matmul columns [g*cgrp, (g+1)*cgrp) use mask column g.  Stats are
    per-tile partials (reduced over tiles in JAX), so the M grid axis stays
    "parallel" (no revisited accumulator -> v7x megacore-friendly).
    """
    acc = jnp.dot(a_ref[...], w_ref[...], preferred_element_type=jnp.float32)
    o_ref[...] = acc.astype(o_ref.dtype)

    ncol = acc.shape[1]
    colk = jax.lax.broadcasted_iota(jnp.int32, (1, ncol), 1)
    m = m_ref[...]
    msel = jnp.where(colk < cgrp, m[:, 0:1],
           jnp.where(colk < 2 * cgrp, m[:, 1:2],
           jnp.where(colk < 3 * cgrp, m[:, 2:3], m[:, 3:4])))
    vals = acc * msel
    sum_ref[...] = jnp.sum(vals, axis=0, keepdims=True)[None]
    sq_ref[...] = jnp.sum(vals * vals, axis=0, keepdims=True)[None]


def _tanh_matmul_t_kernel(w_ref, a_ref, o_ref):
    """o^T = tanh(W^T @ A^T): store lane dim is M (dense vst, no 12-lane mask)."""
    acc = jnp.dot(w_ref[...], a_ref[...], preferred_element_type=jnp.float32)
    o_ref[...] = jnp.tanh(acc).astype(o_ref.dtype)


# ------------------------------ call wrappers ---------------------------------

def _bn_matmul(a, w_mat, mask, *, tile_rows=1024):
    """Returns (slab[Mp, Ncol] bf16, col_sums[Ncol] f32, col_sqsums[Ncol] f32)."""
    m, k = a.shape
    _, ncol = w_mat.shape
    n_tiles, tm, mp = _split_rows(m, tile_rows, 16)
    if mp != m:                     # pad fuses with the im2col producer in XLA
        a = jnp.pad(a, ((0, mp - m), (0, 0)))
        mask = jnp.pad(mask, ((0, mp - m), (0, 0)))

    kernel = functools.partial(_bn_matmul_kernel, cgrp=ncol // 4)
    slab, psum, psq = pl.pallas_call(
        kernel,
        out_shape=(jax.ShapeDtypeStruct((mp, ncol), jnp.bfloat16),
                   jax.ShapeDtypeStruct((n_tiles, 1, ncol), jnp.float32),
                   jax.ShapeDtypeStruct((n_tiles, 1, ncol), jnp.float32)),
        grid=(n_tiles,),
        in_specs=[pl.BlockSpec((tm, k), lambda i: (i, 0)),
                  pl.BlockSpec((k, ncol), lambda i: (0, 0)),
                  pl.BlockSpec((tm, 4), lambda i: (i, 0))],
        out_specs=(pl.BlockSpec((tm, ncol), lambda i: (i, 0)),
                   pl.BlockSpec((1, 1, ncol), lambda i: (i, 0, 0)),
                   pl.BlockSpec((1, 1, ncol), lambda i: (i, 0, 0))),
        compiler_params=pltpu.CompilerParams(
            dimension_semantics=("parallel",),
            vmem_limit_bytes=_VMEM_LIMIT),
    )(a, w_mat, mask)
    return slab, psum.sum(axis=(0, 1)), psq.sum(axis=(0, 1))


def _tanh_matmul_t(w_t, a_t, *, tile_cols=1024):
    """tanh(w_t @ a_t) with lane-dense stores.  Returns f32 [4*Cout, M]."""
    r, k = w_t.shape
    _, m = a_t.shape
    n_tiles, tn, mp = _split_rows(m, tile_cols, 128)
    if mp != m:
        a_t = jnp.pad(a_t, ((0, 0), (0, mp - m)))
    out = pl.pallas_call(
        _tanh_matmul_t_kernel,
        out_shape=jax.ShapeDtypeStruct((r, mp), jnp.float32),
        grid=(n_tiles,),
        in_specs=[pl.BlockSpec((r, k), lambda i: (0, 0)),
                  pl.BlockSpec((k, tn), lambda i: (0, i))],
        out_specs=pl.BlockSpec((r, tn), lambda i: (0, i)),
        compiler_params=pltpu.CompilerParams(
            dimension_semantics=("parallel",),
            vmem_limit_bytes=_VMEM_LIMIT),
    )(w_t, a_t)
    return out[:, :m]


# -------------------------------- JAX glue ------------------------------------

def _bn_scale_shift(sums, sqs, count, gamma, beta, eps=1e-5):
    mean = sums / count
    var = jnp.maximum(sqs / count - mean * mean, 0.0)     # biased (training BN)
    scale = gamma * jax.lax.rsqrt(var + eps)
    return scale, beta - mean * scale


def _im2col_2x2(x):
    """2x2-tap patches of the 1-padded NHWC input: [N*(H+1)*(W+1), 4*C]."""
    n, h, w, c = x.shape
    xp = jnp.pad(x, ((0, 0), (1, 1), (1, 1), (0, 0)))
    taps = [xp[:, dy:dy + h + 1, dx:dx + w + 1, :] for dy in (0, 1) for dx in (0, 1)]
    a = jnp.stack(taps, axis=3)                           # [n, h+1, w+1, 4, c]
    return a.reshape(n * (h + 1) * (w + 1), 4 * c)


def _im2col_2x2_t(x):
    """Transposed 2x2-tap patches: [4*C, N*(H+1)*(W+1)] (lane dim = rows)."""
    n, h, w, c = x.shape
    xp = jnp.pad(x, ((0, 0), (1, 1), (1, 1), (0, 0)))
    taps = [xp[:, dy:dy + h + 1, dx:dx + w + 1, :] for dy in (0, 1) for dx in (0, 1)]
    a = jnp.stack(taps, axis=0)                           # [4, n, h+1, w+1, c]
    a = jnp.transpose(a, (0, 4, 1, 2, 3))                 # [4, c, n, h+1, w+1]
    return a.reshape(4 * c, n * (h + 1) * (w + 1))


def _row_phase_mask(n_img, h, w):
    """Per patch-row validity of the 4 sub-pixel phases (ry,rx): [M, 4] f32."""
    u = jnp.arange(h + 1, dtype=jnp.int32)[:, None, None]
    v = jnp.arange(w + 1, dtype=jnp.int32)[None, :, None]
    ry = jnp.array([0, 0, 1, 1], jnp.int32)[None, None, :]
    rx = jnp.array([0, 1, 0, 1], jnp.int32)[None, None, :]
    oky = jnp.where(ry == 1, u >= 1, u < h)
    okx = jnp.where(rx == 1, v >= 1, v < w)
    m = (oky & okx).astype(jnp.float32)                   # [h+1, w+1, 4]
    m = jnp.broadcast_to(m[None], (n_img, h + 1, w + 1, 4))
    return m.reshape(n_img * (h + 1) * (w + 1), 4)


def _depth_to_space(res, n, h, w, c, scale=None, shift=None, relu=False,
                    out_dtype=jnp.float32):
    """Sub-pixel recombination; optional fused BN affine + ReLU (XLA-fused)."""
    y = res[:n * (h + 1) * (w + 1)].reshape(n, h + 1, w + 1, 2, 2, c)
    y = y.astype(jnp.float32)
    if scale is not None:
        y = y * scale + shift
    if relu:
        y = jnp.maximum(y, 0.0)
    o00 = y[:, :h, :w, 0, 0, :]
    o01 = y[:, :h, 1:, 0, 1, :]
    o10 = y[:, 1:, :w, 1, 0, :]
    o11 = y[:, 1:, 1:, 1, 1, :]
    row0 = jnp.stack([o00, o01], axis=3)                  # [n, h, w, 2, c]
    row1 = jnp.stack([o10, o11], axis=3)
    out = jnp.stack([row0, row1], axis=2)                 # [n, h, 2, w, 2, c]
    return out.reshape(n, 2 * h, 2 * w, c).astype(out_dtype)


def _subpixel_wmat(w):
    """ConvTranspose(k=4,s=2,p=1) weight [Cin,Cout,4,4] -> [4*Cin, 4*Cout].

    Rows ordered (dy, dx, ci), columns ordered (ry, rx, co) with
    Wmat[(dy,dx,ci),(ry,rx,co)] = w[ci, co, 3-ry-2*dy, 3-rx-2*dx].
    """
    cin, cout = w.shape[0], w.shape[1]
    sub = w[:, :, ::-1, ::-1].reshape(cin, cout, 2, 2, 2, 2)  # (ci,co,dy,ry,dx,rx)
    m = jnp.transpose(sub, (2, 4, 0, 3, 5, 1))                # (dy,dx,ci,ry,rx,co)
    return m.reshape(4 * cin, 4 * cout)


def init_params(key, nz, n_classes, n_channels, nf):
    ks = jax.random.split(key, 5)
    cin0 = nz + n_classes
    io = [(cin0, nf * 8), (nf * 8, nf * 4), (nf * 4, nf * 2),
          (nf * 2, nf), (nf, n_channels)]
    p = {}
    for i, (ci, co) in enumerate(io, start=1):
        # PyTorch ConvTranspose2d weight layout: [in_channels, out_channels, kH, kW]
        p[f"w{i}"] = 0.05 * jax.random.normal(ks[i - 1], (ci, co, 4, 4), jnp.float32)
    # MXU-ready layouts (bf16), hoisted out of the forward path.
    p["w1m"] = jnp.transpose(p["w1"], (0, 2, 3, 1)).reshape(
        cin0, 16 * nf * 8).astype(jnp.bfloat16)
    for i in (2, 3, 4):
        p[f"w{i}m"] = _subpixel_wmat(p[f"w{i}"]).astype(jnp.bfloat16)
    # Final layer stored transposed: lane-dense stores via out^T = W^T @ A^T.
    p["w5mt"] = _subpixel_wmat(p["w5"]).T.astype(jnp.bfloat16)
    for i, c in enumerate([nf * 8, nf * 4, nf * 2, nf], start=1):
        p[f"g{i}"] = jnp.ones((c,), jnp.float32)    # BatchNorm default weight
        p[f"b{i}"] = jnp.zeros((c,), jnp.float32)   # BatchNorm default bias
    return p


def cgan_generator_forward(params, z, y):
    """z: [N, nz, 1, 1], y: [N, n_classes, 1, 1] (NCHW).  Returns NCHW image."""
    n = z.shape[0]
    x = jnp.concatenate([z, y], axis=1).reshape(n, -1).astype(jnp.bfloat16)

    # Layer 1: ConvTranspose(k=4, s=1, p=0) on a 1x1 input == pure matmul.
    # (Microscopic work at GAN batch sizes; kept as a Pallas call for uniformity.)
    c1 = params["g1"].shape[0]
    slab, s, sq = _bn_matmul(x, params["w1m"], jnp.ones((n, 4), jnp.float32))
    scale, shift = _bn_scale_shift(s.reshape(16, c1).sum(0),
                                   sq.reshape(16, c1).sum(0),
                                   n * 16, params["g1"], params["b1"])
    act = jnp.maximum(slab[:n].reshape(n, 4, 4, c1).astype(jnp.float32)
                      * scale + shift, 0.0).astype(jnp.bfloat16)
    # TODO(synk): BatchNorm running_mean/running_var tracking (training-time
    # buffer side effect) is not replicated; batch-statistics forward only.
    # NOTE: variance uses E[x^2]-E[x]^2 in f32; fine at this tolerance, use a
    # two-pass/Welford reduction if trained weights need tighter accuracy.

    # Layers 2-4: sub-pixel ConvTranspose + fused per-tile BN-stat reduction.
    for wk, gk, bk in (("w2m", "g2", "b2"), ("w3m", "g3", "b3"), ("w4m", "g4", "b4")):
        nn_, h, w, _ = act.shape
        cout = params[gk].shape[0]
        a = _im2col_2x2(act)                              # bf16, [M, 4*Cin]
        slab, s, sq = _bn_matmul(a, params[wk], _row_phase_mask(nn_, h, w))
        scale, shift = _bn_scale_shift(s.reshape(4, cout).sum(0),
                                       sq.reshape(4, cout).sum(0),
                                       nn_ * 4 * h * w, params[gk], params[bk])
        act = _depth_to_space(slab, nn_, h, w, cout, scale=scale, shift=shift,
                              relu=True, out_dtype=jnp.bfloat16)

    # Layer 5: sub-pixel ConvTranspose + fused tanh, transposed (lane-dense).
    nn_, h, w, _ = act.shape
    cout = params["w5mt"].shape[0] // 4
    a_t = _im2col_2x2_t(act)                              # bf16, [4*Cin, M]
    res_t = _tanh_matmul_t(params["w5mt"], a_t)           # f32, [4*Cout, M]
    out = _depth_to_space(res_t.T, nn_, h, w, cout)       # NHWC f32
    return out.transpose(0, 3, 1, 2)                      # -> NCHW


# ------------------------- pure-JAX f32 reference ---------------------------

def _conv_transpose_ref(x, w, stride, padding):
    k = w.shape[2]
    w_t = jnp.transpose(w[:, :, ::-1, ::-1], (1, 0, 2, 3))    # [Cout, Cin, k, k]
    pad = k - 1 - padding
    return jax.lax.conv_general_dilated(
        x, w_t, window_strides=(1, 1),
        padding=((pad, pad), (pad, pad)),
        lhs_dilation=(stride, stride),
        dimension_numbers=("NCHW", "OIHW", "NCHW"),
        precision=jax.lax.Precision.HIGHEST)


def _bn_relu_ref(x, gamma, beta):
    mean = x.mean(axis=(0, 2, 3), keepdims=True)
    var = ((x - mean) ** 2).mean(axis=(0, 2, 3), keepdims=True)
    y = (x - mean) * jax.lax.rsqrt(var + 1e-5)
    y = y * gamma[None, :, None, None] + beta[None, :, None, None]
    return jnp.maximum(y, 0.0)


def cgan_generator_ref(params, z, y):
    o = jnp.concatenate([z, y], axis=1)
    o = _bn_relu_ref(_conv_transpose_ref(o, params["w1"], 1, 0), params["g1"], params["b1"])
    o = _bn_relu_ref(_conv_transpose_ref(o, params["w2"], 2, 1), params["g2"], params["b2"])
    o = _bn_relu_ref(_conv_transpose_ref(o, params["w3"], 2, 1), params["g3"], params["b3"])
    o = _bn_relu_ref(_conv_transpose_ref(o, params["w4"], 2, 1), params["g4"], params["b4"])
    return jnp.tanh(_conv_transpose_ref(o, params["w5"], 2, 1))


# ---------------------------------- main -------------------------------------

if __name__ == "__main__":
    key = jax.random.PRNGKey(0)
    kz, klab, kp = jax.random.split(key, 3)

    # Small shapes consistent with the module's constructor arguments.
    N, nz, n_classes, n_channels, nf = 2, 32, 8, 3, 16

    z = jax.random.normal(kz, (N, nz, 1, 1), jnp.float32)
    labels = jax.random.randint(klab, (N,), 0, n_classes)
    y = jax.nn.one_hot(labels, n_classes, dtype=jnp.float32).reshape(N, n_classes, 1, 1)

    params = init_params(kp, nz, n_classes, n_channels, nf)

    fwd = jax.jit(cgan_generator_forward)
    out = jax.block_until_ready(fwd(params, z, y))

    assert out.shape == (N, n_channels, 64, 64), out.shape
    assert bool(jnp.all(jnp.isfinite(out)))
    assert bool(jnp.all(jnp.abs(out) <= 1.0 + 1e-6))        # tanh range

    ref = jax.block_until_ready(jax.jit(cgan_generator_ref)(params, z, y))
    max_err = float(jnp.max(jnp.abs(out - ref)))
    # bf16 weights + bf16 intermediate slabs vs an f32 HIGHEST-precision ref.
    assert max_err < 0.2, f"max abs err vs f32 reference too large: {max_err}"

    print("KERNEL_OK")
</pallas_src>

<mosaic_0001>
module attributes {stable_mosaic.version = 11 : i64} {
  func.func @_bn_matmul_kernel(%arg0: i32, %arg1: memref<16x40xbf16, #tpu.memory_space<vmem>>, %arg2: memref<40x2048xbf16, #tpu.memory_space<vmem>>, %arg3: memref<16x4xf32, #tpu.memory_space<vmem>>, %arg4: memref<16x2048xbf16, #tpu.memory_space<vmem>>, %arg5: memref<1x1x2048xf32, #tpu.memory_space<vmem>>, %arg6: memref<1x1x2048xf32, #tpu.memory_space<vmem>>) attributes {dimension_semantics = [#tpu.dimension_semantics<parallel>], iteration_bounds = array<i64: 1>, scalar_prefetch = 0 : i64, scratch_operands = 0 : i64, tpu.core_type = #tpu.core_type<tc>, window_params = [{transform_indices = @transform_0, window_bounds = array<i64: 16, 40>}, {pipeline_mode = #tpu.pipeline_mode<synchronous>, transform_indices = @transform_1, window_bounds = array<i64: 40, 2048>}, {transform_indices = @transform_2, window_bounds = array<i64: 16, 4>}, {transform_indices = @transform_3, window_bounds = array<i64: 16, 2048>}, {transform_indices = @transform_4, window_bounds = array<i64: 1, 1, 2048>}, {transform_indices = @transform_5, window_bounds = array<i64: 1, 1, 2048>}]} {
    %c0 = arith.constant 0 : index
    %c0_0 = arith.constant 0 : index
    %0 = vector.load %arg1[%c0, %c0_0] : memref<16x40xbf16, #tpu.memory_space<vmem>>, vector<16x40xbf16>
    %c0_1 = arith.constant 0 : index
    %c0_2 = arith.constant 0 : index
    %1 = vector.load %arg2[%c0_1, %c0_2] : memref<40x2048xbf16, #tpu.memory_space<vmem>>, vector<40x2048xbf16>
    %cst = arith.constant dense<0.000000e+00> : vector<16x2048xf32>
    %2 = tpu.matmul %0, %1, %cst {dimension_numbers = #tpu.dot_dimension_numbers<[1], [0], [0], [1], [0, 0, 1, 1], [], []>} : vector<16x40xbf16>, vector<40x2048xbf16>, vector<16x2048xf32> -> vector<16x2048xf32>
    %3 = arith.truncf %2 : vector<16x2048xf32> to vector<16x2048xbf16>
    %c0_3 = arith.constant 0 : index
    %c0_4 = arith.constant 0 : index
    %4 = vector.load %arg4[%c0_3, %c0_4] : memref<16x2048xbf16, #tpu.memory_space<vmem>>, vector<16x2048xbf16>
    tpu.vector_store %arg4[%c0_3, %c0_4], %3 {strides = array<i32>} : memref<16x2048xbf16, #tpu.memory_space<vmem>>, vector<16x2048xbf16>,
    %5 = tpu.iota {dimensions = array<i32: 1>} : vector<1x2048xi32>
    %c0_5 = arith.constant 0 : index
    %c0_6 = arith.constant 0 : index
    %6 = vector.load %arg3[%c0_5, %c0_6] : memref<16x4xf32, #tpu.memory_space<vmem>>, vector<16x4xf32>
    %c512_i32 = arith.constant 512 : i32
    %7 = vector.broadcast %c512_i32 : i32 to vector<1x2048xi32>
    %8 = arith.cmpi slt, %5, %7 : vector<1x2048xi32>
    %9 = vector.extract_strided_slice %6 {offsets = [0, 0], sizes = [16, 1], strides = [1, 1]} : vector<16x4xf32> to vector<16x1xf32>
    %c1024_i32 = arith.constant 1024 : i32
    %10 = vector.broadcast %c1024_i32 : i32 to vector<1x2048xi32>
    %11 = arith.cmpi slt, %5, %10 : vector<1x2048xi32>
    %12 = vector.extract_strided_slice %6 {offsets = [0, 1], sizes = [16, 1], strides = [1, 1]} : vector<16x4xf32> to vector<16x1xf32>
    %c1536_i32 = arith.constant 1536 : i32
    %13 = vector.broadcast %c1536_i32 : i32 to vector<1x2048xi32>
    %14 = arith.cmpi slt, %5, %13 : vector<1x2048xi32>
    %15 = vector.extract_strided_slice %6 {offsets = [0, 2], sizes = [16, 1], strides = [1, 1]} : vector<16x4xf32> to vector<16x1xf32>
    %16 = vector.extract_strided_slice %6 {offsets = [0, 3], sizes = [16, 1], strides = [1, 1]} : vector<16x4xf32> to vector<16x1xf32>
    %17 = vector.shape_cast %14 : vector<1x2048xi1> to vector<1x2048xi1>
    %18 = vector.broadcast %17 : vector<1x2048xi1> to vector<16x2048xi1>
    %19 = vector.shape_cast %15 : vector<16x1xf32> to vector<16x1xf32>
    %20 = vector.broadcast %19 : vector<16x1xf32> to vector<16x2048xf32>
    %21 = vector.shape_cast %16 : vector<16x1xf32> to vector<16x1xf32>
    %22 = vector.broadcast %21 : vector<16x1xf32> to vector<16x2048xf32>
    %23 = arith.select %18, %20, %22 : vector<16x2048xi1>, vector<16x2048xf32>
    %24 = vector.shape_cast %11 : vector<1x2048xi1> to vector<1x2048xi1>
    %25 = vector.broadcast %24 : vector<1x2048xi1> to vector<16x2048xi1>
    %26 = vector.shape_cast %12 : vector<16x1xf32> to vector<16x1xf32>
    %27 = vector.broadcast %26 : vector<16x1xf32> to vector<16x2048xf32>
    %28 = arith.select %25, %27, %23 : vector<16x2048xi1>, vector<16x2048xf32>
    %29 = vector.shape_cast %8 : vector<1x2048xi1> to vector<1x2048xi1>
    %30 = vector.broadcast %29 : vector<1x2048xi1> to vector<16x2048xi1>
    %31 = vector.shape_cast %9 : vector<16x1xf32> to vector<16x1xf32>
    %32 = vector.broadcast %31 : vector<16x1xf32> to vector<16x2048xf32>
    %33 = arith.select %30, %32, %28 : vector<16x2048xi1>, vector<16x2048xf32>
    %34 = arith.mulf %2, %33 : vector<16x2048xf32>
    %cst_7 = arith.constant dense<0.000000e+00> : vector<2048xf32>
    %35 = vector.multi_reduction <add>, %34, %cst_7 [0] : vector<16x2048xf32> to vector<2048xf32>
    %36 = vector.shape_cast %35 : vector<2048xf32> to vector<1x2048xf32>
    %37 = vector.shape_cast %36 : vector<1x2048xf32> to vector<1x1x2048xf32>
    %c0_8 = arith.constant 0 : index
    %c0_9 = arith.constant 0 : index
    %c0_10 = arith.constant 0 : index
    %38 = vector.load %arg5[%c0_8, %c0_9, %c0_10] : memref<1x1x2048xf32, #tpu.memory_space<vmem>>, vector<1x1x2048xf32>
    tpu.vector_store %arg5[%c0_8, %c0_9, %c0_10], %37 {strides = array<i32>} : memref<1x1x2048xf32, #tpu.memory_space<vmem>>, vector<1x1x2048xf32>,
    %39 = arith.mulf %34, %34 : vector<16x2048xf32>
    %cst_11 = arith.constant dense<0.000000e+00> : vector<2048xf32>
    %40 = vector.multi_reduction <add>, %39, %cst_11 [0] : vector<16x2048xf32> to vector<2048xf32>
    %41 = vector.shape_cast %40 : vector<2048xf32> to vector<1x2048xf32>
    %42 = vector.shape_cast %41 : vector<1x2048xf32> to vector<1x1x2048xf32>
    %c0_12 = arith.constant 0 : index
    %c0_13 = arith.constant 0 : index
    %c0_14 = arith.constant 0 : index
    %43 = vector.load %arg6[%c0_12, %c0_13, %c0_14] : memref<1x1x2048xf32, #tpu.memory_space<vmem>>, vector<1x1x2048xf32>
    tpu.vector_store %arg6[%c0_12, %c0_13, %c0_14], %42 {strides = array<i32>} : memref<1x1x2048xf32, #tpu.memory_space<vmem>>, vector<1x1x2048xf32>,
    return
  }
  func.func @transform_0(%arg0: i32) -> (i32, i32) {
    %c0_i32 = arith.constant 0 : i32
    %c0_i32_0 = arith.constant 0 : i32
    return %arg0, %c0_i32 : i32, i32
  }
  func.func @transform_1(%arg0: i32) -> (i32, i32) {
    %c0_i32 = arith.constant 0 : i32
    %c0_i32_0 = arith.constant 0 : i32
    %c0_i32_1 = arith.constant 0 : i32
    return %c0_i32, %c0_i32_0 : i32, i32
  }
  func.func @transform_2(%arg0: i32) -> (i32, i32) {
    %c0_i32 = arith.constant 0 : i32
    %c0_i32_0 = arith.constant 0 : i32
    return %arg0, %c0_i32 : i32, i32
  }
  func.func @transform_3(%arg0: i32) -> (i32, i32) {
    %c0_i32 = arith.constant 0 : i32
    %c0_i32_0 = arith.constant 0 : i32
    return %arg0, %c0_i32 : i32, i32
  }
  func.func @transform_4(%arg0: i32) -> (i32, i32, i32) {
    %c0_i32 = arith.constant 0 : i32
    %c0_i32_0 = arith.constant 0 : i32
    %c0_i32_1 = arith.constant 0 : i32
    return %arg0, %c0_i32, %c0_i32_0 : i32, i32, i32
  }
  func.func @transform_5(%arg0: i32) -> (i32, i32, i32) {
    %c0_i32 = arith.constant 0 : i32
    %c0_i32_0 = arith.constant 0 : i32
    %c0_i32_1 = arith.constant 0 : i32
    return %arg0, %c0_i32, %c0_i32_0 : i32, i32, i32
  }
}

module attributes {stable_mosaic.version = 11 : i64} {
  func.func @_bn_matmul_kernel(%arg0: i32, %arg1: memref<64x512xbf16, #tpu.memory_space<vmem>>, %arg2: memref<512x256xbf16, #tpu.memory_space<vmem>>, %arg3: memref<64x4xf32, #tpu.memory_space<vmem>>, %arg4: memref<64x256xbf16, #tpu.memory_space<vmem>>, %arg5: memref<1x1x256xf32, #tpu.memory_space<vmem>>, %arg6: memref<1x1x256xf32, #tpu.memory_space<vmem>>) attributes {dimension_semantics = [#tpu.dimension_semantics<parallel>], iteration_bounds = array<i64: 1>, scalar_prefetch = 0 : i64, scratch_operands = 0 : i64, tpu.core_type = #tpu.core_type<tc>, window_params = [{transform_indices = @transform_0, window_bounds = array<i64: 64, 512>}, {pipeline_mode = #tpu.pipeline_mode<synchronous>, transform_indices = @transform_1, window_bounds = array<i64: 512, 256>}, {transform_indices = @transform_2, window_bounds = array<i64: 64, 4>}, {transform_indices = @transform_3, window_bounds = array<i64: 64, 256>}, {transform_indices = @transform_4, window_bounds = array<i64: 1, 1, 256>}, {transform_indices = @transform_5, window_bounds = array<i64: 1, 1, 256>}]} {
    %c0 = arith.constant 0 : index
    %c0_0 = arith.constant 0 : index
    %0 = vector.load %arg1[%c0, %c0_0] : memref<64x512xbf16, #tpu.memory_space<vmem>>, vector<64x512xbf16>
    %c0_1 = arith.constant 0 : index
    %c0_2 = arith.constant 0 : index
    %1 = vector.load %arg2[%c0_1, %c0_2] : memref<512x256xbf16, #tpu.memory_space<vmem>>, vector<512x256xbf16>
    %cst = arith.constant dense<0.000000e+00> : vector<64x256xf32>
    %2 = tpu.matmul %0, %1, %cst {dimension_numbers = #tpu.dot_dimension_numbers<[1], [0], [0], [1], [0, 0, 1, 1], [], []>} : vector<64x512xbf16>, vector<512x256xbf16>, vector<64x256xf32> -> vector<64x256xf32>
    %3 = arith.truncf %2 : vector<64x256xf32> to vector<64x256xbf16>
    %c0_3 = arith.constant 0 : index
    %c0_4 = arith.constant 0 : index
    %4 = vector.load %arg4[%c0_3, %c0_4] : memref<64x256xbf16, #tpu.memory_space<vmem>>, vector<64x256xbf16>
    tpu.vector_store %arg4[%c0_3, %c0_4], %3 {strides = array<i32>} : memref<64x256xbf16, #tpu.memory_space<vmem>>, vector<64x256xbf16>,
    %5 = tpu.iota {dimensions = array<i32: 1>} : vector<1x256xi32>
    %c0_5 = arith.constant 0 : index
    %c0_6 = arith.constant 0 : index
    %6 = vector.load %arg3[%c0_5, %c0_6] : memref<64x4xf32, #tpu.memory_space<vmem>>, vector<64x4xf32>
    %c64_i32 = arith.constant 64 : i32
    %7 = vector.broadcast %c64_i32 : i32 to vector<1x256xi32>
    %8 = arith.cmpi slt, %5, %7 : vector<1x256xi32>
    %9 = vector.extract_strided_slice %6 {offsets = [0, 0], sizes = [64, 1], strides = [1, 1]} : vector<64x4xf32> to vector<64x1xf32>
    %c128_i32 = arith.constant 128 : i32
    %10 = vector.broadcast %c128_i32 : i32 to vector<1x256xi32>
    %11 = arith.cmpi slt, %5, %10 : vector<1x256xi32>
    %12 = vector.extract_strided_slice %6 {offsets = [0, 1], sizes = [64, 1], strides = [1, 1]} : vector<64x4xf32> to vector<64x1xf32>
    %c192_i32 = arith.constant 192 : i32
    %13 = vector.broadcast %c192_i32 : i32 to vector<1x256xi32>
    %14 = arith.cmpi slt, %5, %13 : vector<1x256xi32>
    %15 = vector.extract_strided_slice %6 {offsets = [0, 2], sizes = [64, 1], strides = [1, 1]} : vector<64x4xf32> to vector<64x1xf32>
    %16 = vector.extract_strided_slice %6 {offsets = [0, 3], sizes = [64, 1], strides = [1, 1]} : vector<64x4xf32> to vector<64x1xf32>
    %17 = vector.shape_cast %14 : vector<1x256xi1> to vector<1x256xi1>
    %18 = vector.broadcast %17 : vector<1x256xi1> to vector<64x256xi1>
    %19 = vector.shape_cast %15 : vector<64x1xf32> to vector<64x1xf32>
    %20 = vector.broadcast %19 : vector<64x1xf32> to vector<64x256xf32>
    %21 = vector.shape_cast %16 : vector<64x1xf32> to vector<64x1xf32>
    %22 = vector.broadcast %21 : vector<64x1xf32> to vector<64x256xf32>
    %23 = arith.select %18, %20, %22 : vector<64x256xi1>, vector<64x256xf32>
    %24 = vector.shape_cast %11 : vector<1x256xi1> to vector<1x256xi1>
    %25 = vector.broadcast %24 : vector<1x256xi1> to vector<64x256xi1>
    %26 = vector.shape_cast %12 : vector<64x1xf32> to vector<64x1xf32>
    %27 = vector.broadcast %26 : vector<64x1xf32> to vector<64x256xf32>
    %28 = arith.select %25, %27, %23 : vector<64x256xi1>, vector<64x256xf32>
    %29 = vector.shape_cast %8 : vector<1x256xi1> to vector<1x256xi1>
    %30 = vector.broadcast %29 : vector<1x256xi1> to vector<64x256xi1>
    %31 = vector.shape_cast %9 : vector<64x1xf32> to vector<64x1xf32>
    %32 = vector.broadcast %31 : vector<64x1xf32> to vector<64x256xf32>
    %33 = arith.select %30, %32, %28 : vector<64x256xi1>, vector<64x256xf32>
    %34 = arith.mulf %2, %33 : vector<64x256xf32>
    %cst_7 = arith.constant dense<0.000000e+00> : vector<256xf32>
    %35 = vector.multi_reduction <add>, %34, %cst_7 [0] : vector<64x256xf32> to vector<256xf32>
    %36 = vector.shape_cast %35 : vector<256xf32> to vector<1x256xf32>
    %37 = vector.shape_cast %36 : vector<1x256xf32> to vector<1x1x256xf32>
    %c0_8 = arith.constant 0 : index
    %c0_9 = arith.constant 0 : index
    %c0_10 = arith.constant 0 : index
    %38 = vector.load %arg5[%c0_8, %c0_9, %c0_10] : memref<1x1x256xf32, #tpu.memory_space<vmem>>, vector<1x1x256xf32>
    tpu.vector_store %arg5[%c0_8, %c0_9, %c0_10], %37 {strides = array<i32>} : memref<1x1x256xf32, #tpu.memory_space<vmem>>, vector<1x1x256xf32>,
    %39 = arith.mulf %34, %34 : vector<64x256xf32>
    %cst_11 = arith.constant dense<0.000000e+00> : vector<256xf32>
    %40 = vector.multi_reduction <add>, %39, %cst_11 [0] : vector<64x256xf32> to vector<256xf32>
    %41 = vector.shape_cast %40 : vector<256xf32> to vector<1x256xf32>
    %42 = vector.shape_cast %41 : vector<1x256xf32> to vector<1x1x256xf32>
    %c0_12 = arith.constant 0 : index
    %c0_13 = arith.constant 0 : index
    %c0_14 = arith.constant 0 : index
    %43 = vector.load %arg6[%c0_12, %c0_13, %c0_14] : memref<1x1x256xf32, #tpu.memory_space<vmem>>, vector<1x1x256xf32>
    tpu.vector_store %arg6[%c0_12, %c0_13, %c0_14], %42 {strides = array<i32>} : memref<1x1x256xf32, #tpu.memory_space<vmem>>, vector<1x1x256xf32>,
    return
  }
  func.func @transform_0(%arg0: i32) -> (i32, i32) {
    %c0_i32 = arith.constant 0 : i32
    %c0_i32_0 = arith.constant 0 : i32
    return %arg0, %c0_i32 : i32, i32
  }
  func.func @transform_1(%arg0: i32) -> (i32, i32) {
    %c0_i32 = arith.constant 0 : i32
    %c0_i32_0 = arith.constant 0 : i32
    %c0_i32_1 = arith.constant 0 : i32
    return %c0_i32, %c0_i32_0 : i32, i32
  }
  func.func @transform_2(%arg0: i32) -> (i32, i32) {
    %c0_i32 = arith.constant 0 : i32
    %c0_i32_0 = arith.constant 0 : i32
    return %arg0, %c0_i32 : i32, i32
  }
  func.func @transform_3(%arg0: i32) -> (i32, i32) {
    %c0_i32 = arith.constant 0 : i32
    %c0_i32_0 = arith.constant 0 : i32
    return %arg0, %c0_i32 : i32, i32
  }
  func.func @transform_4(%arg0: i32) -> (i32, i32, i32) {
    %c0_i32 = arith.constant 0 : i32
    %c0_i32_0 = arith.constant 0 : i32
    %c0_i32_1 = arith.constant 0 : i32
    return %arg0, %c0_i32, %c0_i32_0 : i32, i32, i32
  }
  func.func @transform_5(%arg0: i32) -> (i32, i32, i32) {
    %c0_i32 = arith.constant 0 : i32
    %c0_i32_0 = arith.constant 0 : i32
    %c0_i32_1 = arith.constant 0 : i32
    return %arg0, %c0_i32, %c0_i32_0 : i32, i32, i32
  }
}

module attributes {stable_mosaic.version = 11 : i64} {
  func.func @_bn_matmul_kernel(%arg0: i32, %arg1: memref<176x256xbf16, #tpu.memory_space<vmem>>, %arg2: memref<256x128xbf16, #tpu.memory_space<vmem>>, %arg3: memref<176x4xf32, #tpu.memory_space<vmem>>, %arg4: memref<176x128xbf16, #tpu.memory_space<vmem>>, %arg5: memref<1x1x128xf32, #tpu.memory_space<vmem>>, %arg6: memref<1x1x128xf32, #tpu.memory_space<vmem>>) attributes {dimension_semantics = [#tpu.dimension_semantics<parallel>], iteration_bounds = array<i64: 1>, scalar_prefetch = 0 : i64, scratch_operands = 0 : i64, tpu.core_type = #tpu.core_type<tc>, window_params = [{transform_indices = @transform_0, window_bounds = array<i64: 176, 256>}, {pipeline_mode = #tpu.pipeline_mode<synchronous>, transform_indices = @transform_1, window_bounds = array<i64: 256, 128>}, {transform_indices = @transform_2, window_bounds = array<i64: 176, 4>}, {transform_indices = @transform_3, window_bounds = array<i64: 176, 128>}, {transform_indices = @transform_4, window_bounds = array<i64: 1, 1, 128>}, {transform_indices = @transform_5, window_bounds = array<i64: 1, 1, 128>}]} {
    %c0 = arith.constant 0 : index
    %c0_0 = arith.constant 0 : index
    %0 = vector.load %arg1[%c0, %c0_0] : memref<176x256xbf16, #tpu.memory_space<vmem>>, vector<176x256xbf16>
    %c0_1 = arith.constant 0 : index
    %c0_2 = arith.constant 0 : index
    %1 = vector.load %arg2[%c0_1, %c0_2] : memref<256x128xbf16, #tpu.memory_space<vmem>>, vector<256x128xbf16>
    %cst = arith.constant dense<0.000000e+00> : vector<176x128xf32>
    %2 = tpu.matmul %0, %1, %cst {dimension_numbers = #tpu.dot_dimension_numbers<[1], [0], [0], [1], [0, 0, 1, 1], [], []>} : vector<176x256xbf16>, vector<256x128xbf16>, vector<176x128xf32> -> vector<176x128xf32>
    %3 = arith.truncf %2 : vector<176x128xf32> to vector<176x128xbf16>
    %c0_3 = arith.constant 0 : index
    %c0_4 = arith.constant 0 : index
    %4 = vector.load %arg4[%c0_3, %c0_4] : memref<176x128xbf16, #tpu.memory_space<vmem>>, vector<176x128xbf16>
    tpu.vector_store %arg4[%c0_3, %c0_4], %3 {strides = array<i32>} : memref<176x128xbf16, #tpu.memory_space<vmem>>, vector<176x128xbf16>,
    %5 = tpu.iota {dimensions = array<i32: 1>} : vector<1x128xi32>
    %c0_5 = arith.constant 0 : index
    %c0_6 = arith.constant 0 : index
    %6 = vector.load %arg3[%c0_5, %c0_6] : memref<176x4xf32, #tpu.memory_space<vmem>>, vector<176x4xf32>
    %c32_i32 = arith.constant 32 : i32
    %7 = vector.broadcast %c32_i32 : i32 to vector<1x128xi32>
    %8 = arith.cmpi slt, %5, %7 : vector<1x128xi32>
    %9 = vector.extract_strided_slice %6 {offsets = [0, 0], sizes = [176, 1], strides = [1, 1]} : vector<176x4xf32> to vector<176x1xf32>
    %c64_i32 = arith.constant 64 : i32
    %10 = vector.broadcast %c64_i32 : i32 to vector<1x128xi32>
    %11 = arith.cmpi slt, %5, %10 : vector<1x128xi32>
    %12 = vector.extract_strided_slice %6 {offsets = [0, 1], sizes = [176, 1], strides = [1, 1]} : vector<176x4xf32> to vector<176x1xf32>
    %c96_i32 = arith.constant 96 : i32
    %13 = vector.broadcast %c96_i32 : i32 to vector<1x128xi32>
    %14 = arith.cmpi slt, %5, %13 : vector<1x128xi32>
    %15 = vector.extract_strided_slice %6 {offsets = [0, 2], sizes = [176, 1], strides = [1, 1]} : vector<176x4xf32> to vector<176x1xf32>
    %16 = vector.extract_strided_slice %6 {offsets = [0, 3], sizes = [176, 1], strides = [1, 1]} : vector<176x4xf32> to vector<176x1xf32>
    %17 = vector.shape_cast %14 : vector<1x128xi1> to vector<1x128xi1>
    %18 = vector.broadcast %17 : vector<1x128xi1> to vector<176x128xi1>
    %19 = vector.shape_cast %15 : vector<176x1xf32> to vector<176x1xf32>
    %20 = vector.broadcast %19 : vector<176x1xf32> to vector<176x128xf32>
    %21 = vector.shape_cast %16 : vector<176x1xf32> to vector<176x1xf32>
    %22 = vector.broadcast %21 : vector<176x1xf32> to vector<176x128xf32>
    %23 = arith.select %18, %20, %22 : vector<176x128xi1>, vector<176x128xf32>
    %24 = vector.shape_cast %11 : vector<1x128xi1> to vector<1x128xi1>
    %25 = vector.broadcast %24 : vector<1x128xi1> to vector<176x128xi1>
    %26 = vector.shape_cast %12 : vector<176x1xf32> to vector<176x1xf32>
    %27 = vector.broadcast %26 : vector<176x1xf32> to vector<176x128xf32>
    %28 = arith.select %25, %27, %23 : vector<176x128xi1>, vector<176x128xf32>
    %29 = vector.shape_cast %8 : vector<1x128xi1> to vector<1x128xi1>
    %30 = vector.broadcast %29 : vector<1x128xi1> to vector<176x128xi1>
    %31 = vector.shape_cast %9 : vector<176x1xf32> to vector<176x1xf32>
    %32 = vector.broadcast %31 : vector<176x1xf32> to vector<176x128xf32>
    %33 = arith.select %30, %32, %28 : vector<176x128xi1>, vector<176x128xf32>
    %34 = arith.mulf %2, %33 : vector<176x128xf32>
    %cst_7 = arith.constant dense<0.000000e+00> : vector<128xf32>
    %35 = vector.multi_reduction <add>, %34, %cst_7 [0] : vector<176x128xf32> to vector<128xf32>
    %36 = vector.shape_cast %35 : vector<128xf32> to vector<1x128xf32>
    %37 = vector.shape_cast %36 : vector<1x128xf32> to vector<1x1x128xf32>
    %c0_8 = arith.constant 0 : index
    %c0_9 = arith.constant 0 : index
    %c0_10 = arith.constant 0 : index
    %38 = vector.load %arg5[%c0_8, %c0_9, %c0_10] : memref<1x1x128xf32, #tpu.memory_space<vmem>>, vector<1x1x128xf32>
    tpu.vector_store %arg5[%c0_8, %c0_9, %c0_10], %37 {strides = array<i32>} : memref<1x1x128xf32, #tpu.memory_space<vmem>>, vector<1x1x128xf32>,
    %39 = arith.mulf %34, %34 : vector<176x128xf32>
    %cst_11 = arith.constant dense<0.000000e+00> : vector<128xf32>
    %40 = vector.multi_reduction <add>, %39, %cst_11 [0] : vector<176x128xf32> to vector<128xf32>
    %41 = vector.shape_cast %40 : vector<128xf32> to vector<1x128xf32>
    %42 = vector.shape_cast %41 : vector<1x128xf32> to vector<1x1x128xf32>
    %c0_12 = arith.constant 0 : index
    %c0_13 = arith.constant 0 : index
    %c0_14 = arith.constant 0 : index
    %43 = vector.load %arg6[%c0_12, %c0_13, %c0_14] : memref<1x1x128xf32, #tpu.memory_space<vmem>>, vector<1x1x128xf32>
    tpu.vector_store %arg6[%c0_12, %c0_13, %c0_14], %42 {strides = array<i32>} : memref<1x1x128xf32, #tpu.memory_space<vmem>>, vector<1x1x128xf32>,
    return
  }
  func.func @transform_0(%arg0: i32) -> (i32, i32) {
    %c0_i32 = arith.constant 0 : i32
    %c0_i32_0 = arith.constant 0 : i32
    return %arg0, %c0_i32 : i32, i32
  }
  func.func @transform_1(%arg0: i32) -> (i32, i32) {
    %c0_i32 = arith.constant 0 : i32
    %c0_i32_0 = arith.constant 0 : i32
    %c0_i32_1 = arith.constant 0 : i32
    return %c0_i32, %c0_i32_0 : i32, i32
  }
  func.func @transform_2(%arg0: i32) -> (i32, i32) {
    %c0_i32 = arith.constant 0 : i32
    %c0_i32_0 = arith.constant 0 : i32
    return %arg0, %c0_i32 : i32, i32
  }
  func.func @transform_3(%arg0: i32) -> (i32, i32) {
    %c0_i32 = arith.constant 0 : i32
    %c0_i32_0 = arith.constant 0 : i32
    return %arg0, %c0_i32 : i32, i32
  }
  func.func @transform_4(%arg0: i32) -> (i32, i32, i32) {
    %c0_i32 = arith.constant 0 : i32
    %c0_i32_0 = arith.constant 0 : i32
    %c0_i32_1 = arith.constant 0 : i32
    return %arg0, %c0_i32, %c0_i32_0 : i32, i32, i32
  }
  func.func @transform_5(%arg0: i32) -> (i32, i32, i32) {
    %c0_i32 = arith.constant 0 : i32
    %c0_i32_0 = arith.constant 0 : i32
    %c0_i32_1 = arith.constant 0 : i32
    return %arg0, %c0_i32, %c0_i32_0 : i32, i32, i32
  }
}

module attributes {stable_mosaic.version = 11 : i64} {
  func.func @_bn_matmul_kernel(%arg0: i32, %arg1: memref<592x128xbf16, #tpu.memory_space<vmem>>, %arg2: memref<128x64xbf16, #tpu.memory_space<vmem>>, %arg3: memref<592x4xf32, #tpu.memory_space<vmem>>, %arg4: memref<592x64xbf16, #tpu.memory_space<vmem>>, %arg5: memref<1x1x64xf32, #tpu.memory_space<vmem>>, %arg6: memref<1x1x64xf32, #tpu.memory_space<vmem>>) attributes {dimension_semantics = [#tpu.dimension_semantics<parallel>], iteration_bounds = array<i64: 1>, scalar_prefetch = 0 : i64, scratch_operands = 0 : i64, tpu.core_type = #tpu.core_type<tc>, window_params = [{transform_indices = @transform_0, window_bounds = array<i64: 592, 128>}, {pipeline_mode = #tpu.pipeline_mode<synchronous>, transform_indices = @transform_1, window_bounds = array<i64: 128, 64>}, {transform_indices = @transform_2, window_bounds = array<i64: 592, 4>}, {transform_indices = @transform_3, window_bounds = array<i64: 592, 64>}, {transform_indices = @transform_4, window_bounds = array<i64: 1, 1, 64>}, {transform_indices = @transform_5, window_bounds = array<i64: 1, 1, 64>}]} {
    %c0 = arith.constant 0 : index
    %c0_0 = arith.constant 0 : index
    %0 = vector.load %arg1[%c0, %c0_0] : memref<592x128xbf16, #tpu.memory_space<vmem>>, vector<592x128xbf16>
    %c0_1 = arith.constant 0 : index
    %c0_2 = arith.constant 0 : index
    %1 = vector.load %arg2[%c0_1, %c0_2] : memref<128x64xbf16, #tpu.memory_space<vmem>>, vector<128x64xbf16>
    %cst = arith.constant dense<0.000000e+00> : vector<592x64xf32>
    %2 = tpu.matmul %0, %1, %cst {dimension_numbers = #tpu.dot_dimension_numbers<[1], [0], [0], [1], [0, 0, 1, 1], [], []>} : vector<592x128xbf16>, vector<128x64xbf16>, vector<592x64xf32> -> vector<592x64xf32>
    %3 = arith.truncf %2 : vector<592x64xf32> to vector<592x64xbf16>
    %c0_3 = arith.constant 0 : index
    %c0_4 = arith.constant 0 : index
    %4 = vector.load %arg4[%c0_3, %c0_4] : memref<592x64xbf16, #tpu.memory_space<vmem>>, vector<592x64xbf16>
    tpu.vector_store %arg4[%c0_3, %c0_4], %3 {strides = array<i32>} : memref<592x64xbf16, #tpu.memory_space<vmem>>, vector<592x64xbf16>,
    %5 = tpu.iota {dimensions = array<i32: 1>} : vector<1x64xi32>
    %c0_5 = arith.constant 0 : index
    %c0_6 = arith.constant 0 : index
    %6 = vector.load %arg3[%c0_5, %c0_6] : memref<592x4xf32, #tpu.memory_space<vmem>>, vector<592x4xf32>
    %c16_i32 = arith.constant 16 : i32
    %7 = vector.broadcast %c16_i32 : i32 to vector<1x64xi32>
    %8 = arith.cmpi slt, %5, %7 : vector<1x64xi32>
    %9 = vector.extract_strided_slice %6 {offsets = [0, 0], sizes = [592, 1], strides = [1, 1]} : vector<592x4xf32> to vector<592x1xf32>
    %c32_i32 = arith.constant 32 : i32
    %10 = vector.broadcast %c32_i32 : i32 to vector<1x64xi32>
    %11 = arith.cmpi slt, %5, %10 : vector<1x64xi32>
    %12 = vector.extract_strided_slice %6 {offsets = [0, 1], sizes = [592, 1], strides = [1, 1]} : vector<592x4xf32> to vector<592x1xf32>
    %c48_i32 = arith.constant 48 : i32
    %13 = vector.broadcast %c48_i32 : i32 to vector<1x64xi32>
    %14 = arith.cmpi slt, %5, %13 : vector<1x64xi32>
    %15 = vector.extract_strided_slice %6 {offsets = [0, 2], sizes = [592, 1], strides = [1, 1]} : vector<592x4xf32> to vector<592x1xf32>
    %16 = vector.extract_strided_slice %6 {offsets = [0, 3], sizes = [592, 1], strides = [1, 1]} : vector<592x4xf32> to vector<592x1xf32>
    %17 = vector.shape_cast %14 : vector<1x64xi1> to vector<1x64xi1>
    %18 = vector.broadcast %17 : vector<1x64xi1> to vector<592x64xi1>
    %19 = vector.shape_cast %15 : vector<592x1xf32> to vector<592x1xf32>
    %20 = vector.broadcast %19 : vector<592x1xf32> to vector<592x64xf32>
    %21 = vector.shape_cast %16 : vector<592x1xf32> to vector<592x1xf32>
    %22 = vector.broadcast %21 : vector<592x1xf32> to vector<592x64xf32>
    %23 = arith.select %18, %20, %22 : vector<592x64xi1>, vector<592x64xf32>
    %24 = vector.shape_cast %11 : vector<1x64xi1> to vector<1x64xi1>
    %25 = vector.broadcast %24 : vector<1x64xi1> to vector<592x64xi1>
    %26 = vector.shape_cast %12 : vector<592x1xf32> to vector<592x1xf32>
    %27 = vector.broadcast %26 : vector<592x1xf32> to vector<592x64xf32>
    %28 = arith.select %25, %27, %23 : vector<592x64xi1>, vector<592x64xf32>
    %29 = vector.shape_cast %8 : vector<1x64xi1> to vector<1x64xi1>
    %30 = vector.broadcast %29 : vector<1x64xi1> to vector<592x64xi1>
    %31 = vector.shape_cast %9 : vector<592x1xf32> to vector<592x1xf32>
    %32 = vector.broadcast %31 : vector<592x1xf32> to vector<592x64xf32>
    %33 = arith.select %30, %32, %28 : vector<592x64xi1>, vector<592x64xf32>
    %34 = arith.mulf %2, %33 : vector<592x64xf32>
    %cst_7 = arith.constant dense<0.000000e+00> : vector<64xf32>
    %35 = vector.multi_reduction <add>, %34, %cst_7 [0] : vector<592x64xf32> to vector<64xf32>
    %36 = vector.shape_cast %35 : vector<64xf32> to vector<1x64xf32>
    %37 = vector.shape_cast %36 : vector<1x64xf32> to vector<1x1x64xf32>
    %c0_8 = arith.constant 0 : index
    %c0_9 = arith.constant 0 : index
    %c0_10 = arith.constant 0 : index
    %38 = vector.load %arg5[%c0_8, %c0_9, %c0_10] : memref<1x1x64xf32, #tpu.memory_space<vmem>>, vector<1x1x64xf32>
    tpu.vector_store %arg5[%c0_8, %c0_9, %c0_10], %37 {strides = array<i32>} : memref<1x1x64xf32, #tpu.memory_space<vmem>>, vector<1x1x64xf32>,
    %39 = arith.mulf %34, %34 : vector<592x64xf32>
    %cst_11 = arith.constant dense<0.000000e+00> : vector<64xf32>
    %40 = vector.multi_reduction <add>, %39, %cst_11 [0] : vector<592x64xf32> to vector<64xf32>
    %41 = vector.shape_cast %40 : vector<64xf32> to vector<1x64xf32>
    %42 = vector.shape_cast %41 : vector<1x64xf32> to vector<1x1x64xf32>
    %c0_12 = arith.constant 0 : index
    %c0_13 = arith.constant 0 : index
    %c0_14 = arith.constant 0 : index
    %43 = vector.load %arg6[%c0_12, %c0_13, %c0_14] : memref<1x1x64xf32, #tpu.memory_space<vmem>>, vector<1x1x64xf32>
    tpu.vector_store %arg6[%c0_12, %c0_13, %c0_14], %42 {strides = array<i32>} : memref<1x1x64xf32, #tpu.memory_space<vmem>>, vector<1x1x64xf32>,
    return
  }
  func.func @transform_0(%arg0: i32) -> (i32, i32) {
    %c0_i32 = arith.constant 0 : i32
    %c0_i32_0 = arith.constant 0 : i32
    return %arg0, %c0_i32 : i32, i32
  }
  func.func @transform_1(%arg0: i32) -> (i32, i32) {
    %c0_i32 = arith.constant 0 : i32
    %c0_i32_0 = arith.constant 0 : i32
    %c0_i32_1 = arith.constant 0 : i32
    return %c0_i32, %c0_i32_0 : i32, i32
  }
  func.func @transform_2(%arg0: i32) -> (i32, i32) {
    %c0_i32 = arith.constant 0 : i32
    %c0_i32_0 = arith.constant 0 : i32
    return %arg0, %c0_i32 : i32, i32
  }
  func.func @transform_3(%arg0: i32) -> (i32, i32) {
    %c0_i32 = arith.constant 0 : i32
    %c0_i32_0 = arith.constant 0 : i32
    return %arg0, %c0_i32 : i32, i32
  }
  func.func @transform_4(%arg0: i32) -> (i32, i32, i32) {
    %c0_i32 = arith.constant 0 : i32
    %c0_i32_0 = arith.constant 0 : i32
    %c0_i32_1 = arith.constant 0 : i32
    return %arg0, %c0_i32, %c0_i32_0 : i32, i32, i32
  }
  func.func @transform_5(%arg0: i32) -> (i32, i32, i32) {
    %c0_i32 = arith.constant 0 : i32
    %c0_i32_0 = arith.constant 0 : i32
    %c0_i32_1 = arith.constant 0 : i32
    return %arg0, %c0_i32, %c0_i32_0 : i32, i32, i32
  }
}

module attributes {stable_mosaic.version = 11 : i64} {
  func.func @_tanh_matmul_t_kernel(%arg0: i32, %arg1: memref<12x64xbf16, #tpu.memory_space<vmem>>, %arg2: memref<64x768xbf16, #tpu.memory_space<vmem>>, %arg3: memref<12x768xf32, #tpu.memory_space<vmem>>) attributes {dimension_semantics = [#tpu.dimension_semantics<parallel>], iteration_bounds = array<i64: 3>, scalar_prefetch = 0 : i64, scratch_operands = 0 : i64, tpu.core_type = #tpu.core_type<tc>, window_params = [{pipeline_mode = #tpu.pipeline_mode<synchronous>, transform_indices = @transform_0, window_bounds = array<i64: 12, 64>}, {transform_indices = @transform_1, window_bounds = array<i64: 64, 768>}, {transform_indices = @transform_2, window_bounds = array<i64: 12, 768>}]} {
    %c0 = arith.constant 0 : index
    %c0_0 = arith.constant 0 : index
    %0 = vector.load %arg1[%c0, %c0_0] : memref<12x64xbf16, #tpu.memory_space<vmem>>, vector<12x64xbf16>
    %c0_1 = arith.constant 0 : index
    %c0_2 = arith.constant 0 : index
    %1 = vector.load %arg2[%c0_1, %c0_2] : memref<64x768xbf16, #tpu.memory_space<vmem>>, vector<64x768xbf16>
    %cst = arith.constant dense<0.000000e+00> : vector<12x768xf32>
    %2 = tpu.matmul %0, %1, %cst {dimension_numbers = #tpu.dot_dimension_numbers<[1], [0], [0], [1], [0, 0, 1, 1], [], []>} : vector<12x64xbf16>, vector<64x768xbf16>, vector<12x768xf32> -> vector<12x768xf32>
    %3 = math.tanh %2 : vector<12x768xf32>
    %c0_3 = arith.constant 0 : index
    %c0_4 = arith.constant 0 : index
    %4 = vector.load %arg3[%c0_3, %c0_4] : memref<12x768xf32, #tpu.memory_space<vmem>>, vector<12x768xf32>
    tpu.vector_store %arg3[%c0_3, %c0_4], %3 {strides = array<i32>} : memref<12x768xf32, #tpu.memory_space<vmem>>, vector<12x768xf32>,
    return
  }
  func.func @transform_0(%arg0: i32) -> (i32, i32) {
    %c0_i32 = arith.constant 0 : i32
    %c0_i32_0 = arith.constant 0 : i32
    %c0_i32_1 = arith.constant 0 : i32
    return %c0_i32, %c0_i32_0 : i32, i32
  }
  func.func @transform_1(%arg0: i32) -> (i32, i32) {
    %c0_i32 = arith.constant 0 : i32
    %c0_i32_0 = arith.constant 0 : i32
    return %c0_i32, %arg0 : i32, i32
  }
  func.func @transform_2(%arg0: i32) -> (i32, i32) {
    %c0_i32 = arith.constant 0 : i32
    %c0_i32_0 = arith.constant 0 : i32
    return %c0_i32, %arg0 : i32, i32
  }
}

</mosaic_0001>

<llo_original>
// kernel: cgan_generator_forward.5
$region0: #{cgan_generator_forward.5}
  #allocation0 [shape = 'u32[]', space=smem, size = 0x4, offset = 0x4, fixed_abs, tag = 'smem constant byte address 0x4 - core index']
  #allocation1 [shape = 'u32[144,128]{1,0:T(1,128)}', space=vmem, size = 0x12000, scoped, tag = 'internal scratch']
  %s0 = inlined_call_operand.vmem [shape: bf16[16,40], index: 0, kind: input, shape index: {}]
  %s1 = inlined_call_operand.hbm [shape: bf16[40,2048], index: 1, kind: input, shape index: {}]
  %s2 = inlined_call_operand.vmem [shape: f32[16,4], index: 2, kind: input, shape index: {}]
  %s3 = inlined_call_operand.vmem [shape: bf16[16,2048], index: 3, kind: output, shape index: {0}]
  %s4 = inlined_call_operand.vmem [shape: f32[1,1,2048], index: 4, kind: output, shape index: {1}]
  %s5 = inlined_call_operand.vmem [shape: f32[1,1,2048], index: 5, kind: output, shape index: {2}]
  %6 = xla_tuple %s3, %s4, %s5
  %s7 = sld [smem:[#allocation0]]
  $region42: #{cgan_generator_forward.5} parent=0
    _
  %s9 = ssub.s32 1, %s7
  %s10 = scalar_select 0, %s9, %s7
  $region1: #{cgan_generator_forward.5} parent=0
    #allocation2 [shape = 'u8[163840]{0}', space=vmem, size = 0x28000, scoped, tag = 'input window, operand 1, single buffered']
    #allocation3 [shape = 's32[1]{0}', space=sflag, size = 0x4, scoped, tag = 'scoped memory for cgan_generator_forward.5']
    %11 = vsyncpa [#allocation3], 0
    // Predicated region
    $region2: #{cgan_generator_forward.5} parent=1 // pred_check
      _
    $region3: #{cgan_generator_forward.5} parent=1 // pred_check_branch
      %13 = sbr.rel (0) target = $region5
    $region4: #{cgan_generator_forward.5} parent=1 // pred_region
      _
    $region5: #{cgan_generator_forward.5} parent=1 // pred_fallthru
      _
    // Predicated region
    $region6: #{cgan_generator_forward.5} parent=1 // pred_check
      _
    $region7: #{cgan_generator_forward.5} parent=1 // pred_check_branch
      %15 = sbr.rel (0) target = $region9
    $region8: #{cgan_generator_forward.5} parent=1 // pred_region
      %s17 = ssub.s32 5120, 5120
      %18 = vsyncadd [#allocation3], %s17
      %s19 = sshll.u32 [#allocation2], 4
      %s20 = int_to_ptr.vmem [resolvable:$true] %s19
      %25 = dma.hbm_to_vmem [thread:$0]  %s1, 5120, %s20, [#allocation3], 1024, 1024, 64
    $region9: #{cgan_generator_forward.5} parent=1 // pred_fallthru
      _
    // Predicated region
    $region10: #{cgan_generator_forward.5} parent=1 // pred_check
      _
    $region11: #{cgan_generator_forward.5} parent=1 // pred_check_branch
      %27 = sbr.rel (0) target = $region13
    $region12: #{cgan_generator_forward.5} parent=1 // pred_region
      _
    $region13: #{cgan_generator_forward.5} parent=1 // pred_fallthru
      _
    // Predicated region
    $region14: #{cgan_generator_forward.5} parent=1 // pred_check
      _
    $region15: #{cgan_generator_forward.5} parent=1 // pred_check_branch
      %29 = sbr.rel (0) target = $region17
    $region16: #{cgan_generator_forward.5} parent=1 // pred_region
      %30 = dma.done [#allocation3], 5120
    $region17: #{cgan_generator_forward.5} parent=1 // pred_fallthru
      _
    %v32 = vld [vmem:[%s0] sm:$0xf]
    %v33 = vld [vmem:[%s0 + $0x4] sm:$0xf]
    %v34 = vld [vmem:[#allocation2] sm:$0xff]
    %v35 = vld [vmem:[#allocation2 + $0x8] sm:$0xff]
    %v36 = vld [vmem:[#allocation2 + $0x10] sm:$0xff]
    %v37 = vld [vmem:[#allocation2 + $0x18] sm:$0xff]
    %v38 = vld [vmem:[#allocation2 + $0x20] sm:$0xff]
    %v39 = vld [vmem:[#allocation2 + $0x28] sm:$0xff]
    %v40 = vld [vmem:[#allocation2 + $0x30] sm:$0xff]
    %v41 = vld [vmem:[#allocation2 + $0x38] sm:$0xff]
    %v42 = vld [vmem:[#allocation2 + $0x40] sm:$0xff]
    %v43 = vld [vmem:[#allocation2 + $0x48] sm:$0xff]
    %v44 = vld [vmem:[#allocation2 + $0x50] sm:$0xff]
    %v45 = vld [vmem:[#allocation2 + $0x58] sm:$0xff]
    %v46 = vld [vmem:[#allocation2 + $0x60] sm:$0xff]
    %v47 = vld [vmem:[#allocation2 + $0x68] sm:$0xff]
    %v48 = vld [vmem:[#allocation2 + $0x70] sm:$0xff]
    %v49 = vld [vmem:[#allocation2 + $0x78] sm:$0xff]
    %v50 = vld [vmem:[#allocation2 + $0x80] sm:$0xff]
    %v51 = vld [vmem:[#allocation2 + $0x88] sm:$0xff]
    %v52 = vld [vmem:[#allocation2 + $0x90] sm:$0xff]
    %v53 = vld [vmem:[#allocation2 + $0x98] sm:$0xff]
    %v54 = vld [vmem:[#allocation2 + $0xa0] sm:$0xff]
    %v55 = vld [vmem:[#allocation2 + $0xa8] sm:$0xff]
    %v56 = vld [vmem:[#allocation2 + $0xb0] sm:$0xff]
    %v57 = vld [vmem:[#allocation2 + $0xb8] sm:$0xff]
    %v58 = vld [vmem:[#allocation2 + $0xc0] sm:$0xff]
    %v59 = vld [vmem:[#allocation2 + $0xc8] sm:$0xff]
    %v60 = vld [vmem:[#allocation2 + $0xd0] sm:$0xff]
    %v61 = vld [vmem:[#allocation2 + $0xd8] sm:$0xff]
    %v62 = vld [vmem:[#allocation2 + $0xe0] sm:$0xff]
    %v63 = vld [vmem:[#allocation2 + $0xe8] sm:$0xff]
    %v64 = vld [vmem:[#allocation2 + $0xf0] sm:$0xff]
    %v65 = vld [vmem:[#allocation2 + $0xf8] sm:$0xff]
    %v66 = vld [vmem:[#allocation2 + $0x100] sm:$0xff]
    %v67 = vld [vmem:[#allocation2 + $0x108] sm:$0xff]
    %v68 = vld [vmem:[#allocation2 + $0x110] sm:$0xff]
    %v69 = vld [vmem:[#allocation2 + $0x118] sm:$0xff]
    %v70 = vld [vmem:[#allocation2 + $0x120] sm:$0xff]
    %v71 = vld [vmem:[#allocation2 + $0x128] sm:$0xff]
    %v72 = vld [vmem:[#allocation2 + $0x130] sm:$0xff]
    %v73 = vld [vmem:[#allocation2 + $0x138] sm:$0xff]
    %v76 = vunpack.c.l.b16 %v32
    %v77 = vunpack.c.l.b16 %v33
    %v78 = vpack.c.b16 %v77, %v76
    %v119 = vunpack.c.l.b16 %v34
    %v120 = vunpack.c.h.b16 %v34
    %v121 = vunpack.c.l.b16 %v35
    %v122 = vunpack.c.h.b16 %v35
    %v123 = vunpack.c.l.b16 %v36
    %v124 = vunpack.c.h.b16 %v36
    %v125 = vunpack.c.l.b16 %v37
    %v126 = vunpack.c.h.b16 %v37
    %v127 = vunpack.c.l.b16 %v38
    %v128 = vunpack.c.h.b16 %v38
    %v129 = vunpack.c.l.b16 %v39
    %v130 = vunpack.c.h.b16 %v39
    %v131 = vunpack.c.l.b16 %v40
    %v132 = vunpack.c.h.b16 %v40
    %v133 = vunpack.c.l.b16 %v41
    %v134 = vunpack.c.h.b16 %v41
    %v135 = vunpack.c.l.b16 %v42
    %v136 = vunpack.c.h.b16 %v42
    %v137 = vunpack.c.l.b16 %v43
    %v138 = vunpack.c.h.b16 %v43
    %v139 = vunpack.c.l.b16 %v44
    %v140 = vunpack.c.h.b16 %v44
    %v141 = vunpack.c.l.b16 %v45
    %v142 = vunpack.c.h.b16 %v45
    %v143 = vunpack.c.l.b16 %v46
    %v144 = vunpack.c.h.b16 %v46
    %v145 = vunpack.c.l.b16 %v47
    %v146 = vunpack.c.h.b16 %v47
    %v147 = vunpack.c.l.b16 %v48
    %v148 = vunpack.c.h.b16 %v48
    %v149 = vunpack.c.l.b16 %v49
    %v150 = vunpack.c.h.b16 %v49
    %v151 = vunpack.c.l.b16 %v50
    %v152 = vunpack.c.h.b16 %v50
    %v153 = vunpack.c.l.b16 %v51
    %v154 = vunpack.c.h.b16 %v51
    %v155 = vunpack.c.l.b16 %v52
    %v156 = vunpack.c.h.b16 %v52
    %v157 = vunpack.c.l.b16 %v53
    %v158 = vunpack.c.h.b16 %v53
    %v159 = vunpack.c.l.b16 %v54
    %v160 = vunpack.c.h.b16 %v54
    %v161 = vunpack.c.l.b16 %v55
    %v162 = vunpack.c.h.b16 %v55
    %v163 = vunpack.c.l.b16 %v56
    %v164 = vunpack.c.h.b16 %v56
    %v165 = vunpack.c.l.b16 %v57
    %v166 = vunpack.c.h.b16 %v57
    %v167 = vunpack.c.l.b16 %v58
    %v168 = vunpack.c.h.b16 %v58
    %v169 = vunpack.c.l.b16 %v59
    %v170 = vunpack.c.h.b16 %v59
    %v171 = vunpack.c.l.b16 %v60
    %v172 = vunpack.c.h.b16 %v60
    %v173 = vunpack.c.l.b16 %v61
    %v174 = vunpack.c.h.b16 %v61
    %v175 = vunpack.c.l.b16 %v62
    %v176 = vunpack.c.h.b16 %v62
    %v177 = vunpack.c.l.b16 %v63
    %v178 = vunpack.c.h.b16 %v63
    %v179 = vunpack.c.l.b16 %v64
    %v180 = vunpack.c.h.b16 %v64
    %v181 = vunpack.c.l.b16 %v65
    %v182 = vunpack.c.h.b16 %v65
    %v183 = vunpack.c.l.b16 %v66
    %v184 = vunpack.c.h.b16 %v66
    %v185 = vunpack.c.l.b16 %v67
    %v186 = vunpack.c.h.b16 %v67
    %v187 = vunpack.c.l.b16 %v68
    %v188 = vunpack.c.h.b16 %v68
    %v189 = vunpack.c.l.b16 %v69
    %v190 = vunpack.c.h.b16 %v69
    %v191 = vunpack.c.l.b16 %v70
    %v192 = vunpack.c.h.b16 %v70
    %v193 = vunpack.c.l.b16 %v71
    %v194 = vunpack.c.h.b16 %v71
    %v195 = vunpack.c.l.b16 %v72
    %v196 = vunpack.c.h.b16 %v72
    %v197 = vunpack.c.l.b16 %v73
    %v198 = vunpack.c.h.b16 %v73
    %v199 = vpack.c.b16 %v135, %v119
    %v200 = vpack.c.b16 %v136, %v120
    %v201 = vpack.c.b16 %v137, %v121
    %v202 = vpack.c.b16 %v138, %v122
    %v203 = vpack.c.b16 %v139, %v123
    %v204 = vpack.c.b16 %v140, %v124
    %v205 = vpack.c.b16 %v141, %v125
    %v206 = vpack.c.b16 %v142, %v126
    %v207 = vpack.c.b16 %v143, %v127
    %v208 = vpack.c.b16 %v144, %v128
    %v209 = vpack.c.b16 %v145, %v129
    %v210 = vpack.c.b16 %v146, %v130
    %v211 = vpack.c.b16 %v147, %v131
    %v212 = vpack.c.b16 %v148, %v132
    %v213 = vpack.c.b16 %v149, %v133
    %v214 = vpack.c.b16 %v150, %v134
    %v215 = vpack.c.b16 %v167, %v151
    %v216 = vpack.c.b16 %v168, %v152
    %v217 = vpack.c.b16 %v169, %v153
    %v218 = vpack.c.b16 %v170, %v154
    %v219 = vpack.c.b16 %v171, %v155
    %v220 = vpack.c.b16 %v172, %v156
    %v221 = vpack.c.b16 %v173, %v157
    %v222 = vpack.c.b16 %v174, %v158
    %v223 = vpack.c.b16 %v175, %v159
    %v224 = vpack.c.b16 %v176, %v160
    %v225 = vpack.c.b16 %v177, %v161
    %v226 = vpack.c.b16 %v178, %v162
    %v227 = vpack.c.b16 %v179, %v163
    %v228 = vpack.c.b16 %v180, %v164
    %v229 = vpack.c.b16 %v181, %v165
    %v230 = vpack.c.b16 %v182, %v166
    %v231 = vpack.c.b16 %v183, %v183
    %v232 = vpack.c.b16 %v184, %v184
    %v233 = vpack.c.b16 %v185, %v185
    %v234 = vpack.c.b16 %v186, %v186
    %v235 = vpack.c.b16 %v187, %v187
    %v236 = vpack.c.b16 %v188, %v188
    %v237 = vpack.c.b16 %v189, %v189
    %v238 = vpack.c.b16 %v190, %v190
    %v239 = vpack.c.b16 %v191, %v191
    %v240 = vpack.c.b16 %v192, %v192
    %v241 = vpack.c.b16 %v193, %v193
    %v242 = vpack.c.b16 %v194, %v194
    %v243 = vpack.c.b16 %v195, %v195
    %v244 = vpack.c.b16 %v196, %v196
    %v245 = vpack.c.b16 %v197, %v197
    %v246 = vpack.c.b16 %v198, %v198
    %vm279 = vcmask 326656
    %v281 = vsel %vm279, %v78, 0
    %vm283 = vcmask 1043456
    %v285 = vsel %vm283, %v231, 0
    %v288 = vsel %vm283, %v232, 0
    %v291 = vsel %vm283, %v233, 0
    %v294 = vsel %vm283, %v234, 0
    %v297 = vsel %vm283, %v235, 0
    %v300 = vsel %vm283, %v236, 0
    %v303 = vsel %vm283, %v237, 0
    %v306 = vsel %vm283, %v238, 0
    %v309 = vsel %vm283, %v239, 0
    %v312 = vsel %vm283, %v240, 0
    %v315 = vsel %vm283, %v241, 0
    %v318 = vsel %vm283, %v242, 0
    %v321 = vsel %vm283, %v243, 0
    %v324 = vsel %vm283, %v244, 0
    %v327 = vsel %vm283, %v245, 0
    %v330 = vsel %vm283, %v246, 0
    %332 = vmatprep.subr.bf16.mxu0 %v200
    %333 = vmatpush1.bf16.msra.mxu0 %v199
    %334 = vmatprep.subr.bf16.mxu0 %v216
    %335 = vmatpush1.bf16.msra.mxu0 %v215
    %336 = vmatprep.subr.bf16.mxu0 %v288
    %337 = vmatpush1.bf16.msra.mxu0 %v285
    %338 = vmatprep.subr.bf16.mxu0 0
    %339 = vmatpush1.bf16.msra.mxu0 0
    %340 = vmatprep.subr.bf16.mxu0 0
    %341 = vmatpush1.bf16.msra.mxu0 0
    %342 = vmatprep.subr.bf16.mxu0 0
    %343 = vmatpush1.bf16.msra.mxu0 0
    %344 = vmatprep.subr.bf16.mxu0 0
    %345 = vmatpush1.bf16.msra.mxu0 0
    %346 = vmatprep.subr.bf16.mxu0 0
    %347 = vmatpush1.bf16.msra.mxu0 0
    %348 = vmatprep.subr.bf16.mxu0 0
    %349 = vmatpush1.bf16.msra.mxu0 0
    %350 = vmatprep.subr.bf16.mxu0 0
    %351 = vmatpush1.bf16.msra.mxu0 0
    %352 = vmatprep.subr.bf16.mxu0 0
    %353 = vmatpush1.bf16.msra.mxu0 0
    %354 = vmatprep.subr.bf16.mxu0 0
    %355 = vmatpush1.bf16.msra.mxu0 0
    %356 = vmatprep.subr.bf16.mxu0 0
    %357 = vmatpush1.bf16.msra.mxu0 0
    %358 = vmatprep.subr.bf16.mxu0 0
    %359 = vmatpush1.bf16.msra.mxu0 0
    %360 = vmatprep.subr.bf16.mxu0 0
    %361 = vmatpush1.bf16.msra.mxu0 0
    %362 = vmatprep.subr.bf16.mxu0 0
    %363 = vmatpush1.bf16.msra.mxu0 0
    %364 = vmatprep.mubr.bf16.mxu0 0
    %365 = vmatmul.mubr.bf16.gmra.mrb[0].mxu0 %v281
    %v366 = vpop.f32.mrb[0].mxu0
    %v367 = vadd.f32 0.0, %v366
    %v368 = vpop.f32.mrb[0].mxu0
    %v369 = vadd.f32 0.0, %v368
    %v370 = vpop.f32.mrb[0].mxu0
    %v371 = vadd.f32 0.0, %v370
    %v372 = vpop.f32.mrb[0].mxu0
    %v373 = vadd.f32 0.0, %v372
    %374 = vdwg.mxu0
    %375 = vmatprep.subr.bf16.mxu0 %v202
    %376 = vmatpush1.bf16.msra.mxu0 %v201
    %377 = vmatprep.subr.bf16.mxu0 %v218
    %378 = vmatpush1.bf16.msra.mxu0 %v217
    %379 = vmatprep.subr.bf16.mxu0 %v294
    %380 = vmatpush1.bf16.msra.mxu0 %v291
    %381 = vmatprep.subr.bf16.mxu0 0
    %382 = vmatpush1.bf16.msra.mxu0 0
    %383 = vmatprep.subr.bf16.mxu0 0
    %384 = vmatpush1.bf16.msra.mxu0 0
    %385 = vmatprep.subr.bf16.mxu0 0
    %386 = vmatpush1.bf16.msra.mxu0 0
    %387 = vmatprep.subr.bf16.mxu0 0
    %388 = vmatpush1.bf16.msra.mxu0 0
    %389 = vmatprep.subr.bf16.mxu0 0
    %390 = vmatpush1.bf16.msra.mxu0 0
    %391 = vmatprep.subr.bf16.mxu0 0
    %392 = vmatpush1.bf16.msra.mxu0 0
    %393 = vmatprep.subr.bf16.mxu0 0
    %394 = vmatpush1.bf16.msra.mxu0 0
    %395 = vmatprep.subr.bf16.mxu0 0
    %396 = vmatpush1.bf16.msra.mxu0 0
    %397 = vmatprep.subr.bf16.mxu0 0
    %398 = vmatpush1.bf16.msra.mxu0 0
    %399 = vmatprep.subr.bf16.mxu0 0
    %400 = vmatpush1.bf16.msra.mxu0 0
    %401 = vmatprep.subr.bf16.mxu0 0
    %402 = vmatpush1.bf16.msra.mxu0 0
    %403 = vmatprep.subr.bf16.mxu0 0
    %404 = vmatpush1.bf16.msra.mxu0 0
    %405 = vmatprep.subr.bf16.mxu0 0
    %406 = vmatpush1.bf16.msra.mxu0 0
    %407 = vmatprep.mubr.bf16.mxu0 0
    %408 = vmatmul.mubr.bf16.gmra.mrb[0].mxu0 %v281
    %v409 = vpop.f32.mrb[0].mxu0
    %v410 = vadd.f32 0.0, %v409
    %v411 = vpop.f32.mrb[0].mxu0
    %v412 = vadd.f32 0.0, %v411
    %v413 = vpop.f32.mrb[0].mxu0
    %v414 = vadd.f32 0.0, %v413
    %v415 = vpop.f32.mrb[0].mxu0
    %v416 = vadd.f32 0.0, %v415
    %417 = vdwg.mxu0
    %418 = vmatprep.subr.bf16.mxu0 %v204
    %419 = vmatpush1.bf16.msra.mxu0 %v203
    %420 = vmatprep.subr.bf16.mxu0 %v220
    %421 = vmatpush1.bf16.msra.mxu0 %v219
    %422 = vmatprep.subr.bf16.mxu0 %v300
    %423 = vmatpush1.bf16.msra.mxu0 %v297
    %424 = vmatprep.subr.bf16.mxu0 0
    %425 = vmatpush1.bf16.msra.mxu0 0
    %426 = vmatprep.subr.bf16.mxu0 0
    %427 = vmatpush1.bf16.msra.mxu0 0
    %428 = vmatprep.subr.bf16.mxu0 0
    %429 = vmatpush1.bf16.msra.mxu0 0
    %430 = vmatprep.subr.bf16.mxu0 0
    %431 = vmatpush1.bf16.msra.mxu0 0
    %432 = vmatprep.subr.bf16.mxu0 0
    %433 = vmatpush1.bf16.msra.mxu0 0
    %434 = vmatprep.subr.bf16.mxu0 0
    %435 = vmatpush1.bf16.msra.mxu0 0
    %436 = vmatprep.subr.bf16.mxu0 0
    %437 = vmatpush1.bf16.msra.mxu0 0
    %438 = vmatprep.subr.bf16.mxu0 0
    %439 = vmatpush1.bf16.msra.mxu0 0
    %440 = vmatprep.subr.bf16.mxu0 0
    %441 = vmatpush1.bf16.msra.mxu0 0
    %442 = vmatprep.subr.bf16.mxu0 0
    %443 = vmatpush1.bf16.msra.mxu0 0
    %444 = vmatprep.subr.bf16.mxu0 0
    %445 = vmatpush1.bf16.msra.mxu0 0
    %446 = vmatprep.subr.bf16.mxu0 0
    %447 = vmatpush1.bf16.msra.mxu0 0
    %448 = vmatprep.subr.bf16.mxu0 0
    %449 = vmatpush1.bf16.msra.mxu0 0
    %450 = vmatprep.mubr.bf16.mxu0 0
    %451 = vmatmul.mubr.bf16.gmra.mrb[0].mxu0 %v281
    %v452 = vpop.f32.mrb[0].mxu0
    %v453 = vadd.f32 0.0, %v452
    %v454 = vpop.f32.mrb[0].mxu0
    %v455 = vadd.f32 0.0, %v454
    %v456 = vpop.f32.mrb[0].mxu0
    %v457 = vadd.f32 0.0, %v456
    %v458 = vpop.f32.mrb[0].mxu0
    %v459 = vadd.f32 0.0, %v458
    %460 = vdwg.mxu0
    %461 = vmatprep.subr.bf16.mxu0 %v206
    %462 = vmatpush1.bf16.msra.mxu0 %v205
    %463 = vmatprep.subr.bf16.mxu0 %v222
    %464 = vmatpush1.bf16.msra.mxu0 %v221
    %465 = vmatprep.subr.bf16.mxu0 %v306
    %466 = vmatpush1.bf16.msra.mxu0 %v303
    %467 = vmatprep.subr.bf16.mxu0 0
    %468 = vmatpush1.bf16.msra.mxu0 0
    %469 = vmatprep.subr.bf16.mxu0 0
    %470 = vmatpush1.bf16.msra.mxu0 0
    %471 = vmatprep.subr.bf16.mxu0 0
    %472 = vmatpush1.bf16.msra.mxu0 0
    %473 = vmatprep.subr.bf16.mxu0 0
    %474 = vmatpush1.bf16.msra.mxu0 0
    %475 = vmatprep.subr.bf16.mxu0 0
    %476 = vmatpush1.bf16.msra.mxu0 0
    %477 = vmatprep.subr.bf16.mxu0 0
    %478 = vmatpush1.bf16.msra.mxu0 0
    %479 = vmatprep.subr.bf16.mxu0 0
    %480 = vmatpush1.bf16.msra.mxu0 0
    %481 = vmatprep.subr.bf16.mxu0 0
    %482 = vmatpush1.bf16.msra.mxu0 0
    %483 = vmatprep.subr.bf16.mxu0 0
    %484 = vmatpush1.bf16.msra.mxu0 0
    %485 = vmatprep.subr.bf16.mxu0 0
    %486 = vmatpush1.bf16.msra.mxu0 0
    %487 = vmatprep.subr.bf16.mxu0 0
    %488 = vmatpush1.bf16.msra.mxu0 0
    %489 = vmatprep.subr.bf16.mxu0 0
    %490 = vmatpush1.bf16.msra.mxu0 0
    %491 = vmatprep.subr.bf16.mxu0 0
    %492 = vmatpush1.bf16.msra.mxu0 0
    %493 = vmatprep.mubr.bf16.mxu0 0
    %494 = vmatmul.mubr.bf16.gmra.mrb[0].mxu0 %v281
    %v495 = vpop.f32.mrb[0].mxu0
    %v496 = vadd.f32 0.0, %v495
    %v497 = vpop.f32.mrb[0].mxu0
    %v498 = vadd.f32 0.0, %v497
    %v499 = vpop.f32.mrb[0].mxu0
    %v500 = vadd.f32 0.0, %v499
    %v501 = vpop.f32.mrb[0].mxu0
    %v502 = vadd.f32 0.0, %v501
    %503 = vdwg.mxu0
    %504 = vmatprep.subr.bf16.mxu0 %v208
    %505 = vmatpush1.bf16.msra.mxu0 %v207
    %506 = vmatprep.subr.bf16.mxu0 %v224
    %507 = vmatpush1.bf16.msra.mxu0 %v223
    %508 = vmatprep.subr.bf16.mxu0 %v312
    %509 = vmatpush1.bf16.msra.mxu0 %v309
    %510 = vmatprep.subr.bf16.mxu0 0
    %511 = vmatpush1.bf16.msra.mxu0 0
    %512 = vmatprep.subr.bf16.mxu0 0
    %513 = vmatpush1.bf16.msra.mxu0 0
    %514 = vmatprep.subr.bf16.mxu0 0
    %515 = vmatpush1.bf16.msra.mxu0 0
    %516 = vmatprep.subr.bf16.mxu0 0
    %517 = vmatpush1.bf16.msra.mxu0 0
    %518 = vmatprep.subr.bf16.mxu0 0
    %519 = vmatpush1.bf16.msra.mxu0 0
    %520 = vmatprep.subr.bf16.mxu0 0
    %521 = vmatpush1.bf16.msra.mxu0 0
    %522 = vmatprep.subr.bf16.mxu0 0
    %523 = vmatpush1.bf16.msra.mxu0 0
    %524 = vmatprep.subr.bf16.mxu0 0
    %525 = vmatpush1.bf16.msra.mxu0 0
    %526 = vmatprep.subr.bf16.mxu0 0
    %527 = vmatpush1.bf16.msra.mxu0 0
    %528 = vmatprep.subr.bf16.mxu0 0
    %529 = vmatpush1.bf16.msra.mxu0 0
    %530 = vmatprep.subr.bf16.mxu0 0
    %531 = vmatpush1.bf16.msra.mxu0 0
    %532 = vmatprep.subr.bf16.mxu0 0
    %533 = vmatpush1.bf16.msra.mxu0 0
    %534 = vmatprep.subr.bf16.mxu0 0
    %535 = vmatpush1.bf16.msra.mxu0 0
    %536 = vmatprep.mubr.bf16.mxu0 0
    %537 = vmatmul.mubr.bf16.gmra.mrb[0].mxu0 %v281
    %v538 = vpop.f32.mrb[0].mxu0
    %v539 = vadd.f32 0.0, %v538
    %v540 = vpop.f32.mrb[0].mxu0
    %v541 = vadd.f32 0.0, %v540
    %v542 = vpop.f32.mrb[0].mxu0
    %v543 = vadd.f32 0.0, %v542
    %v544 = vpop.f32.mrb[0].mxu0
    %v545 = vadd.f32 0.0, %v544
    %546 = vdwg.mxu0
    %547 = vmatprep.subr.bf16.mxu0 %v210
    %548 = vmatpush1.bf16.msra.mxu0 %v209
    %549 = vmatprep.subr.bf16.mxu0 %v226
    %550 = vmatpush1.bf16.msra.mxu0 %v225
    %551 = vmatprep.subr.bf16.mxu0 %v318
    %552 = vmatpush1.bf16.msra.mxu0 %v315
    %553 = vmatprep.subr.bf16.mxu0 0
    %554 = vmatpush1.bf16.msra.mxu0 0
    %555 = vmatprep.subr.bf16.mxu0 0
    %556 = vmatpush1.bf16.msra.mxu0 0
    %557 = vmatprep.subr.bf16.mxu0 0
    %558 = vmatpush1.bf16.msra.mxu0 0
    %559 = vmatprep.subr.bf16.mxu0 0
    %560 = vmatpush1.bf16.msra.mxu0 0
    %561 = vmatprep.subr.bf16.mxu0 0
    %562 = vmatpush1.bf16.msra.mxu0 0
    %563 = vmatprep.subr.bf16.mxu0 0
    %564 = vmatpush1.bf16.msra.mxu0 0
    %565 = vmatprep.subr.bf16.mxu0 0
    %566 = vmatpush1.bf16.msra.mxu0 0
    %567 = vmatprep.subr.bf16.mxu0 0
    %568 = vmatpush1.bf16.msra.mxu0 0
    %569 = vmatprep.subr.bf16.mxu0 0
    %570 = vmatpush1.bf16.msra.mxu0 0
    %571 = vmatprep.subr.bf16.mxu0 0
    %572 = vmatpush1.bf16.msra.mxu0 0
    %573 = vmatprep.subr.bf16.mxu0 0
    %574 = vmatpush1.bf16.msra.mxu0 0
    %575 = vmatprep.subr.bf16.mxu0 0
    %576 = vmatpush1.bf16.msra.mxu0 0
    %577 = vmatprep.subr.bf16.mxu0 0
    %578 = vmatpush1.bf16.msra.mxu0 0
    %579 = vmatprep.mubr.bf16.mxu0 0
    %580 = vmatmul.mubr.bf16.gmra.mrb[0].mxu0 %v281
    %v581 = vpop.f32.mrb[0].mxu0
    %v582 = vadd.f32 0.0, %v581
    %v583 = vpop.f32.mrb[0].mxu0
    %v584 = vadd.f32 0.0, %v583
    %v585 = vpop.f32.mrb[0].mxu0
    %v586 = vadd.f32 0.0, %v585
    %v587 = vpop.f32.mrb[0].mxu0
    %v588 = vadd.f32 0.0, %v587
    %589 = vdwg.mxu0
    %590 = vmatprep.subr.bf16.mxu0 %v212
    %591 = vmatpush1.bf16.msra.mxu0 %v211
    %592 = vmatprep.subr.bf16.mxu0 %v228
    %593 = vmatpush1.bf16.msra.mxu0 %v227
    %594 = vmatprep.subr.bf16.mxu0 %v324
    %595 = vmatpush1.bf16.msra.mxu0 %v321
    %596 = vmatprep.subr.bf16.mxu0 0
    %597 = vmatpush1.bf16.msra.mxu0 0
    %598 = vmatprep.subr.bf16.mxu0 0
    %599 = vmatpush1.bf16.msra.mxu0 0
    %600 = vmatprep.subr.bf16.mxu0 0
    %601 = vmatpush1.bf16.msra.mxu0 0
    %602 = vmatprep.subr.bf16.mxu0 0
    %603 = vmatpush1.bf16.msra.mxu0 0
    %604 = vmatprep.subr.bf16.mxu0 0
    %605 = vmatpush1.bf16.msra.mxu0 0
    %606 = vmatprep.subr.bf16.mxu0 0
    %607 = vmatpush1.bf16.msra.mxu0 0
    %608 = vmatprep.subr.bf16.mxu0 0
    %609 = vmatpush1.bf16.msra.mxu0 0
    %610 = vmatprep.subr.bf16.mxu0 0
    %611 = vmatpush1.bf16.msra.mxu0 0
    %612 = vmatprep.subr.bf16.mxu0 0
    %613 = vmatpush1.bf16.msra.mxu0 0
    %614 = vmatprep.subr.bf16.mxu0 0
    %615 = vmatpush1.bf16.msra.mxu0 0
    %616 = vmatprep.subr.bf16.mxu0 0
    %617 = vmatpush1.bf16.msra.mxu0 0
    %618 = vmatprep.subr.bf16.mxu0 0
    %619 = vmatpush1.bf16.msra.mxu0 0
    %620 = vmatprep.subr.bf16.mxu0 0
    %621 = vmatpush1.bf16.msra.mxu0 0
    %622 = vmatprep.mubr.bf16.mxu0 0
    %623 = vmatmul.mubr.bf16.gmra.mrb[0].mxu0 %v281
    %v624 = vpop.f32.mrb[0].mxu0
    %v625 = vadd.f32 0.0, %v624
    %v626 = vpop.f32.mrb[0].mxu0
    %v627 = vadd.f32 0.0, %v626
    %v628 = vpop.f32.mrb[0].mxu0
    %v629 = vadd.f32 0.0, %v628
    %v630 = vpop.f32.mrb[0].mxu0
    %v631 = vadd.f32 0.0, %v630
    %632 = vdwg.mxu0
    %633 = vmatprep.subr.bf16.mxu0 %v214
    %634 = vmatpush1.bf16.msra.mxu0 %v213
    %635 = vmatprep.subr.bf16.mxu0 %v230
    %636 = vmatpush1.bf16.msra.mxu0 %v229
    %637 = vmatprep.subr.bf16.mxu0 %v330
    %638 = vmatpush1.bf16.msra.mxu0 %v327
    %639 = vmatprep.subr.bf16.mxu0 0
    %640 = vmatpush1.bf16.msra.mxu0 0
    %641 = vmatprep.subr.bf16.mxu0 0
    %642 = vmatpush1.bf16.msra.mxu0 0
    %643 = vmatprep.subr.bf16.mxu0 0
    %644 = vmatpush1.bf16.msra.mxu0 0
    %645 = vmatprep.subr.bf16.mxu0 0
    %646 = vmatpush1.bf16.msra.mxu0 0
    %647 = vmatprep.subr.bf16.mxu0 0
    %648 = vmatpush1.bf16.msra.mxu0 0
    %649 = vmatprep.subr.bf16.mxu0 0
    %650 = vmatpush1.bf16.msra.mxu0 0
    %651 = vmatprep.subr.bf16.mxu0 0
    %652 = vmatpush1.bf16.msra.mxu0 0
    %653 = vmatprep.subr.bf16.mxu0 0
    %654 = vmatpush1.bf16.msra.mxu0 0
    %655 = vmatprep.subr.bf16.mxu0 0
    %656 = vmatpush1.bf16.msra.mxu0 0
    %657 = vmatprep.subr.bf16.mxu0 0
    %658 = vmatpush1.bf16.msra.mxu0 0
    %659 = vmatprep.subr.bf16.mxu0 0
    %660 = vmatpush1.bf16.msra.mxu0 0
    %661 = vmatprep.subr.bf16.mxu0 0
    %662 = vmatpush1.bf16.msra.mxu0 0
    %663 = vmatprep.subr.bf16.mxu0 0
    %664 = vmatpush1.bf16.msra.mxu0 0
    %665 = vmatprep.mubr.bf16.mxu0 0
    %666 = vmatmul.mubr.bf16.gmra.mrb[0].mxu0 %v281
    %v667 = vpop.f32.mrb[0].mxu0
    %v668 = vadd.f32 0.0, %v667
    %v669 = vpop.f32.mrb[0].mxu0
    %v670 = vadd.f32 0.0, %v669
    %v671 = vpop.f32.mrb[0].mxu0
    %v672 = vadd.f32 0.0, %v671
    %v673 = vpop.f32.mrb[0].mxu0
    %v674 = vadd.f32 0.0, %v673
    %675 = vdwg.mxu0
    %v676 = vpack.c.bf16 %v371, %v367
    %v677 = vpack.c.bf16 %v373, %v369
    %v678 = vpack.c.bf16 %v414, %v410
    %v679 = vpack.c.bf16 %v416, %v412
    %v680 = vpack.c.bf16 %v457, %v453
    %v681 = vpack.c.bf16 %v459, %v455
    %v682 = vpack.c.bf16 %v500, %v496
    %v683 = vpack.c.bf16 %v502, %v498
    %v684 = vpack.c.bf16 %v543, %v539
    %v685 = vpack.c.bf16 %v545, %v541
    %v686 = vpack.c.bf16 %v586, %v582
    %v687 = vpack.c.bf16 %v588, %v584
    %v688 = vpack.c.bf16 %v629, %v625
    %v689 = vpack.c.bf16 %v631, %v627
    %v690 = vpack.c.bf16 %v672, %v668
    %v691 = vpack.c.bf16 %v674, %v670
    %v708 = vunpack.c.l.b16 %v676
    %v709 = vunpack.c.l.b16 %v677
    %v710 = vunpack.c.l.b16 %v678
    %v711 = vunpack.c.l.b16 %v679
    %v712 = vunpack.c.l.b16 %v680
    %v713 = vunpack.c.l.b16 %v681
    %v714 = vunpack.c.l.b16 %v682
    %v715 = vunpack.c.l.b16 %v683
    %v716 = vunpack.c.l.b16 %v684
    %v717 = vunpack.c.l.b16 %v685
    %v718 = vunpack.c.l.b16 %v686
    %v719 = vunpack.c.l.b16 %v687
    %v720 = vunpack.c.l.b16 %v688
    %v721 = vunpack.c.l.b16 %v689
    %v722 = vunpack.c.l.b16 %v690
    %v723 = vunpack.c.l.b16 %v691
    %v724 = vunpack.c.h.b16 %v676
    %v725 = vunpack.c.h.b16 %v677
    %v726 = vunpack.c.h.b16 %v678
    %v727 = vunpack.c.h.b16 %v679
    %v728 = vunpack.c.h.b16 %v680
    %v729 = vunpack.c.h.b16 %v681
    %v730 = vunpack.c.h.b16 %v682
    %v731 = vunpack.c.h.b16 %v683
    %v732 = vunpack.c.h.b16 %v684
    %v733 = vunpack.c.h.b16 %v685
    %v734 = vunpack.c.h.b16 %v686
    %v735 = vunpack.c.h.b16 %v687
    %v736 = vunpack.c.h.b16 %v688
    %v737 = vunpack.c.h.b16 %v689
    %v738 = vunpack.c.h.b16 %v690
    %v739 = vunpack.c.h.b16 %v691
    %v740 = vpack.c.b16 %v709, %v708
    %v741 = vpack.c.b16 %v711, %v710
    %v742 = vpack.c.b16 %v713, %v712
    %v743 = vpack.c.b16 %v715, %v714
    %v744 = vpack.c.b16 %v717, %v716
    %v745 = vpack.c.b16 %v719, %v718
    %v746 = vpack.c.b16 %v721, %v720
    %v747 = vpack.c.b16 %v723, %v722
    %v748 = vpack.c.b16 %v725, %v724
    %v749 = vpack.c.b16 %v727, %v726
    %v750 = vpack.c.b16 %v729, %v728
    %v751 = vpack.c.b16 %v731, %v730
    %v752 = vpack.c.b16 %v733, %v732
    %v753 = vpack.c.b16 %v735, %v734
    %v754 = vpack.c.b16 %v737, %v736
    %v755 = vpack.c.b16 %v739, %v738
    %772 = vst [vmem:[%s3] sm:$0xff] %v740
    %773 = vst [vmem:[%s3 + $0x8] sm:$0xff] %v741
    %774 = vst [vmem:[%s3 + $0x10] sm:$0xff] %v742
    %775 = vst [vmem:[%s3 + $0x18] sm:$0xff] %v743
    %776 = vst [vmem:[%s3 + $0x20] sm:$0xff] %v744
    %777 = vst [vmem:[%s3 + $0x28] sm:$0xff] %v745
    %778 = vst [vmem:[%s3 + $0x30] sm:$0xff] %v746
    %779 = vst [vmem:[%s3 + $0x38] sm:$0xff] %v747
    %780 = vst [vmem:[%s3 + $0x40] sm:$0xff] %v748
    %781 = vst [vmem:[%s3 + $0x48] sm:$0xff] %v749
    %782 = vst [vmem:[%s3 + $0x50] sm:$0xff] %v750
    %783 = vst [vmem:[%s3 + $0x58] sm:$0xff] %v751
    %784 = vst [vmem:[%s3 + $0x60] sm:$0xff] %v752
    %785 = vst [vmem:[%s3 + $0x68] sm:$0xff] %v753
    %786 = vst [vmem:[%s3 + $0x70] sm:$0xff] %v754
    %787 = vst [vmem:[%s3 + $0x78] sm:$0xff] %v755
    %v788 = vlaneseq
    %v789 = vand.u32 %v788, 127
    %v790 = vadd.s32 %v789, 128
    %v791 = vadd.s32 %v789, 256
    %v792 = vadd.s32 %v789, 384
    %v793 = vadd.s32 %v789, 512
    %v794 = vadd.s32 %v789, 640
    %v795 = vadd.s32 %v789, 768
    %v796 = vadd.s32 %v789, 896
    %v797 = vadd.s32 %v789, 1024
    %v798 = vadd.s32 %v789, 1152
    %v799 = vadd.s32 %v789, 1280
    %v800 = vadd.s32 %v789, 1408
    %v801 = vadd.s32 %v789, 1536
    %v802 = vadd.s32 %v789, 1664
    %v803 = vadd.s32 %v789, 1792
    %v804 = vadd.s32 %v789, 1920
    %v805 = vld [vmem:[%s2] sm:$0xff]
    %v806 = vld [vmem:[%s2 + $0x8] sm:$0xff]
    %vm807 = vcmp.lt.s32.totalorder %v789, 512
    %vm808 = vcmp.lt.s32.totalorder %v790, 512
    %vm809 = vcmp.lt.s32.totalorder %v791, 512
    %vm810 = vcmp.lt.s32.totalorder %v792, 512
    %vm811 = vcmp.lt.s32.totalorder %v793, 512
    %vm812 = vcmp.lt.s32.totalorder %v794, 512
    %vm813 = vcmp.lt.s32.totalorder %v795, 512
    %vm814 = vcmp.lt.s32.totalorder %v796, 512
    %vm815 = vcmp.lt.s32.totalorder %v797, 512
    %vm816 = vcmp.lt.s32.totalorder %v798, 512
    %vm817 = vcmp.lt.s32.totalorder %v799, 512
    %vm818 = vcmp.lt.s32.totalorder %v800, 512
    %vm819 = vcmp.lt.s32.totalorder %v801, 512
    %vm820 = vcmp.lt.s32.totalorder %v802, 512
    %vm821 = vcmp.lt.s32.totalorder %v803, 512
    %vm822 = vcmp.lt.s32.totalorder %v804, 512
    %vm823 = vcmp.lt.s32.totalorder %v789, 1024
    %vm824 = vcmp.lt.s32.totalorder %v790, 1024
    %vm825 = vcmp.lt.s32.totalorder %v791, 1024
    %vm826 = vcmp.lt.s32.totalorder %v792, 1024
    %vm827 = vcmp.lt.s32.totalorder %v793, 1024
    %vm828 = vcmp.lt.s32.totalorder %v794, 1024
    %vm829 = vcmp.lt.s32.totalorder %v795, 1024
    %vm830 = vcmp.lt.s32.totalorder %v796, 1024
    %vm831 = vcmp.lt.s32.totalorder %v797, 1024
    %vm832 = vcmp.lt.s32.totalorder %v798, 1024
    %vm833 = vcmp.lt.s32.totalorder %v799, 1024
    %vm834 = vcmp.lt.s32.totalorder %v800, 1024
    %vm835 = vcmp.lt.s32.totalorder %v801, 1024
    %vm836 = vcmp.lt.s32.totalorder %v802, 1024
    %vm837 = vcmp.lt.s32.totalorder %v803, 1024
    %vm838 = vcmp.lt.s32.totalorder %v804, 1024
    %vm839 = vcmp.lt.s32.totalorder %v789, 1536
    %vm840 = vcmp.lt.s32.totalorder %v790, 1536
    %vm841 = vcmp.lt.s32.totalorder %v791, 1536
    %vm842 = vcmp.lt.s32.totalorder %v792, 1536
    %vm843 = vcmp.lt.s32.totalorder %v793, 1536
    %vm844 = vcmp.lt.s32.totalorder %v794, 1536
    %vm845 = vcmp.lt.s32.totalorder %v795, 1536
    %vm846 = vcmp.lt.s32.totalorder %v796, 1536
    %vm847 = vcmp.lt.s32.totalorder %v797, 1536
    %vm848 = vcmp.lt.s32.totalorder %v798, 1536
    %vm849 = vcmp.lt.s32.totalorder %v799, 1536
    %vm850 = vcmp.lt.s32.totalorder %v800, 1536
    %vm851 = vcmp.lt.s32.totalorder %v801, 1536
    %vm852 = vcmp.lt.s32.totalorder %v802, 1536
    %vm853 = vcmp.lt.s32.totalorder %v803, 1536
    %vm854 = vcmp.lt.s32.totalorder %v804, 1536
    %v855 = vsel %vm839, 1, 0
    %v856 = vsel %vm840, 1, 0
    %v857 = vsel %vm841, 1, 0
    %v858 = vsel %vm842, 1, 0
    %v859 = vsel %vm843, 1, 0
    %v860 = vsel %vm844, 1, 0
    %v861 = vsel %vm845, 1, 0
    %v862 = vsel %vm846, 1, 0
    %v863 = vsel %vm847, 1, 0
    %v864 = vsel %vm848, 1, 0
    %v865 = vsel %vm849, 1, 0
    %v866 = vsel %vm850, 1, 0
    %v867 = vsel %vm851, 1, 0
    %v868 = vsel %vm852, 1, 0
    %v869 = vsel %vm853, 1, 0
    %v870 = vsel %vm854, 1, 0
    %vm871 = vcmp.eq.s32.totalorder %v855, 1
    %vm872 = vcmp.eq.s32.totalorder %v856, 1
    %vm873 = vcmp.eq.s32.totalorder %v857, 1
    %vm874 = vcmp.eq.s32.totalorder %v858, 1
    %vm875 = vcmp.eq.s32.totalorder %v859, 1
    %vm876 = vcmp.eq.s32.totalorder %v860, 1
    %vm877 = vcmp.eq.s32.totalorder %v861, 1
    %vm878 = vcmp.eq.s32.totalorder %v862, 1
    %vm879 = vcmp.eq.s32.totalorder %v863, 1
    %vm880 = vcmp.eq.s32.totalorder %v864, 1
    %vm881 = vcmp.eq.s32.totalorder %v865, 1
    %vm882 = vcmp.eq.s32.totalorder %v866, 1
    %vm883 = vcmp.eq.s32.totalorder %v867, 1
    %vm884 = vcmp.eq.s32.totalorder %v868, 1
    %vm885 = vcmp.eq.s32.totalorder %v869, 1
    %vm886 = vcmp.eq.s32.totalorder %v870, 1
    %888 = vset.pattern.permute.xlu0 2
    %889 = vperm.xlu0 %888, %v805
    %v890 = vpop.permute.xlu0 %889
    %893 = vset.pattern.permute.xlu0 2
    %894 = vperm.xlu0 %893, %v806
    %v895 = vpop.permute.xlu0 %894
    %897 = vset.pattern.permute.xlu0 3
    %898 = vperm.xlu0 %897, %v805
    %v899 = vpop.permute.xlu0 %898
    %901 = vset.pattern.permute.xlu0 3
    %902 = vperm.xlu0 %901, %v806
    %v903 = vpop.permute.xlu0 %902
    %v905 = vsel %vm871, %v890, %v899
    %v906 = vsel %vm872, %v890, %v899
    %v907 = vsel %vm873, %v890, %v899
    %v908 = vsel %vm874, %v890, %v899
    %v909 = vsel %vm875, %v890, %v899
    %v910 = vsel %vm876, %v890, %v899
    %v911 = vsel %vm877, %v890, %v899
    %v912 = vsel %vm878, %v890, %v899
    %v913 = vsel %vm879, %v890, %v899
    %v914 = vsel %vm880, %v890, %v899
    %v915 = vsel %vm881, %v890, %v899
    %v916 = vsel %vm882, %v890, %v899
    %v917 = vsel %vm883, %v890, %v899
    %v918 = vsel %vm884, %v890, %v899
    %v919 = vsel %vm885, %v890, %v899
    %v920 = vsel %vm886, %v890, %v899
    %v921 = vsel %vm871, %v895, %v903
    %v922 = vsel %vm872, %v895, %v903
    %v923 = vsel %vm873, %v895, %v903
    %v924 = vsel %vm874, %v895, %v903
    %v925 = vsel %vm875, %v895, %v903
    %v926 = vsel %vm876, %v895, %v903
    %v927 = vsel %vm877, %v895, %v903
    %v928 = vsel %vm878, %v895, %v903
    %v929 = vsel %vm879, %v895, %v903
    %v930 = vsel %vm880, %v895, %v903
    %v931 = vsel %vm881, %v895, %v903
    %v932 = vsel %vm882, %v895, %v903
    %v933 = vsel %vm883, %v895, %v903
    %v934 = vsel %vm884, %v895, %v903
    %v935 = vsel %vm885, %v895, %v903
    %v936 = vsel %vm886, %v895, %v903
    %v937 = vsel %vm823, 1, 0
    %v938 = vsel %vm824, 1, 0
    %v939 = vsel %vm825, 1, 0
    %v940 = vsel %vm826, 1, 0
    %v941 = vsel %vm827, 1, 0
    %v942 = vsel %vm828, 1, 0
    %v943 = vsel %vm829, 1, 0
    %v944 = vsel %vm830, 1, 0
    %v945 = vsel %vm831, 1, 0
    %v946 = vsel %vm832, 1, 0
    %v947 = vsel %vm833, 1, 0
    %v948 = vsel %vm834, 1, 0
    %v949 = vsel %vm835, 1, 0
    %v950 = vsel %vm836, 1, 0
    %v951 = vsel %vm837, 1, 0
    %v952 = vsel %vm838, 1, 0
    %vm953 = vcmp.eq.s32.totalorder %v937, 1
    %vm954 = vcmp.eq.s32.totalorder %v938, 1
    %vm955 = vcmp.eq.s32.totalorder %v939, 1
    %vm956 = vcmp.eq.s32.totalorder %v940, 1
    %vm957 = vcmp.eq.s32.totalorder %v941, 1
    %vm958 = vcmp.eq.s32.totalorder %v942, 1
    %vm959 = vcmp.eq.s32.totalorder %v943, 1
    %vm960 = vcmp.eq.s32.totalorder %v944, 1
    %vm961 = vcmp.eq.s32.totalorder %v945, 1
    %vm962 = vcmp.eq.s32.totalorder %v946, 1
    %vm963 = vcmp.eq.s32.totalorder %v947, 1
    %vm964 = vcmp.eq.s32.totalorder %v948, 1
    %vm965 = vcmp.eq.s32.totalorder %v949, 1
    %vm966 = vcmp.eq.s32.totalorder %v950, 1
    %vm967 = vcmp.eq.s32.totalorder %v951, 1
    %vm968 = vcmp.eq.s32.totalorder %v952, 1
    %969 = vset.pattern.permute.xlu0 1
    %970 = vperm.xlu0 %969, %v805
    %v971 = vpop.permute.xlu0 %970
    %973 = vset.pattern.permute.xlu0 1
    %974 = vperm.xlu0 %973, %v806
    %v975 = vpop.permute.xlu0 %974
    %v977 = vsel %vm953, %v971, %v905
    %v978 = vsel %vm954, %v971, %v906
    %v979 = vsel %vm955, %v971, %v907
    %v980 = vsel %vm956, %v971, %v908
    %v981 = vsel %vm957, %v971, %v909
    %v982 = vsel %vm958, %v971, %v910
    %v983 = vsel %vm959, %v971, %v911
    %v984 = vsel %vm960, %v971, %v912
    %v985 = vsel %vm961, %v971, %v913
    %v986 = vsel %vm962, %v971, %v914
    %v987 = vsel %vm963, %v971, %v915
    %v988 = vsel %vm964, %v971, %v916
    %v989 = vsel %vm965, %v971, %v917
    %v990 = vsel %vm966, %v971, %v918
    %v991 = vsel %vm967, %v971, %v919
    %v992 = vsel %vm968, %v971, %v920
    %v993 = vsel %vm953, %v975, %v921
    %v994 = vsel %vm954, %v975, %v922
    %v995 = vsel %vm955, %v975, %v923
    %v996 = vsel %vm956, %v975, %v924
    %v997 = vsel %vm957, %v975, %v925
    %v998 = vsel %vm958, %v975, %v926
    %v999 = vsel %vm959, %v975, %v927
    %v1000 = vsel %vm960, %v975, %v928
    %v1001 = vsel %vm961, %v975, %v929
    %v1002 = vsel %vm962, %v975, %v930
    %v1003 = vsel %vm963, %v975, %v931
    %v1004 = vsel %vm964, %v975, %v932
    %v1005 = vsel %vm965, %v975, %v933
    %v1006 = vsel %vm966, %v975, %v934
    %v1007 = vsel %vm967, %v975, %v935
    %v1008 = vsel %vm968, %v975, %v936
    %v1009 = vsel %vm807, 1, 0
    %v1010 = vsel %vm808, 1, 0
    %v1011 = vsel %vm809, 1, 0
    %v1012 = vsel %vm810, 1, 0
    %v1013 = vsel %vm811, 1, 0
    %v1014 = vsel %vm812, 1, 0
    %v1015 = vsel %vm813, 1, 0
    %v1016 = vsel %vm814, 1, 0
    %v1017 = vsel %vm815, 1, 0
    %v1018 = vsel %vm816, 1, 0
    %v1019 = vsel %vm817, 1, 0
    %v1020 = vsel %vm818, 1, 0
    %v1021 = vsel %vm819, 1, 0
    %v1022 = vsel %vm820, 1, 0
    %v1023 = vsel %vm821, 1, 0
    %v1024 = vsel %vm822, 1, 0
    %vm1025 = vcmp.eq.s32.totalorder %v1009, 1
    %vm1026 = vcmp.eq.s32.totalorder %v1010, 1
    %vm1027 = vcmp.eq.s32.totalorder %v1011, 1
    %vm1028 = vcmp.eq.s32.totalorder %v1012, 1
    %vm1029 = vcmp.eq.s32.totalorder %v1013, 1
    %vm1030 = vcmp.eq.s32.totalorder %v1014, 1
    %vm1031 = vcmp.eq.s32.totalorder %v1015, 1
    %vm1032 = vcmp.eq.s32.totalorder %v1016, 1
    %vm1033 = vcmp.eq.s32.totalorder %v1017, 1
    %vm1034 = vcmp.eq.s32.totalorder %v1018, 1
    %vm1035 = vcmp.eq.s32.totalorder %v1019, 1
    %vm1036 = vcmp.eq.s32.totalorder %v1020, 1
    %vm1037 = vcmp.eq.s32.totalorder %v1021, 1
    %vm1038 = vcmp.eq.s32.totalorder %v1022, 1
    %vm1039 = vcmp.eq.s32.totalorder %v1023, 1
    %vm1040 = vcmp.eq.s32.totalorder %v1024, 1
    %1041 = vset.pattern.permute.xlu0 0
    %1042 = vperm.xlu0 %1041, %v805
    %v1043 = vpop.permute.xlu0 %1042
    %1045 = vset.pattern.permute.xlu0 0
    %1046 = vperm.xlu0 %1045, %v806
    %v1047 = vpop.permute.xlu0 %1046
    %v1049 = vsel %vm1025, %v1043, %v977
    %v1050 = vsel %vm1026, %v1043, %v978
    %v1051 = vsel %vm1027, %v1043, %v979
    %v1052 = vsel %vm1028, %v1043, %v980
    %v1053 = vsel %vm1029, %v1043, %v981
    %v1054 = vsel %vm1030, %v1043, %v982
    %v1055 = vsel %vm1031, %v1043, %v983
    %v1056 = vsel %vm1032, %v1043, %v984
    %v1057 = vsel %vm1033, %v1043, %v985
    %v1058 = vsel %vm1034, %v1043, %v986
    %v1059 = vsel %vm1035, %v1043, %v987
    %v1060 = vsel %vm1036, %v1043, %v988
    %v1061 = vsel %vm1037, %v1043, %v989
    %v1062 = vsel %vm1038, %v1043, %v990
    %v1063 = vsel %vm1039, %v1043, %v991
    %v1064 = vsel %vm1040, %v1043, %v992
    %v1065 = vsel %vm1025, %v1047, %v993
    %v1066 = vsel %vm1026, %v1047, %v994
    %v1067 = vsel %vm1027, %v1047, %v995
    %v1068 = vsel %vm1028, %v1047, %v996
    %v1069 = vsel %vm1029, %v1047, %v997
    %v1070 = vsel %vm1030, %v1047, %v998
    %v1071 = vsel %vm1031, %v1047, %v999
    %v1072 = vsel %vm1032, %v1047, %v1000
    %v1073 = vsel %vm1033, %v1047, %v1001
    %v1074 = vsel %vm1034, %v1047, %v1002
    %v1075 = vsel %vm1035, %v1047, %v1003
    %v1076 = vsel %vm1036, %v1047, %v1004
    %v1077 = vsel %vm1037, %v1047, %v1005
    %v1078 = vsel %vm1038, %v1047, %v1006
    %v1079 = vsel %vm1039, %v1047, %v1007
    %v1080 = vsel %vm1040, %v1047, %v1008
    %v1081 = vmul.f32 %v367, %v1049
    %v1082 = vmul.f32 %v369, %v1050
    %v1083 = vmul.f32 %v410, %v1051
    %v1084 = vmul.f32 %v412, %v1052
    %v1085 = vmul.f32 %v453, %v1053
    %v1086 = vmul.f32 %v455, %v1054
    %v1087 = vmul.f32 %v496, %v1055
    %v1088 = vmul.f32 %v498, %v1056
    %v1089 = vmul.f32 %v539, %v1057
    %v1090 = vmul.f32 %v541, %v1058
    %v1091 = vmul.f32 %v582, %v1059
    %v1092 = vmul.f32 %v584, %v1060
    %v1093 = vmul.f32 %v625, %v1061
    %v1094 = vmul.f32 %v627, %v1062
    %v1095 = vmul.f32 %v668, %v1063
    %v1096 = vmul.f32 %v670, %v1064
    %v1097 = vmul.f32 %v371, %v1065
    %v1098 = vmul.f32 %v373, %v1066
    %v1099 = vmul.f32 %v414, %v1067
    %v1100 = vmul.f32 %v416, %v1068
    %v1101 = vmul.f32 %v457, %v1069
    %v1102 = vmul.f32 %v459, %v1070
    %v1103 = vmul.f32 %v500, %v1071
    %v1104 = vmul.f32 %v502, %v1072
    %v1105 = vmul.f32 %v543, %v1073
    %v1106 = vmul.f32 %v545, %v1074
    %v1107 = vmul.f32 %v586, %v1075
    %v1108 = vmul.f32 %v588, %v1076
    %v1109 = vmul.f32 %v629, %v1077
    %v1110 = vmul.f32 %v631, %v1078
    %v1111 = vmul.f32 %v672, %v1079
    %v1112 = vmul.f32 %v674, %v1080
    %v1113 = vadd.f32 %v1081, %v1097
    %v1114 = vrot.slane %v1113, 4
    %v1115 = vadd.f32 %v1113, %v1114
    %v1116 = vrot.slane %v1115, 2
    %v1117 = vadd.f32 %v1115, %v1116
    %v1118 = vrot.slane %v1117, 1
    %v1119 = vadd.f32 %v1117, %v1118
    %v1120 = vadd.f32 %v1082, %v1098
    %v1121 = vrot.slane %v1120, 4
    %v1122 = vadd.f32 %v1120, %v1121
    %v1123 = vrot.slane %v1122, 2
    %v1124 = vadd.f32 %v1122, %v1123
    %v1125 = vrot.slane %v1124, 1
    %v1126 = vadd.f32 %v1124, %v1125
    %v1127 = vadd.f32 %v1083, %v1099
    %v1128 = vrot.slane %v1127, 4
    %v1129 = vadd.f32 %v1127, %v1128
    %v1130 = vrot.slane %v1129, 2
    %v1131 = vadd.f32 %v1129, %v1130
    %v1132 = vrot.slane %v1131, 1
    %v1133 = vadd.f32 %v1131, %v1132
    %v1134 = vadd.f32 %v1084, %v1100
    %v1135 = vrot.slane %v1134, 4
    %v1136 = vadd.f32 %v1134, %v1135
    %v1137 = vrot.slane %v1136, 2
    %v1138 = vadd.f32 %v1136, %v1137
    %v1139 = vrot.slane %v1138, 1
    %v1140 = vadd.f32 %v1138, %v1139
    %v1141 = vadd.f32 %v1085, %v1101
    %v1142 = vrot.slane %v1141, 4
    %v1143 = vadd.f32 %v1141, %v1142
    %v1144 = vrot.slane %v1143, 2
    %v1145 = vadd.f32 %v1143, %v1144
    %v1146 = vrot.slane %v1145, 1
    %v1147 = vadd.f32 %v1145, %v1146
    %v1148 = vadd.f32 %v1086, %v1102
    %v1149 = vrot.slane %v1148, 4
    %v1150 = vadd.f32 %v1148, %v1149
    %v1151 = vrot.slane %v1150, 2
    %v1152 = vadd.f32 %v1150, %v1151
    %v1153 = vrot.slane %v1152, 1
    %v1154 = vadd.f32 %v1152, %v1153
    %v1155 = vadd.f32 %v1087, %v1103
    %v1156 = vrot.slane %v1155, 4
    %v1157 = vadd.f32 %v1155, %v1156
    %v1158 = vrot.slane %v1157, 2
    %v1159 = vadd.f32 %v1157, %v1158
    %v1160 = vrot.slane %v1159, 1
    %v1161 = vadd.f32 %v1159, %v1160
    %v1162 = vadd.f32 %v1088, %v1104
    %v1163 = vrot.slane %v1162, 4
    %v1164 = vadd.f32 %v1162, %v1163
    %v1165 = vrot.slane %v1164, 2
    %v1166 = vadd.f32 %v1164, %v1165
    %v1167 = vrot.slane %v1166, 1
    %v1168 = vadd.f32 %v1166, %v1167
    %v1169 = vadd.f32 %v1089, %v1105
    %v1170 = vrot.slane %v1169, 4
    %v1171 = vadd.f32 %v1169, %v1170
    %v1172 = vrot.slane %v1171, 2
    %v1173 = vadd.f32 %v1171, %v1172
    %v1174 = vrot.slane %v1173, 1
    %v1175 = vadd.f32 %v1173, %v1174
    %v1176 = vadd.f32 %v1090, %v1106
    %v1177 = vrot.slane %v1176, 4
    %v1178 = vadd.f32 %v1176, %v1177
    %v1179 = vrot.slane %v1178, 2
    %v1180 = vadd.f32 %v1178, %v1179
    %v1181 = vrot.slane %v1180, 1
    %v1182 = vadd.f32 %v1180, %v1181
    %v1183 = vadd.f32 %v1091, %v1107
    %v1184 = vrot.slane %v1183, 4
    %v1185 = vadd.f32 %v1183, %v1184
    %v1186 = vrot.slane %v1185, 2
    %v1187 = vadd.f32 %v1185, %v1186
    %v1188 = vrot.slane %v1187, 1
    %v1189 = vadd.f32 %v1187, %v1188
    %v1190 = vadd.f32 %v1092, %v1108
    %v1191 = vrot.slane %v1190, 4
    %v1192 = vadd.f32 %v1190, %v1191
    %v1193 = vrot.slane %v1192, 2
    %v1194 = vadd.f32 %v1192, %v1193
    %v1195 = vrot.slane %v1194, 1
    %v1196 = vadd.f32 %v1194, %v1195
    %v1197 = vadd.f32 %v1093, %v1109
    %v1198 = vrot.slane %v1197, 4
    %v1199 = vadd.f32 %v1197, %v1198
    %v1200 = vrot.slane %v1199, 2
    %v1201 = vadd.f32 %v1199, %v1200
    %v1202 = vrot.slane %v1201, 1
    %v1203 = vadd.f32 %v1201, %v1202
    %v1204 = vadd.f32 %v1094, %v1110
    %v1205 = vrot.slane %v1204, 4
    %v1206 = vadd.f32 %v1204, %v1205
    %v1207 = vrot.slane %v1206, 2
    %v1208 = vadd.f32 %v1206, %v1207
    %v1209 = vrot.slane %v1208, 1
    %v1210 = vadd.f32 %v1208, %v1209
    %v1211 = vadd.f32 %v1095, %v1111
    %v1212 = vrot.slane %v1211, 4
    %v1213 = vadd.f32 %v1211, %v1212
    %v1214 = vrot.slane %v1213, 2
    %v1215 = vadd.f32 %v1213, %v1214
    %v1216 = vrot.slane %v1215, 1
    %v1217 = vadd.f32 %v1215, %v1216
    %v1218 = vadd.f32 %v1096, %v1112
    %v1219 = vrot.slane %v1218, 4
    %v1220 = vadd.f32 %v1218, %v1219
    %v1221 = vrot.slane %v1220, 2
    %v1222 = vadd.f32 %v1220, %v1221
    %v1223 = vrot.slane %v1222, 1
    %v1224 = vadd.f32 %v1222, %v1223
    %v1241 = vcombine.low %v1119, %v1126
    %v1242 = vcombine.low %v1133, %v1140
    %v1243 = vcombine.low %v1147, %v1154
    %v1244 = vcombine.low %v1161, %v1168
    %v1246 = vunpack.c.l.s4 1966171168
    %v1247 = vunpack.c.0.s8 %v1246
    %v1248 = vlaneseq
    %v1249 = vshrl.u32 %v1248, 7
    %v1250 = vsub.s32 %v1247, %v1249
    %v1251 = vrot.slane %v1241, %v1250
    %v1253 = vunpack.c.l.s4 1966171168
    %v1254 = vunpack.c.0.s8 %v1253
    %v1255 = vlaneseq
    %v1256 = vshrl.u32 %v1255, 7
    %v1257 = vsub.s32 %v1254, %v1256
    %v1258 = vrot.slane %v1242, %v1257
    %v1260 = vunpack.c.l.s4 1966171168
    %v1261 = vunpack.c.0.s8 %v1260
    %v1262 = vlaneseq
    %v1263 = vshrl.u32 %v1262, 7
    %v1264 = vsub.s32 %v1261, %v1263
    %v1265 = vrot.slane %v1243, %v1264
    %v1267 = vunpack.c.l.s4 1966171168
    %v1268 = vunpack.c.0.s8 %v1267
    %v1269 = vlaneseq
    %v1270 = vshrl.u32 %v1269, 7
    %v1271 = vsub.s32 %v1268, %v1270
    %v1272 = vrot.slane %v1244, %v1271
    %v1273 = vcombine.low %v1251, %v1258
    %v1274 = vcombine.low %v1265, %v1272
    %v1276 = vunpack.c.l.s4 1966171168
    %v1277 = vunpack.c.0.s8 %v1276
    %v1278 = vlaneseq
    %v1279 = vshrl.u32 %v1278, 7
    %v1280 = vsub.s32 %v1277, %v1279
    %v1281 = vrot.slane %v1273, %v1280
    %v1283 = vunpack.c.l.s4 1966171168
    %v1284 = vunpack.c.0.s8 %v1283
    %v1285 = vlaneseq
    %v1286 = vshrl.u32 %v1285, 7
    %v1287 = vsub.s32 %v1284, %v1286
    %v1288 = vrot.slane %v1274, %v1287
    %v1289 = vcombine.low %v1281, %v1288
    %v1290 = vcombine.low %v1175, %v1182
    %v1291 = vcombine.low %v1189, %v1196
    %v1292 = vcombine.low %v1203, %v1210
    %v1293 = vcombine.low %v1217, %v1224
    %v1295 = vunpack.c.l.s4 1966171168
    %v1296 = vunpack.c.0.s8 %v1295
    %v1297 = vlaneseq
    %v1298 = vshrl.u32 %v1297, 7
    %v1299 = vsub.s32 %v1296, %v1298
    %v1300 = vrot.slane %v1290, %v1299
    %v1302 = vunpack.c.l.s4 1966171168
    %v1303 = vunpack.c.0.s8 %v1302
    %v1304 = vlaneseq
    %v1305 = vshrl.u32 %v1304, 7
    %v1306 = vsub.s32 %v1303, %v1305
    %v1307 = vrot.slane %v1291, %v1306
    %v1309 = vunpack.c.l.s4 1966171168
    %v1310 = vunpack.c.0.s8 %v1309
    %v1311 = vlaneseq
    %v1312 = vshrl.u32 %v1311, 7
    %v1313 = vsub.s32 %v1310, %v1312
    %v1314 = vrot.slane %v1292, %v1313
    %v1316 = vunpack.c.l.s4 1966171168
    %v1317 = vunpack.c.0.s8 %v1316
    %v1318 = vlaneseq
    %v1319 = vshrl.u32 %v1318, 7
    %v1320 = vsub.s32 %v1317, %v1319
    %v1321 = vrot.slane %v1293, %v1320
    %v1322 = vcombine.low %v1300, %v1307
    %v1323 = vcombine.low %v1314, %v1321
    %v1325 = vunpack.c.l.s4 1966171168
    %v1326 = vunpack.c.0.s8 %v1325
    %v1327 = vlaneseq
    %v1328 = vshrl.u32 %v1327, 7
    %v1329 = vsub.s32 %v1326, %v1328
    %v1330 = vrot.slane %v1322, %v1329
    %v1332 = vunpack.c.l.s4 1966171168
    %v1333 = vunpack.c.0.s8 %v1332
    %v1334 = vlaneseq
    %v1335 = vshrl.u32 %v1334, 7
    %v1336 = vsub.s32 %v1333, %v1335
    %v1337 = vrot.slane %v1323, %v1336
    %v1338 = vcombine.low %v1330, %v1337
    %1341 = vst [vmem:[%s4] sm:$0xff] %v1289
    %1342 = vst [vmem:[%s4 + $0x8] sm:$0xff] %v1338
    %v1343 = vmul.f32 %v1081, %v1081
    %v1344 = vmul.f32 %v1082, %v1082
    %v1345 = vmul.f32 %v1083, %v1083
    %v1346 = vmul.f32 %v1084, %v1084
    %v1347 = vmul.f32 %v1085, %v1085
    %v1348 = vmul.f32 %v1086, %v1086
    %v1349 = vmul.f32 %v1087, %v1087
    %v1350 = vmul.f32 %v1088, %v1088
    %v1351 = vmul.f32 %v1089, %v1089
    %v1352 = vmul.f32 %v1090, %v1090
    %v1353 = vmul.f32 %v1091, %v1091
    %v1354 = vmul.f32 %v1092, %v1092
    %v1355 = vmul.f32 %v1093, %v1093
    %v1356 = vmul.f32 %v1094, %v1094
    %v1357 = vmul.f32 %v1095, %v1095
    %v1358 = vmul.f32 %v1096, %v1096
    %v1359 = vmul.f32 %v1097, %v1097
    %v1360 = vmul.f32 %v1098, %v1098
    %v1361 = vmul.f32 %v1099, %v1099
    %v1362 = vmul.f32 %v1100, %v1100
    %v1363 = vmul.f32 %v1101, %v1101
    %v1364 = vmul.f32 %v1102, %v1102
    %v1365 = vmul.f32 %v1103, %v1103
    %v1366 = vmul.f32 %v1104, %v1104
    %v1367 = vmul.f32 %v1105, %v1105
    %v1368 = vmul.f32 %v1106, %v1106
    %v1369 = vmul.f32 %v1107, %v1107
    %v1370 = vmul.f32 %v1108, %v1108
    %v1371 = vmul.f32 %v1109, %v1109
    %v1372 = vmul.f32 %v1110, %v1110
    %v1373 = vmul.f32 %v1111, %v1111
    %v1374 = vmul.f32 %v1112, %v1112
    %v1375 = vadd.f32 %v1343, %v1359
    %v1376 = vrot.slane %v1375, 4
    %v1377 = vadd.f32 %v1375, %v1376
    %v1378 = vrot.slane %v1377, 2
    %v1379 = vadd.f32 %v1377, %v1378
    %v1380 = vrot.slane %v1379, 1
    %v1381 = vadd.f32 %v1379, %v1380
    %v1382 = vadd.f32 %v1344, %v1360
    %v1383 = vrot.slane %v1382, 4
    %v1384 = vadd.f32 %v1382, %v1383
    %v1385 = vrot.slane %v1384, 2
    %v1386 = vadd.f32 %v1384, %v1385
    %v1387 = vrot.slane %v1386, 1
    %v1388 = vadd.f32 %v1386, %v1387
    %v1389 = vadd.f32 %v1345, %v1361
    %v1390 = vrot.slane %v1389, 4
    %v1391 = vadd.f32 %v1389, %v1390
    %v1392 = vrot.slane %v1391, 2
    %v1393 = vadd.f32 %v1391, %v1392
    %v1394 = vrot.slane %v1393, 1
    %v1395 = vadd.f32 %v1393, %v1394
    %v1396 = vadd.f32 %v1346, %v1362
    %v1397 = vrot.slane %v1396, 4
    %v1398 = vadd.f32 %v1396, %v1397
    %v1399 = vrot.slane %v1398, 2
    %v1400 = vadd.f32 %v1398, %v1399
    %v1401 = vrot.slane %v1400, 1
    %v1402 = vadd.f32 %v1400, %v1401
    %v1403 = vadd.f32 %v1347, %v1363
    %v1404 = vrot.slane %v1403, 4
    %v1405 = vadd.f32 %v1403, %v1404
    %v1406 = vrot.slane %v1405, 2
    %v1407 = vadd.f32 %v1405, %v1406
    %v1408 = vrot.slane %v1407, 1
    %v1409 = vadd.f32 %v1407, %v1408
    %v1410 = vadd.f32 %v1348, %v1364
    %v1411 = vrot.slane %v1410, 4
    %v1412 = vadd.f32 %v1410, %v1411
    %v1413 = vrot.slane %v1412, 2
    %v1414 = vadd.f32 %v1412, %v1413
    %v1415 = vrot.slane %v1414, 1
    %v1416 = vadd.f32 %v1414, %v1415
    %v1417 = vadd.f32 %v1349, %v1365
    %v1418 = vrot.slane %v1417, 4
    %v1419 = vadd.f32 %v1417, %v1418
    %v1420 = vrot.slane %v1419, 2
    %v1421 = vadd.f32 %v1419, %v1420
    %v1422 = vrot.slane %v1421, 1
    %v1423 = vadd.f32 %v1421, %v1422
    %v1424 = vadd.f32 %v1350, %v1366
    %v1425 = vrot.slane %v1424, 4
    %v1426 = vadd.f32 %v1424, %v1425
    %v1427 = vrot.slane %v1426, 2
    %v1428 = vadd.f32 %v1426, %v1427
    %v1429 = vrot.slane %v1428, 1
    %v1430 = vadd.f32 %v1428, %v1429
    %v1431 = vadd.f32 %v1351, %v1367
    %v1432 = vrot.slane %v1431, 4
    %v1433 = vadd.f32 %v1431, %v1432
    %v1434 = vrot.slane %v1433, 2
    %v1435 = vadd.f32 %v1433, %v1434
    %v1436 = vrot.slane %v1435, 1
    %v1437 = vadd.f32 %v1435, %v1436
    %v1438 = vadd.f32 %v1352, %v1368
    %v1439 = vrot.slane %v1438, 4
    %v1440 = vadd.f32 %v1438, %v1439
    %v1441 = vrot.slane %v1440, 2
    %v1442 = vadd.f32 %v1440, %v1441
    %v1443 = vrot.slane %v1442, 1
    %v1444 = vadd.f32 %v1442, %v1443
    %v1445 = vadd.f32 %v1353, %v1369
    %v1446 = vrot.slane %v1445, 4
    %v1447 = vadd.f32 %v1445, %v1446
    %v1448 = vrot.slane %v1447, 2
    %v1449 = vadd.f32 %v1447, %v1448
    %v1450 = vrot.slane %v1449, 1
    %v1451 = vadd.f32 %v1449, %v1450
    %v1452 = vadd.f32 %v1354, %v1370
    %v1453 = vrot.slane %v1452, 4
    %v1454 = vadd.f32 %v1452, %v1453
    %v1455 = vrot.slane %v1454, 2
    %v1456 = vadd.f32 %v1454, %v1455
    %v1457 = vrot.slane %v1456, 1
    %v1458 = vadd.f32 %v1456, %v1457
    %v1459 = vadd.f32 %v1355, %v1371
    %v1460 = vrot.slane %v1459, 4
    %v1461 = vadd.f32 %v1459, %v1460
    %v1462 = vrot.slane %v1461, 2
    %v1463 = vadd.f32 %v1461, %v1462
    %v1464 = vrot.slane %v1463, 1
    %v1465 = vadd.f32 %v1463, %v1464
    %v1466 = vadd.f32 %v1356, %v1372
    %v1467 = vrot.slane %v1466, 4
    %v1468 = vadd.f32 %v1466, %v1467
    %v1469 = vrot.slane %v1468, 2
    %v1470 = vadd.f32 %v1468, %v1469
    %v1471 = vrot.slane %v1470, 1
    %v1472 = vadd.f32 %v1470, %v1471
    %v1473 = vadd.f32 %v1357, %v1373
    %v1474 = vrot.slane %v1473, 4
    %v1475 = vadd.f32 %v1473, %v1474
    %v1476 = vrot.slane %v1475, 2
    %v1477 = vadd.f32 %v1475, %v1476
    %v1478 = vrot.slane %v1477, 1
    %v1479 = vadd.f32 %v1477, %v1478
    %v1480 = vadd.f32 %v1358, %v1374
    %v1481 = vrot.slane %v1480, 4
    %v1482 = vadd.f32 %v1480, %v1481
    %v1483 = vrot.slane %v1482, 2
    %v1484 = vadd.f32 %v1482, %v1483
    %v1485 = vrot.slane %v1484, 1
    %v1486 = vadd.f32 %v1484, %v1485
    %v1503 = vcombine.low %v1381, %v1388
    %v1504 = vcombine.low %v1395, %v1402
    %v1505 = vcombine.low %v1409, %v1416
    %v1506 = vcombine.low %v1423, %v1430
    %v1508 = vunpack.c.l.s4 1966171168
    %v1509 = vunpack.c.0.s8 %v1508
    %v1510 = vlaneseq
    %v1511 = vshrl.u32 %v1510, 7
    %v1512 = vsub.s32 %v1509, %v1511
    %v1513 = vrot.slane %v1503, %v1512
    %v1515 = vunpack.c.l.s4 1966171168
    %v1516 = vunpack.c.0.s8 %v1515
    %v1517 = vlaneseq
    %v1518 = vshrl.u32 %v1517, 7
    %v1519 = vsub.s32 %v1516, %v1518
    %v1520 = vrot.slane %v1504, %v1519
    %v1522 = vunpack.c.l.s4 1966171168
    %v1523 = vunpack.c.0.s8 %v1522
    %v1524 = vlaneseq
    %v1525 = vshrl.u32 %v1524, 7
    %v1526 = vsub.s32 %v1523, %v1525
    %v1527 = vrot.slane %v1505, %v1526
    %v1529 = vunpack.c.l.s4 1966171168
    %v1530 = vunpack.c.0.s8 %v1529
    %v1531 = vlaneseq
    %v1532 = vshrl.u32 %v1531, 7
    %v1533 = vsub.s32 %v1530, %v1532
    %v1534 = vrot.slane %v1506, %v1533
    %v1535 = vcombine.low %v1513, %v1520
    %v1536 = vcombine.low %v1527, %v1534
    %v1538 = vunpack.c.l.s4 1966171168
    %v1539 = vunpack.c.0.s8 %v1538
    %v1540 = vlaneseq
    %v1541 = vshrl.u32 %v1540, 7
    %v1542 = vsub.s32 %v1539, %v1541
    %v1543 = vrot.slane %v1535, %v1542
    %v1545 = vunpack.c.l.s4 1966171168
    %v1546 = vunpack.c.0.s8 %v1545
    %v1547 = vlaneseq
    %v1548 = vshrl.u32 %v1547, 7
    %v1549 = vsub.s32 %v1546, %v1548
    %v1550 = vrot.slane %v1536, %v1549
    %v1551 = vcombine.low %v1543, %v1550
    %v1552 = vcombine.low %v1437, %v1444
    %v1553 = vcombine.low %v1451, %v1458
    %v1554 = vcombine.low %v1465, %v1472
    %v1555 = vcombine.low %v1479, %v1486
    %v1557 = vunpack.c.l.s4 1966171168
    %v1558 = vunpack.c.0.s8 %v1557
    %v1559 = vlaneseq
    %v1560 = vshrl.u32 %v1559, 7
    %v1561 = vsub.s32 %v1558, %v1560
    %v1562 = vrot.slane %v1552, %v1561
    %v1564 = vunpack.c.l.s4 1966171168
    %v1565 = vunpack.c.0.s8 %v1564
    %v1566 = vlaneseq
    %v1567 = vshrl.u32 %v1566, 7
    %v1568 = vsub.s32 %v1565, %v1567
    %v1569 = vrot.slane %v1553, %v1568
    %v1571 = vunpack.c.l.s4 1966171168
    %v1572 = vunpack.c.0.s8 %v1571
    %v1573 = vlaneseq
    %v1574 = vshrl.u32 %v1573, 7
    %v1575 = vsub.s32 %v1572, %v1574
    %v1576 = vrot.slane %v1554, %v1575
    %v1578 = vunpack.c.l.s4 1966171168
    %v1579 = vunpack.c.0.s8 %v1578
    %v1580 = vlaneseq
    %v1581 = vshrl.u32 %v1580, 7
    %v1582 = vsub.s32 %v1579, %v1581
    %v1583 = vrot.slane %v1555, %v1582
    %v1584 = vcombine.low %v1562, %v1569
    %v1585 = vcombine.low %v1576, %v1583
    %v1587 = vunpack.c.l.s4 1966171168
    %v1588 = vunpack.c.0.s8 %v1587
    %v1589 = vlaneseq
    %v1590 = vshrl.u32 %v1589, 7
    %v1591 = vsub.s32 %v1588, %v1590
    %v1592 = vrot.slane %v1584, %v1591
    %v1594 = vunpack.c.l.s4 1966171168
    %v1595 = vunpack.c.0.s8 %v1594
    %v1596 = vlaneseq
    %v1597 = vshrl.u32 %v1596, 7
    %v1598 = vsub.s32 %v1595, %v1597
    %v1599 = vrot.slane %v1585, %v1598
    %v1600 = vcombine.low %v1592, %v1599
    %1603 = vst [vmem:[%s5] sm:$0xff] %v1551
    %1604 = vst [vmem:[%s5 + $0x8] sm:$0xff] %v1600
    // Predicated region
    $region18: #{cgan_generator_forward.5} parent=1 // pred_check
      _
    $region19: #{cgan_generator_forward.5} parent=1 // pred_check_branch
      %1606 = sbr.rel (0) target = $region21
    $region20: #{cgan_generator_forward.5} parent=1 // pred_region
      _
    $region21: #{cgan_generator_forward.5} parent=1 // pred_fallthru
      _
    // Predicated region
    $region22: #{cgan_generator_forward.5} parent=1 // pred_check
      _
    $region23: #{cgan_generator_forward.5} parent=1 // pred_check_branch
      %1608 = sbr.rel (0) target = $region25
    $region24: #{cgan_generator_forward.5} parent=1 // pred_region
      _
    $region25: #{cgan_generator_forward.5} parent=1 // pred_fallthru
      _
    // Predicated region
    $region26: #{cgan_generator_forward.5} parent=1 // pred_check
      _
    $region27: #{cgan_generator_forward.5} parent=1 // pred_check_branch
      %1610 = sbr.rel (0) target = $region29
    $region28: #{cgan_generator_forward.5} parent=1 // pred_region
      _
    $region29: #{cgan_generator_forward.5} parent=1 // pred_fallthru
      _
    // Predicated region
    $region30: #{cgan_generator_forward.5} parent=1 // pred_check
      _
    $region31: #{cgan_generator_forward.5} parent=1 // pred_check_branch
      %1612 = sbr.rel (0) target = $region33
    $region32: #{cgan_generator_forward.5} parent=1 // pred_region
      _
    $region33: #{cgan_generator_forward.5} parent=1 // pred_fallthru
      _
    // Predicated region
    $region34: #{cgan_generator_forward.5} parent=1 // pred_check
      _
    $region35: #{cgan_generator_forward.5} parent=1 // pred_check_branch
      %1614 = sbr.rel (0) target = $region37
    $region36: #{cgan_generator_forward.5} parent=1 // pred_region
      _
    $region37: #{cgan_generator_forward.5} parent=1 // pred_fallthru
      _
    // Predicated region
    $region38: #{cgan_generator_forward.5} parent=1 // pred_check
      _
    $region39: #{cgan_generator_forward.5} parent=1 // pred_check_branch
      %1616 = sbr.rel (0) target = $region41
    $region40: #{cgan_generator_forward.5} parent=1 // pred_region
      _
    $region41: #{cgan_generator_forward.5} parent=1 // pred_fallthru
      _
    %1617 = vsyncpa [#allocation3], 1

// kernel: cgan_generator_forward.6
$region0: #{cgan_generator_forward.6}
  #allocation0 [shape = 'u32[]', space=smem, size = 0x4, offset = 0x4, fixed_abs, tag = 'smem constant byte address 0x4 - core index']
  #allocation1 [shape = 'u32[144,128]{1,0:T(1,128)}', space=vmem, size = 0x12000, scoped, tag = 'internal scratch']
  %s0 = inlined_call_operand.vmem [shape: bf16[64,512], index: 0, kind: input, shape index: {}]
  %s1 = inlined_call_operand.vmem [shape: bf16[512,256], index: 1, kind: input, shape index: {}]
  %s2 = inlined_call_operand.vmem [shape: f32[64,4], index: 2, kind: input, shape index: {}]
  %s3 = inlined_call_operand.vmem [shape: bf16[64,256], index: 3, kind: output, shape index: {0}]
  %s4 = inlined_call_operand.vmem [shape: f32[1,1,256], index: 4, kind: output, shape index: {1}]
  %s5 = inlined_call_operand.vmem [shape: f32[1,1,256], index: 5, kind: output, shape index: {2}]
  %6 = xla_tuple %s3, %s4, %s5
  %s7 = sld [smem:[#allocation0]]
  $region38: #{cgan_generator_forward.6} parent=0
    _
  %s9 = ssub.s32 1, %s7
  %s10 = scalar_select 0, %s9, %s7
  // Predicated region
  $region2: #{cgan_generator_forward.6} parent=0 // pred_check
    _
  $region3: #{cgan_generator_forward.6} parent=0 // pred_check_branch
    %12 = sbr.rel (0) target = $region5
  $region4: #{cgan_generator_forward.6} parent=0 // pred_region
    _
  $region5: #{cgan_generator_forward.6} parent=0 // pred_fallthru
    _
  // Predicated region
  $region6: #{cgan_generator_forward.6} parent=0 // pred_check
    _
  $region7: #{cgan_generator_forward.6} parent=0 // pred_check_branch
    %14 = sbr.rel (0) target = $region9
  $region8: #{cgan_generator_forward.6} parent=0 // pred_region
    _
  $region9: #{cgan_generator_forward.6} parent=0 // pred_fallthru
    _
  // Predicated region
  $region10: #{cgan_generator_forward.6} parent=0 // pred_check
    _
  $region11: #{cgan_generator_forward.6} parent=0 // pred_check_branch
    %16 = sbr.rel (0) target = $region13
  $region12: #{cgan_generator_forward.6} parent=0 // pred_region
    _
  $region13: #{cgan_generator_forward.6} parent=0 // pred_fallthru
    _
  %v17 = vld [vmem:[%s0] sm:$0xff]
  %v18 = vld [vmem:[%s0 + $0x8] sm:$0xff]
  %v19 = vld [vmem:[%s0 + $0x10] sm:$0xff]
  %v20 = vld [vmem:[%s0 + $0x18] sm:$0xff]
  %v21 = vld [vmem:[%s0 + $0x20] sm:$0xff]
  %v22 = vld [vmem:[%s0 + $0x28] sm:$0xff]
  %v23 = vld [vmem:[%s0 + $0x30] sm:$0xff]
  %v24 = vld [vmem:[%s0 + $0x38] sm:$0xff]
  %v25 = vld [vmem:[%s0 + $0x40] sm:$0xff]
  %v26 = vld [vmem:[%s0 + $0x48] sm:$0xff]
  %v27 = vld [vmem:[%s0 + $0x50] sm:$0xff]
  %v28 = vld [vmem:[%s0 + $0x58] sm:$0xff]
  %v29 = vld [vmem:[%s0 + $0x60] sm:$0xff]
  %v30 = vld [vmem:[%s0 + $0x68] sm:$0xff]
  %v31 = vld [vmem:[%s0 + $0x70] sm:$0xff]
  %v32 = vld [vmem:[%s0 + $0x78] sm:$0xff]
  %v33 = vld [vmem:[%s1] sm:$0xff]
  %v34 = vld [vmem:[%s1 + $0x8] sm:$0xff]
  %v35 = vld [vmem:[%s1 + $0x10] sm:$0xff]
  %v36 = vld [vmem:[%s1 + $0x18] sm:$0xff]
  %v37 = vld [vmem:[%s1 + $0x20] sm:$0xff]
  %v38 = vld [vmem:[%s1 + $0x28] sm:$0xff]
  %v39 = vld [vmem:[%s1 + $0x30] sm:$0xff]
  %v40 = vld [vmem:[%s1 + $0x38] sm:$0xff]
  %v41 = vld [vmem:[%s1 + $0x40] sm:$0xff]
  %v42 = vld [vmem:[%s1 + $0x48] sm:$0xff]
  %v43 = vld [vmem:[%s1 + $0x50] sm:$0xff]
  %v44 = vld [vmem:[%s1 + $0x58] sm:$0xff]
  %v45 = vld [vmem:[%s1 + $0x60] sm:$0xff]
  %v46 = vld [vmem:[%s1 + $0x68] sm:$0xff]
  %v47 = vld [vmem:[%s1 + $0x70] sm:$0xff]
  %v48 = vld [vmem:[%s1 + $0x78] sm:$0xff]
  %v49 = vld [vmem:[%s1 + $0x80] sm:$0xff]
  %v50 = vld [vmem:[%s1 + $0x88] sm:$0xff]
  %v51 = vld [vmem:[%s1 + $0x90] sm:$0xff]
  %v52 = vld [vmem:[%s1 + $0x98] sm:$0xff]
  %v53 = vld [vmem:[%s1 + $0xa0] sm:$0xff]
  %v54 = vld [vmem:[%s1 + $0xa8] sm:$0xff]
  %v55 = vld [vmem:[%s1 + $0xb0] sm:$0xff]
  %v56 = vld [vmem:[%s1 + $0xb8] sm:$0xff]
  %v57 = vld [vmem:[%s1 + $0xc0] sm:$0xff]
  %v58 = vld [vmem:[%s1 + $0xc8] sm:$0xff]
  %v59 = vld [vmem:[%s1 + $0xd0] sm:$0xff]
  %v60 = vld [vmem:[%s1 + $0xd8] sm:$0xff]
  %v61 = vld [vmem:[%s1 + $0xe0] sm:$0xff]
  %v62 = vld [vmem:[%s1 + $0xe8] sm:$0xff]
  %v63 = vld [vmem:[%s1 + $0xf0] sm:$0xff]
  %v64 = vld [vmem:[%s1 + $0xf8] sm:$0xff]
  %v65 = vld [vmem:[%s1 + $0x100] sm:$0xff]
  %v66 = vld [vmem:[%s1 + $0x108] sm:$0xff]
  %v67 = vld [vmem:[%s1 + $0x110] sm:$0xff]
  %v68 = vld [vmem:[%s1 + $0x118] sm:$0xff]
  %v69 = vld [vmem:[%s1 + $0x120] sm:$0xff]
  %v70 = vld [vmem:[%s1 + $0x128] sm:$0xff]
  %v71 = vld [vmem:[%s1 + $0x130] sm:$0xff]
  %v72 = vld [vmem:[%s1 + $0x138] sm:$0xff]
  %v73 = vld [vmem:[%s1 + $0x140] sm:$0xff]
  %v74 = vld [vmem:[%s1 + $0x148] sm:$0xff]
  %v75 = vld [vmem:[%s1 + $0x150] sm:$0xff]
  %v76 = vld [vmem:[%s1 + $0x158] sm:$0xff]
  %v77 = vld [vmem:[%s1 + $0x160] sm:$0xff]
  %v78 = vld [vmem:[%s1 + $0x168] sm:$0xff]
  %v79 = vld [vmem:[%s1 + $0x170] sm:$0xff]
  %v80 = vld [vmem:[%s1 + $0x178] sm:$0xff]
  %v81 = vld [vmem:[%s1 + $0x180] sm:$0xff]
  %v82 = vld [vmem:[%s1 + $0x188] sm:$0xff]
  %v83 = vld [vmem:[%s1 + $0x190] sm:$0xff]
  %v84 = vld [vmem:[%s1 + $0x198] sm:$0xff]
  %v85 = vld [vmem:[%s1 + $0x1a0] sm:$0xff]
  %v86 = vld [vmem:[%s1 + $0x1a8] sm:$0xff]
  %v87 = vld [vmem:[%s1 + $0x1b0] sm:$0xff]
  %v88 = vld [vmem:[%s1 + $0x1b8] sm:$0xff]
  %v89 = vld [vmem:[%s1 + $0x1c0] sm:$0xff]
  %v90 = vld [vmem:[%s1 + $0x1c8] sm:$0xff]
  %v91 = vld [vmem:[%s1 + $0x1d0] sm:$0xff]
  %v92 = vld [vmem:[%s1 + $0x1d8] sm:$0xff]
  %v93 = vld [vmem:[%s1 + $0x1e0] sm:$0xff]
  %v94 = vld [vmem:[%s1 + $0x1e8] sm:$0xff]
  %v95 = vld [vmem:[%s1 + $0x1f0] sm:$0xff]
  %v96 = vld [vmem:[%s1 + $0x1f8] sm:$0xff]
  %v113 = vunpack.c.l.b16 %v17
  %v114 = vunpack.c.h.b16 %v17
  %v115 = vunpack.c.l.b16 %v18
  %v116 = vunpack.c.h.b16 %v18
  %v117 = vunpack.c.l.b16 %v19
  %v118 = vunpack.c.h.b16 %v19
  %v119 = vunpack.c.l.b16 %v20
  %v120 = vunpack.c.h.b16 %v20
  %v121 = vunpack.c.l.b16 %v21
  %v122 = vunpack.c.h.b16 %v21
  %v123 = vunpack.c.l.b16 %v22
  %v124 = vunpack.c.h.b16 %v22
  %v125 = vunpack.c.l.b16 %v23
  %v126 = vunpack.c.h.b16 %v23
  %v127 = vunpack.c.l.b16 %v24
  %v128 = vunpack.c.h.b16 %v24
  %v129 = vunpack.c.l.b16 %v25
  %v130 = vunpack.c.h.b16 %v25
  %v131 = vunpack.c.l.b16 %v26
  %v132 = vunpack.c.h.b16 %v26
  %v133 = vunpack.c.l.b16 %v27
  %v134 = vunpack.c.h.b16 %v27
  %v135 = vunpack.c.l.b16 %v28
  %v136 = vunpack.c.h.b16 %v28
  %v137 = vunpack.c.l.b16 %v29
  %v138 = vunpack.c.h.b16 %v29
  %v139 = vunpack.c.l.b16 %v30
  %v140 = vunpack.c.h.b16 %v30
  %v141 = vunpack.c.l.b16 %v31
  %v142 = vunpack.c.h.b16 %v31
  %v143 = vunpack.c.l.b16 %v32
  %v144 = vunpack.c.h.b16 %v32
  %v145 = vpack.c.b16 %v117, %v113
  %v146 = vpack.c.b16 %v118, %v114
  %v147 = vpack.c.b16 %v119, %v115
  %v148 = vpack.c.b16 %v120, %v116
  %v149 = vpack.c.b16 %v125, %v121
  %v150 = vpack.c.b16 %v126, %v122
  %v151 = vpack.c.b16 %v127, %v123
  %v152 = vpack.c.b16 %v128, %v124
  %v153 = vpack.c.b16 %v133, %v129
  %v154 = vpack.c.b16 %v134, %v130
  %v155 = vpack.c.b16 %v135, %v131
  %v156 = vpack.c.b16 %v136, %v132
  %v157 = vpack.c.b16 %v141, %v137
  %v158 = vpack.c.b16 %v142, %v138
  %v159 = vpack.c.b16 %v143, %v139
  %v160 = vpack.c.b16 %v144, %v140
  %v241 = vunpack.c.l.b16 %v33
  %v242 = vunpack.c.h.b16 %v33
  %v243 = vunpack.c.l.b16 %v34
  %v244 = vunpack.c.h.b16 %v34
  %v245 = vunpack.c.l.b16 %v35
  %v246 = vunpack.c.h.b16 %v35
  %v247 = vunpack.c.l.b16 %v36
  %v248 = vunpack.c.h.b16 %v36
  %v249 = vunpack.c.l.b16 %v37
  %v250 = vunpack.c.h.b16 %v37
  %v251 = vunpack.c.l.b16 %v38
  %v252 = vunpack.c.h.b16 %v38
  %v253 = vunpack.c.l.b16 %v39
  %v254 = vunpack.c.h.b16 %v39
  %v255 = vunpack.c.l.b16 %v40
  %v256 = vunpack.c.h.b16 %v40
  %v257 = vunpack.c.l.b16 %v41
  %v258 = vunpack.c.h.b16 %v41
  %v259 = vunpack.c.l.b16 %v42
  %v260 = vunpack.c.h.b16 %v42
  %v261 = vunpack.c.l.b16 %v43
  %v262 = vunpack.c.h.b16 %v43
  %v263 = vunpack.c.l.b16 %v44
  %v264 = vunpack.c.h.b16 %v44
  %v265 = vunpack.c.l.b16 %v45
  %v266 = vunpack.c.h.b16 %v45
  %v267 = vunpack.c.l.b16 %v46
  %v268 = vunpack.c.h.b16 %v46
  %v269 = vunpack.c.l.b16 %v47
  %v270 = vunpack.c.h.b16 %v47
  %v271 = vunpack.c.l.b16 %v48
  %v272 = vunpack.c.h.b16 %v48
  %v273 = vunpack.c.l.b16 %v49
  %v274 = vunpack.c.h.b16 %v49
  %v275 = vunpack.c.l.b16 %v50
  %v276 = vunpack.c.h.b16 %v50
  %v277 = vunpack.c.l.b16 %v51
  %v278 = vunpack.c.h.b16 %v51
  %v279 = vunpack.c.l.b16 %v52
  %v280 = vunpack.c.h.b16 %v52
  %v281 = vunpack.c.l.b16 %v53
  %v282 = vunpack.c.h.b16 %v53
  %v283 = vunpack.c.l.b16 %v54
  %v284 = vunpack.c.h.b16 %v54
  %v285 = vunpack.c.l.b16 %v55
  %v286 = vunpack.c.h.b16 %v55
  %v287 = vunpack.c.l.b16 %v56
  %v288 = vunpack.c.h.b16 %v56
  %v289 = vunpack.c.l.b16 %v57
  %v290 = vunpack.c.h.b16 %v57
  %v291 = vunpack.c.l.b16 %v58
  %v292 = vunpack.c.h.b16 %v58
  %v293 = vunpack.c.l.b16 %v59
  %v294 = vunpack.c.h.b16 %v59
  %v295 = vunpack.c.l.b16 %v60
  %v296 = vunpack.c.h.b16 %v60
  %v297 = vunpack.c.l.b16 %v61
  %v298 = vunpack.c.h.b16 %v61
  %v299 = vunpack.c.l.b16 %v62
  %v300 = vunpack.c.h.b16 %v62
  %v301 = vunpack.c.l.b16 %v63
  %v302 = vunpack.c.h.b16 %v63
  %v303 = vunpack.c.l.b16 %v64
  %v304 = vunpack.c.h.b16 %v64
  %v305 = vunpack.c.l.b16 %v65
  %v306 = vunpack.c.h.b16 %v65
  %v307 = vunpack.c.l.b16 %v66
  %v308 = vunpack.c.h.b16 %v66
  %v309 = vunpack.c.l.b16 %v67
  %v310 = vunpack.c.h.b16 %v67
  %v311 = vunpack.c.l.b16 %v68
  %v312 = vunpack.c.h.b16 %v68
  %v313 = vunpack.c.l.b16 %v69
  %v314 = vunpack.c.h.b16 %v69
  %v315 = vunpack.c.l.b16 %v70
  %v316 = vunpack.c.h.b16 %v70
  %v317 = vunpack.c.l.b16 %v71
  %v318 = vunpack.c.h.b16 %v71
  %v319 = vunpack.c.l.b16 %v72
  %v320 = vunpack.c.h.b16 %v72
  %v321 = vunpack.c.l.b16 %v73
  %v322 = vunpack.c.h.b16 %v73
  %v323 = vunpack.c.l.b16 %v74
  %v324 = vunpack.c.h.b16 %v74
  %v325 = vunpack.c.l.b16 %v75
  %v326 = vunpack.c.h.b16 %v75
  %v327 = vunpack.c.l.b16 %v76
  %v328 = vunpack.c.h.b16 %v76
  %v329 = vunpack.c.l.b16 %v77
  %v330 = vunpack.c.h.b16 %v77
  %v331 = vunpack.c.l.b16 %v78
  %v332 = vunpack.c.h.b16 %v78
  %v333 = vunpack.c.l.b16 %v79
  %v334 = vunpack.c.h.b16 %v79
  %v335 = vunpack.c.l.b16 %v80
  %v336 = vunpack.c.h.b16 %v80
  %v337 = vunpack.c.l.b16 %v81
  %v338 = vunpack.c.h.b16 %v81
  %v339 = vunpack.c.l.b16 %v82
  %v340 = vunpack.c.h.b16 %v82
  %v341 = vunpack.c.l.b16 %v83
  %v342 = vunpack.c.h.b16 %v83
  %v343 = vunpack.c.l.b16 %v84
  %v344 = vunpack.c.h.b16 %v84
  %v345 = vunpack.c.l.b16 %v85
  %v346 = vunpack.c.h.b16 %v85
  %v347 = vunpack.c.l.b16 %v86
  %v348 = vunpack.c.h.b16 %v86
  %v349 = vunpack.c.l.b16 %v87
  %v350 = vunpack.c.h.b16 %v87
  %v351 = vunpack.c.l.b16 %v88
  %v352 = vunpack.c.h.b16 %v88
  %v353 = vunpack.c.l.b16 %v89
  %v354 = vunpack.c.h.b16 %v89
  %v355 = vunpack.c.l.b16 %v90
  %v356 = vunpack.c.h.b16 %v90
  %v357 = vunpack.c.l.b16 %v91
  %v358 = vunpack.c.h.b16 %v91
  %v359 = vunpack.c.l.b16 %v92
  %v360 = vunpack.c.h.b16 %v92
  %v361 = vunpack.c.l.b16 %v93
  %v362 = vunpack.c.h.b16 %v93
  %v363 = vunpack.c.l.b16 %v94
  %v364 = vunpack.c.h.b16 %v94
  %v365 = vunpack.c.l.b16 %v95
  %v366 = vunpack.c.h.b16 %v95
  %v367 = vunpack.c.l.b16 %v96
  %v368 = vunpack.c.h.b16 %v96
  %v369 = vpack.c.b16 %v243, %v241
  %v370 = vpack.c.b16 %v244, %v242
  %v371 = vpack.c.b16 %v247, %v245
  %v372 = vpack.c.b16 %v248, %v246
  %v373 = vpack.c.b16 %v251, %v249
  %v374 = vpack.c.b16 %v252, %v250
  %v375 = vpack.c.b16 %v255, %v253
  %v376 = vpack.c.b16 %v256, %v254
  %v377 = vpack.c.b16 %v259, %v257
  %v378 = vpack.c.b16 %v260, %v258
  %v379 = vpack.c.b16 %v263, %v261
  %v380 = vpack.c.b16 %v264, %v262
  %v381 = vpack.c.b16 %v267, %v265
  %v382 = vpack.c.b16 %v268, %v266
  %v383 = vpack.c.b16 %v271, %v269
  %v384 = vpack.c.b16 %v272, %v270
  %v385 = vpack.c.b16 %v275, %v273
  %v386 = vpack.c.b16 %v276, %v274
  %v387 = vpack.c.b16 %v279, %v277
  %v388 = vpack.c.b16 %v280, %v278
  %v389 = vpack.c.b16 %v283, %v281
  %v390 = vpack.c.b16 %v284, %v282
  %v391 = vpack.c.b16 %v287, %v285
  %v392 = vpack.c.b16 %v288, %v286
  %v393 = vpack.c.b16 %v291, %v289
  %v394 = vpack.c.b16 %v292, %v290
  %v395 = vpack.c.b16 %v295, %v293
  %v396 = vpack.c.b16 %v296, %v294
  %v397 = vpack.c.b16 %v299, %v297
  %v398 = vpack.c.b16 %v300, %v298
  %v399 = vpack.c.b16 %v303, %v301
  %v400 = vpack.c.b16 %v304, %v302
  %v401 = vpack.c.b16 %v307, %v305
  %v402 = vpack.c.b16 %v308, %v306
  %v403 = vpack.c.b16 %v311, %v309
  %v404 = vpack.c.b16 %v312, %v310
  %v405 = vpack.c.b16 %v315, %v313
  %v406 = vpack.c.b16 %v316, %v314
  %v407 = vpack.c.b16 %v319, %v317
  %v408 = vpack.c.b16 %v320, %v318
  %v409 = vpack.c.b16 %v323, %v321
  %v410 = vpack.c.b16 %v324, %v322
  %v411 = vpack.c.b16 %v327, %v325
  %v412 = vpack.c.b16 %v328, %v326
  %v413 = vpack.c.b16 %v331, %v329
  %v414 = vpack.c.b16 %v332, %v330
  %v415 = vpack.c.b16 %v335, %v333
  %v416 = vpack.c.b16 %v336, %v334
  %v417 = vpack.c.b16 %v339, %v337
  %v418 = vpack.c.b16 %v340, %v338
  %v419 = vpack.c.b16 %v343, %v341
  %v420 = vpack.c.b16 %v344, %v342
  %v421 = vpack.c.b16 %v347, %v345
  %v422 = vpack.c.b16 %v348, %v346
  %v423 = vpack.c.b16 %v351, %v349
  %v424 = vpack.c.b16 %v352, %v350
  %v425 = vpack.c.b16 %v355, %v353
  %v426 = vpack.c.b16 %v356, %v354
  %v427 = vpack.c.b16 %v359, %v357
  %v428 = vpack.c.b16 %v360, %v358
  %v429 = vpack.c.b16 %v363, %v361
  %v430 = vpack.c.b16 %v364, %v362
  %v431 = vpack.c.b16 %v367, %v365
  %v432 = vpack.c.b16 %v368, %v366
  %497 = vmatprep.subr.bf16.mxu0 %v370
  %498 = vmatpush1.bf16.msra.mxu0 %v369
  %499 = vmatprep.subr.bf16.mxu0 %v372
  %500 = vmatpush1.bf16.msra.mxu0 %v371
  %501 = vmatprep.subr.bf16.mxu0 %v374
  %502 = vmatpush1.bf16.msra.mxu0 %v373
  %503 = vmatprep.subr.bf16.mxu0 %v376
  %504 = vmatpush1.bf16.msra.mxu0 %v375
  %505 = vmatprep.subr.bf16.mxu0 %v378
  %506 = vmatpush1.bf16.msra.mxu0 %v377
  %507 = vmatprep.subr.bf16.mxu0 %v380
  %508 = vmatpush1.bf16.msra.mxu0 %v379
  %509 = vmatprep.subr.bf16.mxu0 %v382
  %510 = vmatpush1.bf16.msra.mxu0 %v381
  %511 = vmatprep.subr.bf16.mxu0 %v384
  %512 = vmatpush1.bf16.msra.mxu0 %v383
  %513 = vmatprep.subr.bf16.mxu0 %v386
  %514 = vmatpush1.bf16.msra.mxu0 %v385
  %515 = vmatprep.subr.bf16.mxu0 %v388
  %516 = vmatpush1.bf16.msra.mxu0 %v387
  %517 = vmatprep.subr.bf16.mxu0 %v390
  %518 = vmatpush1.bf16.msra.mxu0 %v389
  %519 = vmatprep.subr.bf16.mxu0 %v392
  %520 = vmatpush1.bf16.msra.mxu0 %v391
  %521 = vmatprep.subr.bf16.mxu0 %v394
  %522 = vmatpush1.bf16.msra.mxu0 %v393
  %523 = vmatprep.subr.bf16.mxu0 %v396
  %524 = vmatpush1.bf16.msra.mxu0 %v395
  %525 = vmatprep.subr.bf16.mxu0 %v398
  %526 = vmatpush1.bf16.msra.mxu0 %v397
  %527 = vmatprep.subr.bf16.mxu0 %v400
  %528 = vmatpush1.bf16.msra.mxu0 %v399
  %529 = vmatprep.mubr.bf16.mxu0 %v146
  %530 = vmatmul.mubr.bf16.gmra.mrb[0].mxu0 %v145
  %v531 = vpop.f32.mrb[0].mxu0
  %v532 = vadd.f32 0.0, %v531
  %v533 = vpop.f32.mrb[0].mxu0
  %v534 = vadd.f32 0.0, %v533
  %v535 = vpop.f32.mrb[0].mxu0
  %v536 = vadd.f32 0.0, %v535
  %v537 = vpop.f32.mrb[0].mxu0
  %v538 = vadd.f32 0.0, %v537
  %539 = vmatprep.mubr.bf16.mxu0 %v150
  %540 = vmatmul.mubr.bf16.gmra.mrb[0].mxu0 %v149
  %v541 = vpop.f32.mrb[0].mxu0
  %v542 = vadd.f32 0.0, %v541
  %v543 = vpop.f32.mrb[0].mxu0
  %v544 = vadd.f32 0.0, %v543
  %v545 = vpop.f32.mrb[0].mxu0
  %v546 = vadd.f32 0.0, %v545
  %v547 = vpop.f32.mrb[0].mxu0
  %v548 = vadd.f32 0.0, %v547
  %549 = vmatprep.mubr.bf16.mxu0 %v154
  %550 = vmatmul.mubr.bf16.gmra.mrb[0].mxu0 %v153
  %v551 = vpop.f32.mrb[0].mxu0
  %v552 = vadd.f32 0.0, %v551
  %v553 = vpop.f32.mrb[0].mxu0
  %v554 = vadd.f32 0.0, %v553
  %v555 = vpop.f32.mrb[0].mxu0
  %v556 = vadd.f32 0.0, %v555
  %v557 = vpop.f32.mrb[0].mxu0
  %v558 = vadd.f32 0.0, %v557
  %559 = vmatprep.mubr.bf16.mxu0 %v158
  %560 = vmatmul.mubr.bf16.gmra.mrb[0].mxu0 %v157
  %v561 = vpop.f32.mrb[0].mxu0
  %v562 = vadd.f32 0.0, %v561
  %v563 = vpop.f32.mrb[0].mxu0
  %v564 = vadd.f32 0.0, %v563
  %v565 = vpop.f32.mrb[0].mxu0
  %v566 = vadd.f32 0.0, %v565
  %v567 = vpop.f32.mrb[0].mxu0
  %v568 = vadd.f32 0.0, %v567
  %569 = vdwg.mxu0
  %570 = vmatprep.subr.bf16.mxu0 %v402
  %571 = vmatpush1.bf16.msra.mxu0 %v401
  %572 = vmatprep.subr.bf16.mxu0 %v404
  %573 = vmatpush1.bf16.msra.mxu0 %v403
  %574 = vmatprep.subr.bf16.mxu0 %v406
  %575 = vmatpush1.bf16.msra.mxu0 %v405
  %576 = vmatprep.subr.bf16.mxu0 %v408
  %577 = vmatpush1.bf16.msra.mxu0 %v407
  %578 = vmatprep.subr.bf16.mxu0 %v410
  %579 = vmatpush1.bf16.msra.mxu0 %v409
  %580 = vmatprep.subr.bf16.mxu0 %v412
  %581 = vmatpush1.bf16.msra.mxu0 %v411
  %582 = vmatprep.subr.bf16.mxu0 %v414
  %583 = vmatpush1.bf16.msra.mxu0 %v413
  %584 = vmatprep.subr.bf16.mxu0 %v416
  %585 = vmatpush1.bf16.msra.mxu0 %v415
  %586 = vmatprep.subr.bf16.mxu0 %v418
  %587 = vmatpush1.bf16.msra.mxu0 %v417
  %588 = vmatprep.subr.bf16.mxu0 %v420
  %589 = vmatpush1.bf16.msra.mxu0 %v419
  %590 = vmatprep.subr.bf16.mxu0 %v422
  %591 = vmatpush1.bf16.msra.mxu0 %v421
  %592 = vmatprep.subr.bf16.mxu0 %v424
  %593 = vmatpush1.bf16.msra.mxu0 %v423
  %594 = vmatprep.subr.bf16.mxu0 %v426
  %595 = vmatpush1.bf16.msra.mxu0 %v425
  %596 = vmatprep.subr.bf16.mxu0 %v428
  %597 = vmatpush1.bf16.msra.mxu0 %v427
  %598 = vmatprep.subr.bf16.mxu0 %v430
  %599 = vmatpush1.bf16.msra.mxu0 %v429
  %600 = vmatprep.subr.bf16.mxu0 %v432
  %601 = vmatpush1.bf16.msra.mxu0 %v431
  %602 = vmatprep.mubr.bf16.mxu0 %v148
  %603 = vmatmul.mubr.bf16.gmra.mrb[0].mxu0 %v147
  %v604 = vpop.f32.mrb[0].mxu0
  %v605 = vadd.f32 %v532, %v604
  %v606 = vpop.f32.mrb[0].mxu0
  %v607 = vadd.f32 %v534, %v606
  %v608 = vpop.f32.mrb[0].mxu0
  %v609 = vadd.f32 %v536, %v608
  %v610 = vpop.f32.mrb[0].mxu0
  %v611 = vadd.f32 %v538, %v610
  %612 = vmatprep.mubr.bf16.mxu0 %v152
  %613 = vmatmul.mubr.bf16.gmra.mrb[0].mxu0 %v151
  %v614 = vpop.f32.mrb[0].mxu0
  %v615 = vadd.f32 %v542, %v614
  %v616 = vpop.f32.mrb[0].mxu0
  %v617 = vadd.f32 %v544, %v616
  %v618 = vpop.f32.mrb[0].mxu0
  %v619 = vadd.f32 %v546, %v618
  %v620 = vpop.f32.mrb[0].mxu0
  %v621 = vadd.f32 %v548, %v620
  %622 = vmatprep.mubr.bf16.mxu0 %v156
  %623 = vmatmul.mubr.bf16.gmra.mrb[0].mxu0 %v155
  %v624 = vpop.f32.mrb[0].mxu0
  %v625 = vadd.f32 %v552, %v624
  %v626 = vpop.f32.mrb[0].mxu0
  %v627 = vadd.f32 %v554, %v626
  %v628 = vpop.f32.mrb[0].mxu0
  %v629 = vadd.f32 %v556, %v628
  %v630 = vpop.f32.mrb[0].mxu0
  %v631 = vadd.f32 %v558, %v630
  %632 = vmatprep.mubr.bf16.mxu0 %v160
  %633 = vmatmul.mubr.bf16.gmra.mrb[0].mxu0 %v159
  %v634 = vpop.f32.mrb[0].mxu0
  %v635 = vadd.f32 %v562, %v634
  %v636 = vpop.f32.mrb[0].mxu0
  %v637 = vadd.f32 %v564, %v636
  %v638 = vpop.f32.mrb[0].mxu0
  %v639 = vadd.f32 %v566, %v638
  %v640 = vpop.f32.mrb[0].mxu0
  %v641 = vadd.f32 %v568, %v640
  %642 = vdwg.mxu0
  %v643 = vpack.c.bf16 %v609, %v605
  %v644 = vpack.c.bf16 %v611, %v607
  %v645 = vpack.c.bf16 %v619, %v615
  %v646 = vpack.c.bf16 %v621, %v617
  %v647 = vpack.c.bf16 %v629, %v625
  %v648 = vpack.c.bf16 %v631, %v627
  %v649 = vpack.c.bf16 %v639, %v635
  %v650 = vpack.c.bf16 %v641, %v637
  %v659 = vunpack.c.l.b16 %v643
  %v660 = vunpack.c.l.b16 %v644
  %v661 = vunpack.c.h.b16 %v643
  %v662 = vunpack.c.h.b16 %v644
  %v663 = vunpack.c.l.b16 %v645
  %v664 = vunpack.c.l.b16 %v646
  %v665 = vunpack.c.h.b16 %v645
  %v666 = vunpack.c.h.b16 %v646
  %v667 = vunpack.c.l.b16 %v647
  %v668 = vunpack.c.l.b16 %v648
  %v669 = vunpack.c.h.b16 %v647
  %v670 = vunpack.c.h.b16 %v648
  %v671 = vunpack.c.l.b16 %v649
  %v672 = vunpack.c.l.b16 %v650
  %v673 = vunpack.c.h.b16 %v649
  %v674 = vunpack.c.h.b16 %v650
  %v675 = vpack.c.b16 %v660, %v659
  %v676 = vpack.c.b16 %v662, %v661
  %v677 = vpack.c.b16 %v664, %v663
  %v678 = vpack.c.b16 %v666, %v665
  %v679 = vpack.c.b16 %v668, %v667
  %v680 = vpack.c.b16 %v670, %v669
  %v681 = vpack.c.b16 %v672, %v671
  %v682 = vpack.c.b16 %v674, %v673
  %691 = vst [vmem:[%s3] sm:$0xff] %v675
  %692 = vst [vmem:[%s3 + $0x8] sm:$0xff] %v676
  %693 = vst [vmem:[%s3 + $0x10] sm:$0xff] %v677
  %694 = vst [vmem:[%s3 + $0x18] sm:$0xff] %v678
  %695 = vst [vmem:[%s3 + $0x20] sm:$0xff] %v679
  %696 = vst [vmem:[%s3 + $0x28] sm:$0xff] %v680
  %697 = vst [vmem:[%s3 + $0x30] sm:$0xff] %v681
  %698 = vst [vmem:[%s3 + $0x38] sm:$0xff] %v682
  %v699 = vlaneseq
  %v700 = vand.u32 %v699, 127
  %v701 = vadd.s32 %v700, 128
  %v702 = vld [vmem:[%s2] sm:$0xff]
  %v703 = vld [vmem:[%s2 + $0x8] sm:$0xff]
  %v704 = vld [vmem:[%s2 + $0x10] sm:$0xff]
  %v705 = vld [vmem:[%s2 + $0x18] sm:$0xff]
  %v706 = vld [vmem:[%s2 + $0x20] sm:$0xff]
  %v707 = vld [vmem:[%s2 + $0x28] sm:$0xff]
  %v708 = vld [vmem:[%s2 + $0x30] sm:$0xff]
  %v709 = vld [vmem:[%s2 + $0x38] sm:$0xff]
  %vm710 = vcmp.lt.s32.totalorder %v700, 64
  %vm711 = vcmp.lt.s32.totalorder %v701, 64
  %vm712 = vcmp.lt.s32.totalorder %v700, 128
  %vm713 = vcmp.lt.s32.totalorder %v701, 128
  %vm714 = vcmp.lt.s32.totalorder %v700, 192
  %vm715 = vcmp.lt.s32.totalorder %v701, 192
  %v716 = vsel %vm714, 1, 0
  %v717 = vsel %vm715, 1, 0
  %vm718 = vcmp.eq.s32.totalorder %v716, 1
  %vm719 = vcmp.eq.s32.totalorder %v717, 1
  %721 = vset.pattern.permute.xlu0 2
  %722 = vperm.xlu0 %721, %v702
  %v723 = vpop.permute.xlu0 %722
  %726 = vset.pattern.permute.xlu0 2
  %727 = vperm.xlu0 %726, %v703
  %v728 = vpop.permute.xlu0 %727
  %731 = vset.pattern.permute.xlu0 2
  %732 = vperm.xlu0 %731, %v704
  %v733 = vpop.permute.xlu0 %732
  %736 = vset.pattern.permute.xlu0 2
  %737 = vperm.xlu0 %736, %v705
  %v738 = vpop.permute.xlu0 %737
  %741 = vset.pattern.permute.xlu0 2
  %742 = vperm.xlu0 %741, %v706
  %v743 = vpop.permute.xlu0 %742
  %746 = vset.pattern.permute.xlu0 2
  %747 = vperm.xlu0 %746, %v707
  %v748 = vpop.permute.xlu0 %747
  %751 = vset.pattern.permute.xlu0 2
  %752 = vperm.xlu0 %751, %v708
  %v753 = vpop.permute.xlu0 %752
  %756 = vset.pattern.permute.xlu0 2
  %757 = vperm.xlu0 %756, %v709
  %v758 = vpop.permute.xlu0 %757
  %760 = vset.pattern.permute.xlu0 3
  %761 = vperm.xlu0 %760, %v702
  %v762 = vpop.permute.xlu0 %761
  %764 = vset.pattern.permute.xlu0 3
  %765 = vperm.xlu0 %764, %v703
  %v766 = vpop.permute.xlu0 %765
  %768 = vset.pattern.permute.xlu0 3
  %769 = vperm.xlu0 %768, %v704
  %v770 = vpop.permute.xlu0 %769
  %772 = vset.pattern.permute.xlu0 3
  %773 = vperm.xlu0 %772, %v705
  %v774 = vpop.permute.xlu0 %773
  %776 = vset.pattern.permute.xlu0 3
  %777 = vperm.xlu0 %776, %v706
  %v778 = vpop.permute.xlu0 %777
  %780 = vset.pattern.permute.xlu0 3
  %781 = vperm.xlu0 %780, %v707
  %v782 = vpop.permute.xlu0 %781
  %784 = vset.pattern.permute.xlu0 3
  %785 = vperm.xlu0 %784, %v708
  %v786 = vpop.permute.xlu0 %785
  %788 = vset.pattern.permute.xlu0 3
  %789 = vperm.xlu0 %788, %v709
  %v790 = vpop.permute.xlu0 %789
  %v792 = vsel %vm718, %v723, %v762
  %v793 = vsel %vm719, %v723, %v762
  %v794 = vsel %vm718, %v728, %v766
  %v795 = vsel %vm719, %v728, %v766
  %v796 = vsel %vm718, %v733, %v770
  %v797 = vsel %vm719, %v733, %v770
  %v798 = vsel %vm718, %v738, %v774
  %v799 = vsel %vm719, %v738, %v774
  %v800 = vsel %vm718, %v743, %v778
  %v801 = vsel %vm719, %v743, %v778
  %v802 = vsel %vm718, %v748, %v782
  %v803 = vsel %vm719, %v748, %v782
  %v804 = vsel %vm718, %v753, %v786
  %v805 = vsel %vm719, %v753, %v786
  %v806 = vsel %vm718, %v758, %v790
  %v807 = vsel %vm719, %v758, %v790
  %v808 = vsel %vm712, 1, 0
  %v809 = vsel %vm713, 1, 0
  %vm810 = vcmp.eq.s32.totalorder %v808, 1
  %vm811 = vcmp.eq.s32.totalorder %v809, 1
  %812 = vset.pattern.permute.xlu0 1
  %813 = vperm.xlu0 %812, %v702
  %v814 = vpop.permute.xlu0 %813
  %816 = vset.pattern.permute.xlu0 1
  %817 = vperm.xlu0 %816, %v703
  %v818 = vpop.permute.xlu0 %817
  %820 = vset.pattern.permute.xlu0 1
  %821 = vperm.xlu0 %820, %v704
  %v822 = vpop.permute.xlu0 %821
  %824 = vset.pattern.permute.xlu0 1
  %825 = vperm.xlu0 %824, %v705
  %v826 = vpop.permute.xlu0 %825
  %828 = vset.pattern.permute.xlu0 1
  %829 = vperm.xlu0 %828, %v706
  %v830 = vpop.permute.xlu0 %829
  %832 = vset.pattern.permute.xlu0 1
  %833 = vperm.xlu0 %832, %v707
  %v834 = vpop.permute.xlu0 %833
  %836 = vset.pattern.permute.xlu0 1
  %837 = vperm.xlu0 %836, %v708
  %v838 = vpop.permute.xlu0 %837
  %840 = vset.pattern.permute.xlu0 1
  %841 = vperm.xlu0 %840, %v709
  %v842 = vpop.permute.xlu0 %841
  %v844 = vsel %vm810, %v814, %v792
  %v845 = vsel %vm811, %v814, %v793
  %v846 = vsel %vm810, %v818, %v794
  %v847 = vsel %vm811, %v818, %v795
  %v848 = vsel %vm810, %v822, %v796
  %v849 = vsel %vm811, %v822, %v797
  %v850 = vsel %vm810, %v826, %v798
  %v851 = vsel %vm811, %v826, %v799
  %v852 = vsel %vm810, %v830, %v800
  %v853 = vsel %vm811, %v830, %v801
  %v854 = vsel %vm810, %v834, %v802
  %v855 = vsel %vm811, %v834, %v803
  %v856 = vsel %vm810, %v838, %v804
  %v857 = vsel %vm811, %v838, %v805
  %v858 = vsel %vm810, %v842, %v806
  %v859 = vsel %vm811, %v842, %v807
  %v860 = vsel %vm710, 1, 0
  %v861 = vsel %vm711, 1, 0
  %vm862 = vcmp.eq.s32.totalorder %v860, 1
  %vm863 = vcmp.eq.s32.totalorder %v861, 1
  %864 = vset.pattern.permute.xlu0 0
  %865 = vperm.xlu0 %864, %v702
  %v866 = vpop.permute.xlu0 %865
  %868 = vset.pattern.permute.xlu0 0
  %869 = vperm.xlu0 %868, %v703
  %v870 = vpop.permute.xlu0 %869
  %872 = vset.pattern.permute.xlu0 0
  %873 = vperm.xlu0 %872, %v704
  %v874 = vpop.permute.xlu0 %873
  %876 = vset.pattern.permute.xlu0 0
  %877 = vperm.xlu0 %876, %v705
  %v878 = vpop.permute.xlu0 %877
  %880 = vset.pattern.permute.xlu0 0
  %881 = vperm.xlu0 %880, %v706
  %v882 = vpop.permute.xlu0 %881
  %884 = vset.pattern.permute.xlu0 0
  %885 = vperm.xlu0 %884, %v707
  %v886 = vpop.permute.xlu0 %885
  %888 = vset.pattern.permute.xlu0 0
  %889 = vperm.xlu0 %888, %v708
  %v890 = vpop.permute.xlu0 %889
  %892 = vset.pattern.permute.xlu0 0
  %893 = vperm.xlu0 %892, %v709
  %v894 = vpop.permute.xlu0 %893
  %v896 = vsel %vm862, %v866, %v844
  %v897 = vsel %vm863, %v866, %v845
  %v898 = vsel %vm862, %v870, %v846
  %v899 = vsel %vm863, %v870, %v847
  %v900 = vsel %vm862, %v874, %v848
  %v901 = vsel %vm863, %v874, %v849
  %v902 = vsel %vm862, %v878, %v850
  %v903 = vsel %vm863, %v878, %v851
  %v904 = vsel %vm862, %v882, %v852
  %v905 = vsel %vm863, %v882, %v853
  %v906 = vsel %vm862, %v886, %v854
  %v907 = vsel %vm863, %v886, %v855
  %v908 = vsel %vm862, %v890, %v856
  %v909 = vsel %vm863, %v890, %v857
  %v910 = vsel %vm862, %v894, %v858
  %v911 = vsel %vm863, %v894, %v859
  %v912 = vmul.f32 %v605, %v896
  %v913 = vmul.f32 %v607, %v897
  %v914 = vmul.f32 %v609, %v898
  %v915 = vmul.f32 %v611, %v899
  %v916 = vmul.f32 %v615, %v900
  %v917 = vmul.f32 %v617, %v901
  %v918 = vmul.f32 %v619, %v902
  %v919 = vmul.f32 %v621, %v903
  %v920 = vmul.f32 %v625, %v904
  %v921 = vmul.f32 %v627, %v905
  %v922 = vmul.f32 %v629, %v906
  %v923 = vmul.f32 %v631, %v907
  %v924 = vmul.f32 %v635, %v908
  %v925 = vmul.f32 %v637, %v909
  %v926 = vmul.f32 %v639, %v910
  %v927 = vmul.f32 %v641, %v911
  %v928 = vadd.f32 %v912, %v914
  %v929 = vadd.f32 %v928, %v916
  %v930 = vadd.f32 %v929, %v918
  %v931 = vadd.f32 %v930, %v920
  %v932 = vadd.f32 %v931, %v922
  %v933 = vadd.f32 %v932, %v924
  %v934 = vadd.f32 %v933, %v926
  %v935 = vrot.slane %v934, 4
  %v936 = vadd.f32 %v934, %v935
  %v937 = vrot.slane %v936, 2
  %v938 = vadd.f32 %v936, %v937
  %v939 = vrot.slane %v938, 1
  %v940 = vadd.f32 %v938, %v939
  %v941 = vadd.f32 %v913, %v915
  %v942 = vadd.f32 %v941, %v917
  %v943 = vadd.f32 %v942, %v919
  %v944 = vadd.f32 %v943, %v921
  %v945 = vadd.f32 %v944, %v923
  %v946 = vadd.f32 %v945, %v925
  %v947 = vadd.f32 %v946, %v927
  %v948 = vrot.slane %v947, 4
  %v949 = vadd.f32 %v947, %v948
  %v950 = vrot.slane %v949, 2
  %v951 = vadd.f32 %v949, %v950
  %v952 = vrot.slane %v951, 1
  %v953 = vadd.f32 %v951, %v952
  %v956 = vcombine.low %v940, %v953
  %v958 = vunpack.c.l.s4 1966171168
  %v959 = vunpack.c.0.s8 %v958
  %v960 = vlaneseq
  %v961 = vshrl.u32 %v960, 7
  %v962 = vsub.s32 %v959, %v961
  %v963 = vrot.slane %v956, %v962
  %v965 = vunpack.c.l.s4 1966171168
  %v966 = vunpack.c.0.s8 %v965
  %v967 = vlaneseq
  %v968 = vshrl.u32 %v967, 7
  %v969 = vsub.s32 %v966, %v968
  %v970 = vrot.slane %v963, %v969
  %v972 = vlaneseq
  %vm973 = vcmp.ge.s32.totalorder %v972, 0
  %vm974 = vcmp.lt.s32.totalorder %v972, 256
  %vm975 = vmand %vm973, %vm974
  %976 = vst.msk [vmem:[%s4] sm:$0x3] %vm975, %v970
  %v977 = vmul.f32 %v912, %v912
  %v978 = vmul.f32 %v913, %v913
  %v979 = vmul.f32 %v914, %v914
  %v980 = vmul.f32 %v915, %v915
  %v981 = vmul.f32 %v916, %v916
  %v982 = vmul.f32 %v917, %v917
  %v983 = vmul.f32 %v918, %v918
  %v984 = vmul.f32 %v919, %v919
  %v985 = vmul.f32 %v920, %v920
  %v986 = vmul.f32 %v921, %v921
  %v987 = vmul.f32 %v922, %v922
  %v988 = vmul.f32 %v923, %v923
  %v989 = vmul.f32 %v924, %v924
  %v990 = vmul.f32 %v925, %v925
  %v991 = vmul.f32 %v926, %v926
  %v992 = vmul.f32 %v927, %v927
  %v993 = vadd.f32 %v977, %v979
  %v994 = vadd.f32 %v993, %v981
  %v995 = vadd.f32 %v994, %v983
  %v996 = vadd.f32 %v995, %v985
  %v997 = vadd.f32 %v996, %v987
  %v998 = vadd.f32 %v997, %v989
  %v999 = vadd.f32 %v998, %v991
  %v1000 = vrot.slane %v999, 4
  %v1001 = vadd.f32 %v999, %v1000
  %v1002 = vrot.slane %v1001, 2
  %v1003 = vadd.f32 %v1001, %v1002
  %v1004 = vrot.slane %v1003, 1
  %v1005 = vadd.f32 %v1003, %v1004
  %v1006 = vadd.f32 %v978, %v980
  %v1007 = vadd.f32 %v1006, %v982
  %v1008 = vadd.f32 %v1007, %v984
  %v1009 = vadd.f32 %v1008, %v986
  %v1010 = vadd.f32 %v1009, %v988
  %v1011 = vadd.f32 %v1010, %v990
  %v1012 = vadd.f32 %v1011, %v992
  %v1013 = vrot.slane %v1012, 4
  %v1014 = vadd.f32 %v1012, %v1013
  %v1015 = vrot.slane %v1014, 2
  %v1016 = vadd.f32 %v1014, %v1015
  %v1017 = vrot.slane %v1016, 1
  %v1018 = vadd.f32 %v1016, %v1017
  %v1021 = vcombine.low %v1005, %v1018
  %v1023 = vunpack.c.l.s4 1966171168
  %v1024 = vunpack.c.0.s8 %v1023
  %v1025 = vlaneseq
  %v1026 = vshrl.u32 %v1025, 7
  %v1027 = vsub.s32 %v1024, %v1026
  %v1028 = vrot.slane %v1021, %v1027
  %v1030 = vunpack.c.l.s4 1966171168
  %v1031 = vunpack.c.0.s8 %v1030
  %v1032 = vlaneseq
  %v1033 = vshrl.u32 %v1032, 7
  %v1034 = vsub.s32 %v1031, %v1033
  %v1035 = vrot.slane %v1028, %v1034
  %1037 = vst.msk [vmem:[%s5] sm:$0x3] %vm975, %v1035
  // Predicated region
  $region14: #{cgan_generator_forward.6} parent=0 // pred_check
    _
  $region15: #{cgan_generator_forward.6} parent=0 // pred_check_branch
    %1039 = sbr.rel (0) target = $region17
  $region16: #{cgan_generator_forward.6} parent=0 // pred_region
    _
  $region17: #{cgan_generator_forward.6} parent=0 // pred_fallthru
    _
  // Predicated region
  $region18: #{cgan_generator_forward.6} parent=0 // pred_check
    _
  $region19: #{cgan_generator_forward.6} parent=0 // pred_check_branch
    %1041 = sbr.rel (0) target = $region21
  $region20: #{cgan_generator_forward.6} parent=0 // pred_region
    _
  $region21: #{cgan_generator_forward.6} parent=0 // pred_fallthru
    _
  // Predicated region
  $region22: #{cgan_generator_forward.6} parent=0 // pred_check
    _
  $region23: #{cgan_generator_forward.6} parent=0 // pred_check_branch
    %1043 = sbr.rel (0) target = $region25
  $region24: #{cgan_generator_forward.6} parent=0 // pred_region
    _
  $region25: #{cgan_generator_forward.6} parent=0 // pred_fallthru
    _
  // Predicated region
  $region26: #{cgan_generator_forward.6} parent=0 // pred_check
    _
  $region27: #{cgan_generator_forward.6} parent=0 // pred_check_branch
    %1045 = sbr.rel (0) target = $region29
  $region28: #{cgan_generator_forward.6} parent=0 // pred_region
    _
  $region29: #{cgan_generator_forward.6} parent=0 // pred_fallthru
    _
  // Predicated region
  $region30: #{cgan_generator_forward.6} parent=0 // pred_check
    _
  $region31: #{cgan_generator_forward.6} parent=0 // pred_check_branch
    %1047 = sbr.rel (0) target = $region33
  $region32: #{cgan_generator_forward.6} parent=0 // pred_region
    _
  $region33: #{cgan_generator_forward.6} parent=0 // pred_fallthru
    _
  // Predicated region
  $region34: #{cgan_generator_forward.6} parent=0 // pred_check
    _
  $region35: #{cgan_generator_forward.6} parent=0 // pred_check_branch
    %1049 = sbr.rel (0) target = $region37
  $region36: #{cgan_generator_forward.6} parent=0 // pred_region
    _
  $region37: #{cgan_generator_forward.6} parent=0 // pred_fallthru
    _

// kernel: cgan_generator_forward.7
$region0: #{cgan_generator_forward.7}
  #allocation0 [shape = 'u32[]', space=smem, size = 0x4, offset = 0x4, fixed_abs, tag = 'smem constant byte address 0x4 - core index']
  #allocation1 [shape = 'u32[144,128]{1,0:T(1,128)}', space=vmem, size = 0x12000, scoped, tag = 'internal scratch']
  %s0 = inlined_call_operand.vmem [shape: bf16[176,256], index: 0, kind: input, shape index: {}]
  %s1 = inlined_call_operand.vmem [shape: bf16[256,128], index: 1, kind: input, shape index: {}]
  %s2 = inlined_call_operand.vmem [shape: f32[176,4], index: 2, kind: input, shape index: {}]
  %s3 = inlined_call_operand.vmem [shape: bf16[176,128], index: 3, kind: output, shape index: {0}]
  %s4 = inlined_call_operand.vmem [shape: f32[1,1,128], index: 4, kind: output, shape index: {1}]
  %s5 = inlined_call_operand.vmem [shape: f32[1,1,128], index: 5, kind: output, shape index: {2}]
  %6 = xla_tuple %s3, %s4, %s5
  %s7 = sld [smem:[#allocation0]]
  $region38: #{cgan_generator_forward.7} parent=0
    _
  %s9 = ssub.s32 1, %s7
  %s10 = scalar_select 0, %s9, %s7
  // Predicated region
  $region2: #{cgan_generator_forward.7} parent=0 // pred_check
    _
  $region3: #{cgan_generator_forward.7} parent=0 // pred_check_branch
    %12 = sbr.rel (0) target = $region5
  $region4: #{cgan_generator_forward.7} parent=0 // pred_region
    _
  $region5: #{cgan_generator_forward.7} parent=0 // pred_fallthru
    _
  // Predicated region
  $region6: #{cgan_generator_forward.7} parent=0 // pred_check
    _
  $region7: #{cgan_generator_forward.7} parent=0 // pred_check_branch
    %14 = sbr.rel (0) target = $region9
  $region8: #{cgan_generator_forward.7} parent=0 // pred_region
    _
  $region9: #{cgan_generator_forward.7} parent=0 // pred_fallthru
    _
  // Predicated region
  $region10: #{cgan_generator_forward.7} parent=0 // pred_check
    _
  $region11: #{cgan_generator_forward.7} parent=0 // pred_check_branch
    %16 = sbr.rel (0) target = $region13
  $region12: #{cgan_generator_forward.7} parent=0 // pred_region
    _
  $region13: #{cgan_generator_forward.7} parent=0 // pred_fallthru
    _
  %v18 = vld [vmem:[%s0] sm:$0xff]
  %v19 = vld [vmem:[%s0 + $0x8] sm:$0xff]
  %v20 = vld [vmem:[%s0 + $0x10] sm:$0xff]
  %v21 = vld [vmem:[%s0 + $0x18] sm:$0xff]
  %v22 = vld [vmem:[%s0 + $0x20] sm:$0xff]
  %v23 = vld [vmem:[%s0 + $0x28] sm:$0xff]
  %v24 = vld [vmem:[%s0 + $0x30] sm:$0xff]
  %v25 = vld [vmem:[%s0 + $0x38] sm:$0xff]
  %v26 = vld [vmem:[%s0 + $0x40] sm:$0xff]
  %v27 = vld [vmem:[%s0 + $0x48] sm:$0xff]
  %v28 = vld [vmem:[%s0 + $0x50] sm:$0xff]
  %v29 = vld [vmem:[%s0 + $0x58] sm:$0xff]
  %v30 = vld [vmem:[%s0 + $0x60] sm:$0xff]
  %v31 = vld [vmem:[%s0 + $0x68] sm:$0xff]
  %v32 = vld [vmem:[%s0 + $0x70] sm:$0xff]
  %v33 = vld [vmem:[%s0 + $0x78] sm:$0xff]
  %v34 = vld [vmem:[%s0 + $0x80] sm:$0xff]
  %v35 = vld [vmem:[%s0 + $0x88] sm:$0xff]
  %v36 = vld [vmem:[%s0 + $0x90] sm:$0xff]
  %v37 = vld [vmem:[%s0 + $0x98] sm:$0xff]
  %v38 = vld [vmem:[%s0 + $0xa0] sm:$0xff]
  %v39 = vld [vmem:[%s0 + $0xa8] sm:$0xff]
  %v40 = vld [vmem:[%s1] sm:$0xf]
  %v41 = vld [vmem:[%s1 + $0x4] sm:$0xf]
  %v42 = vld [vmem:[%s1 + $0x8] sm:$0xf]
  %v43 = vld [vmem:[%s1 + $0xc] sm:$0xf]
  %v44 = vld [vmem:[%s1 + $0x10] sm:$0xf]
  %v45 = vld [vmem:[%s1 + $0x14] sm:$0xf]
  %v46 = vld [vmem:[%s1 + $0x18] sm:$0xf]
  %v47 = vld [vmem:[%s1 + $0x1c] sm:$0xf]
  %v48 = vld [vmem:[%s1 + $0x20] sm:$0xf]
  %v49 = vld [vmem:[%s1 + $0x24] sm:$0xf]
  %v50 = vld [vmem:[%s1 + $0x28] sm:$0xf]
  %v51 = vld [vmem:[%s1 + $0x2c] sm:$0xf]
  %v52 = vld [vmem:[%s1 + $0x30] sm:$0xf]
  %v53 = vld [vmem:[%s1 + $0x34] sm:$0xf]
  %v54 = vld [vmem:[%s1 + $0x38] sm:$0xf]
  %v55 = vld [vmem:[%s1 + $0x3c] sm:$0xf]
  %v56 = vld [vmem:[%s1 + $0x40] sm:$0xf]
  %v57 = vld [vmem:[%s1 + $0x44] sm:$0xf]
  %v58 = vld [vmem:[%s1 + $0x48] sm:$0xf]
  %v59 = vld [vmem:[%s1 + $0x4c] sm:$0xf]
  %v60 = vld [vmem:[%s1 + $0x50] sm:$0xf]
  %v61 = vld [vmem:[%s1 + $0x54] sm:$0xf]
  %v62 = vld [vmem:[%s1 + $0x58] sm:$0xf]
  %v63 = vld [vmem:[%s1 + $0x5c] sm:$0xf]
  %v64 = vld [vmem:[%s1 + $0x60] sm:$0xf]
  %v65 = vld [vmem:[%s1 + $0x64] sm:$0xf]
  %v66 = vld [vmem:[%s1 + $0x68] sm:$0xf]
  %v67 = vld [vmem:[%s1 + $0x6c] sm:$0xf]
  %v68 = vld [vmem:[%s1 + $0x70] sm:$0xf]
  %v69 = vld [vmem:[%s1 + $0x74] sm:$0xf]
  %v70 = vld [vmem:[%s1 + $0x78] sm:$0xf]
  %v71 = vld [vmem:[%s1 + $0x7c] sm:$0xf]
  %v94 = vunpack.c.l.b16 %v18
  %v95 = vunpack.c.h.b16 %v18
  %v96 = vunpack.c.l.b16 %v19
  %v97 = vunpack.c.h.b16 %v19
  %v98 = vunpack.c.l.b16 %v20
  %v99 = vunpack.c.h.b16 %v20
  %v100 = vunpack.c.l.b16 %v21
  %v101 = vunpack.c.h.b16 %v21
  %v102 = vunpack.c.l.b16 %v22
  %v103 = vunpack.c.h.b16 %v22
  %v104 = vunpack.c.l.b16 %v23
  %v105 = vunpack.c.h.b16 %v23
  %v106 = vunpack.c.l.b16 %v24
  %v107 = vunpack.c.h.b16 %v24
  %v108 = vunpack.c.l.b16 %v25
  %v109 = vunpack.c.h.b16 %v25
  %v110 = vunpack.c.l.b16 %v26
  %v111 = vunpack.c.h.b16 %v26
  %v112 = vunpack.c.l.b16 %v27
  %v113 = vunpack.c.h.b16 %v27
  %v114 = vunpack.c.l.b16 %v28
  %v115 = vunpack.c.h.b16 %v28
  %v116 = vunpack.c.l.b16 %v29
  %v117 = vunpack.c.h.b16 %v29
  %v118 = vunpack.c.l.b16 %v30
  %v119 = vunpack.c.h.b16 %v30
  %v120 = vunpack.c.l.b16 %v31
  %v121 = vunpack.c.h.b16 %v31
  %v122 = vunpack.c.l.b16 %v32
  %v123 = vunpack.c.h.b16 %v32
  %v124 = vunpack.c.l.b16 %v33
  %v125 = vunpack.c.h.b16 %v33
  %v126 = vunpack.c.l.b16 %v34
  %v127 = vunpack.c.h.b16 %v34
  %v128 = vunpack.c.l.b16 %v35
  %v129 = vunpack.c.h.b16 %v35
  %v130 = vunpack.c.l.b16 %v36
  %v131 = vunpack.c.h.b16 %v36
  %v132 = vunpack.c.l.b16 %v37
  %v133 = vunpack.c.h.b16 %v37
  %v134 = vunpack.c.l.b16 %v38
  %v135 = vunpack.c.h.b16 %v38
  %v136 = vunpack.c.l.b16 %v39
  %v137 = vunpack.c.h.b16 %v39
  %v138 = vpack.c.b16 %v96, %v94
  %v139 = vpack.c.b16 %v97, %v95
  %v140 = vpack.c.b16 %v100, %v98
  %v141 = vpack.c.b16 %v101, %v99
  %v142 = vpack.c.b16 %v104, %v102
  %v143 = vpack.c.b16 %v105, %v103
  %v144 = vpack.c.b16 %v108, %v106
  %v145 = vpack.c.b16 %v109, %v107
  %v146 = vpack.c.b16 %v112, %v110
  %v147 = vpack.c.b16 %v113, %v111
  %v148 = vpack.c.b16 %v116, %v114
  %v149 = vpack.c.b16 %v117, %v115
  %v150 = vpack.c.b16 %v120, %v118
  %v151 = vpack.c.b16 %v121, %v119
  %v152 = vpack.c.b16 %v124, %v122
  %v153 = vpack.c.b16 %v125, %v123
  %v154 = vpack.c.b16 %v128, %v126
  %v155 = vpack.c.b16 %v129, %v127
  %v156 = vpack.c.b16 %v132, %v130
  %v157 = vpack.c.b16 %v133, %v131
  %v158 = vpack.c.b16 %v136, %v134
  %v159 = vpack.c.b16 %v137, %v135
  %v214 = vunpack.c.l.b16 %v40
  %v215 = vunpack.c.l.b16 %v41
  %v216 = vunpack.c.l.b16 %v42
  %v217 = vunpack.c.l.b16 %v43
  %v218 = vunpack.c.l.b16 %v44
  %v219 = vunpack.c.l.b16 %v45
  %v220 = vunpack.c.l.b16 %v46
  %v221 = vunpack.c.l.b16 %v47
  %v222 = vunpack.c.l.b16 %v48
  %v223 = vunpack.c.l.b16 %v49
  %v224 = vunpack.c.l.b16 %v50
  %v225 = vunpack.c.l.b16 %v51
  %v226 = vunpack.c.l.b16 %v52
  %v227 = vunpack.c.l.b16 %v53
  %v228 = vunpack.c.l.b16 %v54
  %v229 = vunpack.c.l.b16 %v55
  %v230 = vunpack.c.l.b16 %v56
  %v231 = vunpack.c.l.b16 %v57
  %v232 = vunpack.c.l.b16 %v58
  %v233 = vunpack.c.l.b16 %v59
  %v234 = vunpack.c.l.b16 %v60
  %v235 = vunpack.c.l.b16 %v61
  %v236 = vunpack.c.l.b16 %v62
  %v237 = vunpack.c.l.b16 %v63
  %v238 = vunpack.c.l.b16 %v64
  %v239 = vunpack.c.l.b16 %v65
  %v240 = vunpack.c.l.b16 %v66
  %v241 = vunpack.c.l.b16 %v67
  %v242 = vunpack.c.l.b16 %v68
  %v243 = vunpack.c.l.b16 %v69
  %v244 = vunpack.c.l.b16 %v70
  %v245 = vunpack.c.l.b16 %v71
  %v246 = vpack.c.b16 %v215, %v214
  %v247 = vpack.c.b16 %v217, %v216
  %v248 = vpack.c.b16 %v219, %v218
  %v249 = vpack.c.b16 %v221, %v220
  %v250 = vpack.c.b16 %v223, %v222
  %v251 = vpack.c.b16 %v225, %v224
  %v252 = vpack.c.b16 %v227, %v226
  %v253 = vpack.c.b16 %v229, %v228
  %v254 = vpack.c.b16 %v231, %v230
  %v255 = vpack.c.b16 %v233, %v232
  %v256 = vpack.c.b16 %v235, %v234
  %v257 = vpack.c.b16 %v237, %v236
  %v258 = vpack.c.b16 %v239, %v238
  %v259 = vpack.c.b16 %v241, %v240
  %v260 = vpack.c.b16 %v243, %v242
  %v261 = vpack.c.b16 %v245, %v244
  %278 = vmatprep.subr.bf16.mxu0 0
  %279 = vmatpush1.bf16.msra.mxu0 %v246
  %280 = vmatprep.subr.bf16.mxu0 0
  %281 = vmatpush1.bf16.msra.mxu0 %v247
  %282 = vmatprep.subr.bf16.mxu0 0
  %283 = vmatpush1.bf16.msra.mxu0 %v248
  %284 = vmatprep.subr.bf16.mxu0 0
  %285 = vmatpush1.bf16.msra.mxu0 %v249
  %286 = vmatprep.subr.bf16.mxu0 0
  %287 = vmatpush1.bf16.msra.mxu0 %v250
  %288 = vmatprep.subr.bf16.mxu0 0
  %289 = vmatpush1.bf16.msra.mxu0 %v251
  %290 = vmatprep.subr.bf16.mxu0 0
  %291 = vmatpush1.bf16.msra.mxu0 %v252
  %292 = vmatprep.subr.bf16.mxu0 0
  %293 = vmatpush1.bf16.msra.mxu0 %v253
  %294 = vmatprep.subr.bf16.mxu0 0
  %295 = vmatpush1.bf16.msra.mxu0 %v254
  %296 = vmatprep.subr.bf16.mxu0 0
  %297 = vmatpush1.bf16.msra.mxu0 %v255
  %298 = vmatprep.subr.bf16.mxu0 0
  %299 = vmatpush1.bf16.msra.mxu0 %v256
  %300 = vmatprep.subr.bf16.mxu0 0
  %301 = vmatpush1.bf16.msra.mxu0 %v257
  %302 = vmatprep.subr.bf16.mxu0 0
  %303 = vmatpush1.bf16.msra.mxu0 %v258
  %304 = vmatprep.subr.bf16.mxu0 0
  %305 = vmatpush1.bf16.msra.mxu0 %v259
  %306 = vmatprep.subr.bf16.mxu0 0
  %307 = vmatpush1.bf16.msra.mxu0 %v260
  %308 = vmatprep.subr.bf16.mxu0 0
  %309 = vmatpush1.bf16.msra.mxu0 %v261
  %310 = vmatprep.mubr.bf16.mxu0 %v139
  %311 = vmatmul.mubr.bf16.gmra.mrb[0].mxu0 %v138
  %v312 = vpop.f32.mrb[0].mxu0
  %v313 = vadd.f32 0.0, %v312
  %v314 = vpop.f32.mrb[0].mxu0
  %v315 = vpop.f32.mrb[0].mxu0
  %v316 = vadd.f32 0.0, %v315
  %v317 = vpop.f32.mrb[0].mxu0
  %318 = vmatprep.mubr.bf16.mxu0 %v141
  %319 = vmatmul.mubr.bf16.gmra.mrb[0].mxu0 %v140
  %v320 = vpop.f32.mrb[0].mxu0
  %v321 = vadd.f32 0.0, %v320
  %v322 = vpop.f32.mrb[0].mxu0
  %v323 = vpop.f32.mrb[0].mxu0
  %v324 = vadd.f32 0.0, %v323
  %v325 = vpop.f32.mrb[0].mxu0
  %326 = vmatprep.mubr.bf16.mxu0 %v143
  %327 = vmatmul.mubr.bf16.gmra.mrb[0].mxu0 %v142
  %v328 = vpop.f32.mrb[0].mxu0
  %v329 = vadd.f32 0.0, %v328
  %v330 = vpop.f32.mrb[0].mxu0
  %v331 = vpop.f32.mrb[0].mxu0
  %v332 = vadd.f32 0.0, %v331
  %v333 = vpop.f32.mrb[0].mxu0
  %334 = vmatprep.mubr.bf16.mxu0 %v145
  %335 = vmatmul.mubr.bf16.gmra.mrb[0].mxu0 %v144
  %v336 = vpop.f32.mrb[0].mxu0
  %v337 = vadd.f32 0.0, %v336
  %v338 = vpop.f32.mrb[0].mxu0
  %v339 = vpop.f32.mrb[0].mxu0
  %v340 = vadd.f32 0.0, %v339
  %v341 = vpop.f32.mrb[0].mxu0
  %342 = vmatprep.mubr.bf16.mxu0 %v147
  %343 = vmatmul.mubr.bf16.gmra.mrb[0].mxu0 %v146
  %v344 = vpop.f32.mrb[0].mxu0
  %v345 = vadd.f32 0.0, %v344
  %v346 = vpop.f32.mrb[0].mxu0
  %v347 = vpop.f32.mrb[0].mxu0
  %v348 = vadd.f32 0.0, %v347
  %v349 = vpop.f32.mrb[0].mxu0
  %350 = vmatprep.mubr.bf16.mxu0 %v149
  %351 = vmatmul.mubr.bf16.gmra.mrb[0].mxu0 %v148
  %v352 = vpop.f32.mrb[0].mxu0
  %v353 = vadd.f32 0.0, %v352
  %v354 = vpop.f32.mrb[0].mxu0
  %v355 = vpop.f32.mrb[0].mxu0
  %v356 = vadd.f32 0.0, %v355
  %v357 = vpop.f32.mrb[0].mxu0
  %358 = vmatprep.mubr.bf16.mxu0 %v151
  %359 = vmatmul.mubr.bf16.gmra.mrb[0].mxu0 %v150
  %v360 = vpop.f32.mrb[0].mxu0
  %v361 = vadd.f32 0.0, %v360
  %v362 = vpop.f32.mrb[0].mxu0
  %v363 = vpop.f32.mrb[0].mxu0
  %v364 = vadd.f32 0.0, %v363
  %v365 = vpop.f32.mrb[0].mxu0
  %366 = vmatprep.mubr.bf16.mxu0 %v153
  %367 = vmatmul.mubr.bf16.gmra.mrb[0].mxu0 %v152
  %v368 = vpop.f32.mrb[0].mxu0
  %v369 = vadd.f32 0.0, %v368
  %v370 = vpop.f32.mrb[0].mxu0
  %v371 = vpop.f32.mrb[0].mxu0
  %v372 = vadd.f32 0.0, %v371
  %v373 = vpop.f32.mrb[0].mxu0
  %374 = vmatprep.mubr.bf16.mxu0 %v155
  %375 = vmatmul.mubr.bf16.gmra.mrb[0].mxu0 %v154
  %v376 = vpop.f32.mrb[0].mxu0
  %v377 = vadd.f32 0.0, %v376
  %v378 = vpop.f32.mrb[0].mxu0
  %v379 = vpop.f32.mrb[0].mxu0
  %v380 = vadd.f32 0.0, %v379
  %v381 = vpop.f32.mrb[0].mxu0
  %382 = vmatprep.mubr.bf16.mxu0 %v157
  %383 = vmatmul.mubr.bf16.gmra.mrb[0].mxu0 %v156
  %v384 = vpop.f32.mrb[0].mxu0
  %v385 = vadd.f32 0.0, %v384
  %v386 = vpop.f32.mrb[0].mxu0
  %v387 = vpop.f32.mrb[0].mxu0
  %v388 = vadd.f32 0.0, %v387
  %v389 = vpop.f32.mrb[0].mxu0
  %390 = vmatprep.mubr.bf16.mxu0 %v159
  %391 = vmatmul.mubr.bf16.gmra.mrb[0].mxu0 %v158
  %v392 = vpop.f32.mrb[0].mxu0
  %v393 = vadd.f32 0.0, %v392
  %v394 = vpop.f32.mrb[0].mxu0
  %v395 = vpop.f32.mrb[0].mxu0
  %v396 = vadd.f32 0.0, %v395
  %v397 = vpop.f32.mrb[0].mxu0
  %398 = vdwg.mxu0
  %v399 = vpack.c.bf16 %v316, %v313
  %v400 = vpack.c.bf16 %v324, %v321
  %v401 = vpack.c.bf16 %v332, %v329
  %v402 = vpack.c.bf16 %v340, %v337
  %v403 = vpack.c.bf16 %v348, %v345
  %v404 = vpack.c.bf16 %v356, %v353
  %v405 = vpack.c.bf16 %v364, %v361
  %v406 = vpack.c.bf16 %v372, %v369
  %v407 = vpack.c.bf16 %v380, %v377
  %v408 = vpack.c.bf16 %v388, %v385
  %v409 = vpack.c.bf16 %v396, %v393
  %v421 = vunpack.c.l.b16 %v399
  %v422 = vunpack.c.h.b16 %v399
  %v423 = vunpack.c.l.b16 %v400
  %v424 = vunpack.c.h.b16 %v400
  %v425 = vunpack.c.l.b16 %v401
  %v426 = vunpack.c.h.b16 %v401
  %v427 = vunpack.c.l.b16 %v402
  %v428 = vunpack.c.h.b16 %v402
  %v429 = vunpack.c.l.b16 %v403
  %v430 = vunpack.c.h.b16 %v403
  %v431 = vunpack.c.l.b16 %v404
  %v432 = vunpack.c.h.b16 %v404
  %v433 = vunpack.c.l.b16 %v405
  %v434 = vunpack.c.h.b16 %v405
  %v435 = vunpack.c.l.b16 %v406
  %v436 = vunpack.c.h.b16 %v406
  %v437 = vunpack.c.l.b16 %v407
  %v438 = vunpack.c.h.b16 %v407
  %v439 = vunpack.c.l.b16 %v408
  %v440 = vunpack.c.h.b16 %v408
  %v441 = vunpack.c.l.b16 %v409
  %v442 = vunpack.c.h.b16 %v409
  %v443 = vpack.c.b16 %v421, %v421
  %v444 = vpack.c.b16 %v422, %v422
  %v445 = vpack.c.b16 %v423, %v423
  %v446 = vpack.c.b16 %v424, %v424
  %v447 = vpack.c.b16 %v425, %v425
  %v448 = vpack.c.b16 %v426, %v426
  %v449 = vpack.c.b16 %v427, %v427
  %v450 = vpack.c.b16 %v428, %v428
  %v451 = vpack.c.b16 %v429, %v429
  %v452 = vpack.c.b16 %v430, %v430
  %v453 = vpack.c.b16 %v431, %v431
  %v454 = vpack.c.b16 %v432, %v432
  %v455 = vpack.c.b16 %v433, %v433
  %v456 = vpack.c.b16 %v434, %v434
  %v457 = vpack.c.b16 %v435, %v435
  %v458 = vpack.c.b16 %v436, %v436
  %v459 = vpack.c.b16 %v437, %v437
  %v460 = vpack.c.b16 %v438, %v438
  %v461 = vpack.c.b16 %v439, %v439
  %v462 = vpack.c.b16 %v440, %v440
  %v463 = vpack.c.b16 %v441, %v441
  %v464 = vpack.c.b16 %v442, %v442
  %487 = vst [vmem:[%s3] sm:$0xf] %v443
  %488 = vst [vmem:[%s3 + $0x4] sm:$0xf] %v444
  %489 = vst [vmem:[%s3 + $0x8] sm:$0xf] %v445
  %490 = vst [vmem:[%s3 + $0xc] sm:$0xf] %v446
  %491 = vst [vmem:[%s3 + $0x10] sm:$0xf] %v447
  %492 = vst [vmem:[%s3 + $0x14] sm:$0xf] %v448
  %493 = vst [vmem:[%s3 + $0x18] sm:$0xf] %v449
  %494 = vst [vmem:[%s3 + $0x1c] sm:$0xf] %v450
  %495 = vst [vmem:[%s3 + $0x20] sm:$0xf] %v451
  %496 = vst [vmem:[%s3 + $0x24] sm:$0xf] %v452
  %497 = vst [vmem:[%s3 + $0x28] sm:$0xf] %v453
  %498 = vst [vmem:[%s3 + $0x2c] sm:$0xf] %v454
  %499 = vst [vmem:[%s3 + $0x30] sm:$0xf] %v455
  %500 = vst [vmem:[%s3 + $0x34] sm:$0xf] %v456
  %501 = vst [vmem:[%s3 + $0x38] sm:$0xf] %v457
  %502 = vst [vmem:[%s3 + $0x3c] sm:$0xf] %v458
  %503 = vst [vmem:[%s3 + $0x40] sm:$0xf] %v459
  %504 = vst [vmem:[%s3 + $0x44] sm:$0xf] %v460
  %505 = vst [vmem:[%s3 + $0x48] sm:$0xf] %v461
  %506 = vst [vmem:[%s3 + $0x4c] sm:$0xf] %v462
  %507 = vst [vmem:[%s3 + $0x50] sm:$0xf] %v463
  %508 = vst [vmem:[%s3 + $0x54] sm:$0xf] %v464
  %v509 = vlaneseq
  %v510 = vand.u32 %v509, 127
  %v511 = vld [vmem:[%s2] sm:$0xff]
  %v512 = vld [vmem:[%s2 + $0x8] sm:$0xff]
  %v513 = vld [vmem:[%s2 + $0x10] sm:$0xff]
  %v514 = vld [vmem:[%s2 + $0x18] sm:$0xff]
  %v515 = vld [vmem:[%s2 + $0x20] sm:$0xff]
  %v516 = vld [vmem:[%s2 + $0x28] sm:$0xff]
  %v517 = vld [vmem:[%s2 + $0x30] sm:$0xff]
  %v518 = vld [vmem:[%s2 + $0x38] sm:$0xff]
  %v519 = vld [vmem:[%s2 + $0x40] sm:$0xff]
  %v520 = vld [vmem:[%s2 + $0x48] sm:$0xff]
  %v521 = vld [vmem:[%s2 + $0x50] sm:$0xff]
  %v522 = vld [vmem:[%s2 + $0x58] sm:$0xff]
  %v523 = vld [vmem:[%s2 + $0x60] sm:$0xff]
  %v524 = vld [vmem:[%s2 + $0x68] sm:$0xff]
  %v525 = vld [vmem:[%s2 + $0x70] sm:$0xff]
  %v526 = vld [vmem:[%s2 + $0x78] sm:$0xff]
  %v527 = vld [vmem:[%s2 + $0x80] sm:$0xff]
  %v528 = vld [vmem:[%s2 + $0x88] sm:$0xff]
  %v529 = vld [vmem:[%s2 + $0x90] sm:$0xff]
  %v530 = vld [vmem:[%s2 + $0x98] sm:$0xff]
  %v531 = vld [vmem:[%s2 + $0xa0] sm:$0xff]
  %v532 = vld [vmem:[%s2 + $0xa8] sm:$0xff]
  %vm533 = vcmp.lt.s32.totalorder %v510, 32
  %vm534 = vcmp.lt.s32.totalorder %v510, 64
  %vm535 = vcmp.lt.s32.totalorder %v510, 96
  %v536 = vsel %vm535, 1, 0
  %vm537 = vcmp.eq.s32.totalorder %v536, 1
  %539 = vset.pattern.permute.xlu0 2
  %540 = vperm.xlu0 %539, %v511
  %v541 = vpop.permute.xlu0 %540
  %544 = vset.pattern.permute.xlu0 2
  %545 = vperm.xlu0 %544, %v512
  %v546 = vpop.permute.xlu0 %545
  %549 = vset.pattern.permute.xlu0 2
  %550 = vperm.xlu0 %549, %v513
  %v551 = vpop.permute.xlu0 %550
  %554 = vset.pattern.permute.xlu0 2
  %555 = vperm.xlu0 %554, %v514
  %v556 = vpop.permute.xlu0 %555
  %559 = vset.pattern.permute.xlu0 2
  %560 = vperm.xlu0 %559, %v515
  %v561 = vpop.permute.xlu0 %560
  %564 = vset.pattern.permute.xlu0 2
  %565 = vperm.xlu0 %564, %v516
  %v566 = vpop.permute.xlu0 %565
  %569 = vset.pattern.permute.xlu0 2
  %570 = vperm.xlu0 %569, %v517
  %v571 = vpop.permute.xlu0 %570
  %574 = vset.pattern.permute.xlu0 2
  %575 = vperm.xlu0 %574, %v518
  %v576 = vpop.permute.xlu0 %575
  %579 = vset.pattern.permute.xlu0 2
  %580 = vperm.xlu0 %579, %v519
  %v581 = vpop.permute.xlu0 %580
  %584 = vset.pattern.permute.xlu0 2
  %585 = vperm.xlu0 %584, %v520
  %v586 = vpop.permute.xlu0 %585
  %589 = vset.pattern.permute.xlu0 2
  %590 = vperm.xlu0 %589, %v521
  %v591 = vpop.permute.xlu0 %590
  %594 = vset.pattern.permute.xlu0 2
  %595 = vperm.xlu0 %594, %v522
  %v596 = vpop.permute.xlu0 %595
  %599 = vset.pattern.permute.xlu0 2
  %600 = vperm.xlu0 %599, %v523
  %v601 = vpop.permute.xlu0 %600
  %604 = vset.pattern.permute.xlu0 2
  %605 = vperm.xlu0 %604, %v524
  %v606 = vpop.permute.xlu0 %605
  %609 = vset.pattern.permute.xlu0 2
  %610 = vperm.xlu0 %609, %v525
  %v611 = vpop.permute.xlu0 %610
  %614 = vset.pattern.permute.xlu0 2
  %615 = vperm.xlu0 %614, %v526
  %v616 = vpop.permute.xlu0 %615
  %619 = vset.pattern.permute.xlu0 2
  %620 = vperm.xlu0 %619, %v527
  %v621 = vpop.permute.xlu0 %620
  %624 = vset.pattern.permute.xlu0 2
  %625 = vperm.xlu0 %624, %v528
  %v626 = vpop.permute.xlu0 %625
  %629 = vset.pattern.permute.xlu0 2
  %630 = vperm.xlu0 %629, %v529
  %v631 = vpop.permute.xlu0 %630
  %634 = vset.pattern.permute.xlu0 2
  %635 = vperm.xlu0 %634, %v530
  %v636 = vpop.permute.xlu0 %635
  %639 = vset.pattern.permute.xlu0 2
  %640 = vperm.xlu0 %639, %v531
  %v641 = vpop.permute.xlu0 %640
  %644 = vset.pattern.permute.xlu0 2
  %645 = vperm.xlu0 %644, %v532
  %v646 = vpop.permute.xlu0 %645
  %648 = vset.pattern.permute.xlu0 3
  %649 = vperm.xlu0 %648, %v511
  %v650 = vpop.permute.xlu0 %649
  %652 = vset.pattern.permute.xlu0 3
  %653 = vperm.xlu0 %652, %v512
  %v654 = vpop.permute.xlu0 %653
  %656 = vset.pattern.permute.xlu0 3
  %657 = vperm.xlu0 %656, %v513
  %v658 = vpop.permute.xlu0 %657
  %660 = vset.pattern.permute.xlu0 3
  %661 = vperm.xlu0 %660, %v514
  %v662 = vpop.permute.xlu0 %661
  %664 = vset.pattern.permute.xlu0 3
  %665 = vperm.xlu0 %664, %v515
  %v666 = vpop.permute.xlu0 %665
  %668 = vset.pattern.permute.xlu0 3
  %669 = vperm.xlu0 %668, %v516
  %v670 = vpop.permute.xlu0 %669
  %672 = vset.pattern.permute.xlu0 3
  %673 = vperm.xlu0 %672, %v517
  %v674 = vpop.permute.xlu0 %673
  %676 = vset.pattern.permute.xlu0 3
  %677 = vperm.xlu0 %676, %v518
  %v678 = vpop.permute.xlu0 %677
  %680 = vset.pattern.permute.xlu0 3
  %681 = vperm.xlu0 %680, %v519
  %v682 = vpop.permute.xlu0 %681
  %684 = vset.pattern.permute.xlu0 3
  %685 = vperm.xlu0 %684, %v520
  %v686 = vpop.permute.xlu0 %685
  %688 = vset.pattern.permute.xlu0 3
  %689 = vperm.xlu0 %688, %v521
  %v690 = vpop.permute.xlu0 %689
  %692 = vset.pattern.permute.xlu0 3
  %693 = vperm.xlu0 %692, %v522
  %v694 = vpop.permute.xlu0 %693
  %696 = vset.pattern.permute.xlu0 3
  %697 = vperm.xlu0 %696, %v523
  %v698 = vpop.permute.xlu0 %697
  %700 = vset.pattern.permute.xlu0 3
  %701 = vperm.xlu0 %700, %v524
  %v702 = vpop.permute.xlu0 %701
  %704 = vset.pattern.permute.xlu0 3
  %705 = vperm.xlu0 %704, %v525
  %v706 = vpop.permute.xlu0 %705
  %708 = vset.pattern.permute.xlu0 3
  %709 = vperm.xlu0 %708, %v526
  %v710 = vpop.permute.xlu0 %709
  %712 = vset.pattern.permute.xlu0 3
  %713 = vperm.xlu0 %712, %v527
  %v714 = vpop.permute.xlu0 %713
  %716 = vset.pattern.permute.xlu0 3
  %717 = vperm.xlu0 %716, %v528
  %v718 = vpop.permute.xlu0 %717
  %720 = vset.pattern.permute.xlu0 3
  %721 = vperm.xlu0 %720, %v529
  %v722 = vpop.permute.xlu0 %721
  %724 = vset.pattern.permute.xlu0 3
  %725 = vperm.xlu0 %724, %v530
  %v726 = vpop.permute.xlu0 %725
  %728 = vset.pattern.permute.xlu0 3
  %729 = vperm.xlu0 %728, %v531
  %v730 = vpop.permute.xlu0 %729
  %732 = vset.pattern.permute.xlu0 3
  %733 = vperm.xlu0 %732, %v532
  %v734 = vpop.permute.xlu0 %733
  %v736 = vsel %vm537, %v541, %v650
  %v737 = vsel %vm537, %v546, %v654
  %v738 = vsel %vm537, %v551, %v658
  %v739 = vsel %vm537, %v556, %v662
  %v740 = vsel %vm537, %v561, %v666
  %v741 = vsel %vm537, %v566, %v670
  %v742 = vsel %vm537, %v571, %v674
  %v743 = vsel %vm537, %v576, %v678
  %v744 = vsel %vm537, %v581, %v682
  %v745 = vsel %vm537, %v586, %v686
  %v746 = vsel %vm537, %v591, %v690
  %v747 = vsel %vm537, %v596, %v694
  %v748 = vsel %vm537, %v601, %v698
  %v749 = vsel %vm537, %v606, %v702
  %v750 = vsel %vm537, %v611, %v706
  %v751 = vsel %vm537, %v616, %v710
  %v752 = vsel %vm537, %v621, %v714
  %v753 = vsel %vm537, %v626, %v718
  %v754 = vsel %vm537, %v631, %v722
  %v755 = vsel %vm537, %v636, %v726
  %v756 = vsel %vm537, %v641, %v730
  %v757 = vsel %vm537, %v646, %v734
  %v758 = vsel %vm534, 1, 0
  %vm759 = vcmp.eq.s32.totalorder %v758, 1
  %760 = vset.pattern.permute.xlu0 1
  %761 = vperm.xlu0 %760, %v511
  %v762 = vpop.permute.xlu0 %761
  %764 = vset.pattern.permute.xlu0 1
  %765 = vperm.xlu0 %764, %v512
  %v766 = vpop.permute.xlu0 %765
  %768 = vset.pattern.permute.xlu0 1
  %769 = vperm.xlu0 %768, %v513
  %v770 = vpop.permute.xlu0 %769
  %772 = vset.pattern.permute.xlu0 1
  %773 = vperm.xlu0 %772, %v514
  %v774 = vpop.permute.xlu0 %773
  %776 = vset.pattern.permute.xlu0 1
  %777 = vperm.xlu0 %776, %v515
  %v778 = vpop.permute.xlu0 %777
  %780 = vset.pattern.permute.xlu0 1
  %781 = vperm.xlu0 %780, %v516
  %v782 = vpop.permute.xlu0 %781
  %784 = vset.pattern.permute.xlu0 1
  %785 = vperm.xlu0 %784, %v517
  %v786 = vpop.permute.xlu0 %785
  %788 = vset.pattern.permute.xlu0 1
  %789 = vperm.xlu0 %788, %v518
  %v790 = vpop.permute.xlu0 %789
  %792 = vset.pattern.permute.xlu0 1
  %793 = vperm.xlu0 %792, %v519
  %v794 = vpop.permute.xlu0 %793
  %796 = vset.pattern.permute.xlu0 1
  %797 = vperm.xlu0 %796, %v520
  %v798 = vpop.permute.xlu0 %797
  %800 = vset.pattern.permute.xlu0 1
  %801 = vperm.xlu0 %800, %v521
  %v802 = vpop.permute.xlu0 %801
  %804 = vset.pattern.permute.xlu0 1
  %805 = vperm.xlu0 %804, %v522
  %v806 = vpop.permute.xlu0 %805
  %808 = vset.pattern.permute.xlu0 1
  %809 = vperm.xlu0 %808, %v523
  %v810 = vpop.permute.xlu0 %809
  %812 = vset.pattern.permute.xlu0 1
  %813 = vperm.xlu0 %812, %v524
  %v814 = vpop.permute.xlu0 %813
  %816 = vset.pattern.permute.xlu0 1
  %817 = vperm.xlu0 %816, %v525
  %v818 = vpop.permute.xlu0 %817
  %820 = vset.pattern.permute.xlu0 1
  %821 = vperm.xlu0 %820, %v526
  %v822 = vpop.permute.xlu0 %821
  %824 = vset.pattern.permute.xlu0 1
  %825 = vperm.xlu0 %824, %v527
  %v826 = vpop.permute.xlu0 %825
  %828 = vset.pattern.permute.xlu0 1
  %829 = vperm.xlu0 %828, %v528
  %v830 = vpop.permute.xlu0 %829
  %832 = vset.pattern.permute.xlu0 1
  %833 = vperm.xlu0 %832, %v529
  %v834 = vpop.permute.xlu0 %833
  %836 = vset.pattern.permute.xlu0 1
  %837 = vperm.xlu0 %836, %v530
  %v838 = vpop.permute.xlu0 %837
  %840 = vset.pattern.permute.xlu0 1
  %841 = vperm.xlu0 %840, %v531
  %v842 = vpop.permute.xlu0 %841
  %844 = vset.pattern.permute.xlu0 1
  %845 = vperm.xlu0 %844, %v532
  %v846 = vpop.permute.xlu0 %845
  %v848 = vsel %vm759, %v762, %v736
  %v849 = vsel %vm759, %v766, %v737
  %v850 = vsel %vm759, %v770, %v738
  %v851 = vsel %vm759, %v774, %v739
  %v852 = vsel %vm759, %v778, %v740
  %v853 = vsel %vm759, %v782, %v741
  %v854 = vsel %vm759, %v786, %v742
  %v855 = vsel %vm759, %v790, %v743
  %v856 = vsel %vm759, %v794, %v744
  %v857 = vsel %vm759, %v798, %v745
  %v858 = vsel %vm759, %v802, %v746
  %v859 = vsel %vm759, %v806, %v747
  %v860 = vsel %vm759, %v810, %v748
  %v861 = vsel %vm759, %v814, %v749
  %v862 = vsel %vm759, %v818, %v750
  %v863 = vsel %vm759, %v822, %v751
  %v864 = vsel %vm759, %v826, %v752
  %v865 = vsel %vm759, %v830, %v753
  %v866 = vsel %vm759, %v834, %v754
  %v867 = vsel %vm759, %v838, %v755
  %v868 = vsel %vm759, %v842, %v756
  %v869 = vsel %vm759, %v846, %v757
  %v870 = vsel %vm533, 1, 0
  %vm871 = vcmp.eq.s32.totalorder %v870, 1
  %872 = vset.pattern.permute.xlu0 0
  %873 = vperm.xlu0 %872, %v511
  %v874 = vpop.permute.xlu0 %873
  %876 = vset.pattern.permute.xlu0 0
  %877 = vperm.xlu0 %876, %v512
  %v878 = vpop.permute.xlu0 %877
  %880 = vset.pattern.permute.xlu0 0
  %881 = vperm.xlu0 %880, %v513
  %v882 = vpop.permute.xlu0 %881
  %884 = vset.pattern.permute.xlu0 0
  %885 = vperm.xlu0 %884, %v514
  %v886 = vpop.permute.xlu0 %885
  %888 = vset.pattern.permute.xlu0 0
  %889 = vperm.xlu0 %888, %v515
  %v890 = vpop.permute.xlu0 %889
  %892 = vset.pattern.permute.xlu0 0
  %893 = vperm.xlu0 %892, %v516
  %v894 = vpop.permute.xlu0 %893
  %896 = vset.pattern.permute.xlu0 0
  %897 = vperm.xlu0 %896, %v517
  %v898 = vpop.permute.xlu0 %897
  %900 = vset.pattern.permute.xlu0 0
  %901 = vperm.xlu0 %900, %v518
  %v902 = vpop.permute.xlu0 %901
  %904 = vset.pattern.permute.xlu0 0
  %905 = vperm.xlu0 %904, %v519
  %v906 = vpop.permute.xlu0 %905
  %908 = vset.pattern.permute.xlu0 0
  %909 = vperm.xlu0 %908, %v520
  %v910 = vpop.permute.xlu0 %909
  %912 = vset.pattern.permute.xlu0 0
  %913 = vperm.xlu0 %912, %v521
  %v914 = vpop.permute.xlu0 %913
  %916 = vset.pattern.permute.xlu0 0
  %917 = vperm.xlu0 %916, %v522
  %v918 = vpop.permute.xlu0 %917
  %920 = vset.pattern.permute.xlu0 0
  %921 = vperm.xlu0 %920, %v523
  %v922 = vpop.permute.xlu0 %921
  %924 = vset.pattern.permute.xlu0 0
  %925 = vperm.xlu0 %924, %v524
  %v926 = vpop.permute.xlu0 %925
  %928 = vset.pattern.permute.xlu0 0
  %929 = vperm.xlu0 %928, %v525
  %v930 = vpop.permute.xlu0 %929
  %932 = vset.pattern.permute.xlu0 0
  %933 = vperm.xlu0 %932, %v526
  %v934 = vpop.permute.xlu0 %933
  %936 = vset.pattern.permute.xlu0 0
  %937 = vperm.xlu0 %936, %v527
  %v938 = vpop.permute.xlu0 %937
  %940 = vset.pattern.permute.xlu0 0
  %941 = vperm.xlu0 %940, %v528
  %v942 = vpop.permute.xlu0 %941
  %944 = vset.pattern.permute.xlu0 0
  %945 = vperm.xlu0 %944, %v529
  %v946 = vpop.permute.xlu0 %945
  %948 = vset.pattern.permute.xlu0 0
  %949 = vperm.xlu0 %948, %v530
  %v950 = vpop.permute.xlu0 %949
  %952 = vset.pattern.permute.xlu0 0
  %953 = vperm.xlu0 %952, %v531
  %v954 = vpop.permute.xlu0 %953
  %956 = vset.pattern.permute.xlu0 0
  %957 = vperm.xlu0 %956, %v532
  %v958 = vpop.permute.xlu0 %957
  %v960 = vsel %vm871, %v874, %v848
  %v961 = vsel %vm871, %v878, %v849
  %v962 = vsel %vm871, %v882, %v850
  %v963 = vsel %vm871, %v886, %v851
  %v964 = vsel %vm871, %v890, %v852
  %v965 = vsel %vm871, %v894, %v853
  %v966 = vsel %vm871, %v898, %v854
  %v967 = vsel %vm871, %v902, %v855
  %v968 = vsel %vm871, %v906, %v856
  %v969 = vsel %vm871, %v910, %v857
  %v970 = vsel %vm871, %v914, %v858
  %v971 = vsel %vm871, %v918, %v859
  %v972 = vsel %vm871, %v922, %v860
  %v973 = vsel %vm871, %v926, %v861
  %v974 = vsel %vm871, %v930, %v862
  %v975 = vsel %vm871, %v934, %v863
  %v976 = vsel %vm871, %v938, %v864
  %v977 = vsel %vm871, %v942, %v865
  %v978 = vsel %vm871, %v946, %v866
  %v979 = vsel %vm871, %v950, %v867
  %v980 = vsel %vm871, %v954, %v868
  %v981 = vsel %vm871, %v958, %v869
  %v982 = vmul.f32 %v313, %v960
  %v983 = vmul.f32 %v316, %v961
  %v984 = vmul.f32 %v321, %v962
  %v985 = vmul.f32 %v324, %v963
  %v986 = vmul.f32 %v329, %v964
  %v987 = vmul.f32 %v332, %v965
  %v988 = vmul.f32 %v337, %v966
  %v989 = vmul.f32 %v340, %v967
  %v990 = vmul.f32 %v345, %v968
  %v991 = vmul.f32 %v348, %v969
  %v992 = vmul.f32 %v353, %v970
  %v993 = vmul.f32 %v356, %v971
  %v994 = vmul.f32 %v361, %v972
  %v995 = vmul.f32 %v364, %v973
  %v996 = vmul.f32 %v369, %v974
  %v997 = vmul.f32 %v372, %v975
  %v998 = vmul.f32 %v377, %v976
  %v999 = vmul.f32 %v380, %v977
  %v1000 = vmul.f32 %v385, %v978
  %v1001 = vmul.f32 %v388, %v979
  %v1002 = vmul.f32 %v393, %v980
  %v1003 = vmul.f32 %v396, %v981
  %v1004 = vadd.f32 %v982, %v983
  %v1005 = vadd.f32 %v1004, %v984
  %v1006 = vadd.f32 %v1005, %v985
  %v1007 = vadd.f32 %v1006, %v986
  %v1008 = vadd.f32 %v1007, %v987
  %v1009 = vadd.f32 %v1008, %v988
  %v1010 = vadd.f32 %v1009, %v989
  %v1011 = vadd.f32 %v1010, %v990
  %v1012 = vadd.f32 %v1011, %v991
  %v1013 = vadd.f32 %v1012, %v992
  %v1014 = vadd.f32 %v1013, %v993
  %v1015 = vadd.f32 %v1014, %v994
  %v1016 = vadd.f32 %v1015, %v995
  %v1017 = vadd.f32 %v1016, %v996
  %v1018 = vadd.f32 %v1017, %v997
  %v1019 = vadd.f32 %v1018, %v998
  %v1020 = vadd.f32 %v1019, %v999
  %v1021 = vadd.f32 %v1020, %v1000
  %v1022 = vadd.f32 %v1021, %v1001
  %v1023 = vadd.f32 %v1022, %v1002
  %v1024 = vadd.f32 %v1023, %v1003
  %v1025 = vrot.slane %v1024, 4
  %v1026 = vadd.f32 %v1024, %v1025
  %v1027 = vrot.slane %v1026, 2
  %v1028 = vadd.f32 %v1026, %v1027
  %v1029 = vrot.slane %v1028, 1
  %v1030 = vadd.f32 %v1028, %v1029
  %1031 = vst [vmem:[%s4] sm:$0x1] %v1030
  %v1032 = vmul.f32 %v982, %v982
  %v1033 = vmul.f32 %v983, %v983
  %v1034 = vmul.f32 %v984, %v984
  %v1035 = vmul.f32 %v985, %v985
  %v1036 = vmul.f32 %v986, %v986
  %v1037 = vmul.f32 %v987, %v987
  %v1038 = vmul.f32 %v988, %v988
  %v1039 = vmul.f32 %v989, %v989
  %v1040 = vmul.f32 %v990, %v990
  %v1041 = vmul.f32 %v991, %v991
  %v1042 = vmul.f32 %v992, %v992
  %v1043 = vmul.f32 %v993, %v993
  %v1044 = vmul.f32 %v994, %v994
  %v1045 = vmul.f32 %v995, %v995
  %v1046 = vmul.f32 %v996, %v996
  %v1047 = vmul.f32 %v997, %v997
  %v1048 = vmul.f32 %v998, %v998
  %v1049 = vmul.f32 %v999, %v999
  %v1050 = vmul.f32 %v1000, %v1000
  %v1051 = vmul.f32 %v1001, %v1001
  %v1052 = vmul.f32 %v1002, %v1002
  %v1053 = vmul.f32 %v1003, %v1003
  %v1054 = vadd.f32 %v1032, %v1033
  %v1055 = vadd.f32 %v1054, %v1034
  %v1056 = vadd.f32 %v1055, %v1035
  %v1057 = vadd.f32 %v1056, %v1036
  %v1058 = vadd.f32 %v1057, %v1037
  %v1059 = vadd.f32 %v1058, %v1038
  %v1060 = vadd.f32 %v1059, %v1039
  %v1061 = vadd.f32 %v1060, %v1040
  %v1062 = vadd.f32 %v1061, %v1041
  %v1063 = vadd.f32 %v1062, %v1042
  %v1064 = vadd.f32 %v1063, %v1043
  %v1065 = vadd.f32 %v1064, %v1044
  %v1066 = vadd.f32 %v1065, %v1045
  %v1067 = vadd.f32 %v1066, %v1046
  %v1068 = vadd.f32 %v1067, %v1047
  %v1069 = vadd.f32 %v1068, %v1048
  %v1070 = vadd.f32 %v1069, %v1049
  %v1071 = vadd.f32 %v1070, %v1050
  %v1072 = vadd.f32 %v1071, %v1051
  %v1073 = vadd.f32 %v1072, %v1052
  %v1074 = vadd.f32 %v1073, %v1053
  %v1075 = vrot.slane %v1074, 4
  %v1076 = vadd.f32 %v1074, %v1075
  %v1077 = vrot.slane %v1076, 2
  %v1078 = vadd.f32 %v1076, %v1077
  %v1079 = vrot.slane %v1078, 1
  %v1080 = vadd.f32 %v1078, %v1079
  %1081 = vst [vmem:[%s5] sm:$0x1] %v1080
  // Predicated region
  $region14: #{cgan_generator_forward.7} parent=0 // pred_check
    _
  $region15: #{cgan_generator_forward.7} parent=0 // pred_check_branch
    %1083 = sbr.rel (0) target = $region17
  $region16: #{cgan_generator_forward.7} parent=0 // pred_region
    _
  $region17: #{cgan_generator_forward.7} parent=0 // pred_fallthru
    _
  // Predicated region
  $region18: #{cgan_generator_forward.7} parent=0 // pred_check
    _
  $region19: #{cgan_generator_forward.7} parent=0 // pred_check_branch
    %1085 = sbr.rel (0) target = $region21
  $region20: #{cgan_generator_forward.7} parent=0 // pred_region
    _
  $region21: #{cgan_generator_forward.7} parent=0 // pred_fallthru
    _
  // Predicated region
  $region22: #{cgan_generator_forward.7} parent=0 // pred_check
    _
  $region23: #{cgan_generator_forward.7} parent=0 // pred_check_branch
    %1087 = sbr.rel (0) target = $region25
  $region24: #{cgan_generator_forward.7} parent=0 // pred_region
    _
  $region25: #{cgan_generator_forward.7} parent=0 // pred_fallthru
    _
  // Predicated region
  $region26: #{cgan_generator_forward.7} parent=0 // pred_check
    _
  $region27: #{cgan_generator_forward.7} parent=0 // pred_check_branch
    %1089 = sbr.rel (0) target = $region29
  $region28: #{cgan_generator_forward.7} parent=0 // pred_region
    _
  $region29: #{cgan_generator_forward.7} parent=0 // pred_fallthru
    _
  // Predicated region
  $region30: #{cgan_generator_forward.7} parent=0 // pred_check
    _
  $region31: #{cgan_generator_forward.7} parent=0 // pred_check_branch
    %1091 = sbr.rel (0) target = $region33
  $region32: #{cgan_generator_forward.7} parent=0 // pred_region
    _
  $region33: #{cgan_generator_forward.7} parent=0 // pred_fallthru
    _
  // Predicated region
  $region34: #{cgan_generator_forward.7} parent=0 // pred_check
    _
  $region35: #{cgan_generator_forward.7} parent=0 // pred_check_branch
    %1093 = sbr.rel (0) target = $region37
  $region36: #{cgan_generator_forward.7} parent=0 // pred_region
    _
  $region37: #{cgan_generator_forward.7} parent=0 // pred_fallthru
    _

// kernel: cgan_generator_forward.8
$region0: #{cgan_generator_forward.8}
  #allocation0 [shape = 'u32[]', space=smem, size = 0x4, offset = 0x4, fixed_abs, tag = 'smem constant byte address 0x4 - core index']
  #allocation1 [shape = 'u32[144,128]{1,0:T(1,128)}', space=vmem, size = 0x12000, scoped, tag = 'internal scratch']
  %s0 = inlined_call_operand.vmem [shape: bf16[592,128], index: 0, kind: input, shape index: {}]
  %s1 = inlined_call_operand.vmem [shape: bf16[128,64], index: 1, kind: input, shape index: {}]
  %s2 = inlined_call_operand.vmem [shape: f32[592,4], index: 2, kind: input, shape index: {}]
  %s3 = inlined_call_operand.vmem [shape: bf16[592,64], index: 3, kind: output, shape index: {0}]
  %s4 = inlined_call_operand.vmem [shape: f32[1,1,64], index: 4, kind: output, shape index: {1}]
  %s5 = inlined_call_operand.vmem [shape: f32[1,1,64], index: 5, kind: output, shape index: {2}]
  %6 = xla_tuple %s3, %s4, %s5
  %s7 = sld [smem:[#allocation0]]
  $region38: #{cgan_generator_forward.8} parent=0
    _
  %s9 = ssub.s32 1, %s7
  %s10 = scalar_select 0, %s9, %s7
  // Predicated region
  $region2: #{cgan_generator_forward.8} parent=0 // pred_check
    _
  $region3: #{cgan_generator_forward.8} parent=0 // pred_check_branch
    %12 = sbr.rel (0) target = $region5
  $region4: #{cgan_generator_forward.8} parent=0 // pred_region
    _
  $region5: #{cgan_generator_forward.8} parent=0 // pred_fallthru
    _
  // Predicated region
  $region6: #{cgan_generator_forward.8} parent=0 // pred_check
    _
  $region7: #{cgan_generator_forward.8} parent=0 // pred_check_branch
    %14 = sbr.rel (0) target = $region9
  $region8: #{cgan_generator_forward.8} parent=0 // pred_region
    _
  $region9: #{cgan_generator_forward.8} parent=0 // pred_fallthru
    _
  // Predicated region
  $region10: #{cgan_generator_forward.8} parent=0 // pred_check
    _
  $region11: #{cgan_generator_forward.8} parent=0 // pred_check_branch
    %16 = sbr.rel (0) target = $region13
  $region12: #{cgan_generator_forward.8} parent=0 // pred_region
    _
  $region13: #{cgan_generator_forward.8} parent=0 // pred_fallthru
    _
  %v18 = vld [vmem:[%s0] sm:$0xf]
  %v19 = vld [vmem:[%s0 + $0x4] sm:$0xf]
  %v20 = vld [vmem:[%s0 + $0x8] sm:$0xf]
  %v21 = vld [vmem:[%s0 + $0xc] sm:$0xf]
  %v22 = vld [vmem:[%s0 + $0x10] sm:$0xf]
  %v23 = vld [vmem:[%s0 + $0x14] sm:$0xf]
  %v24 = vld [vmem:[%s0 + $0x18] sm:$0xf]
  %v25 = vld [vmem:[%s0 + $0x1c] sm:$0xf]
  %v26 = vld [vmem:[%s0 + $0x20] sm:$0xf]
  %v27 = vld [vmem:[%s0 + $0x24] sm:$0xf]
  %v28 = vld [vmem:[%s0 + $0x28] sm:$0xf]
  %v29 = vld [vmem:[%s0 + $0x2c] sm:$0xf]
  %v30 = vld [vmem:[%s0 + $0x30] sm:$0xf]
  %v31 = vld [vmem:[%s0 + $0x34] sm:$0xf]
  %v32 = vld [vmem:[%s0 + $0x38] sm:$0xf]
  %v33 = vld [vmem:[%s0 + $0x3c] sm:$0xf]
  %v34 = vld [vmem:[%s0 + $0x40] sm:$0xf]
  %v35 = vld [vmem:[%s0 + $0x44] sm:$0xf]
  %v36 = vld [vmem:[%s0 + $0x48] sm:$0xf]
  %v37 = vld [vmem:[%s0 + $0x4c] sm:$0xf]
  %v38 = vld [vmem:[%s0 + $0x50] sm:$0xf]
  %v39 = vld [vmem:[%s0 + $0x54] sm:$0xf]
  %v40 = vld [vmem:[%s0 + $0x58] sm:$0xf]
  %v41 = vld [vmem:[%s0 + $0x5c] sm:$0xf]
  %v42 = vld [vmem:[%s0 + $0x60] sm:$0xf]
  %v43 = vld [vmem:[%s0 + $0x64] sm:$0xf]
  %v44 = vld [vmem:[%s0 + $0x68] sm:$0xf]
  %v45 = vld [vmem:[%s0 + $0x6c] sm:$0xf]
  %v46 = vld [vmem:[%s0 + $0x70] sm:$0xf]
  %v47 = vld [vmem:[%s0 + $0x74] sm:$0xf]
  %v48 = vld [vmem:[%s0 + $0x78] sm:$0xf]
  %v49 = vld [vmem:[%s0 + $0x7c] sm:$0xf]
  %v50 = vld [vmem:[%s0 + $0x80] sm:$0xf]
  %v51 = vld [vmem:[%s0 + $0x84] sm:$0xf]
  %v52 = vld [vmem:[%s0 + $0x88] sm:$0xf]
  %v53 = vld [vmem:[%s0 + $0x8c] sm:$0xf]
  %v54 = vld [vmem:[%s0 + $0x90] sm:$0xf]
  %v55 = vld [vmem:[%s0 + $0x94] sm:$0xf]
  %v56 = vld [vmem:[%s0 + $0x98] sm:$0xf]
  %v57 = vld [vmem:[%s0 + $0x9c] sm:$0xf]
  %v58 = vld [vmem:[%s0 + $0xa0] sm:$0xf]
  %v59 = vld [vmem:[%s0 + $0xa4] sm:$0xf]
  %v60 = vld [vmem:[%s0 + $0xa8] sm:$0xf]
  %v61 = vld [vmem:[%s0 + $0xac] sm:$0xf]
  %v62 = vld [vmem:[%s0 + $0xb0] sm:$0xf]
  %v63 = vld [vmem:[%s0 + $0xb4] sm:$0xf]
  %v64 = vld [vmem:[%s0 + $0xb8] sm:$0xf]
  %v65 = vld [vmem:[%s0 + $0xbc] sm:$0xf]
  %v66 = vld [vmem:[%s0 + $0xc0] sm:$0xf]
  %v67 = vld [vmem:[%s0 + $0xc4] sm:$0xf]
  %v68 = vld [vmem:[%s0 + $0xc8] sm:$0xf]
  %v69 = vld [vmem:[%s0 + $0xcc] sm:$0xf]
  %v70 = vld [vmem:[%s0 + $0xd0] sm:$0xf]
  %v71 = vld [vmem:[%s0 + $0xd4] sm:$0xf]
  %v72 = vld [vmem:[%s0 + $0xd8] sm:$0xf]
  %v73 = vld [vmem:[%s0 + $0xdc] sm:$0xf]
  %v74 = vld [vmem:[%s0 + $0xe0] sm:$0xf]
  %v75 = vld [vmem:[%s0 + $0xe4] sm:$0xf]
  %v76 = vld [vmem:[%s0 + $0xe8] sm:$0xf]
  %v77 = vld [vmem:[%s0 + $0xec] sm:$0xf]
  %v78 = vld [vmem:[%s0 + $0xf0] sm:$0xf]
  %v79 = vld [vmem:[%s0 + $0xf4] sm:$0xf]
  %v80 = vld [vmem:[%s0 + $0xf8] sm:$0xf]
  %v81 = vld [vmem:[%s0 + $0xfc] sm:$0xf]
  %v82 = vld [vmem:[%s0 + $0x100] sm:$0xf]
  %v83 = vld [vmem:[%s0 + $0x104] sm:$0xf]
  %v84 = vld [vmem:[%s0 + $0x108] sm:$0xf]
  %v85 = vld [vmem:[%s0 + $0x10c] sm:$0xf]
  %v86 = vld [vmem:[%s0 + $0x110] sm:$0xf]
  %v87 = vld [vmem:[%s0 + $0x114] sm:$0xf]
  %v88 = vld [vmem:[%s0 + $0x118] sm:$0xf]
  %v89 = vld [vmem:[%s0 + $0x11c] sm:$0xf]
  %v90 = vld [vmem:[%s0 + $0x120] sm:$0xf]
  %v91 = vld [vmem:[%s0 + $0x124] sm:$0xf]
  %v92 = vld [vmem:[%s1] sm:$0xf]
  %v93 = vld [vmem:[%s1 + $0x4] sm:$0xf]
  %v94 = vld [vmem:[%s1 + $0x8] sm:$0xf]
  %v95 = vld [vmem:[%s1 + $0xc] sm:$0xf]
  %v96 = vld [vmem:[%s1 + $0x10] sm:$0xf]
  %v97 = vld [vmem:[%s1 + $0x14] sm:$0xf]
  %v98 = vld [vmem:[%s1 + $0x18] sm:$0xf]
  %v99 = vld [vmem:[%s1 + $0x1c] sm:$0xf]
  %v100 = vld [vmem:[%s1 + $0x20] sm:$0xf]
  %v101 = vld [vmem:[%s1 + $0x24] sm:$0xf]
  %v102 = vld [vmem:[%s1 + $0x28] sm:$0xf]
  %v103 = vld [vmem:[%s1 + $0x2c] sm:$0xf]
  %v104 = vld [vmem:[%s1 + $0x30] sm:$0xf]
  %v105 = vld [vmem:[%s1 + $0x34] sm:$0xf]
  %v106 = vld [vmem:[%s1 + $0x38] sm:$0xf]
  %v107 = vld [vmem:[%s1 + $0x3c] sm:$0xf]
  %v182 = vunpack.c.l.b16 %v18
  %v183 = vunpack.c.l.b16 %v19
  %v184 = vunpack.c.l.b16 %v20
  %v185 = vunpack.c.l.b16 %v21
  %v186 = vunpack.c.l.b16 %v22
  %v187 = vunpack.c.l.b16 %v23
  %v188 = vunpack.c.l.b16 %v24
  %v189 = vunpack.c.l.b16 %v25
  %v190 = vunpack.c.l.b16 %v26
  %v191 = vunpack.c.l.b16 %v27
  %v192 = vunpack.c.l.b16 %v28
  %v193 = vunpack.c.l.b16 %v29
  %v194 = vunpack.c.l.b16 %v30
  %v195 = vunpack.c.l.b16 %v31
  %v196 = vunpack.c.l.b16 %v32
  %v197 = vunpack.c.l.b16 %v33
  %v198 = vunpack.c.l.b16 %v34
  %v199 = vunpack.c.l.b16 %v35
  %v200 = vunpack.c.l.b16 %v36
  %v201 = vunpack.c.l.b16 %v37
  %v202 = vunpack.c.l.b16 %v38
  %v203 = vunpack.c.l.b16 %v39
  %v204 = vunpack.c.l.b16 %v40
  %v205 = vunpack.c.l.b16 %v41
  %v206 = vunpack.c.l.b16 %v42
  %v207 = vunpack.c.l.b16 %v43
  %v208 = vunpack.c.l.b16 %v44
  %v209 = vunpack.c.l.b16 %v45
  %v210 = vunpack.c.l.b16 %v46
  %v211 = vunpack.c.l.b16 %v47
  %v212 = vunpack.c.l.b16 %v48
  %v213 = vunpack.c.l.b16 %v49
  %v214 = vunpack.c.l.b16 %v50
  %v215 = vunpack.c.l.b16 %v51
  %v216 = vunpack.c.l.b16 %v52
  %v217 = vunpack.c.l.b16 %v53
  %v218 = vunpack.c.l.b16 %v54
  %v219 = vunpack.c.l.b16 %v55
  %v220 = vunpack.c.l.b16 %v56
  %v221 = vunpack.c.l.b16 %v57
  %v222 = vunpack.c.l.b16 %v58
  %v223 = vunpack.c.l.b16 %v59
  %v224 = vunpack.c.l.b16 %v60
  %v225 = vunpack.c.l.b16 %v61
  %v226 = vunpack.c.l.b16 %v62
  %v227 = vunpack.c.l.b16 %v63
  %v228 = vunpack.c.l.b16 %v64
  %v229 = vunpack.c.l.b16 %v65
  %v230 = vunpack.c.l.b16 %v66
  %v231 = vunpack.c.l.b16 %v67
  %v232 = vunpack.c.l.b16 %v68
  %v233 = vunpack.c.l.b16 %v69
  %v234 = vunpack.c.l.b16 %v70
  %v235 = vunpack.c.l.b16 %v71
  %v236 = vunpack.c.l.b16 %v72
  %v237 = vunpack.c.l.b16 %v73
  %v238 = vunpack.c.l.b16 %v74
  %v239 = vunpack.c.l.b16 %v75
  %v240 = vunpack.c.l.b16 %v76
  %v241 = vunpack.c.l.b16 %v77
  %v242 = vunpack.c.l.b16 %v78
  %v243 = vunpack.c.l.b16 %v79
  %v244 = vunpack.c.l.b16 %v80
  %v245 = vunpack.c.l.b16 %v81
  %v246 = vunpack.c.l.b16 %v82
  %v247 = vunpack.c.l.b16 %v83
  %v248 = vunpack.c.l.b16 %v84
  %v249 = vunpack.c.l.b16 %v85
  %v250 = vunpack.c.l.b16 %v86
  %v251 = vunpack.c.l.b16 %v87
  %v252 = vunpack.c.l.b16 %v88
  %v253 = vunpack.c.l.b16 %v89
  %v254 = vunpack.c.l.b16 %v90
  %v255 = vunpack.c.l.b16 %v91
  %v256 = vpack.c.b16 %v183, %v182
  %v257 = vpack.c.b16 %v185, %v184
  %v258 = vpack.c.b16 %v187, %v186
  %v259 = vpack.c.b16 %v189, %v188
  %v260 = vpack.c.b16 %v191, %v190
  %v261 = vpack.c.b16 %v193, %v192
  %v262 = vpack.c.b16 %v195, %v194
  %v263 = vpack.c.b16 %v197, %v196
  %v264 = vpack.c.b16 %v199, %v198
  %v265 = vpack.c.b16 %v201, %v200
  %v266 = vpack.c.b16 %v203, %v202
  %v267 = vpack.c.b16 %v205, %v204
  %v268 = vpack.c.b16 %v207, %v206
  %v269 = vpack.c.b16 %v209, %v208
  %v270 = vpack.c.b16 %v211, %v210
  %v271 = vpack.c.b16 %v213, %v212
  %v272 = vpack.c.b16 %v215, %v214
  %v273 = vpack.c.b16 %v217, %v216
  %v274 = vpack.c.b16 %v219, %v218
  %v275 = vpack.c.b16 %v221, %v220
  %v276 = vpack.c.b16 %v223, %v222
  %v277 = vpack.c.b16 %v225, %v224
  %v278 = vpack.c.b16 %v227, %v226
  %v279 = vpack.c.b16 %v229, %v228
  %v280 = vpack.c.b16 %v231, %v230
  %v281 = vpack.c.b16 %v233, %v232
  %v282 = vpack.c.b16 %v235, %v234
  %v283 = vpack.c.b16 %v237, %v236
  %v284 = vpack.c.b16 %v239, %v238
  %v285 = vpack.c.b16 %v241, %v240
  %v286 = vpack.c.b16 %v243, %v242
  %v287 = vpack.c.b16 %v245, %v244
  %v288 = vpack.c.b16 %v247, %v246
  %v289 = vpack.c.b16 %v249, %v248
  %v290 = vpack.c.b16 %v251, %v250
  %v291 = vpack.c.b16 %v253, %v252
  %v292 = vpack.c.b16 %v255, %v254
  %v346 = vunpack.c.l.b16 %v92
  %v347 = vunpack.c.l.b16 %v93
  %v348 = vunpack.c.l.b16 %v94
  %v349 = vunpack.c.l.b16 %v95
  %v350 = vunpack.c.l.b16 %v96
  %v351 = vunpack.c.l.b16 %v97
  %v352 = vunpack.c.l.b16 %v98
  %v353 = vunpack.c.l.b16 %v99
  %v354 = vunpack.c.l.b16 %v100
  %v355 = vunpack.c.l.b16 %v101
  %v356 = vunpack.c.l.b16 %v102
  %v357 = vunpack.c.l.b16 %v103
  %v358 = vunpack.c.l.b16 %v104
  %v359 = vunpack.c.l.b16 %v105
  %v360 = vunpack.c.l.b16 %v106
  %v361 = vunpack.c.l.b16 %v107
  %v362 = vpack.c.b16 %v347, %v346
  %v363 = vpack.c.b16 %v349, %v348
  %v364 = vpack.c.b16 %v351, %v350
  %v365 = vpack.c.b16 %v353, %v352
  %v366 = vpack.c.b16 %v355, %v354
  %v367 = vpack.c.b16 %v357, %v356
  %v368 = vpack.c.b16 %v359, %v358
  %v369 = vpack.c.b16 %v361, %v360
  %378 = vmatprep.subr.bf16.mxu0 0
  %379 = vmatpush1.bf16.msra.mxu0 %v362
  %380 = vmatprep.subr.bf16.mxu0 0
  %381 = vmatpush1.bf16.msra.mxu0 %v363
  %382 = vmatprep.subr.bf16.mxu0 0
  %383 = vmatpush1.bf16.msra.mxu0 %v364
  %384 = vmatprep.subr.bf16.mxu0 0
  %385 = vmatpush1.bf16.msra.mxu0 %v365
  %386 = vmatprep.subr.bf16.mxu0 0
  %387 = vmatpush1.bf16.msra.mxu0 %v366
  %388 = vmatprep.subr.bf16.mxu0 0
  %389 = vmatpush1.bf16.msra.mxu0 %v367
  %390 = vmatprep.subr.bf16.mxu0 0
  %391 = vmatpush1.bf16.msra.mxu0 %v368
  %392 = vmatprep.subr.bf16.mxu0 0
  %393 = vmatpush1.bf16.msra.mxu0 %v369
  %394 = vmatprep.subr.bf16.mxu0 0
  %395 = vmatpush1.bf16.msra.mxu0 0
  %396 = vmatprep.subr.bf16.mxu0 0
  %397 = vmatpush1.bf16.msra.mxu0 0
  %398 = vmatprep.subr.bf16.mxu0 0
  %399 = vmatpush1.bf16.msra.mxu0 0
  %400 = vmatprep.subr.bf16.mxu0 0
  %401 = vmatpush1.bf16.msra.mxu0 0
  %402 = vmatprep.subr.bf16.mxu0 0
  %403 = vmatpush1.bf16.msra.mxu0 0
  %404 = vmatprep.subr.bf16.mxu0 0
  %405 = vmatpush1.bf16.msra.mxu0 0
  %406 = vmatprep.subr.bf16.mxu0 0
  %407 = vmatpush1.bf16.msra.mxu0 0
  %408 = vmatprep.subr.bf16.mxu0 0
  %409 = vmatpush1.bf16.msra.mxu0 0
  %410 = vmatprep.mubr.bf16.mxu0 0
  %411 = vmatmul.mubr.bf16.gmra.mrb[0].mxu0 %v256
  %v412 = vpop.f32.mrb[0].mxu0
  %v413 = vadd.f32 0.0, %v412
  %v414 = vpop.f32.mrb[0].mxu0
  %v415 = vpop.f32.mrb[0].mxu0
  %v416 = vadd.f32 0.0, %v415
  %v417 = vpop.f32.mrb[0].mxu0
  %418 = vmatprep.mubr.bf16.mxu0 0
  %419 = vmatmul.mubr.bf16.gmra.mrb[0].mxu0 %v257
  %v420 = vpop.f32.mrb[0].mxu0
  %v421 = vadd.f32 0.0, %v420
  %v422 = vpop.f32.mrb[0].mxu0
  %v423 = vpop.f32.mrb[0].mxu0
  %v424 = vadd.f32 0.0, %v423
  %v425 = vpop.f32.mrb[0].mxu0
  %426 = vmatprep.mubr.bf16.mxu0 0
  %427 = vmatmul.mubr.bf16.gmra.mrb[0].mxu0 %v258
  %v428 = vpop.f32.mrb[0].mxu0
  %v429 = vadd.f32 0.0, %v428
  %v430 = vpop.f32.mrb[0].mxu0
  %v431 = vpop.f32.mrb[0].mxu0
  %v432 = vadd.f32 0.0, %v431
  %v433 = vpop.f32.mrb[0].mxu0
  %434 = vmatprep.mubr.bf16.mxu0 0
  %435 = vmatmul.mubr.bf16.gmra.mrb[0].mxu0 %v259
  %v436 = vpop.f32.mrb[0].mxu0
  %v437 = vadd.f32 0.0, %v436
  %v438 = vpop.f32.mrb[0].mxu0
  %v439 = vpop.f32.mrb[0].mxu0
  %v440 = vadd.f32 0.0, %v439
  %v441 = vpop.f32.mrb[0].mxu0
  %442 = vmatprep.mubr.bf16.mxu0 0
  %443 = vmatmul.mubr.bf16.gmra.mrb[0].mxu0 %v260
  %v444 = vpop.f32.mrb[0].mxu0
  %v445 = vadd.f32 0.0, %v444
  %v446 = vpop.f32.mrb[0].mxu0
  %v447 = vpop.f32.mrb[0].mxu0
  %v448 = vadd.f32 0.0, %v447
  %v449 = vpop.f32.mrb[0].mxu0
  %450 = vmatprep.mubr.bf16.mxu0 0
  %451 = vmatmul.mubr.bf16.gmra.mrb[0].mxu0 %v261
  %v452 = vpop.f32.mrb[0].mxu0
  %v453 = vadd.f32 0.0, %v452
  %v454 = vpop.f32.mrb[0].mxu0
  %v455 = vpop.f32.mrb[0].mxu0
  %v456 = vadd.f32 0.0, %v455
  %v457 = vpop.f32.mrb[0].mxu0
  %458 = vmatprep.mubr.bf16.mxu0 0
  %459 = vmatmul.mubr.bf16.gmra.mrb[0].mxu0 %v262
  %v460 = vpop.f32.mrb[0].mxu0
  %v461 = vadd.f32 0.0, %v460
  %v462 = vpop.f32.mrb[0].mxu0
  %v463 = vpop.f32.mrb[0].mxu0
  %v464 = vadd.f32 0.0, %v463
  %v465 = vpop.f32.mrb[0].mxu0
  %466 = vmatprep.mubr.bf16.mxu0 0
  %467 = vmatmul.mubr.bf16.gmra.mrb[0].mxu0 %v263
  %v468 = vpop.f32.mrb[0].mxu0
  %v469 = vadd.f32 0.0, %v468
  %v470 = vpop.f32.mrb[0].mxu0
  %v471 = vpop.f32.mrb[0].mxu0
  %v472 = vadd.f32 0.0, %v471
  %v473 = vpop.f32.mrb[0].mxu0
  %474 = vmatprep.mubr.bf16.mxu0 0
  %475 = vmatmul.mubr.bf16.gmra.mrb[0].mxu0 %v264
  %v476 = vpop.f32.mrb[0].mxu0
  %v477 = vadd.f32 0.0, %v476
  %v478 = vpop.f32.mrb[0].mxu0
  %v479 = vpop.f32.mrb[0].mxu0
  %v480 = vadd.f32 0.0, %v479
  %v481 = vpop.f32.mrb[0].mxu0
  %482 = vmatprep.mubr.bf16.mxu0 0
  %483 = vmatmul.mubr.bf16.gmra.mrb[0].mxu0 %v265
  %v484 = vpop.f32.mrb[0].mxu0
  %v485 = vadd.f32 0.0, %v484
  %v486 = vpop.f32.mrb[0].mxu0
  %v487 = vpop.f32.mrb[0].mxu0
  %v488 = vadd.f32 0.0, %v487
  %v489 = vpop.f32.mrb[0].mxu0
  %490 = vmatprep.mubr.bf16.mxu0 0
  %491 = vmatmul.mubr.bf16.gmra.mrb[0].mxu0 %v266
  %v492 = vpop.f32.mrb[0].mxu0
  %v493 = vadd.f32 0.0, %v492
  %v494 = vpop.f32.mrb[0].mxu0
  %v495 = vpop.f32.mrb[0].mxu0
  %v496 = vadd.f32 0.0, %v495
  %v497 = vpop.f32.mrb[0].mxu0
  %498 = vmatprep.mubr.bf16.mxu0 0
  %499 = vmatmul.mubr.bf16.gmra.mrb[0].mxu0 %v267
  %v500 = vpop.f32.mrb[0].mxu0
  %v501 = vadd.f32 0.0, %v500
  %v502 = vpop.f32.mrb[0].mxu0
  %v503 = vpop.f32.mrb[0].mxu0
  %v504 = vadd.f32 0.0, %v503
  %v505 = vpop.f32.mrb[0].mxu0
  %506 = vmatprep.mubr.bf16.mxu0 0
  %507 = vmatmul.mubr.bf16.gmra.mrb[0].mxu0 %v268
  %v508 = vpop.f32.mrb[0].mxu0
  %v509 = vadd.f32 0.0, %v508
  %v510 = vpop.f32.mrb[0].mxu0
  %v511 = vpop.f32.mrb[0].mxu0
  %v512 = vadd.f32 0.0, %v511
  %v513 = vpop.f32.mrb[0].mxu0
  %514 = vmatprep.mubr.bf16.mxu0 0
  %515 = vmatmul.mubr.bf16.gmra.mrb[0].mxu0 %v269
  %v516 = vpop.f32.mrb[0].mxu0
  %v517 = vadd.f32 0.0, %v516
  %v518 = vpop.f32.mrb[0].mxu0
  %v519 = vpop.f32.mrb[0].mxu0
  %v520 = vadd.f32 0.0, %v519
  %v521 = vpop.f32.mrb[0].mxu0
  %522 = vmatprep.mubr.bf16.mxu0 0
  %523 = vmatmul.mubr.bf16.gmra.mrb[0].mxu0 %v270
  %v524 = vpop.f32.mrb[0].mxu0
  %v525 = vadd.f32 0.0, %v524
  %v526 = vpop.f32.mrb[0].mxu0
  %v527 = vpop.f32.mrb[0].mxu0
  %v528 = vadd.f32 0.0, %v527
  %v529 = vpop.f32.mrb[0].mxu0
  %530 = vmatprep.mubr.bf16.mxu0 0
  %531 = vmatmul.mubr.bf16.gmra.mrb[0].mxu0 %v271
  %v532 = vpop.f32.mrb[0].mxu0
  %v533 = vadd.f32 0.0, %v532
  %v534 = vpop.f32.mrb[0].mxu0
  %v535 = vpop.f32.mrb[0].mxu0
  %v536 = vadd.f32 0.0, %v535
  %v537 = vpop.f32.mrb[0].mxu0
  %538 = vmatprep.mubr.bf16.mxu0 0
  %539 = vmatmul.mubr.bf16.gmra.mrb[0].mxu0 %v272
  %v540 = vpop.f32.mrb[0].mxu0
  %v541 = vadd.f32 0.0, %v540
  %v542 = vpop.f32.mrb[0].mxu0
  %v543 = vpop.f32.mrb[0].mxu0
  %v544 = vadd.f32 0.0, %v543
  %v545 = vpop.f32.mrb[0].mxu0
  %546 = vmatprep.mubr.bf16.mxu0 0
  %547 = vmatmul.mubr.bf16.gmra.mrb[0].mxu0 %v273
  %v548 = vpop.f32.mrb[0].mxu0
  %v549 = vadd.f32 0.0, %v548
  %v550 = vpop.f32.mrb[0].mxu0
  %v551 = vpop.f32.mrb[0].mxu0
  %v552 = vadd.f32 0.0, %v551
  %v553 = vpop.f32.mrb[0].mxu0
  %554 = vmatprep.mubr.bf16.mxu0 0
  %555 = vmatmul.mubr.bf16.gmra.mrb[0].mxu0 %v274
  %v556 = vpop.f32.mrb[0].mxu0
  %v557 = vadd.f32 0.0, %v556
  %v558 = vpop.f32.mrb[0].mxu0
  %v559 = vpop.f32.mrb[0].mxu0
  %v560 = vadd.f32 0.0, %v559
  %v561 = vpop.f32.mrb[0].mxu0
  %562 = vmatprep.mubr.bf16.mxu0 0
  %563 = vmatmul.mubr.bf16.gmra.mrb[0].mxu0 %v275
  %v564 = vpop.f32.mrb[0].mxu0
  %v565 = vadd.f32 0.0, %v564
  %v566 = vpop.f32.mrb[0].mxu0
  %v567 = vpop.f32.mrb[0].mxu0
  %v568 = vadd.f32 0.0, %v567
  %v569 = vpop.f32.mrb[0].mxu0
  %570 = vmatprep.mubr.bf16.mxu0 0
  %571 = vmatmul.mubr.bf16.gmra.mrb[0].mxu0 %v276
  %v572 = vpop.f32.mrb[0].mxu0
  %v573 = vadd.f32 0.0, %v572
  %v574 = vpop.f32.mrb[0].mxu0
  %v575 = vpop.f32.mrb[0].mxu0
  %v576 = vadd.f32 0.0, %v575
  %v577 = vpop.f32.mrb[0].mxu0
  %578 = vmatprep.mubr.bf16.mxu0 0
  %579 = vmatmul.mubr.bf16.gmra.mrb[0].mxu0 %v277
  %v580 = vpop.f32.mrb[0].mxu0
  %v581 = vadd.f32 0.0, %v580
  %v582 = vpop.f32.mrb[0].mxu0
  %v583 = vpop.f32.mrb[0].mxu0
  %v584 = vadd.f32 0.0, %v583
  %v585 = vpop.f32.mrb[0].mxu0
  %586 = vmatprep.mubr.bf16.mxu0 0
  %587 = vmatmul.mubr.bf16.gmra.mrb[0].mxu0 %v278
  %v588 = vpop.f32.mrb[0].mxu0
  %v589 = vadd.f32 0.0, %v588
  %v590 = vpop.f32.mrb[0].mxu0
  %v591 = vpop.f32.mrb[0].mxu0
  %v592 = vadd.f32 0.0, %v591
  %v593 = vpop.f32.mrb[0].mxu0
  %594 = vmatprep.mubr.bf16.mxu0 0
  %595 = vmatmul.mubr.bf16.gmra.mrb[0].mxu0 %v279
  %v596 = vpop.f32.mrb[0].mxu0
  %v597 = vadd.f32 0.0, %v596
  %v598 = vpop.f32.mrb[0].mxu0
  %v599 = vpop.f32.mrb[0].mxu0
  %v600 = vadd.f32 0.0, %v599
  %v601 = vpop.f32.mrb[0].mxu0
  %602 = vmatprep.mubr.bf16.mxu0 0
  %603 = vmatmul.mubr.bf16.gmra.mrb[0].mxu0 %v280
  %v604 = vpop.f32.mrb[0].mxu0
  %v605 = vadd.f32 0.0, %v604
  %v606 = vpop.f32.mrb[0].mxu0
  %v607 = vpop.f32.mrb[0].mxu0
  %v608 = vadd.f32 0.0, %v607
  %v609 = vpop.f32.mrb[0].mxu0
  %610 = vmatprep.mubr.bf16.mxu0 0
  %611 = vmatmul.mubr.bf16.gmra.mrb[0].mxu0 %v281
  %v612 = vpop.f32.mrb[0].mxu0
  %v613 = vadd.f32 0.0, %v612
  %v614 = vpop.f32.mrb[0].mxu0
  %v615 = vpop.f32.mrb[0].mxu0
  %v616 = vadd.f32 0.0, %v615
  %v617 = vpop.f32.mrb[0].mxu0
  %618 = vmatprep.mubr.bf16.mxu0 0
  %619 = vmatmul.mubr.bf16.gmra.mrb[0].mxu0 %v282
  %v620 = vpop.f32.mrb[0].mxu0
  %v621 = vadd.f32 0.0, %v620
  %v622 = vpop.f32.mrb[0].mxu0
  %v623 = vpop.f32.mrb[0].mxu0
  %v624 = vadd.f32 0.0, %v623
  %v625 = vpop.f32.mrb[0].mxu0
  %626 = vmatprep.mubr.bf16.mxu0 0
  %627 = vmatmul.mubr.bf16.gmra.mrb[0].mxu0 %v283
  %v628 = vpop.f32.mrb[0].mxu0
  %v629 = vadd.f32 0.0, %v628
  %v630 = vpop.f32.mrb[0].mxu0
  %v631 = vpop.f32.mrb[0].mxu0
  %v632 = vadd.f32 0.0, %v631
  %v633 = vpop.f32.mrb[0].mxu0
  %634 = vmatprep.mubr.bf16.mxu0 0
  %635 = vmatmul.mubr.bf16.gmra.mrb[0].mxu0 %v284
  %v636 = vpop.f32.mrb[0].mxu0
  %v637 = vadd.f32 0.0, %v636
  %v638 = vpop.f32.mrb[0].mxu0
  %v639 = vpop.f32.mrb[0].mxu0
  %v640 = vadd.f32 0.0, %v639
  %v641 = vpop.f32.mrb[0].mxu0
  %642 = vmatprep.mubr.bf16.mxu0 0
  %643 = vmatmul.mubr.bf16.gmra.mrb[0].mxu0 %v285
  %v644 = vpop.f32.mrb[0].mxu0
  %v645 = vadd.f32 0.0, %v644
  %v646 = vpop.f32.mrb[0].mxu0
  %v647 = vpop.f32.mrb[0].mxu0
  %v648 = vadd.f32 0.0, %v647
  %v649 = vpop.f32.mrb[0].mxu0
  %650 = vmatprep.mubr.bf16.mxu0 0
  %651 = vmatmul.mubr.bf16.gmra.mrb[0].mxu0 %v286
  %v652 = vpop.f32.mrb[0].mxu0
  %v653 = vadd.f32 0.0, %v652
  %v654 = vpop.f32.mrb[0].mxu0
  %v655 = vpop.f32.mrb[0].mxu0
  %v656 = vadd.f32 0.0, %v655
  %v657 = vpop.f32.mrb[0].mxu0
  %658 = vmatprep.mubr.bf16.mxu0 0
  %659 = vmatmul.mubr.bf16.gmra.mrb[0].mxu0 %v287
  %v660 = vpop.f32.mrb[0].mxu0
  %v661 = vadd.f32 0.0, %v660
  %v662 = vpop.f32.mrb[0].mxu0
  %v663 = vpop.f32.mrb[0].mxu0
  %v664 = vadd.f32 0.0, %v663
  %v665 = vpop.f32.mrb[0].mxu0
  %666 = vmatprep.mubr.bf16.mxu0 0
  %667 = vmatmul.mubr.bf16.gmra.mrb[0].mxu0 %v288
  %v668 = vpop.f32.mrb[0].mxu0
  %v669 = vadd.f32 0.0, %v668
  %v670 = vpop.f32.mrb[0].mxu0
  %v671 = vpop.f32.mrb[0].mxu0
  %v672 = vadd.f32 0.0, %v671
  %v673 = vpop.f32.mrb[0].mxu0
  %674 = vmatprep.mubr.bf16.mxu0 0
  %675 = vmatmul.mubr.bf16.gmra.mrb[0].mxu0 %v289
  %v676 = vpop.f32.mrb[0].mxu0
  %v677 = vadd.f32 0.0, %v676
  %v678 = vpop.f32.mrb[0].mxu0
  %v679 = vpop.f32.mrb[0].mxu0
  %v680 = vadd.f32 0.0, %v679
  %v681 = vpop.f32.mrb[0].mxu0
  %682 = vmatprep.mubr.bf16.mxu0 0
  %683 = vmatmul.mubr.bf16.gmra.mrb[0].mxu0 %v290
  %v684 = vpop.f32.mrb[0].mxu0
  %v685 = vadd.f32 0.0, %v684
  %v686 = vpop.f32.mrb[0].mxu0
  %v687 = vpop.f32.mrb[0].mxu0
  %v688 = vadd.f32 0.0, %v687
  %v689 = vpop.f32.mrb[0].mxu0
  %690 = vmatprep.mubr.bf16.mxu0 0
  %691 = vmatmul.mubr.bf16.gmra.mrb[0].mxu0 %v291
  %v692 = vpop.f32.mrb[0].mxu0
  %v693 = vadd.f32 0.0, %v692
  %v694 = vpop.f32.mrb[0].mxu0
  %v695 = vpop.f32.mrb[0].mxu0
  %v696 = vadd.f32 0.0, %v695
  %v697 = vpop.f32.mrb[0].mxu0
  %698 = vmatprep.mubr.bf16.mxu0 0
  %699 = vmatmul.mubr.bf16.gmra.mrb[0].mxu0 %v292
  %v700 = vpop.f32.mrb[0].mxu0
  %v701 = vadd.f32 0.0, %v700
  %v702 = vpop.f32.mrb[0].mxu0
  %v703 = vpop.f32.mrb[0].mxu0
  %v704 = vadd.f32 0.0, %v703
  %v705 = vpop.f32.mrb[0].mxu0
  %706 = vdwg.mxu0
  %v707 = vpack.c.bf16 %v416, %v413
  %v708 = vpack.c.bf16 %v424, %v421
  %v709 = vpack.c.bf16 %v432, %v429
  %v710 = vpack.c.bf16 %v440, %v437
  %v711 = vpack.c.bf16 %v448, %v445
  %v712 = vpack.c.bf16 %v456, %v453
  %v713 = vpack.c.bf16 %v464, %v461
  %v714 = vpack.c.bf16 %v472, %v469
  %v715 = vpack.c.bf16 %v480, %v477
  %v716 = vpack.c.bf16 %v488, %v485
  %v717 = vpack.c.bf16 %v496, %v493
  %v718 = vpack.c.bf16 %v504, %v501
  %v719 = vpack.c.bf16 %v512, %v509
  %v720 = vpack.c.bf16 %v520, %v517
  %v721 = vpack.c.bf16 %v528, %v525
  %v722 = vpack.c.bf16 %v536, %v533
  %v723 = vpack.c.bf16 %v544, %v541
  %v724 = vpack.c.bf16 %v552, %v549
  %v725 = vpack.c.bf16 %v560, %v557
  %v726 = vpack.c.bf16 %v568, %v565
  %v727 = vpack.c.bf16 %v576, %v573
  %v728 = vpack.c.bf16 %v584, %v581
  %v729 = vpack.c.bf16 %v592, %v589
  %v730 = vpack.c.bf16 %v600, %v597
  %v731 = vpack.c.bf16 %v608, %v605
  %v732 = vpack.c.bf16 %v616, %v613
  %v733 = vpack.c.bf16 %v624, %v621
  %v734 = vpack.c.bf16 %v632, %v629
  %v735 = vpack.c.bf16 %v640, %v637
  %v736 = vpack.c.bf16 %v648, %v645
  %v737 = vpack.c.bf16 %v656, %v653
  %v738 = vpack.c.bf16 %v664, %v661
  %v739 = vpack.c.bf16 %v672, %v669
  %v740 = vpack.c.bf16 %v680, %v677
  %v741 = vpack.c.bf16 %v688, %v685
  %v742 = vpack.c.bf16 %v696, %v693
  %v743 = vpack.c.bf16 %v704, %v701
  %v781 = vunpack.c.l.b16 %v707
  %v782 = vunpack.c.h.b16 %v707
  %v783 = vunpack.c.l.b16 %v708
  %v784 = vunpack.c.h.b16 %v708
  %v785 = vunpack.c.l.b16 %v709
  %v786 = vunpack.c.h.b16 %v709
  %v787 = vunpack.c.l.b16 %v710
  %v788 = vunpack.c.h.b16 %v710
  %v789 = vunpack.c.l.b16 %v711
  %v790 = vunpack.c.h.b16 %v711
  %v791 = vunpack.c.l.b16 %v712
  %v792 = vunpack.c.h.b16 %v712
  %v793 = vunpack.c.l.b16 %v713
  %v794 = vunpack.c.h.b16 %v713
  %v795 = vunpack.c.l.b16 %v714
  %v796 = vunpack.c.h.b16 %v714
  %v797 = vunpack.c.l.b16 %v715
  %v798 = vunpack.c.h.b16 %v715
  %v799 = vunpack.c.l.b16 %v716
  %v800 = vunpack.c.h.b16 %v716
  %v801 = vunpack.c.l.b16 %v717
  %v802 = vunpack.c.h.b16 %v717
  %v803 = vunpack.c.l.b16 %v718
  %v804 = vunpack.c.h.b16 %v718
  %v805 = vunpack.c.l.b16 %v719
  %v806 = vunpack.c.h.b16 %v719
  %v807 = vunpack.c.l.b16 %v720
  %v808 = vunpack.c.h.b16 %v720
  %v809 = vunpack.c.l.b16 %v721
  %v810 = vunpack.c.h.b16 %v721
  %v811 = vunpack.c.l.b16 %v722
  %v812 = vunpack.c.h.b16 %v722
  %v813 = vunpack.c.l.b16 %v723
  %v814 = vunpack.c.h.b16 %v723
  %v815 = vunpack.c.l.b16 %v724
  %v816 = vunpack.c.h.b16 %v724
  %v817 = vunpack.c.l.b16 %v725
  %v818 = vunpack.c.h.b16 %v725
  %v819 = vunpack.c.l.b16 %v726
  %v820 = vunpack.c.h.b16 %v726
  %v821 = vunpack.c.l.b16 %v727
  %v822 = vunpack.c.h.b16 %v727
  %v823 = vunpack.c.l.b16 %v728
  %v824 = vunpack.c.h.b16 %v728
  %v825 = vunpack.c.l.b16 %v729
  %v826 = vunpack.c.h.b16 %v729
  %v827 = vunpack.c.l.b16 %v730
  %v828 = vunpack.c.h.b16 %v730
  %v829 = vunpack.c.l.b16 %v731
  %v830 = vunpack.c.h.b16 %v731
  %v831 = vunpack.c.l.b16 %v732
  %v832 = vunpack.c.h.b16 %v732
  %v833 = vunpack.c.l.b16 %v733
  %v834 = vunpack.c.h.b16 %v733
  %v835 = vunpack.c.l.b16 %v734
  %v836 = vunpack.c.h.b16 %v734
  %v837 = vunpack.c.l.b16 %v735
  %v838 = vunpack.c.h.b16 %v735
  %v839 = vunpack.c.l.b16 %v736
  %v840 = vunpack.c.h.b16 %v736
  %v841 = vunpack.c.l.b16 %v737
  %v842 = vunpack.c.h.b16 %v737
  %v843 = vunpack.c.l.b16 %v738
  %v844 = vunpack.c.h.b16 %v738
  %v845 = vunpack.c.l.b16 %v739
  %v846 = vunpack.c.h.b16 %v739
  %v847 = vunpack.c.l.b16 %v740
  %v848 = vunpack.c.h.b16 %v740
  %v849 = vunpack.c.l.b16 %v741
  %v850 = vunpack.c.h.b16 %v741
  %v851 = vunpack.c.l.b16 %v742
  %v852 = vunpack.c.h.b16 %v742
  %v853 = vunpack.c.l.b16 %v743
  %v854 = vunpack.c.h.b16 %v743
  %v855 = vpack.c.b16 %v781, %v781
  %v856 = vpack.c.b16 %v782, %v782
  %v857 = vpack.c.b16 %v783, %v783
  %v858 = vpack.c.b16 %v784, %v784
  %v859 = vpack.c.b16 %v785, %v785
  %v860 = vpack.c.b16 %v786, %v786
  %v861 = vpack.c.b16 %v787, %v787
  %v862 = vpack.c.b16 %v788, %v788
  %v863 = vpack.c.b16 %v789, %v789
  %v864 = vpack.c.b16 %v790, %v790
  %v865 = vpack.c.b16 %v791, %v791
  %v866 = vpack.c.b16 %v792, %v792
  %v867 = vpack.c.b16 %v793, %v793
  %v868 = vpack.c.b16 %v794, %v794
  %v869 = vpack.c.b16 %v795, %v795
  %v870 = vpack.c.b16 %v796, %v796
  %v871 = vpack.c.b16 %v797, %v797
  %v872 = vpack.c.b16 %v798, %v798
  %v873 = vpack.c.b16 %v799, %v799
  %v874 = vpack.c.b16 %v800, %v800
  %v875 = vpack.c.b16 %v801, %v801
  %v876 = vpack.c.b16 %v802, %v802
  %v877 = vpack.c.b16 %v803, %v803
  %v878 = vpack.c.b16 %v804, %v804
  %v879 = vpack.c.b16 %v805, %v805
  %v880 = vpack.c.b16 %v806, %v806
  %v881 = vpack.c.b16 %v807, %v807
  %v882 = vpack.c.b16 %v808, %v808
  %v883 = vpack.c.b16 %v809, %v809
  %v884 = vpack.c.b16 %v810, %v810
  %v885 = vpack.c.b16 %v811, %v811
  %v886 = vpack.c.b16 %v812, %v812
  %v887 = vpack.c.b16 %v813, %v813
  %v888 = vpack.c.b16 %v814, %v814
  %v889 = vpack.c.b16 %v815, %v815
  %v890 = vpack.c.b16 %v816, %v816
  %v891 = vpack.c.b16 %v817, %v817
  %v892 = vpack.c.b16 %v818, %v818
  %v893 = vpack.c.b16 %v819, %v819
  %v894 = vpack.c.b16 %v820, %v820
  %v895 = vpack.c.b16 %v821, %v821
  %v896 = vpack.c.b16 %v822, %v822
  %v897 = vpack.c.b16 %v823, %v823
  %v898 = vpack.c.b16 %v824, %v824
  %v899 = vpack.c.b16 %v825, %v825
  %v900 = vpack.c.b16 %v826, %v826
  %v901 = vpack.c.b16 %v827, %v827
  %v902 = vpack.c.b16 %v828, %v828
  %v903 = vpack.c.b16 %v829, %v829
  %v904 = vpack.c.b16 %v830, %v830
  %v905 = vpack.c.b16 %v831, %v831
  %v906 = vpack.c.b16 %v832, %v832
  %v907 = vpack.c.b16 %v833, %v833
  %v908 = vpack.c.b16 %v834, %v834
  %v909 = vpack.c.b16 %v835, %v835
  %v910 = vpack.c.b16 %v836, %v836
  %v911 = vpack.c.b16 %v837, %v837
  %v912 = vpack.c.b16 %v838, %v838
  %v913 = vpack.c.b16 %v839, %v839
  %v914 = vpack.c.b16 %v840, %v840
  %v915 = vpack.c.b16 %v841, %v841
  %v916 = vpack.c.b16 %v842, %v842
  %v917 = vpack.c.b16 %v843, %v843
  %v918 = vpack.c.b16 %v844, %v844
  %v919 = vpack.c.b16 %v845, %v845
  %v920 = vpack.c.b16 %v846, %v846
  %v921 = vpack.c.b16 %v847, %v847
  %v922 = vpack.c.b16 %v848, %v848
  %v923 = vpack.c.b16 %v849, %v849
  %v924 = vpack.c.b16 %v850, %v850
  %v925 = vpack.c.b16 %v851, %v851
  %v926 = vpack.c.b16 %v852, %v852
  %v927 = vpack.c.b16 %v853, %v853
  %v928 = vpack.c.b16 %v854, %v854
  %vm1003 = vcmask 519168
  %1004 = vst.msk [vmem:[%s3] sm:$0xf] %vm1003, %v855
  %1005 = vst.msk [vmem:[%s3 + $0x4] sm:$0xf] %vm1003, %v856
  %1006 = vst.msk [vmem:[%s3 + $0x8] sm:$0xf] %vm1003, %v857
  %1007 = vst.msk [vmem:[%s3 + $0xc] sm:$0xf] %vm1003, %v858
  %1008 = vst.msk [vmem:[%s3 + $0x10] sm:$0xf] %vm1003, %v859
  %1009 = vst.msk [vmem:[%s3 + $0x14] sm:$0xf] %vm1003, %v860
  %1010 = vst.msk [vmem:[%s3 + $0x18] sm:$0xf] %vm1003, %v861
  %1011 = vst.msk [vmem:[%s3 + $0x1c] sm:$0xf] %vm1003, %v862
  %1012 = vst.msk [vmem:[%s3 + $0x20] sm:$0xf] %vm1003, %v863
  %1013 = vst.msk [vmem:[%s3 + $0x24] sm:$0xf] %vm1003, %v864
  %1014 = vst.msk [vmem:[%s3 + $0x28] sm:$0xf] %vm1003, %v865
  %1015 = vst.msk [vmem:[%s3 + $0x2c] sm:$0xf] %vm1003, %v866
  %1016 = vst.msk [vmem:[%s3 + $0x30] sm:$0xf] %vm1003, %v867
  %1017 = vst.msk [vmem:[%s3 + $0x34] sm:$0xf] %vm1003, %v868
  %1018 = vst.msk [vmem:[%s3 + $0x38] sm:$0xf] %vm1003, %v869
  %1019 = vst.msk [vmem:[%s3 + $0x3c] sm:$0xf] %vm1003, %v870
  %1020 = vst.msk [vmem:[%s3 + $0x40] sm:$0xf] %vm1003, %v871
  %1021 = vst.msk [vmem:[%s3 + $0x44] sm:$0xf] %vm1003, %v872
  %1022 = vst.msk [vmem:[%s3 + $0x48] sm:$0xf] %vm1003, %v873
  %1023 = vst.msk [vmem:[%s3 + $0x4c] sm:$0xf] %vm1003, %v874
  %1024 = vst.msk [vmem:[%s3 + $0x50] sm:$0xf] %vm1003, %v875
  %1025 = vst.msk [vmem:[%s3 + $0x54] sm:$0xf] %vm1003, %v876
  %1026 = vst.msk [vmem:[%s3 + $0x58] sm:$0xf] %vm1003, %v877
  %1027 = vst.msk [vmem:[%s3 + $0x5c] sm:$0xf] %vm1003, %v878
  %1028 = vst.msk [vmem:[%s3 + $0x60] sm:$0xf] %vm1003, %v879
  %1029 = vst.msk [vmem:[%s3 + $0x64] sm:$0xf] %vm1003, %v880
  %1030 = vst.msk [vmem:[%s3 + $0x68] sm:$0xf] %vm1003, %v881
  %1031 = vst.msk [vmem:[%s3 + $0x6c] sm:$0xf] %vm1003, %v882
  %1032 = vst.msk [vmem:[%s3 + $0x70] sm:$0xf] %vm1003, %v883
  %1033 = vst.msk [vmem:[%s3 + $0x74] sm:$0xf] %vm1003, %v884
  %1034 = vst.msk [vmem:[%s3 + $0x78] sm:$0xf] %vm1003, %v885
  %1035 = vst.msk [vmem:[%s3 + $0x7c] sm:$0xf] %vm1003, %v886
  %1036 = vst.msk [vmem:[%s3 + $0x80] sm:$0xf] %vm1003, %v887
  %1037 = vst.msk [vmem:[%s3 + $0x84] sm:$0xf] %vm1003, %v888
  %1038 = vst.msk [vmem:[%s3 + $0x88] sm:$0xf] %vm1003, %v889
  %1039 = vst.msk [vmem:[%s3 + $0x8c] sm:$0xf] %vm1003, %v890
  %1040 = vst.msk [vmem:[%s3 + $0x90] sm:$0xf] %vm1003, %v891
  %1041 = vst.msk [vmem:[%s3 + $0x94] sm:$0xf] %vm1003, %v892
  %1042 = vst.msk [vmem:[%s3 + $0x98] sm:$0xf] %vm1003, %v893
  %1043 = vst.msk [vmem:[%s3 + $0x9c] sm:$0xf] %vm1003, %v894
  %1044 = vst.msk [vmem:[%s3 + $0xa0] sm:$0xf] %vm1003, %v895
  %1045 = vst.msk [vmem:[%s3 + $0xa4] sm:$0xf] %vm1003, %v896
  %1046 = vst.msk [vmem:[%s3 + $0xa8] sm:$0xf] %vm1003, %v897
  %1047 = vst.msk [vmem:[%s3 + $0xac] sm:$0xf] %vm1003, %v898
  %1048 = vst.msk [vmem:[%s3 + $0xb0] sm:$0xf] %vm1003, %v899
  %1049 = vst.msk [vmem:[%s3 + $0xb4] sm:$0xf] %vm1003, %v900
  %1050 = vst.msk [vmem:[%s3 + $0xb8] sm:$0xf] %vm1003, %v901
  %1051 = vst.msk [vmem:[%s3 + $0xbc] sm:$0xf] %vm1003, %v902
  %1052 = vst.msk [vmem:[%s3 + $0xc0] sm:$0xf] %vm1003, %v903
  %1053 = vst.msk [vmem:[%s3 + $0xc4] sm:$0xf] %vm1003, %v904
  %1054 = vst.msk [vmem:[%s3 + $0xc8] sm:$0xf] %vm1003, %v905
  %1055 = vst.msk [vmem:[%s3 + $0xcc] sm:$0xf] %vm1003, %v906
  %1056 = vst.msk [vmem:[%s3 + $0xd0] sm:$0xf] %vm1003, %v907
  %1057 = vst.msk [vmem:[%s3 + $0xd4] sm:$0xf] %vm1003, %v908
  %1058 = vst.msk [vmem:[%s3 + $0xd8] sm:$0xf] %vm1003, %v909
  %1059 = vst.msk [vmem:[%s3 + $0xdc] sm:$0xf] %vm1003, %v910
  %1060 = vst.msk [vmem:[%s3 + $0xe0] sm:$0xf] %vm1003, %v911
  %1061 = vst.msk [vmem:[%s3 + $0xe4] sm:$0xf] %vm1003, %v912
  %1062 = vst.msk [vmem:[%s3 + $0xe8] sm:$0xf] %vm1003, %v913
  %1063 = vst.msk [vmem:[%s3 + $0xec] sm:$0xf] %vm1003, %v914
  %1064 = vst.msk [vmem:[%s3 + $0xf0] sm:$0xf] %vm1003, %v915
  %1065 = vst.msk [vmem:[%s3 + $0xf4] sm:$0xf] %vm1003, %v916
  %1066 = vst.msk [vmem:[%s3 + $0xf8] sm:$0xf] %vm1003, %v917
  %1067 = vst.msk [vmem:[%s3 + $0xfc] sm:$0xf] %vm1003, %v918
  %1068 = vst.msk [vmem:[%s3 + $0x100] sm:$0xf] %vm1003, %v919
  %1069 = vst.msk [vmem:[%s3 + $0x104] sm:$0xf] %vm1003, %v920
  %1070 = vst.msk [vmem:[%s3 + $0x108] sm:$0xf] %vm1003, %v921
  %1071 = vst.msk [vmem:[%s3 + $0x10c] sm:$0xf] %vm1003, %v922
  %1072 = vst.msk [vmem:[%s3 + $0x110] sm:$0xf] %vm1003, %v923
  %1073 = vst.msk [vmem:[%s3 + $0x114] sm:$0xf] %vm1003, %v924
  %1074 = vst.msk [vmem:[%s3 + $0x118] sm:$0xf] %vm1003, %v925
  %1075 = vst.msk [vmem:[%s3 + $0x11c] sm:$0xf] %vm1003, %v926
  %1076 = vst.msk [vmem:[%s3 + $0x120] sm:$0xf] %vm1003, %v927
  %1077 = vst.msk [vmem:[%s3 + $0x124] sm:$0xf] %vm1003, %v928
  %v1078 = vlaneseq
  %v1079 = vand.u32 %v1078, 127
  %v1080 = vld [vmem:[%s2] sm:$0xff]
  %v1081 = vld [vmem:[%s2 + $0x8] sm:$0xff]
  %v1082 = vld [vmem:[%s2 + $0x10] sm:$0xff]
  %v1083 = vld [vmem:[%s2 + $0x18] sm:$0xff]
  %v1084 = vld [vmem:[%s2 + $0x20] sm:$0xff]
  %v1085 = vld [vmem:[%s2 + $0x28] sm:$0xff]
  %v1086 = vld [vmem:[%s2 + $0x30] sm:$0xff]
  %v1087 = vld [vmem:[%s2 + $0x38] sm:$0xff]
  %v1088 = vld [vmem:[%s2 + $0x40] sm:$0xff]
  %v1089 = vld [vmem:[%s2 + $0x48] sm:$0xff]
  %v1090 = vld [vmem:[%s2 + $0x50] sm:$0xff]
  %v1091 = vld [vmem:[%s2 + $0x58] sm:$0xff]
  %v1092 = vld [vmem:[%s2 + $0x60] sm:$0xff]
  %v1093 = vld [vmem:[%s2 + $0x68] sm:$0xff]
  %v1094 = vld [vmem:[%s2 + $0x70] sm:$0xff]
  %v1095 = vld [vmem:[%s2 + $0x78] sm:$0xff]
  %v1096 = vld [vmem:[%s2 + $0x80] sm:$0xff]
  %v1097 = vld [vmem:[%s2 + $0x88] sm:$0xff]
  %v1098 = vld [vmem:[%s2 + $0x90] sm:$0xff]
  %v1099 = vld [vmem:[%s2 + $0x98] sm:$0xff]
  %v1100 = vld [vmem:[%s2 + $0xa0] sm:$0xff]
  %v1101 = vld [vmem:[%s2 + $0xa8] sm:$0xff]
  %v1102 = vld [vmem:[%s2 + $0xb0] sm:$0xff]
  %v1103 = vld [vmem:[%s2 + $0xb8] sm:$0xff]
  %v1104 = vld [vmem:[%s2 + $0xc0] sm:$0xff]
  %v1105 = vld [vmem:[%s2 + $0xc8] sm:$0xff]
  %v1106 = vld [vmem:[%s2 + $0xd0] sm:$0xff]
  %v1107 = vld [vmem:[%s2 + $0xd8] sm:$0xff]
  %v1108 = vld [vmem:[%s2 + $0xe0] sm:$0xff]
  %v1109 = vld [vmem:[%s2 + $0xe8] sm:$0xff]
  %v1110 = vld [vmem:[%s2 + $0xf0] sm:$0xff]
  %v1111 = vld [vmem:[%s2 + $0xf8] sm:$0xff]
  %v1112 = vld [vmem:[%s2 + $0x100] sm:$0xff]
  %v1113 = vld [vmem:[%s2 + $0x108] sm:$0xff]
  %v1114 = vld [vmem:[%s2 + $0x110] sm:$0xff]
  %v1115 = vld [vmem:[%s2 + $0x118] sm:$0xff]
  %v1116 = vld [vmem:[%s2 + $0x120] sm:$0xff]
  %v1117 = vld [vmem:[%s2 + $0x128] sm:$0xff]
  %v1118 = vld [vmem:[%s2 + $0x130] sm:$0xff]
  %v1119 = vld [vmem:[%s2 + $0x138] sm:$0xff]
  %v1120 = vld [vmem:[%s2 + $0x140] sm:$0xff]
  %v1121 = vld [vmem:[%s2 + $0x148] sm:$0xff]
  %v1122 = vld [vmem:[%s2 + $0x150] sm:$0xff]
  %v1123 = vld [vmem:[%s2 + $0x158] sm:$0xff]
  %v1124 = vld [vmem:[%s2 + $0x160] sm:$0xff]
  %v1125 = vld [vmem:[%s2 + $0x168] sm:$0xff]
  %v1126 = vld [vmem:[%s2 + $0x170] sm:$0xff]
  %v1127 = vld [vmem:[%s2 + $0x178] sm:$0xff]
  %v1128 = vld [vmem:[%s2 + $0x180] sm:$0xff]
  %v1129 = vld [vmem:[%s2 + $0x188] sm:$0xff]
  %v1130 = vld [vmem:[%s2 + $0x190] sm:$0xff]
  %v1131 = vld [vmem:[%s2 + $0x198] sm:$0xff]
  %v1132 = vld [vmem:[%s2 + $0x1a0] sm:$0xff]
  %v1133 = vld [vmem:[%s2 + $0x1a8] sm:$0xff]
  %v1134 = vld [vmem:[%s2 + $0x1b0] sm:$0xff]
  %v1135 = vld [vmem:[%s2 + $0x1b8] sm:$0xff]
  %v1136 = vld [vmem:[%s2 + $0x1c0] sm:$0xff]
  %v1137 = vld [vmem:[%s2 + $0x1c8] sm:$0xff]
  %v1138 = vld [vmem:[%s2 + $0x1d0] sm:$0xff]
  %v1139 = vld [vmem:[%s2 + $0x1d8] sm:$0xff]
  %v1140 = vld [vmem:[%s2 + $0x1e0] sm:$0xff]
  %v1141 = vld [vmem:[%s2 + $0x1e8] sm:$0xff]
  %v1142 = vld [vmem:[%s2 + $0x1f0] sm:$0xff]
  %v1143 = vld [vmem:[%s2 + $0x1f8] sm:$0xff]
  %v1144 = vld [vmem:[%s2 + $0x200] sm:$0xff]
  %v1145 = vld [vmem:[%s2 + $0x208] sm:$0xff]
  %v1146 = vld [vmem:[%s2 + $0x210] sm:$0xff]
  %v1147 = vld [vmem:[%s2 + $0x218] sm:$0xff]
  %v1148 = vld [vmem:[%s2 + $0x220] sm:$0xff]
  %v1149 = vld [vmem:[%s2 + $0x228] sm:$0xff]
  %v1150 = vld [vmem:[%s2 + $0x230] sm:$0xff]
  %v1151 = vld [vmem:[%s2 + $0x238] sm:$0xff]
  %v1152 = vld [vmem:[%s2 + $0x240] sm:$0xff]
  %v1153 = vld [vmem:[%s2 + $0x248] sm:$0xff]
  %vm1154 = vcmp.lt.s32.totalorder %v1079, 16
  %vm1155 = vcmp.lt.s32.totalorder %v1079, 32
  %vm1156 = vcmp.lt.s32.totalorder %v1079, 48
  %v1157 = vsel %vm1156, 1, 0
  %vm1158 = vcmp.eq.s32.totalorder %v1157, 1
  %1160 = vset.pattern.permute.xlu0 2
  %1161 = vperm.xlu0 %1160, %v1080
  %v1162 = vpop.permute.xlu0 %1161
  %1165 = vset.pattern.permute.xlu0 2
  %1166 = vperm.xlu0 %1165, %v1081
  %v1167 = vpop.permute.xlu0 %1166
  %1170 = vset.pattern.permute.xlu0 2
  %1171 = vperm.xlu0 %1170, %v1082
  %v1172 = vpop.permute.xlu0 %1171
  %1175 = vset.pattern.permute.xlu0 2
  %1176 = vperm.xlu0 %1175, %v1083
  %v1177 = vpop.permute.xlu0 %1176
  %1180 = vset.pattern.permute.xlu0 2
  %1181 = vperm.xlu0 %1180, %v1084
  %v1182 = vpop.permute.xlu0 %1181
  %1185 = vset.pattern.permute.xlu0 2
  %1186 = vperm.xlu0 %1185, %v1085
  %v1187 = vpop.permute.xlu0 %1186
  %1190 = vset.pattern.permute.xlu0 2
  %1191 = vperm.xlu0 %1190, %v1086
  %v1192 = vpop.permute.xlu0 %1191
  %1195 = vset.pattern.permute.xlu0 2
  %1196 = vperm.xlu0 %1195, %v1087
  %v1197 = vpop.permute.xlu0 %1196
  %1200 = vset.pattern.permute.xlu0 2
  %1201 = vperm.xlu0 %1200, %v1088
  %v1202 = vpop.permute.xlu0 %1201
  %1205 = vset.pattern.permute.xlu0 2
  %1206 = vperm.xlu0 %1205, %v1089
  %v1207 = vpop.permute.xlu0 %1206
  %1210 = vset.pattern.permute.xlu0 2
  %1211 = vperm.xlu0 %1210, %v1090
  %v1212 = vpop.permute.xlu0 %1211
  %1215 = vset.pattern.permute.xlu0 2
  %1216 = vperm.xlu0 %1215, %v1091
  %v1217 = vpop.permute.xlu0 %1216
  %1220 = vset.pattern.permute.xlu0 2
  %1221 = vperm.xlu0 %1220, %v1092
  %v1222 = vpop.permute.xlu0 %1221
  %1225 = vset.pattern.permute.xlu0 2
  %1226 = vperm.xlu0 %1225, %v1093
  %v1227 = vpop.permute.xlu0 %1226
  %1230 = vset.pattern.permute.xlu0 2
  %1231 = vperm.xlu0 %1230, %v1094
  %v1232 = vpop.permute.xlu0 %1231
  %1235 = vset.pattern.permute.xlu0 2
  %1236 = vperm.xlu0 %1235, %v1095
  %v1237 = vpop.permute.xlu0 %1236
  %1240 = vset.pattern.permute.xlu0 2
  %1241 = vperm.xlu0 %1240, %v1096
  %v1242 = vpop.permute.xlu0 %1241
  %1245 = vset.pattern.permute.xlu0 2
  %1246 = vperm.xlu0 %1245, %v1097
  %v1247 = vpop.permute.xlu0 %1246
  %1250 = vset.pattern.permute.xlu0 2
  %1251 = vperm.xlu0 %1250, %v1098
  %v1252 = vpop.permute.xlu0 %1251
  %1255 = vset.pattern.permute.xlu0 2
  %1256 = vperm.xlu0 %1255, %v1099
  %v1257 = vpop.permute.xlu0 %1256
  %1260 = vset.pattern.permute.xlu0 2
  %1261 = vperm.xlu0 %1260, %v1100
  %v1262 = vpop.permute.xlu0 %1261
  %1265 = vset.pattern.permute.xlu0 2
  %1266 = vperm.xlu0 %1265, %v1101
  %v1267 = vpop.permute.xlu0 %1266
  %1270 = vset.pattern.permute.xlu0 2
  %1271 = vperm.xlu0 %1270, %v1102
  %v1272 = vpop.permute.xlu0 %1271
  %1275 = vset.pattern.permute.xlu0 2
  %1276 = vperm.xlu0 %1275, %v1103
  %v1277 = vpop.permute.xlu0 %1276
  %1280 = vset.pattern.permute.xlu0 2
  %1281 = vperm.xlu0 %1280, %v1104
  %v1282 = vpop.permute.xlu0 %1281
  %1285 = vset.pattern.permute.xlu0 2
  %1286 = vperm.xlu0 %1285, %v1105
  %v1287 = vpop.permute.xlu0 %1286
  %1290 = vset.pattern.permute.xlu0 2
  %1291 = vperm.xlu0 %1290, %v1106
  %v1292 = vpop.permute.xlu0 %1291
  %1295 = vset.pattern.permute.xlu0 2
  %1296 = vperm.xlu0 %1295, %v1107
  %v1297 = vpop.permute.xlu0 %1296
  %1300 = vset.pattern.permute.xlu0 2
  %1301 = vperm.xlu0 %1300, %v1108
  %v1302 = vpop.permute.xlu0 %1301
  %1305 = vset.pattern.permute.xlu0 2
  %1306 = vperm.xlu0 %1305, %v1109
  %v1307 = vpop.permute.xlu0 %1306
  %1310 = vset.pattern.permute.xlu0 2
  %1311 = vperm.xlu0 %1310, %v1110
  %v1312 = vpop.permute.xlu0 %1311
  %1315 = vset.pattern.permute.xlu0 2
  %1316 = vperm.xlu0 %1315, %v1111
  %v1317 = vpop.permute.xlu0 %1316
  %1320 = vset.pattern.permute.xlu0 2
  %1321 = vperm.xlu0 %1320, %v1112
  %v1322 = vpop.permute.xlu0 %1321
  %1325 = vset.pattern.permute.xlu0 2
  %1326 = vperm.xlu0 %1325, %v1113
  %v1327 = vpop.permute.xlu0 %1326
  %1330 = vset.pattern.permute.xlu0 2
  %1331 = vperm.xlu0 %1330, %v1114
  %v1332 = vpop.permute.xlu0 %1331
  %1335 = vset.pattern.permute.xlu0 2
  %1336 = vperm.xlu0 %1335, %v1115
  %v1337 = vpop.permute.xlu0 %1336
  %1340 = vset.pattern.permute.xlu0 2
  %1341 = vperm.xlu0 %1340, %v1116
  %v1342 = vpop.permute.xlu0 %1341
  %1345 = vset.pattern.permute.xlu0 2
  %1346 = vperm.xlu0 %1345, %v1117
  %v1347 = vpop.permute.xlu0 %1346
  %1350 = vset.pattern.permute.xlu0 2
  %1351 = vperm.xlu0 %1350, %v1118
  %v1352 = vpop.permute.xlu0 %1351
  %1355 = vset.pattern.permute.xlu0 2
  %1356 = vperm.xlu0 %1355, %v1119
  %v1357 = vpop.permute.xlu0 %1356
  %1360 = vset.pattern.permute.xlu0 2
  %1361 = vperm.xlu0 %1360, %v1120
  %v1362 = vpop.permute.xlu0 %1361
  %1365 = vset.pattern.permute.xlu0 2
  %1366 = vperm.xlu0 %1365, %v1121
  %v1367 = vpop.permute.xlu0 %1366
  %1370 = vset.pattern.permute.xlu0 2
  %1371 = vperm.xlu0 %1370, %v1122
  %v1372 = vpop.permute.xlu0 %1371
  %1375 = vset.pattern.permute.xlu0 2
  %1376 = vperm.xlu0 %1375, %v1123
  %v1377 = vpop.permute.xlu0 %1376
  %1380 = vset.pattern.permute.xlu0 2
  %1381 = vperm.xlu0 %1380, %v1124
  %v1382 = vpop.permute.xlu0 %1381
  %1385 = vset.pattern.permute.xlu0 2
  %1386 = vperm.xlu0 %1385, %v1125
  %v1387 = vpop.permute.xlu0 %1386
  %1390 = vset.pattern.permute.xlu0 2
  %1391 = vperm.xlu0 %1390, %v1126
  %v1392 = vpop.permute.xlu0 %1391
  %1395 = vset.pattern.permute.xlu0 2
  %1396 = vperm.xlu0 %1395, %v1127
  %v1397 = vpop.permute.xlu0 %1396
  %1400 = vset.pattern.permute.xlu0 2
  %1401 = vperm.xlu0 %1400, %v1128
  %v1402 = vpop.permute.xlu0 %1401
  %1405 = vset.pattern.permute.xlu0 2
  %1406 = vperm.xlu0 %1405, %v1129
  %v1407 = vpop.permute.xlu0 %1406
  %1410 = vset.pattern.permute.xlu0 2
  %1411 = vperm.xlu0 %1410, %v1130
  %v1412 = vpop.permute.xlu0 %1411
  %1415 = vset.pattern.permute.xlu0 2
  %1416 = vperm.xlu0 %1415, %v1131
  %v1417 = vpop.permute.xlu0 %1416
  %1420 = vset.pattern.permute.xlu0 2
  %1421 = vperm.xlu0 %1420, %v1132
  %v1422 = vpop.permute.xlu0 %1421
  %1425 = vset.pattern.permute.xlu0 2
  %1426 = vperm.xlu0 %1425, %v1133
  %v1427 = vpop.permute.xlu0 %1426
  %1430 = vset.pattern.permute.xlu0 2
  %1431 = vperm.xlu0 %1430, %v1134
  %v1432 = vpop.permute.xlu0 %1431
  %1435 = vset.pattern.permute.xlu0 2
  %1436 = vperm.xlu0 %1435, %v1135
  %v1437 = vpop.permute.xlu0 %1436
  %1440 = vset.pattern.permute.xlu0 2
  %1441 = vperm.xlu0 %1440, %v1136
  %v1442 = vpop.permute.xlu0 %1441
  %1445 = vset.pattern.permute.xlu0 2
  %1446 = vperm.xlu0 %1445, %v1137
  %v1447 = vpop.permute.xlu0 %1446
  %1450 = vset.pattern.permute.xlu0 2
  %1451 = vperm.xlu0 %1450, %v1138
  %v1452 = vpop.permute.xlu0 %1451
  %1455 = vset.pattern.permute.xlu0 2
  %1456 = vperm.xlu0 %1455, %v1139
  %v1457 = vpop.permute.xlu0 %1456
  %1460 = vset.pattern.permute.xlu0 2
  %1461 = vperm.xlu0 %1460, %v1140
  %v1462 = vpop.permute.xlu0 %1461
  %1465 = vset.pattern.permute.xlu0 2
  %1466 = vperm.xlu0 %1465, %v1141
  %v1467 = vpop.permute.xlu0 %1466
  %1470 = vset.pattern.permute.xlu0 2
  %1471 = vperm.xlu0 %1470, %v1142
  %v1472 = vpop.permute.xlu0 %1471
  %1475 = vset.pattern.permute.xlu0 2
  %1476 = vperm.xlu0 %1475, %v1143
  %v1477 = vpop.permute.xlu0 %1476
  %1480 = vset.pattern.permute.xlu0 2
  %1481 = vperm.xlu0 %1480, %v1144
  %v1482 = vpop.permute.xlu0 %1481
  %1485 = vset.pattern.permute.xlu0 2
  %1486 = vperm.xlu0 %1485, %v1145
  %v1487 = vpop.permute.xlu0 %1486
  %1490 = vset.pattern.permute.xlu0 2
  %1491 = vperm.xlu0 %1490, %v1146
  %v1492 = vpop.permute.xlu0 %1491
  %1495 = vset.pattern.permute.xlu0 2
  %1496 = vperm.xlu0 %1495, %v1147
  %v1497 = vpop.permute.xlu0 %1496
  %1500 = vset.pattern.permute.xlu0 2
  %1501 = vperm.xlu0 %1500, %v1148
  %v1502 = vpop.permute.xlu0 %1501
  %1505 = vset.pattern.permute.xlu0 2
  %1506 = vperm.xlu0 %1505, %v1149
  %v1507 = vpop.permute.xlu0 %1506
  %1510 = vset.pattern.permute.xlu0 2
  %1511 = vperm.xlu0 %1510, %v1150
  %v1512 = vpop.permute.xlu0 %1511
  %1515 = vset.pattern.permute.xlu0 2
  %1516 = vperm.xlu0 %1515, %v1151
  %v1517 = vpop.permute.xlu0 %1516
  %1520 = vset.pattern.permute.xlu0 2
  %1521 = vperm.xlu0 %1520, %v1152
  %v1522 = vpop.permute.xlu0 %1521
  %1525 = vset.pattern.permute.xlu0 2
  %1526 = vperm.xlu0 %1525, %v1153
  %v1527 = vpop.permute.xlu0 %1526
  %1529 = vset.pattern.permute.xlu0 3
  %1530 = vperm.xlu0 %1529, %v1080
  %v1531 = vpop.permute.xlu0 %1530
  %1533 = vset.pattern.permute.xlu0 3
  %1534 = vperm.xlu0 %1533, %v1081
  %v1535 = vpop.permute.xlu0 %1534
  %1537 = vset.pattern.permute.xlu0 3
  %1538 = vperm.xlu0 %1537, %v1082
  %v1539 = vpop.permute.xlu0 %1538
  %1541 = vset.pattern.permute.xlu0 3
  %1542 = vperm.xlu0 %1541, %v1083
  %v1543 = vpop.permute.xlu0 %1542
  %1545 = vset.pattern.permute.xlu0 3
  %1546 = vperm.xlu0 %1545, %v1084
  %v1547 = vpop.permute.xlu0 %1546
  %1549 = vset.pattern.permute.xlu0 3
  %1550 = vperm.xlu0 %1549, %v1085
  %v1551 = vpop.permute.xlu0 %1550
  %1553 = vset.pattern.permute.xlu0 3
  %1554 = vperm.xlu0 %1553, %v1086
  %v1555 = vpop.permute.xlu0 %1554
  %1557 = vset.pattern.permute.xlu0 3
  %1558 = vperm.xlu0 %1557, %v1087
  %v1559 = vpop.permute.xlu0 %1558
  %1561 = vset.pattern.permute.xlu0 3
  %1562 = vperm.xlu0 %1561, %v1088
  %v1563 = vpop.permute.xlu0 %1562
  %1565 = vset.pattern.permute.xlu0 3
  %1566 = vperm.xlu0 %1565, %v1089
  %v1567 = vpop.permute.xlu0 %1566
  %1569 = vset.pattern.permute.xlu0 3
  %1570 = vperm.xlu0 %1569, %v1090
  %v1571 = vpop.permute.xlu0 %1570
  %1573 = vset.pattern.permute.xlu0 3
  %1574 = vperm.xlu0 %1573, %v1091
  %v1575 = vpop.permute.xlu0 %1574
  %1577 = vset.pattern.permute.xlu0 3
  %1578 = vperm.xlu0 %1577, %v1092
  %v1579 = vpop.permute.xlu0 %1578
  %1581 = vset.pattern.permute.xlu0 3
  %1582 = vperm.xlu0 %1581, %v1093
  %v1583 = vpop.permute.xlu0 %1582
  %1585 = vset.pattern.permute.xlu0 3
  %1586 = vperm.xlu0 %1585, %v1094
  %v1587 = vpop.permute.xlu0 %1586
  %1589 = vset.pattern.permute.xlu0 3
  %1590 = vperm.xlu0 %1589, %v1095
  %v1591 = vpop.permute.xlu0 %1590
  %1593 = vset.pattern.permute.xlu0 3
  %1594 = vperm.xlu0 %1593, %v1096
  %v1595 = vpop.permute.xlu0 %1594
  %1597 = vset.pattern.permute.xlu0 3
  %1598 = vperm.xlu0 %1597, %v1097
  %v1599 = vpop.permute.xlu0 %1598
  %1601 = vset.pattern.permute.xlu0 3
  %1602 = vperm.xlu0 %1601, %v1098
  %v1603 = vpop.permute.xlu0 %1602
  %1605 = vset.pattern.permute.xlu0 3
  %1606 = vperm.xlu0 %1605, %v1099
  %v1607 = vpop.permute.xlu0 %1606
  %1609 = vset.pattern.permute.xlu0 3
  %1610 = vperm.xlu0 %1609, %v1100
  %v1611 = vpop.permute.xlu0 %1610
  %1613 = vset.pattern.permute.xlu0 3
  %1614 = vperm.xlu0 %1613, %v1101
  %v1615 = vpop.permute.xlu0 %1614
  %1617 = vset.pattern.permute.xlu0 3
  %1618 = vperm.xlu0 %1617, %v1102
  %v1619 = vpop.permute.xlu0 %1618
  %1621 = vset.pattern.permute.xlu0 3
  %1622 = vperm.xlu0 %1621, %v1103
  %v1623 = vpop.permute.xlu0 %1622
  %1625 = vset.pattern.permute.xlu0 3
  %1626 = vperm.xlu0 %1625, %v1104
  %v1627 = vpop.permute.xlu0 %1626
  %1629 = vset.pattern.permute.xlu0 3
  %1630 = vperm.xlu0 %1629, %v1105
  %v1631 = vpop.permute.xlu0 %1630
  %1633 = vset.pattern.permute.xlu0 3
  %1634 = vperm.xlu0 %1633, %v1106
  %v1635 = vpop.permute.xlu0 %1634
  %1637 = vset.pattern.permute.xlu0 3
  %1638 = vperm.xlu0 %1637, %v1107
  %v1639 = vpop.permute.xlu0 %1638
  %1641 = vset.pattern.permute.xlu0 3
  %1642 = vperm.xlu0 %1641, %v1108
  %v1643 = vpop.permute.xlu0 %1642
  %1645 = vset.pattern.permute.xlu0 3
  %1646 = vperm.xlu0 %1645, %v1109
  %v1647 = vpop.permute.xlu0 %1646
  %1649 = vset.pattern.permute.xlu0 3
  %1650 = vperm.xlu0 %1649, %v1110
  %v1651 = vpop.permute.xlu0 %1650
  %1653 = vset.pattern.permute.xlu0 3
  %1654 = vperm.xlu0 %1653, %v1111
  %v1655 = vpop.permute.xlu0 %1654
  %1657 = vset.pattern.permute.xlu0 3
  %1658 = vperm.xlu0 %1657, %v1112
  %v1659 = vpop.permute.xlu0 %1658
  %1661 = vset.pattern.permute.xlu0 3
  %1662 = vperm.xlu0 %1661, %v1113
  %v1663 = vpop.permute.xlu0 %1662
  %1665 = vset.pattern.permute.xlu0 3
  %1666 = vperm.xlu0 %1665, %v1114
  %v1667 = vpop.permute.xlu0 %1666
  %1669 = vset.pattern.permute.xlu0 3
  %1670 = vperm.xlu0 %1669, %v1115
  %v1671 = vpop.permute.xlu0 %1670
  %1673 = vset.pattern.permute.xlu0 3
  %1674 = vperm.xlu0 %1673, %v1116
  %v1675 = vpop.permute.xlu0 %1674
  %1677 = vset.pattern.permute.xlu0 3
  %1678 = vperm.xlu0 %1677, %v1117
  %v1679 = vpop.permute.xlu0 %1678
  %1681 = vset.pattern.permute.xlu0 3
  %1682 = vperm.xlu0 %1681, %v1118
  %v1683 = vpop.permute.xlu0 %1682
  %1685 = vset.pattern.permute.xlu0 3
  %1686 = vperm.xlu0 %1685, %v1119
  %v1687 = vpop.permute.xlu0 %1686
  %1689 = vset.pattern.permute.xlu0 3
  %1690 = vperm.xlu0 %1689, %v1120
  %v1691 = vpop.permute.xlu0 %1690
  %1693 = vset.pattern.permute.xlu0 3
  %1694 = vperm.xlu0 %1693, %v1121
  %v1695 = vpop.permute.xlu0 %1694
  %1697 = vset.pattern.permute.xlu0 3
  %1698 = vperm.xlu0 %1697, %v1122
  %v1699 = vpop.permute.xlu0 %1698
  %1701 = vset.pattern.permute.xlu0 3
  %1702 = vperm.xlu0 %1701, %v1123
  %v1703 = vpop.permute.xlu0 %1702
  %1705 = vset.pattern.permute.xlu0 3
  %1706 = vperm.xlu0 %1705, %v1124
  %v1707 = vpop.permute.xlu0 %1706
  %1709 = vset.pattern.permute.xlu0 3
  %1710 = vperm.xlu0 %1709, %v1125
  %v1711 = vpop.permute.xlu0 %1710
  %1713 = vset.pattern.permute.xlu0 3
  %1714 = vperm.xlu0 %1713, %v1126
  %v1715 = vpop.permute.xlu0 %1714
  %1717 = vset.pattern.permute.xlu0 3
  %1718 = vperm.xlu0 %1717, %v1127
  %v1719 = vpop.permute.xlu0 %1718
  %1721 = vset.pattern.permute.xlu0 3
  %1722 = vperm.xlu0 %1721, %v1128
  %v1723 = vpop.permute.xlu0 %1722
  %1725 = vset.pattern.permute.xlu0 3
  %1726 = vperm.xlu0 %1725, %v1129
  %v1727 = vpop.permute.xlu0 %1726
  %1729 = vset.pattern.permute.xlu0 3
  %1730 = vperm.xlu0 %1729, %v1130
  %v1731 = vpop.permute.xlu0 %1730
  %1733 = vset.pattern.permute.xlu0 3
  %1734 = vperm.xlu0 %1733, %v1131
  %v1735 = vpop.permute.xlu0 %1734
  %1737 = vset.pattern.permute.xlu0 3
  %1738 = vperm.xlu0 %1737, %v1132
  %v1739 = vpop.permute.xlu0 %1738
  %1741 = vset.pattern.permute.xlu0 3
  %1742 = vperm.xlu0 %1741, %v1133
  %v1743 = vpop.permute.xlu0 %1742
  %1745 = vset.pattern.permute.xlu0 3
  %1746 = vperm.xlu0 %1745, %v1134
  %v1747 = vpop.permute.xlu0 %1746
  %1749 = vset.pattern.permute.xlu0 3
  %1750 = vperm.xlu0 %1749, %v1135
  %v1751 = vpop.permute.xlu0 %1750
  %1753 = vset.pattern.permute.xlu0 3
  %1754 = vperm.xlu0 %1753, %v1136
  %v1755 = vpop.permute.xlu0 %1754
  %1757 = vset.pattern.permute.xlu0 3
  %1758 = vperm.xlu0 %1757, %v1137
  %v1759 = vpop.permute.xlu0 %1758
  %1761 = vset.pattern.permute.xlu0 3
  %1762 = vperm.xlu0 %1761, %v1138
  %v1763 = vpop.permute.xlu0 %1762
  %1765 = vset.pattern.permute.xlu0 3
  %1766 = vperm.xlu0 %1765, %v1139
  %v1767 = vpop.permute.xlu0 %1766
  %1769 = vset.pattern.permute.xlu0 3
  %1770 = vperm.xlu0 %1769, %v1140
  %v1771 = vpop.permute.xlu0 %1770
  %1773 = vset.pattern.permute.xlu0 3
  %1774 = vperm.xlu0 %1773, %v1141
  %v1775 = vpop.permute.xlu0 %1774
  %1777 = vset.pattern.permute.xlu0 3
  %1778 = vperm.xlu0 %1777, %v1142
  %v1779 = vpop.permute.xlu0 %1778
  %1781 = vset.pattern.permute.xlu0 3
  %1782 = vperm.xlu0 %1781, %v1143
  %v1783 = vpop.permute.xlu0 %1782
  %1785 = vset.pattern.permute.xlu0 3
  %1786 = vperm.xlu0 %1785, %v1144
  %v1787 = vpop.permute.xlu0 %1786
  %1789 = vset.pattern.permute.xlu0 3
  %1790 = vperm.xlu0 %1789, %v1145
  %v1791 = vpop.permute.xlu0 %1790
  %1793 = vset.pattern.permute.xlu0 3
  %1794 = vperm.xlu0 %1793, %v1146
  %v1795 = vpop.permute.xlu0 %1794
  %1797 = vset.pattern.permute.xlu0 3
  %1798 = vperm.xlu0 %1797, %v1147
  %v1799 = vpop.permute.xlu0 %1798
  %1801 = vset.pattern.permute.xlu0 3
  %1802 = vperm.xlu0 %1801, %v1148
  %v1803 = vpop.permute.xlu0 %1802
  %1805 = vset.pattern.permute.xlu0 3
  %1806 = vperm.xlu0 %1805, %v1149
  %v1807 = vpop.permute.xlu0 %1806
  %1809 = vset.pattern.permute.xlu0 3
  %1810 = vperm.xlu0 %1809, %v1150
  %v1811 = vpop.permute.xlu0 %1810
  %1813 = vset.pattern.permute.xlu0 3
  %1814 = vperm.xlu0 %1813, %v1151
  %v1815 = vpop.permute.xlu0 %1814
  %1817 = vset.pattern.permute.xlu0 3
  %1818 = vperm.xlu0 %1817, %v1152
  %v1819 = vpop.permute.xlu0 %1818
  %1821 = vset.pattern.permute.xlu0 3
  %1822 = vperm.xlu0 %1821, %v1153
  %v1823 = vpop.permute.xlu0 %1822
  %v1825 = vsel %vm1158, %v1162, %v1531
  %v1826 = vsel %vm1158, %v1167, %v1535
  %v1827 = vsel %vm1158, %v1172, %v1539
  %v1828 = vsel %vm1158, %v1177, %v1543
  %v1829 = vsel %vm1158, %v1182, %v1547
  %v1830 = vsel %vm1158, %v1187, %v1551
  %v1831 = vsel %vm1158, %v1192, %v1555
  %v1832 = vsel %vm1158, %v1197, %v1559
  %v1833 = vsel %vm1158, %v1202, %v1563
  %v1834 = vsel %vm1158, %v1207, %v1567
  %v1835 = vsel %vm1158, %v1212, %v1571
  %v1836 = vsel %vm1158, %v1217, %v1575
  %v1837 = vsel %vm1158, %v1222, %v1579
  %v1838 = vsel %vm1158, %v1227, %v1583
  %v1839 = vsel %vm1158, %v1232, %v1587
  %v1840 = vsel %vm1158, %v1237, %v1591
  %v1841 = vsel %vm1158, %v1242, %v1595
  %v1842 = vsel %vm1158, %v1247, %v1599
  %v1843 = vsel %vm1158, %v1252, %v1603
  %v1844 = vsel %vm1158, %v1257, %v1607
  %v1845 = vsel %vm1158, %v1262, %v1611
  %v1846 = vsel %vm1158, %v1267, %v1615
  %v1847 = vsel %vm1158, %v1272, %v1619
  %v1848 = vsel %vm1158, %v1277, %v1623
  %v1849 = vsel %vm1158, %v1282, %v1627
  %v1850 = vsel %vm1158, %v1287, %v1631
  %v1851 = vsel %vm1158, %v1292, %v1635
  %v1852 = vsel %vm1158, %v1297, %v1639
  %v1853 = vsel %vm1158, %v1302, %v1643
  %v1854 = vsel %vm1158, %v1307, %v1647
  %v1855 = vsel %vm1158, %v1312, %v1651
  %v1856 = vsel %vm1158, %v1317, %v1655
  %v1857 = vsel %vm1158, %v1322, %v1659
  %v1858 = vsel %vm1158, %v1327, %v1663
  %v1859 = vsel %vm1158, %v1332, %v1667
  %v1860 = vsel %vm1158, %v1337, %v1671
  %v1861 = vsel %vm1158, %v1342, %v1675
  %v1862 = vsel %vm1158, %v1347, %v1679
  %v1863 = vsel %vm1158, %v1352, %v1683
  %v1864 = vsel %vm1158, %v1357, %v1687
  %v1865 = vsel %vm1158, %v1362, %v1691
  %v1866 = vsel %vm1158, %v1367, %v1695
  %v1867 = vsel %vm1158, %v1372, %v1699
  %v1868 = vsel %vm1158, %v1377, %v1703
  %v1869 = vsel %vm1158, %v1382, %v1707
  %v1870 = vsel %vm1158, %v1387, %v1711
  %v1871 = vsel %vm1158, %v1392, %v1715
  %v1872 = vsel %vm1158, %v1397, %v1719
  %v1873 = vsel %vm1158, %v1402, %v1723
  %v1874 = vsel %vm1158, %v1407, %v1727
  %v1875 = vsel %vm1158, %v1412, %v1731
  %v1876 = vsel %vm1158, %v1417, %v1735
  %v1877 = vsel %vm1158, %v1422, %v1739
  %v1878 = vsel %vm1158, %v1427, %v1743
  %v1879 = vsel %vm1158, %v1432, %v1747
  %v1880 = vsel %vm1158, %v1437, %v1751
  %v1881 = vsel %vm1158, %v1442, %v1755
  %v1882 = vsel %vm1158, %v1447, %v1759
  %v1883 = vsel %vm1158, %v1452, %v1763
  %v1884 = vsel %vm1158, %v1457, %v1767
  %v1885 = vsel %vm1158, %v1462, %v1771
  %v1886 = vsel %vm1158, %v1467, %v1775
  %v1887 = vsel %vm1158, %v1472, %v1779
  %v1888 = vsel %vm1158, %v1477, %v1783
  %v1889 = vsel %vm1158, %v1482, %v1787
  %v1890 = vsel %vm1158, %v1487, %v1791
  %v1891 = vsel %vm1158, %v1492, %v1795
  %v1892 = vsel %vm1158, %v1497, %v1799
  %v1893 = vsel %vm1158, %v1502, %v1803
  %v1894 = vsel %vm1158, %v1507, %v1807
  %v1895 = vsel %vm1158, %v1512, %v1811
  %v1896 = vsel %vm1158, %v1517, %v1815
  %v1897 = vsel %vm1158, %v1522, %v1819
  %v1898 = vsel %vm1158, %v1527, %v1823
  %v1899 = vsel %vm1155, 1, 0
  %vm1900 = vcmp.eq.s32.totalorder %v1899, 1
  %1901 = vset.pattern.permute.xlu0 1
  %1902 = vperm.xlu0 %1901, %v1080
  %v1903 = vpop.permute.xlu0 %1902
  %1905 = vset.pattern.permute.xlu0 1
  %1906 = vperm.xlu0 %1905, %v1081
  %v1907 = vpop.permute.xlu0 %1906
  %1909 = vset.pattern.permute.xlu0 1
  %1910 = vperm.xlu0 %1909, %v1082
  %v1911 = vpop.permute.xlu0 %1910
  %1913 = vset.pattern.permute.xlu0 1
  %1914 = vperm.xlu0 %1913, %v1083
  %v1915 = vpop.permute.xlu0 %1914
  %1917 = vset.pattern.permute.xlu0 1
  %1918 = vperm.xlu0 %1917, %v1084
  %v1919 = vpop.permute.xlu0 %1918
  %1921 = vset.pattern.permute.xlu0 1
  %1922 = vperm.xlu0 %1921, %v1085
  %v1923 = vpop.permute.xlu0 %1922
  %1925 = vset.pattern.permute.xlu0 1
  %1926 = vperm.xlu0 %1925, %v1086
  %v1927 = vpop.permute.xlu0 %1926
  %1929 = vset.pattern.permute.xlu0 1
  %1930 = vperm.xlu0 %1929, %v1087
  %v1931 = vpop.permute.xlu0 %1930
  %1933 = vset.pattern.permute.xlu0 1
  %1934 = vperm.xlu0 %1933, %v1088
  %v1935 = vpop.permute.xlu0 %1934
  %1937 = vset.pattern.permute.xlu0 1
  %1938 = vperm.xlu0 %1937, %v1089
  %v1939 = vpop.permute.xlu0 %1938
  %1941 = vset.pattern.permute.xlu0 1
  %1942 = vperm.xlu0 %1941, %v1090
  %v1943 = vpop.permute.xlu0 %1942
  %1945 = vset.pattern.permute.xlu0 1
  %1946 = vperm.xlu0 %1945, %v1091
  %v1947 = vpop.permute.xlu0 %1946
  %1949 = vset.pattern.permute.xlu0 1
  %1950 = vperm.xlu0 %1949, %v1092
  %v1951 = vpop.permute.xlu0 %1950
  %1953 = vset.pattern.permute.xlu0 1
  %1954 = vperm.xlu0 %1953, %v1093
  %v1955 = vpop.permute.xlu0 %1954
  %1957 = vset.pattern.permute.xlu0 1
  %1958 = vperm.xlu0 %1957, %v1094
  %v1959 = vpop.permute.xlu0 %1958
  %1961 = vset.pattern.permute.xlu0 1
  %1962 = vperm.xlu0 %1961, %v1095
  %v1963 = vpop.permute.xlu0 %1962
  %1965 = vset.pattern.permute.xlu0 1
  %1966 = vperm.xlu0 %1965, %v1096
  %v1967 = vpop.permute.xlu0 %1966
  %1969 = vset.pattern.permute.xlu0 1
  %1970 = vperm.xlu0 %1969, %v1097
  %v1971 = vpop.permute.xlu0 %1970
  %1973 = vset.pattern.permute.xlu0 1
  %1974 = vperm.xlu0 %1973, %v1098
  %v1975 = vpop.permute.xlu0 %1974
  %1977 = vset.pattern.permute.xlu0 1
  %1978 = vperm.xlu0 %1977, %v1099
  %v1979 = vpop.permute.xlu0 %1978
  %1981 = vset.pattern.permute.xlu0 1
  %1982 = vperm.xlu0 %1981, %v1100
  %v1983 = vpop.permute.xlu0 %1982
  %1985 = vset.pattern.permute.xlu0 1
  %1986 = vperm.xlu0 %1985, %v1101
  %v1987 = vpop.permute.xlu0 %1986
  %1989 = vset.pattern.permute.xlu0 1
  %1990 = vperm.xlu0 %1989, %v1102
  %v1991 = vpop.permute.xlu0 %1990
  %1993 = vset.pattern.permute.xlu0 1
  %1994 = vperm.xlu0 %1993, %v1103
  %v1995 = vpop.permute.xlu0 %1994
  %1997 = vset.pattern.permute.xlu0 1
  %1998 = vperm.xlu0 %1997, %v1104
  %v1999 = vpop.permute.xlu0 %1998
  %2001 = vset.pattern.permute.xlu0 1
  %2002 = vperm.xlu0 %2001, %v1105
  %v2003 = vpop.permute.xlu0 %2002
  %2005 = vset.pattern.permute.xlu0 1
  %2006 = vperm.xlu0 %2005, %v1106
  %v2007 = vpop.permute.xlu0 %2006
  %2009 = vset.pattern.permute.xlu0 1
  %2010 = vperm.xlu0 %2009, %v1107
  %v2011 = vpop.permute.xlu0 %2010
  %2013 = vset.pattern.permute.xlu0 1
  %2014 = vperm.xlu0 %2013, %v1108
  %v2015 = vpop.permute.xlu0 %2014
  %2017 = vset.pattern.permute.xlu0 1
  %2018 = vperm.xlu0 %2017, %v1109
  %v2019 = vpop.permute.xlu0 %2018
  %2021 = vset.pattern.permute.xlu0 1
  %2022 = vperm.xlu0 %2021, %v1110
  %v2023 = vpop.permute.xlu0 %2022
  %2025 = vset.pattern.permute.xlu0 1
  %2026 = vperm.xlu0 %2025, %v1111
  %v2027 = vpop.permute.xlu0 %2026
  %2029 = vset.pattern.permute.xlu0 1
  %2030 = vperm.xlu0 %2029, %v1112
  %v2031 = vpop.permute.xlu0 %2030
  %2033 = vset.pattern.permute.xlu0 1
  %2034 = vperm.xlu0 %2033, %v1113
  %v2035 = vpop.permute.xlu0 %2034
  %2037 = vset.pattern.permute.xlu0 1
  %2038 = vperm.xlu0 %2037, %v1114
  %v2039 = vpop.permute.xlu0 %2038
  %2041 = vset.pattern.permute.xlu0 1
  %2042 = vperm.xlu0 %2041, %v1115
  %v2043 = vpop.permute.xlu0 %2042
  %2045 = vset.pattern.permute.xlu0 1
  %2046 = vperm.xlu0 %2045, %v1116
  %v2047 = vpop.permute.xlu0 %2046
  %2049 = vset.pattern.permute.xlu0 1
  %2050 = vperm.xlu0 %2049, %v1117
  %v2051 = vpop.permute.xlu0 %2050
  %2053 = vset.pattern.permute.xlu0 1
  %2054 = vperm.xlu0 %2053, %v1118
  %v2055 = vpop.permute.xlu0 %2054
  %2057 = vset.pattern.permute.xlu0 1
  %2058 = vperm.xlu0 %2057, %v1119
  %v2059 = vpop.permute.xlu0 %2058
  %2061 = vset.pattern.permute.xlu0 1
  %2062 = vperm.xlu0 %2061, %v1120
  %v2063 = vpop.permute.xlu0 %2062
  %2065 = vset.pattern.permute.xlu0 1
  %2066 = vperm.xlu0 %2065, %v1121
  %v2067 = vpop.permute.xlu0 %2066
  %2069 = vset.pattern.permute.xlu0 1
  %2070 = vperm.xlu0 %2069, %v1122
  %v2071 = vpop.permute.xlu0 %2070
  %2073 = vset.pattern.permute.xlu0 1
  %2074 = vperm.xlu0 %2073, %v1123
  %v2075 = vpop.permute.xlu0 %2074
  %2077 = vset.pattern.permute.xlu0 1
  %2078 = vperm.xlu0 %2077, %v1124
  %v2079 = vpop.permute.xlu0 %2078
  %2081 = vset.pattern.permute.xlu0 1
  %2082 = vperm.xlu0 %2081, %v1125
  %v2083 = vpop.permute.xlu0 %2082
  %2085 = vset.pattern.permute.xlu0 1
  %2086 = vperm.xlu0 %2085, %v1126
  %v2087 = vpop.permute.xlu0 %2086
  %2089 = vset.pattern.permute.xlu0 1
  %2090 = vperm.xlu0 %2089, %v1127
  %v2091 = vpop.permute.xlu0 %2090
  %2093 = vset.pattern.permute.xlu0 1
  %2094 = vperm.xlu0 %2093, %v1128
  %v2095 = vpop.permute.xlu0 %2094
  %2097 = vset.pattern.permute.xlu0 1
  %2098 = vperm.xlu0 %2097, %v1129
  %v2099 = vpop.permute.xlu0 %2098
  %2101 = vset.pattern.permute.xlu0 1
  %2102 = vperm.xlu0 %2101, %v1130
  %v2103 = vpop.permute.xlu0 %2102
  %2105 = vset.pattern.permute.xlu0 1
  %2106 = vperm.xlu0 %2105, %v1131
  %v2107 = vpop.permute.xlu0 %2106
  %2109 = vset.pattern.permute.xlu0 1
  %2110 = vperm.xlu0 %2109, %v1132
  %v2111 = vpop.permute.xlu0 %2110
  %2113 = vset.pattern.permute.xlu0 1
  %2114 = vperm.xlu0 %2113, %v1133
  %v2115 = vpop.permute.xlu0 %2114
  %2117 = vset.pattern.permute.xlu0 1
  %2118 = vperm.xlu0 %2117, %v1134
  %v2119 = vpop.permute.xlu0 %2118
  %2121 = vset.pattern.permute.xlu0 1
  %2122 = vperm.xlu0 %2121, %v1135
  %v2123 = vpop.permute.xlu0 %2122
  %2125 = vset.pattern.permute.xlu0 1
  %2126 = vperm.xlu0 %2125, %v1136
  %v2127 = vpop.permute.xlu0 %2126
  %2129 = vset.pattern.permute.xlu0 1
  %2130 = vperm.xlu0 %2129, %v1137
  %v2131 = vpop.permute.xlu0 %2130
  %2133 = vset.pattern.permute.xlu0 1
  %2134 = vperm.xlu0 %2133, %v1138
  %v2135 = vpop.permute.xlu0 %2134
  %2137 = vset.pattern.permute.xlu0 1
  %2138 = vperm.xlu0 %2137, %v1139
  %v2139 = vpop.permute.xlu0 %2138
  %2141 = vset.pattern.permute.xlu0 1
  %2142 = vperm.xlu0 %2141, %v1140
  %v2143 = vpop.permute.xlu0 %2142
  %2145 = vset.pattern.permute.xlu0 1
  %2146 = vperm.xlu0 %2145, %v1141
  %v2147 = vpop.permute.xlu0 %2146
  %2149 = vset.pattern.permute.xlu0 1
  %2150 = vperm.xlu0 %2149, %v1142
  %v2151 = vpop.permute.xlu0 %2150
  %2153 = vset.pattern.permute.xlu0 1
  %2154 = vperm.xlu0 %2153, %v1143
  %v2155 = vpop.permute.xlu0 %2154
  %2157 = vset.pattern.permute.xlu0 1
  %2158 = vperm.xlu0 %2157, %v1144
  %v2159 = vpop.permute.xlu0 %2158
  %2161 = vset.pattern.permute.xlu0 1
  %2162 = vperm.xlu0 %2161, %v1145
  %v2163 = vpop.permute.xlu0 %2162
  %2165 = vset.pattern.permute.xlu0 1
  %2166 = vperm.xlu0 %2165, %v1146
  %v2167 = vpop.permute.xlu0 %2166
  %2169 = vset.pattern.permute.xlu0 1
  %2170 = vperm.xlu0 %2169, %v1147
  %v2171 = vpop.permute.xlu0 %2170
  %2173 = vset.pattern.permute.xlu0 1
  %2174 = vperm.xlu0 %2173, %v1148
  %v2175 = vpop.permute.xlu0 %2174
  %2177 = vset.pattern.permute.xlu0 1
  %2178 = vperm.xlu0 %2177, %v1149
  %v2179 = vpop.permute.xlu0 %2178
  %2181 = vset.pattern.permute.xlu0 1
  %2182 = vperm.xlu0 %2181, %v1150
  %v2183 = vpop.permute.xlu0 %2182
  %2185 = vset.pattern.permute.xlu0 1
  %2186 = vperm.xlu0 %2185, %v1151
  %v2187 = vpop.permute.xlu0 %2186
  %2189 = vset.pattern.permute.xlu0 1
  %2190 = vperm.xlu0 %2189, %v1152
  %v2191 = vpop.permute.xlu0 %2190
  %2193 = vset.pattern.permute.xlu0 1
  %2194 = vperm.xlu0 %2193, %v1153
  %v2195 = vpop.permute.xlu0 %2194
  %v2197 = vsel %vm1900, %v1903, %v1825
  %v2198 = vsel %vm1900, %v1907, %v1826
  %v2199 = vsel %vm1900, %v1911, %v1827
  %v2200 = vsel %vm1900, %v1915, %v1828
  %v2201 = vsel %vm1900, %v1919, %v1829
  %v2202 = vsel %vm1900, %v1923, %v1830
  %v2203 = vsel %vm1900, %v1927, %v1831
  %v2204 = vsel %vm1900, %v1931, %v1832
  %v2205 = vsel %vm1900, %v1935, %v1833
  %v2206 = vsel %vm1900, %v1939, %v1834
  %v2207 = vsel %vm1900, %v1943, %v1835
  %v2208 = vsel %vm1900, %v1947, %v1836
  %v2209 = vsel %vm1900, %v1951, %v1837
  %v2210 = vsel %vm1900, %v1955, %v1838
  %v2211 = vsel %vm1900, %v1959, %v1839
  %v2212 = vsel %vm1900, %v1963, %v1840
  %v2213 = vsel %vm1900, %v1967, %v1841
  %v2214 = vsel %vm1900, %v1971, %v1842
  %v2215 = vsel %vm1900, %v1975, %v1843
  %v2216 = vsel %vm1900, %v1979, %v1844
  %v2217 = vsel %vm1900, %v1983, %v1845
  %v2218 = vsel %vm1900, %v1987, %v1846
  %v2219 = vsel %vm1900, %v1991, %v1847
  %v2220 = vsel %vm1900, %v1995, %v1848
  %v2221 = vsel %vm1900, %v1999, %v1849
  %v2222 = vsel %vm1900, %v2003, %v1850
  %v2223 = vsel %vm1900, %v2007, %v1851
  %v2224 = vsel %vm1900, %v2011, %v1852
  %v2225 = vsel %vm1900, %v2015, %v1853
  %v2226 = vsel %vm1900, %v2019, %v1854
  %v2227 = vsel %vm1900, %v2023, %v1855
  %v2228 = vsel %vm1900, %v2027, %v1856
  %v2229 = vsel %vm1900, %v2031, %v1857
  %v2230 = vsel %vm1900, %v2035, %v1858
  %v2231 = vsel %vm1900, %v2039, %v1859
  %v2232 = vsel %vm1900, %v2043, %v1860
  %v2233 = vsel %vm1900, %v2047, %v1861
  %v2234 = vsel %vm1900, %v2051, %v1862
  %v2235 = vsel %vm1900, %v2055, %v1863
  %v2236 = vsel %vm1900, %v2059, %v1864
  %v2237 = vsel %vm1900, %v2063, %v1865
  %v2238 = vsel %vm1900, %v2067, %v1866
  %v2239 = vsel %vm1900, %v2071, %v1867
  %v2240 = vsel %vm1900, %v2075, %v1868
  %v2241 = vsel %vm1900, %v2079, %v1869
  %v2242 = vsel %vm1900, %v2083, %v1870
  %v2243 = vsel %vm1900, %v2087, %v1871
  %v2244 = vsel %vm1900, %v2091, %v1872
  %v2245 = vsel %vm1900, %v2095, %v1873
  %v2246 = vsel %vm1900, %v2099, %v1874
  %v2247 = vsel %vm1900, %v2103, %v1875
  %v2248 = vsel %vm1900, %v2107, %v1876
  %v2249 = vsel %vm1900, %v2111, %v1877
  %v2250 = vsel %vm1900, %v2115, %v1878
  %v2251 = vsel %vm1900, %v2119, %v1879
  %v2252 = vsel %vm1900, %v2123, %v1880
  %v2253 = vsel %vm1900, %v2127, %v1881
  %v2254 = vsel %vm1900, %v2131, %v1882
  %v2255 = vsel %vm1900, %v2135, %v1883
  %v2256 = vsel %vm1900, %v2139, %v1884
  %v2257 = vsel %vm1900, %v2143, %v1885
  %v2258 = vsel %vm1900, %v2147, %v1886
  %v2259 = vsel %vm1900, %v2151, %v1887
  %v2260 = vsel %vm1900, %v2155, %v1888
  %v2261 = vsel %vm1900, %v2159, %v1889
  %v2262 = vsel %vm1900, %v2163, %v1890
  %v2263 = vsel %vm1900, %v2167, %v1891
  %v2264 = vsel %vm1900, %v2171, %v1892
  %v2265 = vsel %vm1900, %v2175, %v1893
  %v2266 = vsel %vm1900, %v2179, %v1894
  %v2267 = vsel %vm1900, %v2183, %v1895
  %v2268 = vsel %vm1900, %v2187, %v1896
  %v2269 = vsel %vm1900, %v2191, %v1897
  %v2270 = vsel %vm1900, %v2195, %v1898
  %v2271 = vsel %vm1154, 1, 0
  %vm2272 = vcmp.eq.s32.totalorder %v2271, 1
  %2273 = vset.pattern.permute.xlu0 0
  %2274 = vperm.xlu0 %2273, %v1080
  %v2275 = vpop.permute.xlu0 %2274
  %2277 = vset.pattern.permute.xlu0 0
  %2278 = vperm.xlu0 %2277, %v1081
  %v2279 = vpop.permute.xlu0 %2278
  %2281 = vset.pattern.permute.xlu0 0
  %2282 = vperm.xlu0 %2281, %v1082
  %v2283 = vpop.permute.xlu0 %2282
  %2285 = vset.pattern.permute.xlu0 0
  %2286 = vperm.xlu0 %2285, %v1083
  %v2287 = vpop.permute.xlu0 %2286
  %2289 = vset.pattern.permute.xlu0 0
  %2290 = vperm.xlu0 %2289, %v1084
  %v2291 = vpop.permute.xlu0 %2290
  %2293 = vset.pattern.permute.xlu0 0
  %2294 = vperm.xlu0 %2293, %v1085
  %v2295 = vpop.permute.xlu0 %2294
  %2297 = vset.pattern.permute.xlu0 0
  %2298 = vperm.xlu0 %2297, %v1086
  %v2299 = vpop.permute.xlu0 %2298
  %2301 = vset.pattern.permute.xlu0 0
  %2302 = vperm.xlu0 %2301, %v1087
  %v2303 = vpop.permute.xlu0 %2302
  %2305 = vset.pattern.permute.xlu0 0
  %2306 = vperm.xlu0 %2305, %v1088
  %v2307 = vpop.permute.xlu0 %2306
  %2309 = vset.pattern.permute.xlu0 0
  %2310 = vperm.xlu0 %2309, %v1089
  %v2311 = vpop.permute.xlu0 %2310
  %2313 = vset.pattern.permute.xlu0 0
  %2314 = vperm.xlu0 %2313, %v1090
  %v2315 = vpop.permute.xlu0 %2314
  %2317 = vset.pattern.permute.xlu0 0
  %2318 = vperm.xlu0 %2317, %v1091
  %v2319 = vpop.permute.xlu0 %2318
  %2321 = vset.pattern.permute.xlu0 0
  %2322 = vperm.xlu0 %2321, %v1092
  %v2323 = vpop.permute.xlu0 %2322
  %2325 = vset.pattern.permute.xlu0 0
  %2326 = vperm.xlu0 %2325, %v1093
  %v2327 = vpop.permute.xlu0 %2326
  %2329 = vset.pattern.permute.xlu0 0
  %2330 = vperm.xlu0 %2329, %v1094
  %v2331 = vpop.permute.xlu0 %2330
  %2333 = vset.pattern.permute.xlu0 0
  %2334 = vperm.xlu0 %2333, %v1095
  %v2335 = vpop.permute.xlu0 %2334
  %2337 = vset.pattern.permute.xlu0 0
  %2338 = vperm.xlu0 %2337, %v1096
  %v2339 = vpop.permute.xlu0 %2338
  %2341 = vset.pattern.permute.xlu0 0
  %2342 = vperm.xlu0 %2341, %v1097
  %v2343 = vpop.permute.xlu0 %2342
  %2345 = vset.pattern.permute.xlu0 0
  %2346 = vperm.xlu0 %2345, %v1098
  %v2347 = vpop.permute.xlu0 %2346
  %2349 = vset.pattern.permute.xlu0 0
  %2350 = vperm.xlu0 %2349, %v1099
  %v2351 = vpop.permute.xlu0 %2350
  %2353 = vset.pattern.permute.xlu0 0
  %2354 = vperm.xlu0 %2353, %v1100
  %v2355 = vpop.permute.xlu0 %2354
  %2357 = vset.pattern.permute.xlu0 0
  %2358 = vperm.xlu0 %2357, %v1101
  %v2359 = vpop.permute.xlu0 %2358
  %2361 = vset.pattern.permute.xlu0 0
  %2362 = vperm.xlu0 %2361, %v1102
  %v2363 = vpop.permute.xlu0 %2362
  %2365 = vset.pattern.permute.xlu0 0
  %2366 = vperm.xlu0 %2365, %v1103
  %v2367 = vpop.permute.xlu0 %2366
  %2369 = vset.pattern.permute.xlu0 0
  %2370 = vperm.xlu0 %2369, %v1104
  %v2371 = vpop.permute.xlu0 %2370
  %2373 = vset.pattern.permute.xlu0 0
  %2374 = vperm.xlu0 %2373, %v1105
  %v2375 = vpop.permute.xlu0 %2374
  %2377 = vset.pattern.permute.xlu0 0
  %2378 = vperm.xlu0 %2377, %v1106
  %v2379 = vpop.permute.xlu0 %2378
  %2381 = vset.pattern.permute.xlu0 0
  %2382 = vperm.xlu0 %2381, %v1107
  %v2383 = vpop.permute.xlu0 %2382
  %2385 = vset.pattern.permute.xlu0 0
  %2386 = vperm.xlu0 %2385, %v1108
  %v2387 = vpop.permute.xlu0 %2386
  %2389 = vset.pattern.permute.xlu0 0
  %2390 = vperm.xlu0 %2389, %v1109
  %v2391 = vpop.permute.xlu0 %2390
  %2393 = vset.pattern.permute.xlu0 0
  %2394 = vperm.xlu0 %2393, %v1110
  %v2395 = vpop.permute.xlu0 %2394
  %2397 = vset.pattern.permute.xlu0 0
  %2398 = vperm.xlu0 %2397, %v1111
  %v2399 = vpop.permute.xlu0 %2398
  %2401 = vset.pattern.permute.xlu0 0
  %2402 = vperm.xlu0 %2401, %v1112
  %v2403 = vpop.permute.xlu0 %2402
  %2405 = vset.pattern.permute.xlu0 0
  %2406 = vperm.xlu0 %2405, %v1113
  %v2407 = vpop.permute.xlu0 %2406
  %2409 = vset.pattern.permute.xlu0 0
  %2410 = vperm.xlu0 %2409, %v1114
  %v2411 = vpop.permute.xlu0 %2410
  %2413 = vset.pattern.permute.xlu0 0
  %2414 = vperm.xlu0 %2413, %v1115
  %v2415 = vpop.permute.xlu0 %2414
  %2417 = vset.pattern.permute.xlu0 0
  %2418 = vperm.xlu0 %2417, %v1116
  %v2419 = vpop.permute.xlu0 %2418
  %2421 = vset.pattern.permute.xlu0 0
  %2422 = vperm.xlu0 %2421, %v1117
  %v2423 = vpop.permute.xlu0 %2422
  %2425 = vset.pattern.permute.xlu0 0
  %2426 = vperm.xlu0 %2425, %v1118
  %v2427 = vpop.permute.xlu0 %2426
  %2429 = vset.pattern.permute.xlu0 0
  %2430 = vperm.xlu0 %2429, %v1119
  %v2431 = vpop.permute.xlu0 %2430
  %2433 = vset.pattern.permute.xlu0 0
  %2434 = vperm.xlu0 %2433, %v1120
  %v2435 = vpop.permute.xlu0 %2434
  %2437 = vset.pattern.permute.xlu0 0
  %2438 = vperm.xlu0 %2437, %v1121
  %v2439 = vpop.permute.xlu0 %2438
  %2441 = vset.pattern.permute.xlu0 0
  %2442 = vperm.xlu0 %2441, %v1122
  %v2443 = vpop.permute.xlu0 %2442
  %2445 = vset.pattern.permute.xlu0 0
  %2446 = vperm.xlu0 %2445, %v1123
  %v2447 = vpop.permute.xlu0 %2446
  %2449 = vset.pattern.permute.xlu0 0
  %2450 = vperm.xlu0 %2449, %v1124
  %v2451 = vpop.permute.xlu0 %2450
  %2453 = vset.pattern.permute.xlu0 0
  %2454 = vperm.xlu0 %2453, %v1125
  %v2455 = vpop.permute.xlu0 %2454
  %2457 = vset.pattern.permute.xlu0 0
  %2458 = vperm.xlu0 %2457, %v1126
  %v2459 = vpop.permute.xlu0 %2458
  %2461 = vset.pattern.permute.xlu0 0
  %2462 = vperm.xlu0 %2461, %v1127
  %v2463 = vpop.permute.xlu0 %2462
  %2465 = vset.pattern.permute.xlu0 0
  %2466 = vperm.xlu0 %2465, %v1128
  %v2467 = vpop.permute.xlu0 %2466
  %2469 = vset.pattern.permute.xlu0 0
  %2470 = vperm.xlu0 %2469, %v1129
  %v2471 = vpop.permute.xlu0 %2470
  %2473 = vset.pattern.permute.xlu0 0
  %2474 = vperm.xlu0 %2473, %v1130
  %v2475 = vpop.permute.xlu0 %2474
  %2477 = vset.pattern.permute.xlu0 0
  %2478 = vperm.xlu0 %2477, %v1131
  %v2479 = vpop.permute.xlu0 %2478
  %2481 = vset.pattern.permute.xlu0 0
  %2482 = vperm.xlu0 %2481, %v1132
  %v2483 = vpop.permute.xlu0 %2482
  %2485 = vset.pattern.permute.xlu0 0
  %2486 = vperm.xlu0 %2485, %v1133
  %v2487 = vpop.permute.xlu0 %2486
  %2489 = vset.pattern.permute.xlu0 0
  %2490 = vperm.xlu0 %2489, %v1134
  %v2491 = vpop.permute.xlu0 %2490
  %2493 = vset.pattern.permute.xlu0 0
  %2494 = vperm.xlu0 %2493, %v1135
  %v2495 = vpop.permute.xlu0 %2494
  %2497 = vset.pattern.permute.xlu0 0
  %2498 = vperm.xlu0 %2497, %v1136
  %v2499 = vpop.permute.xlu0 %2498
  %2501 = vset.pattern.permute.xlu0 0
  %2502 = vperm.xlu0 %2501, %v1137
  %v2503 = vpop.permute.xlu0 %2502
  %2505 = vset.pattern.permute.xlu0 0
  %2506 = vperm.xlu0 %2505, %v1138
  %v2507 = vpop.permute.xlu0 %2506
  %2509 = vset.pattern.permute.xlu0 0
  %2510 = vperm.xlu0 %2509, %v1139
  %v2511 = vpop.permute.xlu0 %2510
  %2513 = vset.pattern.permute.xlu0 0
  %2514 = vperm.xlu0 %2513, %v1140
  %v2515 = vpop.permute.xlu0 %2514
  %2517 = vset.pattern.permute.xlu0 0
  %2518 = vperm.xlu0 %2517, %v1141
  %v2519 = vpop.permute.xlu0 %2518
  %2521 = vset.pattern.permute.xlu0 0
  %2522 = vperm.xlu0 %2521, %v1142
  %v2523 = vpop.permute.xlu0 %2522
  %2525 = vset.pattern.permute.xlu0 0
  %2526 = vperm.xlu0 %2525, %v1143
  %v2527 = vpop.permute.xlu0 %2526
  %2529 = vset.pattern.permute.xlu0 0
  %2530 = vperm.xlu0 %2529, %v1144
  %v2531 = vpop.permute.xlu0 %2530
  %2533 = vset.pattern.permute.xlu0 0
  %2534 = vperm.xlu0 %2533, %v1145
  %v2535 = vpop.permute.xlu0 %2534
  %2537 = vset.pattern.permute.xlu0 0
  %2538 = vperm.xlu0 %2537, %v1146
  %v2539 = vpop.permute.xlu0 %2538
  %2541 = vset.pattern.permute.xlu0 0
  %2542 = vperm.xlu0 %2541, %v1147
  %v2543 = vpop.permute.xlu0 %2542
  %2545 = vset.pattern.permute.xlu0 0
  %2546 = vperm.xlu0 %2545, %v1148
  %v2547 = vpop.permute.xlu0 %2546
  %2549 = vset.pattern.permute.xlu0 0
  %2550 = vperm.xlu0 %2549, %v1149
  %v2551 = vpop.permute.xlu0 %2550
  %2553 = vset.pattern.permute.xlu0 0
  %2554 = vperm.xlu0 %2553, %v1150
  %v2555 = vpop.permute.xlu0 %2554
  %2557 = vset.pattern.permute.xlu0 0
  %2558 = vperm.xlu0 %2557, %v1151
  %v2559 = vpop.permute.xlu0 %2558
  %2561 = vset.pattern.permute.xlu0 0
  %2562 = vperm.xlu0 %2561, %v1152
  %v2563 = vpop.permute.xlu0 %2562
  %2565 = vset.pattern.permute.xlu0 0
  %2566 = vperm.xlu0 %2565, %v1153
  %v2567 = vpop.permute.xlu0 %2566
  %v2569 = vsel %vm2272, %v2275, %v2197
  %v2570 = vsel %vm2272, %v2279, %v2198
  %v2571 = vsel %vm2272, %v2283, %v2199
  %v2572 = vsel %vm2272, %v2287, %v2200
  %v2573 = vsel %vm2272, %v2291, %v2201
  %v2574 = vsel %vm2272, %v2295, %v2202
  %v2575 = vsel %vm2272, %v2299, %v2203
  %v2576 = vsel %vm2272, %v2303, %v2204
  %v2577 = vsel %vm2272, %v2307, %v2205
  %v2578 = vsel %vm2272, %v2311, %v2206
  %v2579 = vsel %vm2272, %v2315, %v2207
  %v2580 = vsel %vm2272, %v2319, %v2208
  %v2581 = vsel %vm2272, %v2323, %v2209
  %v2582 = vsel %vm2272, %v2327, %v2210
  %v2583 = vsel %vm2272, %v2331, %v2211
  %v2584 = vsel %vm2272, %v2335, %v2212
  %v2585 = vsel %vm2272, %v2339, %v2213
  %v2586 = vsel %vm2272, %v2343, %v2214
  %v2587 = vsel %vm2272, %v2347, %v2215
  %v2588 = vsel %vm2272, %v2351, %v2216
  %v2589 = vsel %vm2272, %v2355, %v2217
  %v2590 = vsel %vm2272, %v2359, %v2218
  %v2591 = vsel %vm2272, %v2363, %v2219
  %v2592 = vsel %vm2272, %v2367, %v2220
  %v2593 = vsel %vm2272, %v2371, %v2221
  %v2594 = vsel %vm2272, %v2375, %v2222
  %v2595 = vsel %vm2272, %v2379, %v2223
  %v2596 = vsel %vm2272, %v2383, %v2224
  %v2597 = vsel %vm2272, %v2387, %v2225
  %v2598 = vsel %vm2272, %v2391, %v2226
  %v2599 = vsel %vm2272, %v2395, %v2227
  %v2600 = vsel %vm2272, %v2399, %v2228
  %v2601 = vsel %vm2272, %v2403, %v2229
  %v2602 = vsel %vm2272, %v2407, %v2230
  %v2603 = vsel %vm2272, %v2411, %v2231
  %v2604 = vsel %vm2272, %v2415, %v2232
  %v2605 = vsel %vm2272, %v2419, %v2233
  %v2606 = vsel %vm2272, %v2423, %v2234
  %v2607 = vsel %vm2272, %v2427, %v2235
  %v2608 = vsel %vm2272, %v2431, %v2236
  %v2609 = vsel %vm2272, %v2435, %v2237
  %v2610 = vsel %vm2272, %v2439, %v2238
  %v2611 = vsel %vm2272, %v2443, %v2239
  %v2612 = vsel %vm2272, %v2447, %v2240
  %v2613 = vsel %vm2272, %v2451, %v2241
  %v2614 = vsel %vm2272, %v2455, %v2242
  %v2615 = vsel %vm2272, %v2459, %v2243
  %v2616 = vsel %vm2272, %v2463, %v2244
  %v2617 = vsel %vm2272, %v2467, %v2245
  %v2618 = vsel %vm2272, %v2471, %v2246
  %v2619 = vsel %vm2272, %v2475, %v2247
  %v2620 = vsel %vm2272, %v2479, %v2248
  %v2621 = vsel %vm2272, %v2483, %v2249
  %v2622 = vsel %vm2272, %v2487, %v2250
  %v2623 = vsel %vm2272, %v2491, %v2251
  %v2624 = vsel %vm2272, %v2495, %v2252
  %v2625 = vsel %vm2272, %v2499, %v2253
  %v2626 = vsel %vm2272, %v2503, %v2254
  %v2627 = vsel %vm2272, %v2507, %v2255
  %v2628 = vsel %vm2272, %v2511, %v2256
  %v2629 = vsel %vm2272, %v2515, %v2257
  %v2630 = vsel %vm2272, %v2519, %v2258
  %v2631 = vsel %vm2272, %v2523, %v2259
  %v2632 = vsel %vm2272, %v2527, %v2260
  %v2633 = vsel %vm2272, %v2531, %v2261
  %v2634 = vsel %vm2272, %v2535, %v2262
  %v2635 = vsel %vm2272, %v2539, %v2263
  %v2636 = vsel %vm2272, %v2543, %v2264
  %v2637 = vsel %vm2272, %v2547, %v2265
  %v2638 = vsel %vm2272, %v2551, %v2266
  %v2639 = vsel %vm2272, %v2555, %v2267
  %v2640 = vsel %vm2272, %v2559, %v2268
  %v2641 = vsel %vm2272, %v2563, %v2269
  %v2642 = vsel %vm2272, %v2567, %v2270
  %v2643 = vmul.f32 %v413, %v2569
  %v2644 = vmul.f32 %v416, %v2570
  %v2645 = vmul.f32 %v421, %v2571
  %v2646 = vmul.f32 %v424, %v2572
  %v2647 = vmul.f32 %v429, %v2573
  %v2648 = vmul.f32 %v432, %v2574
  %v2649 = vmul.f32 %v437, %v2575
  %v2650 = vmul.f32 %v440, %v2576
  %v2651 = vmul.f32 %v445, %v2577
  %v2652 = vmul.f32 %v448, %v2578
  %v2653 = vmul.f32 %v453, %v2579
  %v2654 = vmul.f32 %v456, %v2580
  %v2655 = vmul.f32 %v461, %v2581
  %v2656 = vmul.f32 %v464, %v2582
  %v2657 = vmul.f32 %v469, %v2583
  %v2658 = vmul.f32 %v472, %v2584
  %v2659 = vmul.f32 %v477, %v2585
  %v2660 = vmul.f32 %v480, %v2586
  %v2661 = vmul.f32 %v485, %v2587
  %v2662 = vmul.f32 %v488, %v2588
  %v2663 = vmul.f32 %v493, %v2589
  %v2664 = vmul.f32 %v496, %v2590
  %v2665 = vmul.f32 %v501, %v2591
  %v2666 = vmul.f32 %v504, %v2592
  %v2667 = vmul.f32 %v509, %v2593
  %v2668 = vmul.f32 %v512, %v2594
  %v2669 = vmul.f32 %v517, %v2595
  %v2670 = vmul.f32 %v520, %v2596
  %v2671 = vmul.f32 %v525, %v2597
  %v2672 = vmul.f32 %v528, %v2598
  %v2673 = vmul.f32 %v533, %v2599
  %v2674 = vmul.f32 %v536, %v2600
  %v2675 = vmul.f32 %v541, %v2601
  %v2676 = vmul.f32 %v544, %v2602
  %v2677 = vmul.f32 %v549, %v2603
  %v2678 = vmul.f32 %v552, %v2604
  %v2679 = vmul.f32 %v557, %v2605
  %v2680 = vmul.f32 %v560, %v2606
  %v2681 = vmul.f32 %v565, %v2607
  %v2682 = vmul.f32 %v568, %v2608
  %v2683 = vmul.f32 %v573, %v2609
  %v2684 = vmul.f32 %v576, %v2610
  %v2685 = vmul.f32 %v581, %v2611
  %v2686 = vmul.f32 %v584, %v2612
  %v2687 = vmul.f32 %v589, %v2613
  %v2688 = vmul.f32 %v592, %v2614
  %v2689 = vmul.f32 %v597, %v2615
  %v2690 = vmul.f32 %v600, %v2616
  %v2691 = vmul.f32 %v605, %v2617
  %v2692 = vmul.f32 %v608, %v2618
  %v2693 = vmul.f32 %v613, %v2619
  %v2694 = vmul.f32 %v616, %v2620
  %v2695 = vmul.f32 %v621, %v2621
  %v2696 = vmul.f32 %v624, %v2622
  %v2697 = vmul.f32 %v629, %v2623
  %v2698 = vmul.f32 %v632, %v2624
  %v2699 = vmul.f32 %v637, %v2625
  %v2700 = vmul.f32 %v640, %v2626
  %v2701 = vmul.f32 %v645, %v2627
  %v2702 = vmul.f32 %v648, %v2628
  %v2703 = vmul.f32 %v653, %v2629
  %v2704 = vmul.f32 %v656, %v2630
  %v2705 = vmul.f32 %v661, %v2631
  %v2706 = vmul.f32 %v664, %v2632
  %v2707 = vmul.f32 %v669, %v2633
  %v2708 = vmul.f32 %v672, %v2634
  %v2709 = vmul.f32 %v677, %v2635
  %v2710 = vmul.f32 %v680, %v2636
  %v2711 = vmul.f32 %v685, %v2637
  %v2712 = vmul.f32 %v688, %v2638
  %v2713 = vmul.f32 %v693, %v2639
  %v2714 = vmul.f32 %v696, %v2640
  %v2715 = vmul.f32 %v701, %v2641
  %v2716 = vmul.f32 %v704, %v2642
  %vm2717 = vcmask 523264
  %v2718 = vsel %vm2717, %v2643, 0.0
  %v2719 = vsel %vm2717, %v2644, 0.0
  %v2720 = vadd.f32 %v2718, %v2719
  %v2721 = vsel %vm2717, %v2645, 0.0
  %v2722 = vadd.f32 %v2720, %v2721
  %v2723 = vsel %vm2717, %v2646, 0.0
  %v2724 = vadd.f32 %v2722, %v2723
  %v2725 = vsel %vm2717, %v2647, 0.0
  %v2726 = vadd.f32 %v2724, %v2725
  %v2727 = vsel %vm2717, %v2648, 0.0
  %v2728 = vadd.f32 %v2726, %v2727
  %v2729 = vsel %vm2717, %v2649, 0.0
  %v2730 = vadd.f32 %v2728, %v2729
  %v2731 = vsel %vm2717, %v2650, 0.0
  %v2732 = vadd.f32 %v2730, %v2731
  %v2733 = vsel %vm2717, %v2651, 0.0
  %v2734 = vadd.f32 %v2732, %v2733
  %v2735 = vsel %vm2717, %v2652, 0.0
  %v2736 = vadd.f32 %v2734, %v2735
  %v2737 = vsel %vm2717, %v2653, 0.0
  %v2738 = vadd.f32 %v2736, %v2737
  %v2739 = vsel %vm2717, %v2654, 0.0
  %v2740 = vadd.f32 %v2738, %v2739
  %v2741 = vsel %vm2717, %v2655, 0.0
  %v2742 = vadd.f32 %v2740, %v2741
  %v2743 = vsel %vm2717, %v2656, 0.0
  %v2744 = vadd.f32 %v2742, %v2743
  %v2745 = vsel %vm2717, %v2657, 0.0
  %v2746 = vadd.f32 %v2744, %v2745
  %v2747 = vsel %vm2717, %v2658, 0.0
  %v2748 = vadd.f32 %v2746, %v2747
  %v2749 = vsel %vm2717, %v2659, 0.0
  %v2750 = vadd.f32 %v2748, %v2749
  %v2751 = vsel %vm2717, %v2660, 0.0
  %v2752 = vadd.f32 %v2750, %v2751
  %v2753 = vsel %vm2717, %v2661, 0.0
  %v2754 = vadd.f32 %v2752, %v2753
  %v2755 = vsel %vm2717, %v2662, 0.0
  %v2756 = vadd.f32 %v2754, %v2755
  %v2757 = vsel %vm2717, %v2663, 0.0
  %v2758 = vadd.f32 %v2756, %v2757
  %v2759 = vsel %vm2717, %v2664, 0.0
  %v2760 = vadd.f32 %v2758, %v2759
  %v2761 = vsel %vm2717, %v2665, 0.0
  %v2762 = vadd.f32 %v2760, %v2761
  %v2763 = vsel %vm2717, %v2666, 0.0
  %v2764 = vadd.f32 %v2762, %v2763
  %v2765 = vsel %vm2717, %v2667, 0.0
  %v2766 = vadd.f32 %v2764, %v2765
  %v2767 = vsel %vm2717, %v2668, 0.0
  %v2768 = vadd.f32 %v2766, %v2767
  %v2769 = vsel %vm2717, %v2669, 0.0
  %v2770 = vadd.f32 %v2768, %v2769
  %v2771 = vsel %vm2717, %v2670, 0.0
  %v2772 = vadd.f32 %v2770, %v2771
  %v2773 = vsel %vm2717, %v2671, 0.0
  %v2774 = vadd.f32 %v2772, %v2773
  %v2775 = vsel %vm2717, %v2672, 0.0
  %v2776 = vadd.f32 %v2774, %v2775
  %v2777 = vsel %vm2717, %v2673, 0.0
  %v2778 = vadd.f32 %v2776, %v2777
  %v2779 = vsel %vm2717, %v2674, 0.0
  %v2780 = vadd.f32 %v2778, %v2779
  %v2781 = vsel %vm2717, %v2675, 0.0
  %v2782 = vadd.f32 %v2780, %v2781
  %v2783 = vsel %vm2717, %v2676, 0.0
  %v2784 = vadd.f32 %v2782, %v2783
  %v2785 = vsel %vm2717, %v2677, 0.0
  %v2786 = vadd.f32 %v2784, %v2785
  %v2787 = vsel %vm2717, %v2678, 0.0
  %v2788 = vadd.f32 %v2786, %v2787
  %v2789 = vsel %vm2717, %v2679, 0.0
  %v2790 = vadd.f32 %v2788, %v2789
  %v2791 = vsel %vm2717, %v2680, 0.0
  %v2792 = vadd.f32 %v2790, %v2791
  %v2793 = vsel %vm2717, %v2681, 0.0
  %v2794 = vadd.f32 %v2792, %v2793
  %v2795 = vsel %vm2717, %v2682, 0.0
  %v2796 = vadd.f32 %v2794, %v2795
  %v2797 = vsel %vm2717, %v2683, 0.0
  %v2798 = vadd.f32 %v2796, %v2797
  %v2799 = vsel %vm2717, %v2684, 0.0
  %v2800 = vadd.f32 %v2798, %v2799
  %v2801 = vsel %vm2717, %v2685, 0.0
  %v2802 = vadd.f32 %v2800, %v2801
  %v2803 = vsel %vm2717, %v2686, 0.0
  %v2804 = vadd.f32 %v2802, %v2803
  %v2805 = vsel %vm2717, %v2687, 0.0
  %v2806 = vadd.f32 %v2804, %v2805
  %v2807 = vsel %vm2717, %v2688, 0.0
  %v2808 = vadd.f32 %v2806, %v2807
  %v2809 = vsel %vm2717, %v2689, 0.0
  %v2810 = vadd.f32 %v2808, %v2809
  %v2811 = vsel %vm2717, %v2690, 0.0
  %v2812 = vadd.f32 %v2810, %v2811
  %v2813 = vsel %vm2717, %v2691, 0.0
  %v2814 = vadd.f32 %v2812, %v2813
  %v2815 = vsel %vm2717, %v2692, 0.0
  %v2816 = vadd.f32 %v2814, %v2815
  %v2817 = vsel %vm2717, %v2693, 0.0
  %v2818 = vadd.f32 %v2816, %v2817
  %v2819 = vsel %vm2717, %v2694, 0.0
  %v2820 = vadd.f32 %v2818, %v2819
  %v2821 = vsel %vm2717, %v2695, 0.0
  %v2822 = vadd.f32 %v2820, %v2821
  %v2823 = vsel %vm2717, %v2696, 0.0
  %v2824 = vadd.f32 %v2822, %v2823
  %v2825 = vsel %vm2717, %v2697, 0.0
  %v2826 = vadd.f32 %v2824, %v2825
  %v2827 = vsel %vm2717, %v2698, 0.0
  %v2828 = vadd.f32 %v2826, %v2827
  %v2829 = vsel %vm2717, %v2699, 0.0
  %v2830 = vadd.f32 %v2828, %v2829
  %v2831 = vsel %vm2717, %v2700, 0.0
  %v2832 = vadd.f32 %v2830, %v2831
  %v2833 = vsel %vm2717, %v2701, 0.0
  %v2834 = vadd.f32 %v2832, %v2833
  %v2835 = vsel %vm2717, %v2702, 0.0
  %v2836 = vadd.f32 %v2834, %v2835
  %v2837 = vsel %vm2717, %v2703, 0.0
  %v2838 = vadd.f32 %v2836, %v2837
  %v2839 = vsel %vm2717, %v2704, 0.0
  %v2840 = vadd.f32 %v2838, %v2839
  %v2841 = vsel %vm2717, %v2705, 0.0
  %v2842 = vadd.f32 %v2840, %v2841
  %v2843 = vsel %vm2717, %v2706, 0.0
  %v2844 = vadd.f32 %v2842, %v2843
  %v2845 = vsel %vm2717, %v2707, 0.0
  %v2846 = vadd.f32 %v2844, %v2845
  %v2847 = vsel %vm2717, %v2708, 0.0
  %v2848 = vadd.f32 %v2846, %v2847
  %v2849 = vsel %vm2717, %v2709, 0.0
  %v2850 = vadd.f32 %v2848, %v2849
  %v2851 = vsel %vm2717, %v2710, 0.0
  %v2852 = vadd.f32 %v2850, %v2851
  %v2853 = vsel %vm2717, %v2711, 0.0
  %v2854 = vadd.f32 %v2852, %v2853
  %v2855 = vsel %vm2717, %v2712, 0.0
  %v2856 = vadd.f32 %v2854, %v2855
  %v2857 = vsel %vm2717, %v2713, 0.0
  %v2858 = vadd.f32 %v2856, %v2857
  %v2859 = vsel %vm2717, %v2714, 0.0
  %v2860 = vadd.f32 %v2858, %v2859
  %v2861 = vsel %vm2717, %v2715, 0.0
  %v2862 = vadd.f32 %v2860, %v2861
  %v2863 = vsel %vm2717, %v2716, 0.0
  %v2864 = vadd.f32 %v2862, %v2863
  %v2865 = vrot.slane %v2864, 4
  %v2866 = vadd.f32 %v2864, %v2865
  %v2867 = vrot.slane %v2866, 2
  %v2868 = vadd.f32 %v2866, %v2867
  %v2869 = vrot.slane %v2868, 1
  %v2870 = vadd.f32 %v2868, %v2869
  %vm2871 = vcmask 516096
  %2872 = vst.msk [vmem:[%s4] sm:$0x1] %vm2871, %v2870
  %v2873 = vmul.f32 %v2643, %v2643
  %v2874 = vmul.f32 %v2644, %v2644
  %v2875 = vmul.f32 %v2645, %v2645
  %v2876 = vmul.f32 %v2646, %v2646
  %v2877 = vmul.f32 %v2647, %v2647
  %v2878 = vmul.f32 %v2648, %v2648
  %v2879 = vmul.f32 %v2649, %v2649
  %v2880 = vmul.f32 %v2650, %v2650
  %v2881 = vmul.f32 %v2651, %v2651
  %v2882 = vmul.f32 %v2652, %v2652
  %v2883 = vmul.f32 %v2653, %v2653
  %v2884 = vmul.f32 %v2654, %v2654
  %v2885 = vmul.f32 %v2655, %v2655
  %v2886 = vmul.f32 %v2656, %v2656
  %v2887 = vmul.f32 %v2657, %v2657
  %v2888 = vmul.f32 %v2658, %v2658
  %v2889 = vmul.f32 %v2659, %v2659
  %v2890 = vmul.f32 %v2660, %v2660
  %v2891 = vmul.f32 %v2661, %v2661
  %v2892 = vmul.f32 %v2662, %v2662
  %v2893 = vmul.f32 %v2663, %v2663
  %v2894 = vmul.f32 %v2664, %v2664
  %v2895 = vmul.f32 %v2665, %v2665
  %v2896 = vmul.f32 %v2666, %v2666
  %v2897 = vmul.f32 %v2667, %v2667
  %v2898 = vmul.f32 %v2668, %v2668
  %v2899 = vmul.f32 %v2669, %v2669
  %v2900 = vmul.f32 %v2670, %v2670
  %v2901 = vmul.f32 %v2671, %v2671
  %v2902 = vmul.f32 %v2672, %v2672
  %v2903 = vmul.f32 %v2673, %v2673
  %v2904 = vmul.f32 %v2674, %v2674
  %v2905 = vmul.f32 %v2675, %v2675
  %v2906 = vmul.f32 %v2676, %v2676
  %v2907 = vmul.f32 %v2677, %v2677
  %v2908 = vmul.f32 %v2678, %v2678
  %v2909 = vmul.f32 %v2679, %v2679
  %v2910 = vmul.f32 %v2680, %v2680
  %v2911 = vmul.f32 %v2681, %v2681
  %v2912 = vmul.f32 %v2682, %v2682
  %v2913 = vmul.f32 %v2683, %v2683
  %v2914 = vmul.f32 %v2684, %v2684
  %v2915 = vmul.f32 %v2685, %v2685
  %v2916 = vmul.f32 %v2686, %v2686
  %v2917 = vmul.f32 %v2687, %v2687
  %v2918 = vmul.f32 %v2688, %v2688
  %v2919 = vmul.f32 %v2689, %v2689
  %v2920 = vmul.f32 %v2690, %v2690
  %v2921 = vmul.f32 %v2691, %v2691
  %v2922 = vmul.f32 %v2692, %v2692
  %v2923 = vmul.f32 %v2693, %v2693
  %v2924 = vmul.f32 %v2694, %v2694
  %v2925 = vmul.f32 %v2695, %v2695
  %v2926 = vmul.f32 %v2696, %v2696
  %v2927 = vmul.f32 %v2697, %v2697
  %v2928 = vmul.f32 %v2698, %v2698
  %v2929 = vmul.f32 %v2699, %v2699
  %v2930 = vmul.f32 %v2700, %v2700
  %v2931 = vmul.f32 %v2701, %v2701
  %v2932 = vmul.f32 %v2702, %v2702
  %v2933 = vmul.f32 %v2703, %v2703
  %v2934 = vmul.f32 %v2704, %v2704
  %v2935 = vmul.f32 %v2705, %v2705
  %v2936 = vmul.f32 %v2706, %v2706
  %v2937 = vmul.f32 %v2707, %v2707
  %v2938 = vmul.f32 %v2708, %v2708
  %v2939 = vmul.f32 %v2709, %v2709
  %v2940 = vmul.f32 %v2710, %v2710
  %v2941 = vmul.f32 %v2711, %v2711
  %v2942 = vmul.f32 %v2712, %v2712
  %v2943 = vmul.f32 %v2713, %v2713
  %v2944 = vmul.f32 %v2714, %v2714
  %v2945 = vmul.f32 %v2715, %v2715
  %v2946 = vmul.f32 %v2716, %v2716
  %v2947 = vsel %vm2717, %v2873, 0.0
  %v2948 = vsel %vm2717, %v2874, 0.0
  %v2949 = vadd.f32 %v2947, %v2948
  %v2950 = vsel %vm2717, %v2875, 0.0
  %v2951 = vadd.f32 %v2949, %v2950
  %v2952 = vsel %vm2717, %v2876, 0.0
  %v2953 = vadd.f32 %v2951, %v2952
  %v2954 = vsel %vm2717, %v2877, 0.0
  %v2955 = vadd.f32 %v2953, %v2954
  %v2956 = vsel %vm2717, %v2878, 0.0
  %v2957 = vadd.f32 %v2955, %v2956
  %v2958 = vsel %vm2717, %v2879, 0.0
  %v2959 = vadd.f32 %v2957, %v2958
  %v2960 = vsel %vm2717, %v2880, 0.0
  %v2961 = vadd.f32 %v2959, %v2960
  %v2962 = vsel %vm2717, %v2881, 0.0
  %v2963 = vadd.f32 %v2961, %v2962
  %v2964 = vsel %vm2717, %v2882, 0.0
  %v2965 = vadd.f32 %v2963, %v2964
  %v2966 = vsel %vm2717, %v2883, 0.0
  %v2967 = vadd.f32 %v2965, %v2966
  %v2968 = vsel %vm2717, %v2884, 0.0
  %v2969 = vadd.f32 %v2967, %v2968
  %v2970 = vsel %vm2717, %v2885, 0.0
  %v2971 = vadd.f32 %v2969, %v2970
  %v2972 = vsel %vm2717, %v2886, 0.0
  %v2973 = vadd.f32 %v2971, %v2972
  %v2974 = vsel %vm2717, %v2887, 0.0
  %v2975 = vadd.f32 %v2973, %v2974
  %v2976 = vsel %vm2717, %v2888, 0.0
  %v2977 = vadd.f32 %v2975, %v2976
  %v2978 = vsel %vm2717, %v2889, 0.0
  %v2979 = vadd.f32 %v2977, %v2978
  %v2980 = vsel %vm2717, %v2890, 0.0
  %v2981 = vadd.f32 %v2979, %v2980
  %v2982 = vsel %vm2717, %v2891, 0.0
  %v2983 = vadd.f32 %v2981, %v2982
  %v2984 = vsel %vm2717, %v2892, 0.0
  %v2985 = vadd.f32 %v2983, %v2984
  %v2986 = vsel %vm2717, %v2893, 0.0
  %v2987 = vadd.f32 %v2985, %v2986
  %v2988 = vsel %vm2717, %v2894, 0.0
  %v2989 = vadd.f32 %v2987, %v2988
  %v2990 = vsel %vm2717, %v2895, 0.0
  %v2991 = vadd.f32 %v2989, %v2990
  %v2992 = vsel %vm2717, %v2896, 0.0
  %v2993 = vadd.f32 %v2991, %v2992
  %v2994 = vsel %vm2717, %v2897, 0.0
  %v2995 = vadd.f32 %v2993, %v2994
  %v2996 = vsel %vm2717, %v2898, 0.0
  %v2997 = vadd.f32 %v2995, %v2996
  %v2998 = vsel %vm2717, %v2899, 0.0
  %v2999 = vadd.f32 %v2997, %v2998
  %v3000 = vsel %vm2717, %v2900, 0.0
  %v3001 = vadd.f32 %v2999, %v3000
  %v3002 = vsel %vm2717, %v2901, 0.0
  %v3003 = vadd.f32 %v3001, %v3002
  %v3004 = vsel %vm2717, %v2902, 0.0
  %v3005 = vadd.f32 %v3003, %v3004
  %v3006 = vsel %vm2717, %v2903, 0.0
  %v3007 = vadd.f32 %v3005, %v3006
  %v3008 = vsel %vm2717, %v2904, 0.0
  %v3009 = vadd.f32 %v3007, %v3008
  %v3010 = vsel %vm2717, %v2905, 0.0
  %v3011 = vadd.f32 %v3009, %v3010
  %v3012 = vsel %vm2717, %v2906, 0.0
  %v3013 = vadd.f32 %v3011, %v3012
  %v3014 = vsel %vm2717, %v2907, 0.0
  %v3015 = vadd.f32 %v3013, %v3014
  %v3016 = vsel %vm2717, %v2908, 0.0
  %v3017 = vadd.f32 %v3015, %v3016
  %v3018 = vsel %vm2717, %v2909, 0.0
  %v3019 = vadd.f32 %v3017, %v3018
  %v3020 = vsel %vm2717, %v2910, 0.0
  %v3021 = vadd.f32 %v3019, %v3020
  %v3022 = vsel %vm2717, %v2911, 0.0
  %v3023 = vadd.f32 %v3021, %v3022
  %v3024 = vsel %vm2717, %v2912, 0.0
  %v3025 = vadd.f32 %v3023, %v3024
  %v3026 = vsel %vm2717, %v2913, 0.0
  %v3027 = vadd.f32 %v3025, %v3026
  %v3028 = vsel %vm2717, %v2914, 0.0
  %v3029 = vadd.f32 %v3027, %v3028
  %v3030 = vsel %vm2717, %v2915, 0.0
  %v3031 = vadd.f32 %v3029, %v3030
  %v3032 = vsel %vm2717, %v2916, 0.0
  %v3033 = vadd.f32 %v3031, %v3032
  %v3034 = vsel %vm2717, %v2917, 0.0
  %v3035 = vadd.f32 %v3033, %v3034
  %v3036 = vsel %vm2717, %v2918, 0.0
  %v3037 = vadd.f32 %v3035, %v3036
  %v3038 = vsel %vm2717, %v2919, 0.0
  %v3039 = vadd.f32 %v3037, %v3038
  %v3040 = vsel %vm2717, %v2920, 0.0
  %v3041 = vadd.f32 %v3039, %v3040
  %v3042 = vsel %vm2717, %v2921, 0.0
  %v3043 = vadd.f32 %v3041, %v3042
  %v3044 = vsel %vm2717, %v2922, 0.0
  %v3045 = vadd.f32 %v3043, %v3044
  %v3046 = vsel %vm2717, %v2923, 0.0
  %v3047 = vadd.f32 %v3045, %v3046
  %v3048 = vsel %vm2717, %v2924, 0.0
  %v3049 = vadd.f32 %v3047, %v3048
  %v3050 = vsel %vm2717, %v2925, 0.0
  %v3051 = vadd.f32 %v3049, %v3050
  %v3052 = vsel %vm2717, %v2926, 0.0
  %v3053 = vadd.f32 %v3051, %v3052
  %v3054 = vsel %vm2717, %v2927, 0.0
  %v3055 = vadd.f32 %v3053, %v3054
  %v3056 = vsel %vm2717, %v2928, 0.0
  %v3057 = vadd.f32 %v3055, %v3056
  %v3058 = vsel %vm2717, %v2929, 0.0
  %v3059 = vadd.f32 %v3057, %v3058
  %v3060 = vsel %vm2717, %v2930, 0.0
  %v3061 = vadd.f32 %v3059, %v3060
  %v3062 = vsel %vm2717, %v2931, 0.0
  %v3063 = vadd.f32 %v3061, %v3062
  %v3064 = vsel %vm2717, %v2932, 0.0
  %v3065 = vadd.f32 %v3063, %v3064
  %v3066 = vsel %vm2717, %v2933, 0.0
  %v3067 = vadd.f32 %v3065, %v3066
  %v3068 = vsel %vm2717, %v2934, 0.0
  %v3069 = vadd.f32 %v3067, %v3068
  %v3070 = vsel %vm2717, %v2935, 0.0
  %v3071 = vadd.f32 %v3069, %v3070
  %v3072 = vsel %vm2717, %v2936, 0.0
  %v3073 = vadd.f32 %v3071, %v3072
  %v3074 = vsel %vm2717, %v2937, 0.0
  %v3075 = vadd.f32 %v3073, %v3074
  %v3076 = vsel %vm2717, %v2938, 0.0
  %v3077 = vadd.f32 %v3075, %v3076
  %v3078 = vsel %vm2717, %v2939, 0.0
  %v3079 = vadd.f32 %v3077, %v3078
  %v3080 = vsel %vm2717, %v2940, 0.0
  %v3081 = vadd.f32 %v3079, %v3080
  %v3082 = vsel %vm2717, %v2941, 0.0
  %v3083 = vadd.f32 %v3081, %v3082
  %v3084 = vsel %vm2717, %v2942, 0.0
  %v3085 = vadd.f32 %v3083, %v3084
  %v3086 = vsel %vm2717, %v2943, 0.0
  %v3087 = vadd.f32 %v3085, %v3086
  %v3088 = vsel %vm2717, %v2944, 0.0
  %v3089 = vadd.f32 %v3087, %v3088
  %v3090 = vsel %vm2717, %v2945, 0.0
  %v3091 = vadd.f32 %v3089, %v3090
  %v3092 = vsel %vm2717, %v2946, 0.0
  %v3093 = vadd.f32 %v3091, %v3092
  %v3094 = vrot.slane %v3093, 4
  %v3095 = vadd.f32 %v3093, %v3094
  %v3096 = vrot.slane %v3095, 2
  %v3097 = vadd.f32 %v3095, %v3096
  %v3098 = vrot.slane %v3097, 1
  %v3099 = vadd.f32 %v3097, %v3098
  %3100 = vst.msk [vmem:[%s5] sm:$0x1] %vm2871, %v3099
  // Predicated region
  $region14: #{cgan_generator_forward.8} parent=0 // pred_check
    _
  $region15: #{cgan_generator_forward.8} parent=0 // pred_check_branch
    %3102 = sbr.rel (0) target = $region17
  $region16: #{cgan_generator_forward.8} parent=0 // pred_region
    _
  $region17: #{cgan_generator_forward.8} parent=0 // pred_fallthru
    _
  // Predicated region
  $region18: #{cgan_generator_forward.8} parent=0 // pred_check
    _
  $region19: #{cgan_generator_forward.8} parent=0 // pred_check_branch
    %3104 = sbr.rel (0) target = $region21
  $region20: #{cgan_generator_forward.8} parent=0 // pred_region
    _
  $region21: #{cgan_generator_forward.8} parent=0 // pred_fallthru
    _
  // Predicated region
  $region22: #{cgan_generator_forward.8} parent=0 // pred_check
    _
  $region23: #{cgan_generator_forward.8} parent=0 // pred_check_branch
    %3106 = sbr.rel (0) target = $region25
  $region24: #{cgan_generator_forward.8} parent=0 // pred_region
    _
  $region25: #{cgan_generator_forward.8} parent=0 // pred_fallthru
    _
  // Predicated region
  $region26: #{cgan_generator_forward.8} parent=0 // pred_check
    _
  $region27: #{cgan_generator_forward.8} parent=0 // pred_check_branch
    %3108 = sbr.rel (0) target = $region29
  $region28: #{cgan_generator_forward.8} parent=0 // pred_region
    _
  $region29: #{cgan_generator_forward.8} parent=0 // pred_fallthru
    _
  // Predicated region
  $region30: #{cgan_generator_forward.8} parent=0 // pred_check
    _
  $region31: #{cgan_generator_forward.8} parent=0 // pred_check_branch
    %3110 = sbr.rel (0) target = $region33
  $region32: #{cgan_generator_forward.8} parent=0 // pred_region
    _
  $region33: #{cgan_generator_forward.8} parent=0 // pred_fallthru
    _
  // Predicated region
  $region34: #{cgan_generator_forward.8} parent=0 // pred_check
    _
  $region35: #{cgan_generator_forward.8} parent=0 // pred_check_branch
    %3112 = sbr.rel (0) target = $region37
  $region36: #{cgan_generator_forward.8} parent=0 // pred_region
    _
  $region37: #{cgan_generator_forward.8} parent=0 // pred_fallthru
    _

// kernel: cgan_generator_forward.9
$region0: #{cgan_generator_forward.9}
  #allocation0 [shape = 'u32[]', space=smem, size = 0x4, offset = 0x4, fixed_abs, tag = 'smem constant byte address 0x4 - core index']
  #allocation1 [shape = 'u32[144,128]{1,0:T(1,128)}', space=vmem, size = 0x12000, scoped, tag = 'internal scratch']
  %s0 = inlined_call_operand.vmem [shape: bf16[12,64], index: 0, kind: input, shape index: {}]
  %s1 = inlined_call_operand.vmem [shape: bf16[64,2304], index: 1, kind: input, shape index: {}]
  %s2 = inlined_call_operand.vmem [shape: f32[12,2304], index: 2, kind: output, shape index: {}]
  %s3 = sld [smem:[#allocation0]]
  $region83: #{cgan_generator_forward.9} parent=0
    _
  %s5 = ssub.s32 1, %s3
  %s6 = scalar_select 0, %s5, %s3
  $region1: #{cgan_generator_forward.9} parent=0
    #allocation2 [shape = 'u8[196608]{0}', space=vmem, size = 0x30000, scoped, tag = 'input window, operand 1']
    #allocation3 [shape = 'u8[98304]{0}', space=vmem, size = 0x18000, scoped, tag = 'output window, operand 0']
    loop: start=0, step=1, limit=5
    $region2: #{cgan_generator_forward.9} parent=1 // loop_pre_header
      _
    $region3: #{cgan_generator_forward.9} parent=1 // loop_header
      %s8 = sphi 0, %s12
      %p9 = scmp.ge.s32.totalorder %s8, 5
      %s16 = sphi 0, %s16
      %s18 = sphi 0, %s16
      %s19 = sphi 0, %s18
      %s33 = sphi 0, %s19
      %s39 = sphi 0, %s41
      %s42 = sphi 0, %s39
      %s43 = sphi 0, %s42
      %s59 = sphi 0, %s43
      %s65 = sphi 0, %s67
      %s68 = sphi 0, %s65
      %s69 = sphi 0, %s68
      %s85 = sphi 0, %s69
    $region4: #{cgan_generator_forward.9} parent=1 // loop_header_branch
      %11 = sbr.rel (%p9) target = $region8
    $region5: #{cgan_generator_forward.9} parent=1 // loop_body
      %s13 = ssub.s32 %s8, 1
      %s14 = ssub.s32 %s8, 2
      %s15 = sadd.s32 %s8, 1
      %s17 = sadd.s32 %s16, 1
      %p20 = scmp.eq.s32.totalorder %s8, 2
      %p21 = scmp.ne.s32.totalorder %s16, %s18
      %p22 = scmp.eq.s32.totalorder %s8, 0
      %p23 = por %p21, %p22
      %p24 = scmp.ne.s32.totalorder %s16, %s18
      %p25 = scmp.eq.s32.totalorder %s13, 2
      %p26 = por %p24, %p25
      %p27 = scmp.ne.s32.totalorder %s18, %s19
      %p28 = scmp.eq.s32.totalorder %s13, 0
      %p29 = por %p27, %p28
      %p30 = scmp.ne.s32.totalorder %s18, %s19
      %p31 = scmp.eq.s32.totalorder %s14, 2
      %p32 = por %p30, %p31
      %p34 = scmp.ne.s32.totalorder %s19, %s33
      %p35 = scmp.eq.s32.totalorder %s14, 0
      %p36 = por %p34, %p35
      %s37 = ssub.s32 %s8, %s15
      %p38 = scmp.eq.s32.totalorder %s37, 0
      %s40 = sadd.s32 %s39, 1
      %s41 = scalar_select %p38, %s39, %s40
      %p44 = pneg %p38
      %p45 = scmp.eq.s32.totalorder %s8, 2
      %p46 = por %p44, %p45
      %p47 = scmp.ne.s32.totalorder %s39, %s42
      %p48 = scmp.eq.s32.totalorder %s8, 0
      %p49 = por %p47, %p48
      %p50 = scmp.ne.s32.totalorder %s39, %s42
      %p51 = scmp.eq.s32.totalorder %s13, 2
      %p52 = por %p50, %p51
      %p53 = scmp.ne.s32.totalorder %s42, %s43
      %p54 = scmp.eq.s32.totalorder %s13, 0
      %p55 = por %p53, %p54
      %p56 = scmp.ne.s32.totalorder %s42, %s43
      %p57 = scmp.eq.s32.totalorder %s14, 2
      %p58 = por %p56, %p57
      %p60 = scmp.ne.s32.totalorder %s43, %s59
      %p61 = scmp.eq.s32.totalorder %s14, 0
      %p62 = por %p60, %p61
      %s63 = ssub.s32 %s8, %s15
      %p64 = scmp.eq.s32.totalorder %s63, 0
      %s66 = sadd.s32 %s65, 1
      %s67 = scalar_select %p64, %s65, %s66
      %p70 = pneg %p64
      %p71 = scmp.eq.s32.totalorder %s8, 2
      %p72 = por %p70, %p71
      %p73 = scmp.ne.s32.totalorder %s65, %s68
      %p74 = scmp.eq.s32.totalorder %s8, 0
      %p75 = por %p73, %p74
      %p76 = scmp.ne.s32.totalorder %s65, %s68
      %p77 = scmp.eq.s32.totalorder %s13, 2
      %p78 = por %p76, %p77
      %p79 = scmp.ne.s32.totalorder %s68, %s69
      %p80 = scmp.eq.s32.totalorder %s13, 0
      %p81 = por %p79, %p80
      %p82 = scmp.ne.s32.totalorder %s68, %s69
      %p83 = scmp.eq.s32.totalorder %s14, 2
      %p84 = por %p82, %p83
      %p86 = scmp.ne.s32.totalorder %s69, %s85
      %p87 = scmp.eq.s32.totalorder %s14, 0
      %p88 = por %p86, %p87
      %p89 = scmp.le.s32.totalorder 1, %s8
      %p90 = scmp.lt.s32.totalorder %s8, 4
      %p91 = pnand %p89, %p90
      %p92 = pneg %p91
      // Predicated region
      $region9: #{cgan_generator_forward.9} parent=5 // pred_check
        _
      $region10: #{cgan_generator_forward.9} parent=5 // pred_check_branch
        %94 = sbr.rel (%p91) target = $region12
      $region11: #{cgan_generator_forward.9} parent=5 // pred_region
        %s95 = ssub.s32 %s8, 1
        // Predicated region
        $region13: #{cgan_generator_forward.9} parent=11 // pred_check
          %p96 = pneg %p29
        $region14: #{cgan_generator_forward.9} parent=11 // pred_check_branch
          %98 = sbr.rel (%p96) target = $region16
        $region15: #{cgan_generator_forward.9} parent=11 // pred_region
          _
        $region16: #{cgan_generator_forward.9} parent=11 // pred_fallthru
          _
      $region12: #{cgan_generator_forward.9} parent=5 // pred_fallthru
        _
      %p99 = scmp.lt.s32.totalorder %s8, 3
      // Predicated region
      $region17: #{cgan_generator_forward.9} parent=5 // pred_check
        %p100 = pneg %p99
      $region18: #{cgan_generator_forward.9} parent=5 // pred_check_branch
        %102 = sbr.rel (%p100) target = $region20
      $region19: #{cgan_generator_forward.9} parent=5 // pred_region
        // Predicated region
        $region21: #{cgan_generator_forward.9} parent=19 // pred_check
          %p103 = pneg %p49
        $region22: #{cgan_generator_forward.9} parent=19 // pred_check_branch
          %105 = sbr.rel (%p103) target = $region24
        $region23: #{cgan_generator_forward.9} parent=19 // pred_region
          %s106 = sand.u32 %s39, 1
          %s107 = sand.u32 %s39, 1
          %s108 = smul.addr %s107, 192
          %s109 = scalar_lea.vmem [#allocation2], %s108
          %s110 = smul.u32 6, %s8
          %s111 = smul.addr %s110, 4
          %s112 = scalar_lea.vmem %s1, %s111
          // Predicated region
          $region25: #{cgan_generator_forward.9} parent=23 // pred_check
            _
          $region26: #{cgan_generator_forward.9} parent=23 // pred_check_branch
            %114 = sbr.rel (0) target = $region28
          $region27: #{cgan_generator_forward.9} parent=23 // pred_region
            // Predicated region
            $region29: #{cgan_generator_forward.9} parent=27 // pred_check
              _
            $region30: #{cgan_generator_forward.9} parent=27 // pred_check_branch
              %116 = sbr.rel (0) target = $region32
            $region31: #{cgan_generator_forward.9} parent=27 // pred_region
              loop: start=0, step=1, limit=1
              $region33: #{cgan_generator_forward.9} parent=31 // loop_pre_header
                _
              $region34: #{cgan_generator_forward.9} parent=31 // loop_header
                %s118 = sphi 0, %s122
                %p119 = scmp.ge.s32.totalorder %s118, 1
                %s123 = sphi %s112, %s112
                %s124 = sphi %s109, %s109
              $region35: #{cgan_generator_forward.9} parent=31 // loop_header_branch
                %121 = sbr.rel (%p119) target = $region39
              $region36: #{cgan_generator_forward.9} parent=31 // loop_body
                %v125 = vld [vmem:[%s123] sm:$0xff]
                %126 = vst [vmem:[%s124] sm:$0xff] %v125
                %v127 = vld [vmem:[%s123 + $0x8] sm:$0xff]
                %128 = vst [vmem:[%s124 + $0x8] sm:$0xff] %v127
                %v129 = vld [vmem:[%s123 + $0x10] sm:$0xff]
                %130 = vst [vmem:[%s124 + $0x10] sm:$0xff] %v129
                %v131 = vld [vmem:[%s123 + $0x48] sm:$0xff]
                %132 = vst [vmem:[%s124 + $0x18] sm:$0xff] %v131
                %v133 = vld [vmem:[%s123 + $0x50] sm:$0xff]
                %134 = vst [vmem:[%s124 + $0x20] sm:$0xff] %v133
                %v135 = vld [vmem:[%s123 + $0x58] sm:$0xff]
                %136 = vst [vmem:[%s124 + $0x28] sm:$0xff] %v135
                %v137 = vld [vmem:[%s123 + $0x90] sm:$0xff]
                %138 = vst [vmem:[%s124 + $0x30] sm:$0xff] %v137
                %v139 = vld [vmem:[%s123 + $0x98] sm:$0xff]
                %140 = vst [vmem:[%s124 + $0x38] sm:$0xff] %v139
                %v141 = vld [vmem:[%s123 + $0xa0] sm:$0xff]
                %142 = vst [vmem:[%s124 + $0x40] sm:$0xff] %v141
                %v143 = vld [vmem:[%s123 + $0xd8] sm:$0xff]
                %144 = vst [vmem:[%s124 + $0x48] sm:$0xff] %v143
                %v145 = vld [vmem:[%s123 + $0xe0] sm:$0xff]
                %146 = vst [vmem:[%s124 + $0x50] sm:$0xff] %v145
                %v147 = vld [vmem:[%s123 + $0xe8] sm:$0xff]
                %148 = vst [vmem:[%s124 + $0x58] sm:$0xff] %v147
                %v149 = vld [vmem:[%s123 + $0x120] sm:$0xff]
                %150 = vst [vmem:[%s124 + $0x60] sm:$0xff] %v149
                %v151 = vld [vmem:[%s123 + $0x128] sm:$0xff]
                %152 = vst [vmem:[%s124 + $0x68] sm:$0xff] %v151
                %v153 = vld [vmem:[%s123 + $0x130] sm:$0xff]
                %154 = vst [vmem:[%s124 + $0x70] sm:$0xff] %v153
                %v155 = vld [vmem:[%s123 + $0x168] sm:$0xff]
                %156 = vst [vmem:[%s124 + $0x78] sm:$0xff] %v155
                %v157 = vld [vmem:[%s123 + $0x170] sm:$0xff]
                %158 = vst [vmem:[%s124 + $0x80] sm:$0xff] %v157
                %v159 = vld [vmem:[%s123 + $0x178] sm:$0xff]
                %160 = vst [vmem:[%s124 + $0x88] sm:$0xff] %v159
                %v161 = vld [vmem:[%s123 + $0x1b0] sm:$0xff]
                %162 = vst [vmem:[%s124 + $0x90] sm:$0xff] %v161
                %v163 = vld [vmem:[%s123 + $0x1b8] sm:$0xff]
                %164 = vst [vmem:[%s124 + $0x98] sm:$0xff] %v163
                %v165 = vld [vmem:[%s123 + $0x1c0] sm:$0xff]
                %166 = vst [vmem:[%s124 + $0xa0] sm:$0xff] %v165
                %v167 = vld [vmem:[%s123 + $0x1f8] sm:$0xff]
                %168 = vst [vmem:[%s124 + $0xa8] sm:$0xff] %v167
                %v169 = vld [vmem:[%s123 + $0x200] sm:$0xff]
                %170 = vst [vmem:[%s124 + $0xb0] sm:$0xff] %v169
                %v171 = vld [vmem:[%s123 + $0x208] sm:$0xff]
                %172 = vst [vmem:[%s124 + $0xb8] sm:$0xff] %v171
              $region37: #{cgan_generator_forward.9} parent=31 // loop_footer
                %s122 = sadd.s32 1, %s118
              $region38: #{cgan_generator_forward.9} parent=31 // loop_footer_branch
                %117 = sbr.rel target = $region34
              $region39: #{cgan_generator_forward.9} parent=31 // loop_exit
                _
            $region32: #{cgan_generator_forward.9} parent=27 // pred_fallthru
              _
            // Predicated region
            $region40: #{cgan_generator_forward.9} parent=27 // pred_check
              _
            $region41: #{cgan_generator_forward.9} parent=27 // pred_check_branch
              %174 = sbr.rel target = $region43
            $region42: #{cgan_generator_forward.9} parent=27 // pred_region
              _
            $region43: #{cgan_generator_forward.9} parent=27 // pred_fallthru
              _
          $region28: #{cgan_generator_forward.9} parent=23 // pred_fallthru
            _
          %175 = vnop
        $region24: #{cgan_generator_forward.9} parent=19 // pred_fallthru
          _
      $region20: #{cgan_generator_forward.9} parent=5 // pred_fallthru
        _
      %p176 = scmp.le.s32.totalorder 1, %s8
      %p177 = scmp.lt.s32.totalorder %s8, 4
      %p178 = pnand %p176, %p177
      %p179 = pneg %p178
      // Predicated region
      $region44: #{cgan_generator_forward.9} parent=5 // pred_check
        _
      $region45: #{cgan_generator_forward.9} parent=5 // pred_check_branch
        %181 = sbr.rel (%p178) target = $region47
      $region46: #{cgan_generator_forward.9} parent=5 // pred_region
        %s182 = ssub.s32 %s8, 1
        %s183 = sand.u32 %s42, 1
        %s184 = sand.u32 %s42, 1
        %s185 = smul.addr %s184, 192
        %s186 = scalar_lea.vmem [#allocation2], %s185
        // Predicated region
        $region48: #{cgan_generator_forward.9} parent=46 // pred_check
          %p187 = pneg %p55
        $region49: #{cgan_generator_forward.9} parent=46 // pred_check_branch
          %189 = sbr.rel (%p187) target = $region51
        $region50: #{cgan_generator_forward.9} parent=46 // pred_region
          _
        $region51: #{cgan_generator_forward.9} parent=46 // pred_fallthru
          _
        %p190 = pneg %p29
        %p191 = pneg %p26
        %s192 = sand.u32 %s42, 1
        %s193 = sand.u32 %s42, 1
        %s194 = smul.addr %s193, 192
        %s195 = scalar_lea.vmem [#allocation2], %s194
        %p196 = pneg %p55
        %p197 = pneg %p52
        %p198 = pneg %p81
        %p199 = pneg %p78
        %s200 = sand.u32 %s68, 1
        %s201 = sand.u32 %s68, 1
        %s202 = smul.addr %s201, 96
        %s203 = scalar_lea.vmem [#allocation3], %s202
        %s204 = smul.u32 6, %s13
        %s205 = smul.u32 6, %s13
        %v207 = vld [vmem:[%s0] sm:$0xf]
        %v208 = vld [vmem:[%s0 + $0x4] sm:$0x3]
        %v209 = vld [vmem:[%s186] sm:$0xff]
        %v210 = vld [vmem:[%s186 + $0x8] sm:$0xff]
        %v211 = vld [vmem:[%s186 + $0x10] sm:$0xff]
        %v212 = vld [vmem:[%s186 + $0x18] sm:$0xff]
        %v213 = vld [vmem:[%s186 + $0x20] sm:$0xff]
        %v214 = vld [vmem:[%s186 + $0x28] sm:$0xff]
        %v215 = vld [vmem:[%s186 + $0x30] sm:$0xff]
        %v216 = vld [vmem:[%s186 + $0x38] sm:$0xff]
        %v217 = vld [vmem:[%s186 + $0x40] sm:$0xff]
        %v218 = vld [vmem:[%s186 + $0x48] sm:$0xff]
        %v219 = vld [vmem:[%s186 + $0x50] sm:$0xff]
        %v220 = vld [vmem:[%s186 + $0x58] sm:$0xff]
        %v221 = vld [vmem:[%s186 + $0x60] sm:$0xff]
        %v222 = vld [vmem:[%s186 + $0x68] sm:$0xff]
        %v223 = vld [vmem:[%s186 + $0x70] sm:$0xff]
        %v224 = vld [vmem:[%s186 + $0x78] sm:$0xff]
        %v225 = vld [vmem:[%s186 + $0x80] sm:$0xff]
        %v226 = vld [vmem:[%s186 + $0x88] sm:$0xff]
        %v227 = vld [vmem:[%s186 + $0x90] sm:$0xff]
        %v228 = vld [vmem:[%s186 + $0x98] sm:$0xff]
        %v229 = vld [vmem:[%s186 + $0xa0] sm:$0xff]
        %v230 = vld [vmem:[%s186 + $0xa8] sm:$0xff]
        %v231 = vld [vmem:[%s186 + $0xb0] sm:$0xff]
        %v232 = vld [vmem:[%s186 + $0xb8] sm:$0xff]
        %v235 = vunpack.c.l.b16 %v207
        %v236 = vunpack.c.l.b16 %v208
        %v237 = vpack.c.b16 %v236, %v235
        %v262 = vunpack.c.l.b16 %v209
        %v263 = vunpack.c.h.b16 %v209
        %v264 = vunpack.c.l.b16 %v210
        %v265 = vunpack.c.h.b16 %v210
        %v266 = vunpack.c.l.b16 %v211
        %v267 = vunpack.c.h.b16 %v211
        %v268 = vunpack.c.l.b16 %v212
        %v269 = vunpack.c.h.b16 %v212
        %v270 = vunpack.c.l.b16 %v213
        %v271 = vunpack.c.h.b16 %v213
        %v272 = vunpack.c.l.b16 %v214
        %v273 = vunpack.c.h.b16 %v214
        %v274 = vunpack.c.l.b16 %v215
        %v275 = vunpack.c.h.b16 %v215
        %v276 = vunpack.c.l.b16 %v216
        %v277 = vunpack.c.h.b16 %v216
        %v278 = vunpack.c.l.b16 %v217
        %v279 = vunpack.c.h.b16 %v217
        %v280 = vunpack.c.l.b16 %v218
        %v281 = vunpack.c.h.b16 %v218
        %v282 = vunpack.c.l.b16 %v219
        %v283 = vunpack.c.h.b16 %v219
        %v284 = vunpack.c.l.b16 %v220
        %v285 = vunpack.c.h.b16 %v220
        %v286 = vunpack.c.l.b16 %v221
        %v287 = vunpack.c.h.b16 %v221
        %v288 = vunpack.c.l.b16 %v222
        %v289 = vunpack.c.h.b16 %v222
        %v290 = vunpack.c.l.b16 %v223
        %v291 = vunpack.c.h.b16 %v223
        %v292 = vunpack.c.l.b16 %v224
        %v293 = vunpack.c.h.b16 %v224
        %v294 = vunpack.c.l.b16 %v225
        %v295 = vunpack.c.h.b16 %v225
        %v296 = vunpack.c.l.b16 %v226
        %v297 = vunpack.c.h.b16 %v226
        %v298 = vunpack.c.l.b16 %v227
        %v299 = vunpack.c.h.b16 %v227
        %v300 = vunpack.c.l.b16 %v228
        %v301 = vunpack.c.h.b16 %v228
        %v302 = vunpack.c.l.b16 %v229
        %v303 = vunpack.c.h.b16 %v229
        %v304 = vunpack.c.l.b16 %v230
        %v305 = vunpack.c.h.b16 %v230
        %v306 = vunpack.c.l.b16 %v231
        %v307 = vunpack.c.h.b16 %v231
        %v308 = vunpack.c.l.b16 %v232
        %v309 = vunpack.c.h.b16 %v232
        %v310 = vpack.c.b16 %v268, %v262
        %v311 = vpack.c.b16 %v269, %v263
        %v312 = vpack.c.b16 %v270, %v264
        %v313 = vpack.c.b16 %v271, %v265
        %v314 = vpack.c.b16 %v272, %v266
        %v315 = vpack.c.b16 %v273, %v267
        %v316 = vpack.c.b16 %v280, %v274
        %v317 = vpack.c.b16 %v281, %v275
        %v318 = vpack.c.b16 %v282, %v276
        %v319 = vpack.c.b16 %v283, %v277
        %v320 = vpack.c.b16 %v284, %v278
        %v321 = vpack.c.b16 %v285, %v279
        %v322 = vpack.c.b16 %v292, %v286
        %v323 = vpack.c.b16 %v293, %v287
        %v324 = vpack.c.b16 %v294, %v288
        %v325 = vpack.c.b16 %v295, %v289
        %v326 = vpack.c.b16 %v296, %v290
        %v327 = vpack.c.b16 %v297, %v291
        %v328 = vpack.c.b16 %v304, %v298
        %v329 = vpack.c.b16 %v305, %v299
        %v330 = vpack.c.b16 %v306, %v300
        %v331 = vpack.c.b16 %v307, %v301
        %v332 = vpack.c.b16 %v308, %v302
        %v333 = vpack.c.b16 %v309, %v303
        %vm358 = vcmask 523264
        %v360 = vsel %vm358, %v237, 0
        %362 = vmatprep.subr.bf16.mxu0 %v311
        %363 = vmatpush1.bf16.msra.mxu0 %v310
        %364 = vmatprep.subr.bf16.mxu0 %v317
        %365 = vmatpush1.bf16.msra.mxu0 %v316
        %366 = vmatprep.subr.bf16.mxu0 %v323
        %367 = vmatpush1.bf16.msra.mxu0 %v322
        %368 = vmatprep.subr.bf16.mxu0 %v329
        %369 = vmatpush1.bf16.msra.mxu0 %v328
        %370 = vmatprep.subr.bf16.mxu0 0
        %371 = vmatpush1.bf16.msra.mxu0 0
        %372 = vmatprep.subr.bf16.mxu0 0
        %373 = vmatpush1.bf16.msra.mxu0 0
        %374 = vmatprep.subr.bf16.mxu0 0
        %375 = vmatpush1.bf16.msra.mxu0 0
        %376 = vmatprep.subr.bf16.mxu0 0
        %377 = vmatpush1.bf16.msra.mxu0 0
        %378 = vmatprep.subr.bf16.mxu0 0
        %379 = vmatpush1.bf16.msra.mxu0 0
        %380 = vmatprep.subr.bf16.mxu0 0
        %381 = vmatpush1.bf16.msra.mxu0 0
        %382 = vmatprep.subr.bf16.mxu0 0
        %383 = vmatpush1.bf16.msra.mxu0 0
        %384 = vmatprep.subr.bf16.mxu0 0
        %385 = vmatpush1.bf16.msra.mxu0 0
        %386 = vmatprep.subr.bf16.mxu0 0
        %387 = vmatpush1.bf16.msra.mxu0 0
        %388 = vmatprep.subr.bf16.mxu0 0
        %389 = vmatpush1.bf16.msra.mxu0 0
        %390 = vmatprep.subr.bf16.mxu0 0
        %391 = vmatpush1.bf16.msra.mxu0 0
        %392 = vmatprep.subr.bf16.mxu0 0
        %393 = vmatpush1.bf16.msra.mxu0 0
        %394 = vmatprep.mubr.bf16.mxu0 0
        %395 = vmatmul.mubr.bf16.gmra.mrb[0].mxu0 %v360
        %v396 = vpop.f32.mrb[0].mxu0
        %v397 = vadd.f32 0.0, %v396
        %v398 = vpop.f32.mrb[0].mxu0
        %v399 = vadd.f32 0.0, %v398
        %v400 = vpop.f32.mrb[0].mxu0
        %v401 = vadd.f32 0.0, %v400
        %v402 = vpop.f32.mrb[0].mxu0
        %v403 = vadd.f32 0.0, %v402
        %404 = vdwg.mxu0
        %405 = vmatprep.subr.bf16.mxu0 %v313
        %406 = vmatpush1.bf16.msra.mxu0 %v312
        %407 = vmatprep.subr.bf16.mxu0 %v319
        %408 = vmatpush1.bf16.msra.mxu0 %v318
        %409 = vmatprep.subr.bf16.mxu0 %v325
        %410 = vmatpush1.bf16.msra.mxu0 %v324
        %411 = vmatprep.subr.bf16.mxu0 %v331
        %412 = vmatpush1.bf16.msra.mxu0 %v330
        %413 = vmatprep.subr.bf16.mxu0 0
        %414 = vmatpush1.bf16.msra.mxu0 0
        %415 = vmatprep.subr.bf16.mxu0 0
        %416 = vmatpush1.bf16.msra.mxu0 0
        %417 = vmatprep.subr.bf16.mxu0 0
        %418 = vmatpush1.bf16.msra.mxu0 0
        %419 = vmatprep.subr.bf16.mxu0 0
        %420 = vmatpush1.bf16.msra.mxu0 0
        %421 = vmatprep.subr.bf16.mxu0 0
        %422 = vmatpush1.bf16.msra.mxu0 0
        %423 = vmatprep.subr.bf16.mxu0 0
        %424 = vmatpush1.bf16.msra.mxu0 0
        %425 = vmatprep.subr.bf16.mxu0 0
        %426 = vmatpush1.bf16.msra.mxu0 0
        %427 = vmatprep.subr.bf16.mxu0 0
        %428 = vmatpush1.bf16.msra.mxu0 0
        %429 = vmatprep.subr.bf16.mxu0 0
        %430 = vmatpush1.bf16.msra.mxu0 0
        %431 = vmatprep.subr.bf16.mxu0 0
        %432 = vmatpush1.bf16.msra.mxu0 0
        %433 = vmatprep.subr.bf16.mxu0 0
        %434 = vmatpush1.bf16.msra.mxu0 0
        %435 = vmatprep.subr.bf16.mxu0 0
        %436 = vmatpush1.bf16.msra.mxu0 0
        %437 = vmatprep.mubr.bf16.mxu0 0
        %438 = vmatmul.mubr.bf16.gmra.mrb[0].mxu0 %v360
        %v439 = vpop.f32.mrb[0].mxu0
        %v440 = vadd.f32 0.0, %v439
        %v441 = vpop.f32.mrb[0].mxu0
        %v442 = vadd.f32 0.0, %v441
        %v443 = vpop.f32.mrb[0].mxu0
        %v444 = vadd.f32 0.0, %v443
        %v445 = vpop.f32.mrb[0].mxu0
        %v446 = vadd.f32 0.0, %v445
        %447 = vdwg.mxu0
        %448 = vmatprep.subr.bf16.mxu0 %v315
        %449 = vmatpush1.bf16.msra.mxu0 %v314
        %450 = vmatprep.subr.bf16.mxu0 %v321
        %451 = vmatpush1.bf16.msra.mxu0 %v320
        %452 = vmatprep.subr.bf16.mxu0 %v327
        %453 = vmatpush1.bf16.msra.mxu0 %v326
        %454 = vmatprep.subr.bf16.mxu0 %v333
        %455 = vmatpush1.bf16.msra.mxu0 %v332
        %456 = vmatprep.subr.bf16.mxu0 0
        %457 = vmatpush1.bf16.msra.mxu0 0
        %458 = vmatprep.subr.bf16.mxu0 0
        %459 = vmatpush1.bf16.msra.mxu0 0
        %460 = vmatprep.subr.bf16.mxu0 0
        %461 = vmatpush1.bf16.msra.mxu0 0
        %462 = vmatprep.subr.bf16.mxu0 0
        %463 = vmatpush1.bf16.msra.mxu0 0
        %464 = vmatprep.subr.bf16.mxu0 0
        %465 = vmatpush1.bf16.msra.mxu0 0
        %466 = vmatprep.subr.bf16.mxu0 0
        %467 = vmatpush1.bf16.msra.mxu0 0
        %468 = vmatprep.subr.bf16.mxu0 0
        %469 = vmatpush1.bf16.msra.mxu0 0
        %470 = vmatprep.subr.bf16.mxu0 0
        %471 = vmatpush1.bf16.msra.mxu0 0
        %472 = vmatprep.subr.bf16.mxu0 0
        %473 = vmatpush1.bf16.msra.mxu0 0
        %474 = vmatprep.subr.bf16.mxu0 0
        %475 = vmatpush1.bf16.msra.mxu0 0
        %476 = vmatprep.subr.bf16.mxu0 0
        %477 = vmatpush1.bf16.msra.mxu0 0
        %478 = vmatprep.subr.bf16.mxu0 0
        %479 = vmatpush1.bf16.msra.mxu0 0
        %480 = vmatprep.mubr.bf16.mxu0 0
        %481 = vmatmul.mubr.bf16.gmra.mrb[0].mxu0 %v360
        %v482 = vpop.f32.mrb[0].mxu0
        %v483 = vadd.f32 0.0, %v482
        %v484 = vpop.f32.mrb[0].mxu0
        %v485 = vadd.f32 0.0, %v484
        %v486 = vpop.f32.mrb[0].mxu0
        %v487 = vadd.f32 0.0, %v486
        %v488 = vpop.f32.mrb[0].mxu0
        %v489 = vadd.f32 0.0, %v488
        %490 = vdwg.mxu0
        %v491 = vtanh.pop %v397
        %v492 = vtanh.pop %v399
        %v493 = vtanh.pop %v440
        %v494 = vtanh.pop %v442
        %v495 = vtanh.pop %v483
        %v496 = vtanh.pop %v485
        %v497 = vtanh.pop %v401
        %v498 = vtanh.pop %v403
        %v499 = vtanh.pop %v444
        %v500 = vtanh.pop %v446
        %v501 = vtanh.pop %v487
        %v502 = vtanh.pop %v489
        %503 = vst [vmem:[%s203] sm:$0xff] %v491
        %504 = vst [vmem:[%s203 + $0x8] sm:$0xff] %v492
        %505 = vst [vmem:[%s203 + $0x10] sm:$0xff] %v493
        %506 = vst [vmem:[%s203 + $0x18] sm:$0xff] %v494
        %507 = vst [vmem:[%s203 + $0x20] sm:$0xff] %v495
        %508 = vst [vmem:[%s203 + $0x28] sm:$0xff] %v496
        %509 = vst [vmem:[%s203 + $0x30] sm:$0xf] %v497
        %510 = vst [vmem:[%s203 + $0x38] sm:$0xf] %v498
        %511 = vst [vmem:[%s203 + $0x40] sm:$0xf] %v499
        %512 = vst [vmem:[%s203 + $0x48] sm:$0xf] %v500
        %513 = vst [vmem:[%s203 + $0x50] sm:$0xf] %v501
        %514 = vst [vmem:[%s203 + $0x58] sm:$0xf] %v502
        %s515 = sand.u32 %s68, 1
        %s516 = sand.u32 %s68, 1
        %s517 = smul.addr %s516, 96
        %s518 = scalar_lea.vmem [#allocation3], %s517
        // Predicated region
        $region52: #{cgan_generator_forward.9} parent=46 // pred_check
          %p519 = pneg %p78
        $region53: #{cgan_generator_forward.9} parent=46 // pred_check_branch
          %521 = sbr.rel (%p519) target = $region55
        $region54: #{cgan_generator_forward.9} parent=46 // pred_region
          %s522 = smul.u32 6, %s13
          %s523 = smul.addr %s522, 8
          %s524 = scalar_lea.vmem %s2, %s523
          // Predicated region
          $region56: #{cgan_generator_forward.9} parent=54 // pred_check
            _
          $region57: #{cgan_generator_forward.9} parent=54 // pred_check_branch
            %526 = sbr.rel (0) target = $region59
          $region58: #{cgan_generator_forward.9} parent=54 // pred_region
            // Predicated region
            $region60: #{cgan_generator_forward.9} parent=58 // pred_check
              _
            $region61: #{cgan_generator_forward.9} parent=58 // pred_check_branch
              %528 = sbr.rel (0) target = $region63
            $region62: #{cgan_generator_forward.9} parent=58 // pred_region
              loop: start=0, step=1, limit=1
              $region64: #{cgan_generator_forward.9} parent=62 // loop_pre_header
                _
              $region65: #{cgan_generator_forward.9} parent=62 // loop_header
                %s530 = sphi 0, %s534
                %p531 = scmp.ge.s32.totalorder %s530, 1
                %s535 = sphi %s518, %s518
                %s536 = sphi %s524, %s524
              $region66: #{cgan_generator_forward.9} parent=62 // loop_header_branch
                %533 = sbr.rel (%p531) target = $region70
              $region67: #{cgan_generator_forward.9} parent=62 // loop_body
                %v537 = vld [vmem:[%s535] sm:$0xff]
                %538 = vst [vmem:[%s536] sm:$0xff] %v537
                %v539 = vld [vmem:[%s535 + $0x8] sm:$0xff]
                %540 = vst [vmem:[%s536 + $0x8] sm:$0xff] %v539
                %v541 = vld [vmem:[%s535 + $0x10] sm:$0xff]
                %542 = vst [vmem:[%s536 + $0x10] sm:$0xff] %v541
                %v543 = vld [vmem:[%s535 + $0x18] sm:$0xff]
                %544 = vst [vmem:[%s536 + $0x18] sm:$0xff] %v543
                %v545 = vld [vmem:[%s535 + $0x20] sm:$0xff]
                %546 = vst [vmem:[%s536 + $0x20] sm:$0xff] %v545
                %v547 = vld [vmem:[%s535 + $0x28] sm:$0xff]
                %548 = vst [vmem:[%s536 + $0x28] sm:$0xff] %v547
                %v549 = vld [vmem:[%s535 + $0x30] sm:$0xff]
                %550 = vst [vmem:[%s536 + $0x90] sm:$0xff] %v549
                %v551 = vld [vmem:[%s535 + $0x38] sm:$0xff]
                %552 = vst [vmem:[%s536 + $0x98] sm:$0xff] %v551
                %v553 = vld [vmem:[%s535 + $0x40] sm:$0xff]
                %554 = vst [vmem:[%s536 + $0xa0] sm:$0xff] %v553
                %v555 = vld [vmem:[%s535 + $0x48] sm:$0xff]
                %556 = vst [vmem:[%s536 + $0xa8] sm:$0xff] %v555
                %v557 = vld [vmem:[%s535 + $0x50] sm:$0xff]
                %558 = vst [vmem:[%s536 + $0xb0] sm:$0xff] %v557
                %v559 = vld [vmem:[%s535 + $0x58] sm:$0xff]
                %560 = vst [vmem:[%s536 + $0xb8] sm:$0xff] %v559
              $region68: #{cgan_generator_forward.9} parent=62 // loop_footer
                %s534 = sadd.s32 1, %s530
              $region69: #{cgan_generator_forward.9} parent=62 // loop_footer_branch
                %529 = sbr.rel target = $region65
              $region70: #{cgan_generator_forward.9} parent=62 // loop_exit
                _
            $region63: #{cgan_generator_forward.9} parent=58 // pred_fallthru
              _
            // Predicated region
            $region71: #{cgan_generator_forward.9} parent=58 // pred_check
              _
            $region72: #{cgan_generator_forward.9} parent=58 // pred_check_branch
              %562 = sbr.rel target = $region74
            $region73: #{cgan_generator_forward.9} parent=58 // pred_region
              _
            $region74: #{cgan_generator_forward.9} parent=58 // pred_fallthru
              _
          $region59: #{cgan_generator_forward.9} parent=54 // pred_fallthru
            _
          %563 = vnop
        $region55: #{cgan_generator_forward.9} parent=46 // pred_fallthru
          _
      $region47: #{cgan_generator_forward.9} parent=5 // pred_fallthru
        _
      %p564 = scmp.le.s32.totalorder 2, %s8
      // Predicated region
      $region75: #{cgan_generator_forward.9} parent=5 // pred_check
        %p565 = pneg %p564
      $region76: #{cgan_generator_forward.9} parent=5 // pred_check_branch
        %567 = sbr.rel (%p565) target = $region78
      $region77: #{cgan_generator_forward.9} parent=5 // pred_region
        %s568 = ssub.s32 %s8, 2
        // Predicated region
        $region79: #{cgan_generator_forward.9} parent=77 // pred_check
          %p569 = pneg %p84
        $region80: #{cgan_generator_forward.9} parent=77 // pred_check_branch
          %571 = sbr.rel (%p569) target = $region82
        $region81: #{cgan_generator_forward.9} parent=77 // pred_region
          %s572 = sand.u32 %s69, 1
          %s573 = sand.u32 %s69, 1
          %s574 = smul.addr %s573, 96
          %s575 = scalar_lea.vmem [#allocation3], %s574
        $region82: #{cgan_generator_forward.9} parent=77 // pred_fallthru
          _
      $region78: #{cgan_generator_forward.9} parent=5 // pred_fallthru
        _
    $region6: #{cgan_generator_forward.9} parent=1 // loop_footer
      %s12 = sadd.s32 1, %s8
    $region7: #{cgan_generator_forward.9} parent=1 // loop_footer_branch
      %7 = sbr.rel target = $region3
    $region8: #{cgan_generator_forward.9} parent=1 // loop_exit
      _

</llo_original>
